<compile_context>
chip_gen: v7x
topology: tpu7x:2x2x1
jax: 0.10.0
libtpu: 0.0.40
codegen_flags: <defaults>
</compile_context>

<pallas_src>
import functools

import jax
import jax.numpy as jnp
from jax import lax
from jax.experimental import pallas as pl
from jax.experimental.pallas import tpu as pltpu

F32 = jnp.float32
BF16 = jnp.bfloat16


def _vmem_spec():
    return pl.BlockSpec(memory_space=pltpu.MemorySpace.VMEM)


def _vmem_specs(n):
    return [_vmem_spec() for _ in range(n)]


# ----------------------------------------------------------------------------- in-kernel helpers


def _elu(x):
    return jnp.where(x > 0.0, x, jnp.exp(jnp.minimum(x, 0.0)) - 1.0)


def _l2normalize(x):
    nrm = jnp.sqrt(jnp.sum(x * x, axis=1, keepdims=True))
    return x / jnp.maximum(nrm, 1e-12)            # F.normalize(p=2, dim=-1)


def _gat_core(x, adj, w1, a_src, a_dst):
    """Dense single-head GAT: returns (linearly-transformed features, attention matrix)."""
    h = jnp.dot(x, w1, preferred_element_type=F32)                        # [N, H]
    # Scores produced directly in the orientation needed for the outer sum
    # (avoids an XLU transpose of a [N,1] column).
    dst_col = lax.dot_general(h, a_dst, (((1,), (1,)), ((), ())),
                              preferred_element_type=F32)                 # [N, 1]
    src_row = lax.dot_general(a_src, h, (((1,), (1,)), ((), ())),
                              preferred_element_type=F32)                 # [1, N]
    e = jax.nn.sigmoid(dst_col + src_row)                                 # e[i, j]
    e = jnp.where(adj > 0.0, e, -1e30)                                    # mask non-edges
    e_max = jnp.max(e, axis=1, keepdims=True)
    p = jnp.exp(e - e_max)
    denom = jnp.sum(p, axis=1, keepdims=True)
    alpha = p / jnp.maximum(denom, 1e-30)                                 # guard empty rows
    return h, alpha


# ----------------------------------------------------------------------------- kernel 1: main branch


# TODO(synk): GATConv source (STAGATE-style, with `attention=` / `tied_attention=`) was not
# provided; implemented a dense-adjacency single-head GAT: sigmoid edge scores, masked
# softmax over incoming edges, attention=False => plain linear transform,
# tied_attention => reuse conv1's alpha matrix.
def _branch_main_kernel(x_ref, adj_ref, w1_ref, asrc_ref, adst_ref, w2_ref,
                        head1_ref, w3_ref, w4_ref, nei_ref, neg_ref,
                        z_ref, h4_ref, emb_ref, ploss_ref):
    x = x_ref[...]
    adj = adj_ref[...]

    h1_lin, alpha = _gat_core(x, adj, w1_ref[...], asrc_ref[...], adst_ref[...])
    h1 = _elu(jnp.dot(alpha, h1_lin, preferred_element_type=F32))         # conv1 + elu
    h2 = jnp.dot(h1, w2_ref[...], preferred_element_type=F32)             # conv2 (attention=False)

    z = _l2normalize(jnp.dot(h2, head1_ref[...], preferred_element_type=F32))
    z_ref[...] = z

    # conv3 with attention tied to conv1's coefficients, then conv4 (attention=False)
    h3_lin = jnp.dot(h2, w3_ref[...], preferred_element_type=F32)
    h3 = _elu(jnp.dot(alpha, h3_lin, preferred_element_type=F32))
    h4_ref[...] = jnp.dot(h3, w4_ref[...], preferred_element_type=F32)

    # AvgReadout(mask=adj, emb=z) -> l2 normalize -> sigmoid
    vsum = jnp.dot(adj, z, preferred_element_type=F32)
    row_sum = jnp.sum(adj, axis=1, keepdims=True)
    emb = jax.nn.sigmoid(_l2normalize(vsum / row_sum))
    emb_ref[...] = emb

    # TODO(synk): regularization() source was not provided; implemented the standard
    # cosine-similarity neighbour/negative regularizer on (graph_nei, graph_neg).
    en = _l2normalize(emb)
    sim = lax.dot_general(en, en, (((1,), (1,)), ((), ())),
                          preferred_element_type=F32)                     # en @ en.T
    mat = jax.nn.sigmoid(sim)
    cnt = float(mat.shape[0] * mat.shape[1])
    nei_term = jnp.sum(jnp.sum(nei_ref[...] * jnp.log(mat),
                               axis=1, keepdims=True), axis=0, keepdims=True) / cnt
    neg_term = jnp.sum(jnp.sum(neg_ref[...] * jnp.log(1.0 - mat),
                               axis=1, keepdims=True), axis=0, keepdims=True) / cnt
    ploss_ref[...] = -(nei_term + neg_term) * 0.5


def pallas_branch_main(x, adj, w1, a_src, a_dst, w2, head1, w3, w4, nei, neg):
    n, in_dim = x.shape
    out_dim = head1.shape[1]
    return pl.pallas_call(
        _branch_main_kernel,
        out_shape=(
            jax.ShapeDtypeStruct((n, out_dim), F32),   # z
            jax.ShapeDtypeStruct((n, in_dim), F32),    # h4
            jax.ShapeDtypeStruct((n, out_dim), F32),   # emb
            jax.ShapeDtypeStruct((1, 1), F32),         # pair loss
        ),
        in_specs=_vmem_specs(11),
        out_specs=(_vmem_spec(), _vmem_spec(), _vmem_spec(), _vmem_spec()),
    )(x, adj, w1, a_src, a_dst, w2, head1, w3, w4, nei, neg)


# ----------------------------------------------------------------------------- kernel 2: augmented branch


def _branch_aug_kernel(x_ref, adj_ref, w1_ref, asrc_ref, adst_ref, w2_ref, head2_ref, z_ref):
    h1_lin, alpha = _gat_core(x_ref[...], adj_ref[...], w1_ref[...],
                              asrc_ref[...], adst_ref[...])
    h1 = _elu(jnp.dot(alpha, h1_lin, preferred_element_type=F32))
    h2a = jnp.dot(h1, w2_ref[...], preferred_element_type=F32)
    z_ref[...] = _l2normalize(jnp.dot(h2a, head2_ref[...], preferred_element_type=F32))


def pallas_branch_aug(x, adj, w1, a_src, a_dst, w2, head2):
    n = x.shape[0]
    out_dim = head2.shape[1]
    return pl.pallas_call(
        _branch_aug_kernel,
        out_shape=jax.ShapeDtypeStruct((n, out_dim), F32),
        in_specs=_vmem_specs(7),
        out_specs=_vmem_spec(),
    )(x, adj, w1, a_src, a_dst, w2, head2)


# ----------------------------------------------------------------------------- kernel 3: batched projector


def _proj_pair_kernel(z_ref, za_ref,
                      ws1_ref, bs1_ref, gs_ref, bes_ref, ws2_ref, bs2_ref,
                      wt1_ref, bt1_ref, gt_ref, bet_ref, wt2_ref, bt2_ref,
                      q_ref, k_ref):
    n = z_ref.shape[0]
    x = jnp.concatenate([z_ref[...], za_ref[...]], axis=0)       # [2N, D]

    def bn(h):
        mean = jnp.mean(h, axis=0, keepdims=True)
        var = jnp.mean((h - mean) ** 2, axis=0, keepdims=True)   # biased (training-mode BN)
        return (h - mean) * lax.rsqrt(var + 1e-5)

    def proj(w1, b1, gamma, beta, w2_bf16, b2):
        h = jnp.dot(x, w1, preferred_element_type=F32) + b1      # [2N, H]
        # BatchNorm stats per original tensor (rows [0:N] = z, [N:2N] = z_a), matching
        # two independent nn.BatchNorm1d invocations. Elementwise math stays f32.
        h = jnp.concatenate([bn(h[:n]), bn(h[n:])], axis=0) * gamma + beta
        h = jnp.maximum(h, 0.0)
        # bf16 operands (f32 accumulation) for the 512x512 MXU matmul.
        return jnp.dot(h.astype(BF16), w2_bf16, preferred_element_type=F32) + b2

    q_ref[...] = proj(ws1_ref[...], bs1_ref[...], gs_ref[...], bes_ref[...],
                      ws2_ref[...], bs2_ref[...])                # student: [q ; q_a]
    k_ref[...] = proj(wt1_ref[...], bt1_ref[...], gt_ref[...], bet_ref[...],
                      wt2_ref[...], bt2_ref[...])                # teacher: [k ; k_a]


def pallas_proj_pair(z, z_a, student, teacher):
    n = z.shape[0]
    h = student["w2"].shape[1]
    return pl.pallas_call(
        _proj_pair_kernel,
        out_shape=(jax.ShapeDtypeStruct((2 * n, h), F32),
                   jax.ShapeDtypeStruct((2 * n, h), F32)),
        in_specs=_vmem_specs(14),
        out_specs=(_vmem_spec(), _vmem_spec()),
    )(z, z_a,
      student["w1"], student["b1"], student["gamma"], student["beta"],
      student["w2"].astype(BF16), student["b2"],
      teacher["w1"], teacher["b1"], teacher["gamma"], teacher["beta"],
      teacher["w2"].astype(BF16), teacher["b2"])


# ----------------------------------------------------------------------------- kernel 4: MHA + dual InfoNCE


def _mha_infonce_kernel(k2n_ref, wv_ref, bv_ref, wo_ref, bo_ref, loss_ref, *, temperature):
    kk = k2n_ref[...]                              # rows [0:N] = k (from z), [N:2N] = k_a (from z_a)
    n = kk.shape[0] // 2

    # TODO(synk): nn.MultiheadAttention is called with sequence length 1 (L=1, B=N), so the
    # per-head softmax over a single key is identically 1 and the output reduces to
    # out_proj(V_proj(key_value)); Wq/Wk projections do not affect the forward value.
    v = jnp.dot(kk.astype(BF16), wv_ref[...], preferred_element_type=F32) + bv_ref[...]
    attn = jnp.dot(v.astype(BF16), wo_ref[...], preferred_element_type=F32) + bo_ref[...]

    def infonce(q, k):
        qn = _l2normalize(q)
        kn = _l2normalize(k)
        logits = lax.dot_general(qn, kn, (((1,), (1,)), ((), ())),
                                 preferred_element_type=F32) / temperature
        m = jnp.max(logits, axis=1, keepdims=True)
        lse = jnp.log(jnp.sum(jnp.exp(logits - m), axis=1, keepdims=True)) + m
        rows = lax.broadcasted_iota(jnp.int32, logits.shape, 0)
        cols = lax.broadcasted_iota(jnp.int32, logits.shape, 1)
        diag = jnp.sum(jnp.where(rows == cols, logits, 0.0), axis=1, keepdims=True)
        per_row = lse - diag                       # cross-entropy with labels = arange(N)
        return jnp.sum(per_row, axis=0, keepdims=True) / float(q.shape[0])

    k_blk, ka_blk = kk[:n], kk[n:]
    attn_from_k, attn_from_ka = attn[:n], attn[n:]
    # loss = infonce(mha(q, k_a, k_a), k_a) + infonce(mha(q_a, k, k), k)
    loss_ref[...] = infonce(attn_from_ka, ka_blk) + infonce(attn_from_k, k_blk)


def pallas_mha_infonce(k2n, wv, bv, wo, bo, temperature):
    kern = functools.partial(_mha_infonce_kernel, temperature=float(temperature))
    return pl.pallas_call(
        kern,
        out_shape=jax.ShapeDtypeStruct((1, 1), F32),
        in_specs=_vmem_specs(5),
        out_specs=_vmem_spec(),
    )(k2n, wv.astype(BF16), bv, wo.astype(BF16), bo)


# ----------------------------------------------------------------------------- model glue


def contrastive_head_forward(p, z, z_a, m=0.999, temperature=0.07):
    # EMA teacher update (torch does this in-place under no_grad; here the updated values
    # are used for this forward -- persisting them across steps is the caller's job).
    mom = jax.tree_util.tree_map(lambda pk, pq: m * pk + (1.0 - m) * pq,
                                 p["momentum_proj"], p["proj"])
    q2n, k2n = pallas_proj_pair(z, z_a, p["proj"], mom)
    del q2n  # student projections do not influence the returned loss (seq-len-1 MHA)
    mha = p["mha"]
    return pallas_mha_infonce(k2n, mha["wv"], mha["bv"], mha["wo"], mha["bo"],
                              temperature)[0, 0]


def _moca_forward(params, features, adj, graph_nei, graph_neg, feat_a):
    z, h4, emb, ploss = pallas_branch_main(
        features, adj, params["W1"], params["a1_src"], params["a1_dst"],
        params["W2"], params["head1"], params["W3"], params["W4"],
        graph_nei, graph_neg)

    if feat_a is not None:
        z_a = pallas_branch_aug(feat_a, adj, params["W1"], params["a1_src"],
                                params["a1_dst"], params["W2"], params["head2"])
    else:
        z_a = z

    # (emb_a = sigm(read(z_a, adj)) in the torch forward is never used -> dropped.)
    contr_loss = contrastive_head_forward(params["contrast"], z, z_a)
    return z, h4, contr_loss, ploss[0, 0], emb


moca_forward = jax.jit(_moca_forward)


# ----------------------------------------------------------------------------- params


def _xavier(key, shape):
    fan_in, fan_out = shape[0], shape[1]
    limit = (6.0 / (fan_in + fan_out)) ** 0.5
    return jax.random.uniform(key, shape, F32, -limit, limit)


def init_params(key, hidden_dims, contrast_hidden=512):
    in_dim, num_hidden, out_dim = hidden_dims
    ks = jax.random.split(key, 20)
    h = contrast_hidden
    proj = {
        "w1": _xavier(ks[10], (out_dim, h)),
        "b1": jnp.zeros((1, h), F32),
        "gamma": jnp.ones((1, h), F32),
        "beta": jnp.zeros((1, h), F32),
        "w2": _xavier(ks[11], (h, h)),
        "b2": jnp.zeros((1, h), F32),
    }
    params = {
        "W1": _xavier(ks[0], (in_dim, num_hidden)),
        "a1_src": _xavier(ks[1], (1, num_hidden)),
        "a1_dst": _xavier(ks[2], (1, num_hidden)),
        "W2": _xavier(ks[3], (num_hidden, out_dim)),
        "W3": _xavier(ks[4], (out_dim, num_hidden)),
        "W4": _xavier(ks[5], (num_hidden, in_dim)),
        "head1": _xavier(ks[6], (out_dim, out_dim)),
        "head2": _xavier(ks[7], (out_dim, out_dim)),
        "contrast": {
            "proj": proj,
            "momentum_proj": jax.tree_util.tree_map(lambda x: x, proj),  # teacher = copy of student
            "mha": {
                # Wq/Wk kept for structural faithfulness; value-irrelevant with seq-len 1.
                "wq": _xavier(ks[12], (h, h)),
                "bq": jnp.zeros((1, h), F32),
                "wk": _xavier(ks[13], (h, h)),
                "bk": jnp.zeros((1, h), F32),
                "wv": _xavier(ks[14], (h, h)),
                "bv": jnp.zeros((1, h), F32),
                "wo": _xavier(ks[15], (h, h)),
                "bo": jnp.zeros((1, h), F32),
            },
        },
    }
    return params


# ----------------------------------------------------------------------------- main


if __name__ == "__main__":
    key = jax.random.PRNGKey(0)
    k_par, k_feat, k_aug, k_adj = jax.random.split(key, 4)

    N = 32
    hidden_dims = [16, 32, 8]  # [in_dim, num_hidden, out_dim]
    params = init_params(k_par, hidden_dims, contrast_hidden=512)

    features = jax.random.normal(k_feat, (N, hidden_dims[0]), F32)
    feat_a = features + 0.1 * jax.random.normal(k_aug, (N, hidden_dims[0]), F32)

    eye = jnp.eye(N, dtype=F32)
    adj = (jax.random.uniform(k_adj, (N, N)) < 0.2).astype(F32)
    adj = jnp.maximum(jnp.maximum(adj, adj.T), eye)  # symmetric + self loops (no empty rows)
    graph_nei = adj * (1.0 - eye)
    graph_neg = (1.0 - adj) * (1.0 - eye)

    out = moca_forward(params, features, adj, graph_nei, graph_neg, feat_a)
    jax.block_until_ready(out)

    z, h4, contr_loss, pair_loss, emb = out
    assert z.shape == (N, hidden_dims[2])
    assert h4.shape == (N, hidden_dims[0])
    assert emb.shape == (N, hidden_dims[2])
    assert contr_loss.ndim == 0 and pair_loss.ndim == 0
    assert bool(jnp.isfinite(contr_loss)) and bool(jnp.isfinite(pair_loss))
    print("KERNEL_OK")
</pallas_src>

<mosaic_0001>
module attributes {stable_mosaic.version = 11 : i64} {
  func.func @_branch_main_kernel(%arg0: memref<32x16xf32, #tpu.memory_space<vmem>>, %arg1: memref<32x32xf32, #tpu.memory_space<vmem>>, %arg2: memref<16x32xf32, #tpu.memory_space<vmem>>, %arg3: memref<1x32xf32, #tpu.memory_space<vmem>>, %arg4: memref<1x32xf32, #tpu.memory_space<vmem>>, %arg5: memref<32x8xf32, #tpu.memory_space<vmem>>, %arg6: memref<8x8xf32, #tpu.memory_space<vmem>>, %arg7: memref<8x32xf32, #tpu.memory_space<vmem>>, %arg8: memref<32x16xf32, #tpu.memory_space<vmem>>, %arg9: memref<32x32xf32, #tpu.memory_space<vmem>>, %arg10: memref<32x32xf32, #tpu.memory_space<vmem>>, %arg11: memref<32x8xf32, #tpu.memory_space<vmem>>, %arg12: memref<32x16xf32, #tpu.memory_space<vmem>>, %arg13: memref<32x8xf32, #tpu.memory_space<vmem>>, %arg14: memref<1x1xf32, #tpu.memory_space<vmem>>) attributes {dimension_semantics = [], scalar_prefetch = 0 : i64, scratch_operands = 0 : i64, tpu.core_type = #tpu.core_type<tc>} {
    %c0 = arith.constant 0 : index
    %c0_0 = arith.constant 0 : index
    %0 = vector.load %arg0[%c0, %c0_0] : memref<32x16xf32, #tpu.memory_space<vmem>>, vector<32x16xf32>
    %c0_1 = arith.constant 0 : index
    %c0_2 = arith.constant 0 : index
    %1 = vector.load %arg1[%c0_1, %c0_2] : memref<32x32xf32, #tpu.memory_space<vmem>>, vector<32x32xf32>
    %c0_3 = arith.constant 0 : index
    %c0_4 = arith.constant 0 : index
    %2 = vector.load %arg2[%c0_3, %c0_4] : memref<16x32xf32, #tpu.memory_space<vmem>>, vector<16x32xf32>
    %c0_5 = arith.constant 0 : index
    %c0_6 = arith.constant 0 : index
    %3 = vector.load %arg3[%c0_5, %c0_6] : memref<1x32xf32, #tpu.memory_space<vmem>>, vector<1x32xf32>
    %c0_7 = arith.constant 0 : index
    %c0_8 = arith.constant 0 : index
    %4 = vector.load %arg4[%c0_7, %c0_8] : memref<1x32xf32, #tpu.memory_space<vmem>>, vector<1x32xf32>
    %cst = arith.constant dense<0.000000e+00> : vector<32x32xf32>
    %5 = tpu.matmul %0, %2, %cst {dimension_numbers = #tpu.dot_dimension_numbers<[1], [0], [0], [1], [0, 0, 1, 1], [], []>} : vector<32x16xf32>, vector<16x32xf32>, vector<32x32xf32> -> vector<32x32xf32>
    %cst_9 = arith.constant dense<0.000000e+00> : vector<32x1xf32>
    %6 = tpu.matmul %5, %4, %cst_9 {dimension_numbers = #tpu.dot_dimension_numbers<[1], [1], [0], [0], [0, 0, 1, 0], [], []>} : vector<32x32xf32>, vector<1x32xf32>, vector<32x1xf32> -> vector<32x1xf32>
    %cst_10 = arith.constant dense<0.000000e+00> : vector<1x32xf32>
    %7 = tpu.matmul %3, %5, %cst_10 {dimension_numbers = #tpu.dot_dimension_numbers<[1], [1], [0], [0], [0, 0, 1, 0], [], []>} : vector<1x32xf32>, vector<32x32xf32>, vector<1x32xf32> -> vector<1x32xf32>
    %8 = vector.broadcast %6 : vector<32x1xf32> to vector<32x32xf32>
    %9 = vector.broadcast %7 : vector<1x32xf32> to vector<32x32xf32>
    %10 = arith.addf %8, %9 : vector<32x32xf32>
    %11 = arith.negf %10 : vector<32x32xf32>
    %12 = math.exp %11 : vector<32x32xf32>
    %cst_11 = arith.constant 1.000000e+00 : f32
    %13 = vector.broadcast %cst_11 : f32 to vector<32x32xf32>
    %14 = arith.addf %13, %12 : vector<32x32xf32>
    %15 = arith.divf %13, %14 : vector<32x32xf32>
    %cst_12 = arith.constant 0.000000e+00 : f32
    %16 = vector.broadcast %cst_12 : f32 to vector<32x32xf32>
    %17 = arith.cmpf ogt, %1, %16 : vector<32x32xf32>
    %cst_13 = arith.constant -1.000000e+30 : f32
    %18 = vector.broadcast %cst_13 : f32 to vector<32x32xf32>
    %19 = arith.select %17, %15, %18 : vector<32x32xi1>, vector<32x32xf32>
    %cst_14 = arith.constant dense<0xFF800000> : vector<32xf32>
    %20 = vector.multi_reduction <maximumf>, %19, %cst_14 [1] : vector<32x32xf32> to vector<32xf32>
    %21 = vector.shape_cast %20 : vector<32xf32> to vector<32x1xf32>
    %22 = vector.broadcast %21 : vector<32x1xf32> to vector<32x32xf32>
    %23 = arith.subf %19, %22 : vector<32x32xf32>
    %24 = math.exp %23 : vector<32x32xf32>
    %cst_15 = arith.constant dense<0.000000e+00> : vector<32xf32>
    %25 = vector.multi_reduction <add>, %24, %cst_15 [1] : vector<32x32xf32> to vector<32xf32>
    %26 = vector.shape_cast %25 : vector<32xf32> to vector<32x1xf32>
    %cst_16 = arith.constant 1.000000e-30 : f32
    %27 = vector.broadcast %cst_16 : f32 to vector<32x1xf32>
    %28 = arith.maximumf %26, %27 : vector<32x1xf32>
    %29 = vector.broadcast %28 : vector<32x1xf32> to vector<32x32xf32>
    %30 = arith.divf %24, %29 : vector<32x32xf32>
    %cst_17 = arith.constant dense<0.000000e+00> : vector<32x32xf32>
    %31 = tpu.matmul %30, %5, %cst_17 {dimension_numbers = #tpu.dot_dimension_numbers<[1], [0], [0], [1], [0, 0, 1, 1], [], []>} : vector<32x32xf32>, vector<32x32xf32>, vector<32x32xf32> -> vector<32x32xf32>
    %cst_18 = arith.constant 0.000000e+00 : f32
    %32 = vector.broadcast %cst_18 : f32 to vector<32x32xf32>
    %33 = arith.cmpf ogt, %31, %32 : vector<32x32xf32>
    %cst_19 = arith.constant 0.000000e+00 : f32
    %34 = vector.broadcast %cst_19 : f32 to vector<32x32xf32>
    %35 = arith.minimumf %31, %34 : vector<32x32xf32>
    %36 = math.exp %35 : vector<32x32xf32>
    %cst_20 = arith.constant 1.000000e+00 : f32
    %37 = vector.broadcast %cst_20 : f32 to vector<32x32xf32>
    %38 = arith.subf %36, %37 : vector<32x32xf32>
    %39 = arith.select %33, %31, %38 : vector<32x32xi1>, vector<32x32xf32>
    %c0_21 = arith.constant 0 : index
    %c0_22 = arith.constant 0 : index
    %40 = vector.load %arg5[%c0_21, %c0_22] : memref<32x8xf32, #tpu.memory_space<vmem>>, vector<32x8xf32>
    %cst_23 = arith.constant dense<0.000000e+00> : vector<32x8xf32>
    %41 = tpu.matmul %39, %40, %cst_23 {dimension_numbers = #tpu.dot_dimension_numbers<[1], [0], [0], [1], [0, 0, 1, 1], [], []>} : vector<32x32xf32>, vector<32x8xf32>, vector<32x8xf32> -> vector<32x8xf32>
    %c0_24 = arith.constant 0 : index
    %c0_25 = arith.constant 0 : index
    %42 = vector.load %arg6[%c0_24, %c0_25] : memref<8x8xf32, #tpu.memory_space<vmem>>, vector<8x8xf32>
    %cst_26 = arith.constant dense<0.000000e+00> : vector<32x8xf32>
    %43 = tpu.matmul %41, %42, %cst_26 {dimension_numbers = #tpu.dot_dimension_numbers<[1], [0], [0], [1], [0, 0, 1, 1], [], []>} : vector<32x8xf32>, vector<8x8xf32>, vector<32x8xf32> -> vector<32x8xf32>
    %44 = arith.mulf %43, %43 : vector<32x8xf32>
    %cst_27 = arith.constant dense<0.000000e+00> : vector<32xf32>
    %45 = vector.multi_reduction <add>, %44, %cst_27 [1] : vector<32x8xf32> to vector<32xf32>
    %46 = vector.shape_cast %45 : vector<32xf32> to vector<32x1xf32>
    %47 = math.sqrt %46 : vector<32x1xf32>
    %cst_28 = arith.constant 9.99999996E-13 : f32
    %48 = vector.broadcast %cst_28 : f32 to vector<32x1xf32>
    %49 = arith.maximumf %47, %48 : vector<32x1xf32>
    %50 = vector.broadcast %49 : vector<32x1xf32> to vector<32x8xf32>
    %51 = arith.divf %43, %50 : vector<32x8xf32>
    %c0_29 = arith.constant 0 : index
    %c0_30 = arith.constant 0 : index
    %52 = vector.load %arg11[%c0_29, %c0_30] : memref<32x8xf32, #tpu.memory_space<vmem>>, vector<32x8xf32>
    tpu.vector_store %arg11[%c0_29, %c0_30], %51 {strides = array<i32>} : memref<32x8xf32, #tpu.memory_space<vmem>>, vector<32x8xf32>,
    %c0_31 = arith.constant 0 : index
    %c0_32 = arith.constant 0 : index
    %53 = vector.load %arg7[%c0_31, %c0_32] : memref<8x32xf32, #tpu.memory_space<vmem>>, vector<8x32xf32>
    %cst_33 = arith.constant dense<0.000000e+00> : vector<32x32xf32>
    %54 = tpu.matmul %41, %53, %cst_33 {dimension_numbers = #tpu.dot_dimension_numbers<[1], [0], [0], [1], [0, 0, 1, 1], [], []>} : vector<32x8xf32>, vector<8x32xf32>, vector<32x32xf32> -> vector<32x32xf32>
    %cst_34 = arith.constant dense<0.000000e+00> : vector<32x32xf32>
    %55 = tpu.matmul %30, %54, %cst_34 {dimension_numbers = #tpu.dot_dimension_numbers<[1], [0], [0], [1], [0, 0, 1, 1], [], []>} : vector<32x32xf32>, vector<32x32xf32>, vector<32x32xf32> -> vector<32x32xf32>
    %cst_35 = arith.constant 0.000000e+00 : f32
    %56 = vector.broadcast %cst_35 : f32 to vector<32x32xf32>
    %57 = arith.cmpf ogt, %55, %56 : vector<32x32xf32>
    %cst_36 = arith.constant 0.000000e+00 : f32
    %58 = vector.broadcast %cst_36 : f32 to vector<32x32xf32>
    %59 = arith.minimumf %55, %58 : vector<32x32xf32>
    %60 = math.exp %59 : vector<32x32xf32>
    %cst_37 = arith.constant 1.000000e+00 : f32
    %61 = vector.broadcast %cst_37 : f32 to vector<32x32xf32>
    %62 = arith.subf %60, %61 : vector<32x32xf32>
    %63 = arith.select %57, %55, %62 : vector<32x32xi1>, vector<32x32xf32>
    %c0_38 = arith.constant 0 : index
    %c0_39 = arith.constant 0 : index
    %64 = vector.load %arg8[%c0_38, %c0_39] : memref<32x16xf32, #tpu.memory_space<vmem>>, vector<32x16xf32>
    %cst_40 = arith.constant dense<0.000000e+00> : vector<32x16xf32>
    %65 = tpu.matmul %63, %64, %cst_40 {dimension_numbers = #tpu.dot_dimension_numbers<[1], [0], [0], [1], [0, 0, 1, 1], [], []>} : vector<32x32xf32>, vector<32x16xf32>, vector<32x16xf32> -> vector<32x16xf32>
    %c0_41 = arith.constant 0 : index
    %c0_42 = arith.constant 0 : index
    %66 = vector.load %arg12[%c0_41, %c0_42] : memref<32x16xf32, #tpu.memory_space<vmem>>, vector<32x16xf32>
    tpu.vector_store %arg12[%c0_41, %c0_42], %65 {strides = array<i32>} : memref<32x16xf32, #tpu.memory_space<vmem>>, vector<32x16xf32>,
    %cst_43 = arith.constant dense<0.000000e+00> : vector<32x8xf32>
    %67 = tpu.matmul %1, %51, %cst_43 {dimension_numbers = #tpu.dot_dimension_numbers<[1], [0], [0], [1], [0, 0, 1, 1], [], []>} : vector<32x32xf32>, vector<32x8xf32>, vector<32x8xf32> -> vector<32x8xf32>
    %cst_44 = arith.constant dense<0.000000e+00> : vector<32xf32>
    %68 = vector.multi_reduction <add>, %1, %cst_44 [1] : vector<32x32xf32> to vector<32xf32>
    %69 = vector.shape_cast %68 : vector<32xf32> to vector<32x1xf32>
    %70 = vector.broadcast %69 : vector<32x1xf32> to vector<32x8xf32>
    %71 = arith.divf %67, %70 : vector<32x8xf32>
    %72 = arith.mulf %71, %71 : vector<32x8xf32>
    %cst_45 = arith.constant dense<0.000000e+00> : vector<32xf32>
    %73 = vector.multi_reduction <add>, %72, %cst_45 [1] : vector<32x8xf32> to vector<32xf32>
    %74 = vector.shape_cast %73 : vector<32xf32> to vector<32x1xf32>
    %75 = math.sqrt %74 : vector<32x1xf32>
    %cst_46 = arith.constant 9.99999996E-13 : f32
    %76 = vector.broadcast %cst_46 : f32 to vector<32x1xf32>
    %77 = arith.maximumf %75, %76 : vector<32x1xf32>
    %78 = vector.broadcast %77 : vector<32x1xf32> to vector<32x8xf32>
    %79 = arith.divf %71, %78 : vector<32x8xf32>
    %80 = arith.negf %79 : vector<32x8xf32>
    %81 = math.exp %80 : vector<32x8xf32>
    %cst_47 = arith.constant 1.000000e+00 : f32
    %82 = vector.broadcast %cst_47 : f32 to vector<32x8xf32>
    %83 = arith.addf %82, %81 : vector<32x8xf32>
    %84 = arith.divf %82, %83 : vector<32x8xf32>
    %c0_48 = arith.constant 0 : index
    %c0_49 = arith.constant 0 : index
    %85 = vector.load %arg13[%c0_48, %c0_49] : memref<32x8xf32, #tpu.memory_space<vmem>>, vector<32x8xf32>
    tpu.vector_store %arg13[%c0_48, %c0_49], %84 {strides = array<i32>} : memref<32x8xf32, #tpu.memory_space<vmem>>, vector<32x8xf32>,
    %86 = arith.mulf %84, %84 : vector<32x8xf32>
    %cst_50 = arith.constant dense<0.000000e+00> : vector<32xf32>
    %87 = vector.multi_reduction <add>, %86, %cst_50 [1] : vector<32x8xf32> to vector<32xf32>
    %88 = vector.shape_cast %87 : vector<32xf32> to vector<32x1xf32>
    %89 = math.sqrt %88 : vector<32x1xf32>
    %cst_51 = arith.constant 9.99999996E-13 : f32
    %90 = vector.broadcast %cst_51 : f32 to vector<32x1xf32>
    %91 = arith.maximumf %89, %90 : vector<32x1xf32>
    %92 = vector.broadcast %91 : vector<32x1xf32> to vector<32x8xf32>
    %93 = arith.divf %84, %92 : vector<32x8xf32>
    %cst_52 = arith.constant dense<0.000000e+00> : vector<32x32xf32>
    %94 = tpu.matmul %93, %93, %cst_52 {dimension_numbers = #tpu.dot_dimension_numbers<[1], [1], [0], [0], [0, 0, 1, 0], [], []>} : vector<32x8xf32>, vector<32x8xf32>, vector<32x32xf32> -> vector<32x32xf32>
    %95 = arith.negf %94 : vector<32x32xf32>
    %96 = math.exp %95 : vector<32x32xf32>
    %cst_53 = arith.constant 1.000000e+00 : f32
    %97 = vector.broadcast %cst_53 : f32 to vector<32x32xf32>
    %98 = arith.addf %97, %96 : vector<32x32xf32>
    %99 = arith.divf %97, %98 : vector<32x32xf32>
    %c0_54 = arith.constant 0 : index
    %c0_55 = arith.constant 0 : index
    %100 = vector.load %arg9[%c0_54, %c0_55] : memref<32x32xf32, #tpu.memory_space<vmem>>, vector<32x32xf32>
    %101 = math.log %99 : vector<32x32xf32>
    %102 = arith.mulf %100, %101 : vector<32x32xf32>
    %cst_56 = arith.constant dense<0.000000e+00> : vector<32xf32>
    %103 = vector.multi_reduction <add>, %102, %cst_56 [1] : vector<32x32xf32> to vector<32xf32>
    %104 = vector.shape_cast %103 : vector<32xf32> to vector<32x1xf32>
    %cst_57 = arith.constant dense<0.000000e+00> : vector<1xf32>
    %105 = vector.multi_reduction <add>, %104, %cst_57 [0] : vector<32x1xf32> to vector<1xf32>
    %106 = vector.shape_cast %105 : vector<1xf32> to vector<1x1xf32>
    %cst_58 = arith.constant 1.024000e+03 : f32
    %107 = vector.broadcast %cst_58 : f32 to vector<1x1xf32>
    %108 = arith.divf %106, %107 : vector<1x1xf32>
    %c0_59 = arith.constant 0 : index
    %c0_60 = arith.constant 0 : index
    %109 = vector.load %arg10[%c0_59, %c0_60] : memref<32x32xf32, #tpu.memory_space<vmem>>, vector<32x32xf32>
    %cst_61 = arith.constant 1.000000e+00 : f32
    %110 = vector.broadcast %cst_61 : f32 to vector<32x32xf32>
    %111 = arith.subf %110, %99 : vector<32x32xf32>
    %112 = math.log %111 : vector<32x32xf32>
    %113 = arith.mulf %109, %112 : vector<32x32xf32>
    %cst_62 = arith.constant dense<0.000000e+00> : vector<32xf32>
    %114 = vector.multi_reduction <add>, %113, %cst_62 [1] : vector<32x32xf32> to vector<32xf32>
    %115 = vector.shape_cast %114 : vector<32xf32> to vector<32x1xf32>
    %cst_63 = arith.constant dense<0.000000e+00> : vector<1xf32>
    %116 = vector.multi_reduction <add>, %115, %cst_63 [0] : vector<32x1xf32> to vector<1xf32>
    %117 = vector.shape_cast %116 : vector<1xf32> to vector<1x1xf32>
    %cst_64 = arith.constant 1.024000e+03 : f32
    %118 = vector.broadcast %cst_64 : f32 to vector<1x1xf32>
    %119 = arith.divf %117, %118 : vector<1x1xf32>
    %120 = arith.addf %108, %119 : vector<1x1xf32>
    %cst_65 = arith.constant 0.000000e+00 : f32
    %121 = vector.broadcast %cst_65 : f32 to vector<1x1xf32>
    %122 = arith.subf %121, %120 : vector<1x1xf32>
    %cst_66 = arith.constant 5.000000e-01 : f32
    %123 = vector.broadcast %cst_66 : f32 to vector<1x1xf32>
    %124 = arith.mulf %122, %123 : vector<1x1xf32>
    %c0_67 = arith.constant 0 : index
    %c0_68 = arith.constant 0 : index
    %125 = vector.load %arg14[%c0_67, %c0_68] : memref<1x1xf32, #tpu.memory_space<vmem>>, vector<1x1xf32>
    tpu.vector_store %arg14[%c0_67, %c0_68], %124 {strides = array<i32>} : memref<1x1xf32, #tpu.memory_space<vmem>>, vector<1x1xf32>,
    return
  }
}

module attributes {stable_mosaic.version = 11 : i64} {
  func.func @_branch_aug_kernel(%arg0: memref<32x16xf32, #tpu.memory_space<vmem>>, %arg1: memref<32x32xf32, #tpu.memory_space<vmem>>, %arg2: memref<16x32xf32, #tpu.memory_space<vmem>>, %arg3: memref<1x32xf32, #tpu.memory_space<vmem>>, %arg4: memref<1x32xf32, #tpu.memory_space<vmem>>, %arg5: memref<32x8xf32, #tpu.memory_space<vmem>>, %arg6: memref<8x8xf32, #tpu.memory_space<vmem>>, %arg7: memref<32x8xf32, #tpu.memory_space<vmem>>) attributes {dimension_semantics = [], scalar_prefetch = 0 : i64, scratch_operands = 0 : i64, tpu.core_type = #tpu.core_type<tc>} {
    %c0 = arith.constant 0 : index
    %c0_0 = arith.constant 0 : index
    %0 = vector.load %arg0[%c0, %c0_0] : memref<32x16xf32, #tpu.memory_space<vmem>>, vector<32x16xf32>
    %c0_1 = arith.constant 0 : index
    %c0_2 = arith.constant 0 : index
    %1 = vector.load %arg1[%c0_1, %c0_2] : memref<32x32xf32, #tpu.memory_space<vmem>>, vector<32x32xf32>
    %c0_3 = arith.constant 0 : index
    %c0_4 = arith.constant 0 : index
    %2 = vector.load %arg2[%c0_3, %c0_4] : memref<16x32xf32, #tpu.memory_space<vmem>>, vector<16x32xf32>
    %c0_5 = arith.constant 0 : index
    %c0_6 = arith.constant 0 : index
    %3 = vector.load %arg3[%c0_5, %c0_6] : memref<1x32xf32, #tpu.memory_space<vmem>>, vector<1x32xf32>
    %c0_7 = arith.constant 0 : index
    %c0_8 = arith.constant 0 : index
    %4 = vector.load %arg4[%c0_7, %c0_8] : memref<1x32xf32, #tpu.memory_space<vmem>>, vector<1x32xf32>
    %cst = arith.constant dense<0.000000e+00> : vector<32x32xf32>
    %5 = tpu.matmul %0, %2, %cst {dimension_numbers = #tpu.dot_dimension_numbers<[1], [0], [0], [1], [0, 0, 1, 1], [], []>} : vector<32x16xf32>, vector<16x32xf32>, vector<32x32xf32> -> vector<32x32xf32>
    %cst_9 = arith.constant dense<0.000000e+00> : vector<32x1xf32>
    %6 = tpu.matmul %5, %4, %cst_9 {dimension_numbers = #tpu.dot_dimension_numbers<[1], [1], [0], [0], [0, 0, 1, 0], [], []>} : vector<32x32xf32>, vector<1x32xf32>, vector<32x1xf32> -> vector<32x1xf32>
    %cst_10 = arith.constant dense<0.000000e+00> : vector<1x32xf32>
    %7 = tpu.matmul %3, %5, %cst_10 {dimension_numbers = #tpu.dot_dimension_numbers<[1], [1], [0], [0], [0, 0, 1, 0], [], []>} : vector<1x32xf32>, vector<32x32xf32>, vector<1x32xf32> -> vector<1x32xf32>
    %8 = vector.broadcast %6 : vector<32x1xf32> to vector<32x32xf32>
    %9 = vector.broadcast %7 : vector<1x32xf32> to vector<32x32xf32>
    %10 = arith.addf %8, %9 : vector<32x32xf32>
    %11 = arith.negf %10 : vector<32x32xf32>
    %12 = math.exp %11 : vector<32x32xf32>
    %cst_11 = arith.constant 1.000000e+00 : f32
    %13 = vector.broadcast %cst_11 : f32 to vector<32x32xf32>
    %14 = arith.addf %13, %12 : vector<32x32xf32>
    %15 = arith.divf %13, %14 : vector<32x32xf32>
    %cst_12 = arith.constant 0.000000e+00 : f32
    %16 = vector.broadcast %cst_12 : f32 to vector<32x32xf32>
    %17 = arith.cmpf ogt, %1, %16 : vector<32x32xf32>
    %cst_13 = arith.constant -1.000000e+30 : f32
    %18 = vector.broadcast %cst_13 : f32 to vector<32x32xf32>
    %19 = arith.select %17, %15, %18 : vector<32x32xi1>, vector<32x32xf32>
    %cst_14 = arith.constant dense<0xFF800000> : vector<32xf32>
    %20 = vector.multi_reduction <maximumf>, %19, %cst_14 [1] : vector<32x32xf32> to vector<32xf32>
    %21 = vector.shape_cast %20 : vector<32xf32> to vector<32x1xf32>
    %22 = vector.broadcast %21 : vector<32x1xf32> to vector<32x32xf32>
    %23 = arith.subf %19, %22 : vector<32x32xf32>
    %24 = math.exp %23 : vector<32x32xf32>
    %cst_15 = arith.constant dense<0.000000e+00> : vector<32xf32>
    %25 = vector.multi_reduction <add>, %24, %cst_15 [1] : vector<32x32xf32> to vector<32xf32>
    %26 = vector.shape_cast %25 : vector<32xf32> to vector<32x1xf32>
    %cst_16 = arith.constant 1.000000e-30 : f32
    %27 = vector.broadcast %cst_16 : f32 to vector<32x1xf32>
    %28 = arith.maximumf %26, %27 : vector<32x1xf32>
    %29 = vector.broadcast %28 : vector<32x1xf32> to vector<32x32xf32>
    %30 = arith.divf %24, %29 : vector<32x32xf32>
    %cst_17 = arith.constant dense<0.000000e+00> : vector<32x32xf32>
    %31 = tpu.matmul %30, %5, %cst_17 {dimension_numbers = #tpu.dot_dimension_numbers<[1], [0], [0], [1], [0, 0, 1, 1], [], []>} : vector<32x32xf32>, vector<32x32xf32>, vector<32x32xf32> -> vector<32x32xf32>
    %cst_18 = arith.constant 0.000000e+00 : f32
    %32 = vector.broadcast %cst_18 : f32 to vector<32x32xf32>
    %33 = arith.cmpf ogt, %31, %32 : vector<32x32xf32>
    %cst_19 = arith.constant 0.000000e+00 : f32
    %34 = vector.broadcast %cst_19 : f32 to vector<32x32xf32>
    %35 = arith.minimumf %31, %34 : vector<32x32xf32>
    %36 = math.exp %35 : vector<32x32xf32>
    %cst_20 = arith.constant 1.000000e+00 : f32
    %37 = vector.broadcast %cst_20 : f32 to vector<32x32xf32>
    %38 = arith.subf %36, %37 : vector<32x32xf32>
    %39 = arith.select %33, %31, %38 : vector<32x32xi1>, vector<32x32xf32>
    %c0_21 = arith.constant 0 : index
    %c0_22 = arith.constant 0 : index
    %40 = vector.load %arg5[%c0_21, %c0_22] : memref<32x8xf32, #tpu.memory_space<vmem>>, vector<32x8xf32>
    %cst_23 = arith.constant dense<0.000000e+00> : vector<32x8xf32>
    %41 = tpu.matmul %39, %40, %cst_23 {dimension_numbers = #tpu.dot_dimension_numbers<[1], [0], [0], [1], [0, 0, 1, 1], [], []>} : vector<32x32xf32>, vector<32x8xf32>, vector<32x8xf32> -> vector<32x8xf32>
    %c0_24 = arith.constant 0 : index
    %c0_25 = arith.constant 0 : index
    %42 = vector.load %arg6[%c0_24, %c0_25] : memref<8x8xf32, #tpu.memory_space<vmem>>, vector<8x8xf32>
    %cst_26 = arith.constant dense<0.000000e+00> : vector<32x8xf32>
    %43 = tpu.matmul %41, %42, %cst_26 {dimension_numbers = #tpu.dot_dimension_numbers<[1], [0], [0], [1], [0, 0, 1, 1], [], []>} : vector<32x8xf32>, vector<8x8xf32>, vector<32x8xf32> -> vector<32x8xf32>
    %44 = arith.mulf %43, %43 : vector<32x8xf32>
    %cst_27 = arith.constant dense<0.000000e+00> : vector<32xf32>
    %45 = vector.multi_reduction <add>, %44, %cst_27 [1] : vector<32x8xf32> to vector<32xf32>
    %46 = vector.shape_cast %45 : vector<32xf32> to vector<32x1xf32>
    %47 = math.sqrt %46 : vector<32x1xf32>
    %cst_28 = arith.constant 9.99999996E-13 : f32
    %48 = vector.broadcast %cst_28 : f32 to vector<32x1xf32>
    %49 = arith.maximumf %47, %48 : vector<32x1xf32>
    %50 = vector.broadcast %49 : vector<32x1xf32> to vector<32x8xf32>
    %51 = arith.divf %43, %50 : vector<32x8xf32>
    %c0_29 = arith.constant 0 : index
    %c0_30 = arith.constant 0 : index
    %52 = vector.load %arg7[%c0_29, %c0_30] : memref<32x8xf32, #tpu.memory_space<vmem>>, vector<32x8xf32>
    tpu.vector_store %arg7[%c0_29, %c0_30], %51 {strides = array<i32>} : memref<32x8xf32, #tpu.memory_space<vmem>>, vector<32x8xf32>,
    return
  }
}

module attributes {stable_mosaic.version = 11 : i64} {
  func.func @_proj_pair_kernel(%arg0: memref<32x8xf32, #tpu.memory_space<vmem>>, %arg1: memref<32x8xf32, #tpu.memory_space<vmem>>, %arg2: memref<8x512xf32, #tpu.memory_space<vmem>>, %arg3: memref<1x512xf32, #tpu.memory_space<vmem>>, %arg4: memref<1x512xf32, #tpu.memory_space<vmem>>, %arg5: memref<1x512xf32, #tpu.memory_space<vmem>>, %arg6: memref<512x512xbf16, #tpu.memory_space<vmem>>, %arg7: memref<1x512xf32, #tpu.memory_space<vmem>>, %arg8: memref<8x512xf32, #tpu.memory_space<vmem>>, %arg9: memref<1x512xf32, #tpu.memory_space<vmem>>, %arg10: memref<1x512xf32, #tpu.memory_space<vmem>>, %arg11: memref<1x512xf32, #tpu.memory_space<vmem>>, %arg12: memref<512x512xbf16, #tpu.memory_space<vmem>>, %arg13: memref<1x512xf32, #tpu.memory_space<vmem>>, %arg14: memref<64x512xf32, #tpu.memory_space<vmem>>, %arg15: memref<64x512xf32, #tpu.memory_space<vmem>>) attributes {dimension_semantics = [], scalar_prefetch = 0 : i64, scratch_operands = 0 : i64, tpu.core_type = #tpu.core_type<tc>} {
    %c0 = arith.constant 0 : index
    %c0_0 = arith.constant 0 : index
    %0 = vector.load %arg0[%c0, %c0_0] : memref<32x8xf32, #tpu.memory_space<vmem>>, vector<32x8xf32>
    %c0_1 = arith.constant 0 : index
    %c0_2 = arith.constant 0 : index
    %1 = vector.load %arg1[%c0_1, %c0_2] : memref<32x8xf32, #tpu.memory_space<vmem>>, vector<32x8xf32>
    %2 = tpu.concatenate %0, %1 in 0 : vector<32x8xf32>, vector<32x8xf32> -> vector<64x8xf32>
    %c0_3 = arith.constant 0 : index
    %c0_4 = arith.constant 0 : index
    %3 = vector.load %arg2[%c0_3, %c0_4] : memref<8x512xf32, #tpu.memory_space<vmem>>, vector<8x512xf32>
    %c0_5 = arith.constant 0 : index
    %c0_6 = arith.constant 0 : index
    %4 = vector.load %arg3[%c0_5, %c0_6] : memref<1x512xf32, #tpu.memory_space<vmem>>, vector<1x512xf32>
    %c0_7 = arith.constant 0 : index
    %c0_8 = arith.constant 0 : index
    %5 = vector.load %arg4[%c0_7, %c0_8] : memref<1x512xf32, #tpu.memory_space<vmem>>, vector<1x512xf32>
    %c0_9 = arith.constant 0 : index
    %c0_10 = arith.constant 0 : index
    %6 = vector.load %arg5[%c0_9, %c0_10] : memref<1x512xf32, #tpu.memory_space<vmem>>, vector<1x512xf32>
    %c0_11 = arith.constant 0 : index
    %c0_12 = arith.constant 0 : index
    %7 = vector.load %arg6[%c0_11, %c0_12] : memref<512x512xbf16, #tpu.memory_space<vmem>>, vector<512x512xbf16>
    %c0_13 = arith.constant 0 : index
    %c0_14 = arith.constant 0 : index
    %8 = vector.load %arg7[%c0_13, %c0_14] : memref<1x512xf32, #tpu.memory_space<vmem>>, vector<1x512xf32>
    %cst = arith.constant dense<0.000000e+00> : vector<64x512xf32>
    %9 = tpu.matmul %2, %3, %cst {dimension_numbers = #tpu.dot_dimension_numbers<[1], [0], [0], [1], [0, 0, 1, 1], [], []>} : vector<64x8xf32>, vector<8x512xf32>, vector<64x512xf32> -> vector<64x512xf32>
    %10 = vector.broadcast %4 : vector<1x512xf32> to vector<64x512xf32>
    %11 = arith.addf %9, %10 : vector<64x512xf32>
    %12 = vector.extract_strided_slice %11 {offsets = [0, 0], sizes = [32, 512], strides = [1, 1]} : vector<64x512xf32> to vector<32x512xf32>
    %cst_15 = arith.constant dense<0.000000e+00> : vector<512xf32>
    %13 = vector.multi_reduction <add>, %12, %cst_15 [0] : vector<32x512xf32> to vector<512xf32>
    %14 = vector.shape_cast %13 : vector<512xf32> to vector<1x512xf32>
    %cst_16 = arith.constant 3.200000e+01 : f32
    %15 = vector.broadcast %cst_16 : f32 to vector<1x512xf32>
    %16 = arith.divf %14, %15 : vector<1x512xf32>
    %17 = vector.broadcast %16 : vector<1x512xf32> to vector<32x512xf32>
    %18 = arith.subf %12, %17 : vector<32x512xf32>
    %19 = arith.mulf %18, %18 : vector<32x512xf32>
    %cst_17 = arith.constant dense<0.000000e+00> : vector<512xf32>
    %20 = vector.multi_reduction <add>, %19, %cst_17 [0] : vector<32x512xf32> to vector<512xf32>
    %21 = vector.shape_cast %20 : vector<512xf32> to vector<1x512xf32>
    %cst_18 = arith.constant 3.200000e+01 : f32
    %22 = vector.broadcast %cst_18 : f32 to vector<1x512xf32>
    %23 = arith.divf %21, %22 : vector<1x512xf32>
    %24 = vector.broadcast %16 : vector<1x512xf32> to vector<32x512xf32>
    %25 = arith.subf %12, %24 : vector<32x512xf32>
    %cst_19 = arith.constant 9.99999974E-6 : f32
    %26 = vector.broadcast %cst_19 : f32 to vector<1x512xf32>
    %27 = arith.addf %23, %26 : vector<1x512xf32>
    %28 = math.rsqrt %27 : vector<1x512xf32>
    %29 = vector.broadcast %28 : vector<1x512xf32> to vector<32x512xf32>
    %30 = arith.mulf %25, %29 : vector<32x512xf32>
    %31 = vector.extract_strided_slice %11 {offsets = [32, 0], sizes = [32, 512], strides = [1, 1]} : vector<64x512xf32> to vector<32x512xf32>
    %cst_20 = arith.constant dense<0.000000e+00> : vector<512xf32>
    %32 = vector.multi_reduction <add>, %31, %cst_20 [0] : vector<32x512xf32> to vector<512xf32>
    %33 = vector.shape_cast %32 : vector<512xf32> to vector<1x512xf32>
    %cst_21 = arith.constant 3.200000e+01 : f32
    %34 = vector.broadcast %cst_21 : f32 to vector<1x512xf32>
    %35 = arith.divf %33, %34 : vector<1x512xf32>
    %36 = vector.broadcast %35 : vector<1x512xf32> to vector<32x512xf32>
    %37 = arith.subf %31, %36 : vector<32x512xf32>
    %38 = arith.mulf %37, %37 : vector<32x512xf32>
    %cst_22 = arith.constant dense<0.000000e+00> : vector<512xf32>
    %39 = vector.multi_reduction <add>, %38, %cst_22 [0] : vector<32x512xf32> to vector<512xf32>
    %40 = vector.shape_cast %39 : vector<512xf32> to vector<1x512xf32>
    %cst_23 = arith.constant 3.200000e+01 : f32
    %41 = vector.broadcast %cst_23 : f32 to vector<1x512xf32>
    %42 = arith.divf %40, %41 : vector<1x512xf32>
    %43 = vector.broadcast %35 : vector<1x512xf32> to vector<32x512xf32>
    %44 = arith.subf %31, %43 : vector<32x512xf32>
    %cst_24 = arith.constant 9.99999974E-6 : f32
    %45 = vector.broadcast %cst_24 : f32 to vector<1x512xf32>
    %46 = arith.addf %42, %45 : vector<1x512xf32>
    %47 = math.rsqrt %46 : vector<1x512xf32>
    %48 = vector.broadcast %47 : vector<1x512xf32> to vector<32x512xf32>
    %49 = arith.mulf %44, %48 : vector<32x512xf32>
    %50 = tpu.concatenate %30, %49 in 0 : vector<32x512xf32>, vector<32x512xf32> -> vector<64x512xf32>
    %51 = vector.broadcast %5 : vector<1x512xf32> to vector<64x512xf32>
    %52 = arith.mulf %50, %51 : vector<64x512xf32>
    %53 = vector.broadcast %6 : vector<1x512xf32> to vector<64x512xf32>
    %54 = arith.addf %52, %53 : vector<64x512xf32>
    %cst_25 = arith.constant 0.000000e+00 : f32
    %55 = vector.broadcast %cst_25 : f32 to vector<64x512xf32>
    %56 = arith.maximumf %54, %55 : vector<64x512xf32>
    %57 = arith.truncf %56 : vector<64x512xf32> to vector<64x512xbf16>
    %cst_26 = arith.constant dense<0.000000e+00> : vector<64x512xf32>
    %58 = tpu.matmul %57, %7, %cst_26 {dimension_numbers = #tpu.dot_dimension_numbers<[1], [0], [0], [1], [0, 0, 1, 1], [], []>} : vector<64x512xbf16>, vector<512x512xbf16>, vector<64x512xf32> -> vector<64x512xf32>
    %59 = vector.broadcast %8 : vector<1x512xf32> to vector<64x512xf32>
    %60 = arith.addf %58, %59 : vector<64x512xf32>
    %c0_27 = arith.constant 0 : index
    %c0_28 = arith.constant 0 : index
    %61 = vector.load %arg14[%c0_27, %c0_28] : memref<64x512xf32, #tpu.memory_space<vmem>>, vector<64x512xf32>
    tpu.vector_store %arg14[%c0_27, %c0_28], %60 {strides = array<i32>} : memref<64x512xf32, #tpu.memory_space<vmem>>, vector<64x512xf32>,
    %c0_29 = arith.constant 0 : index
    %c0_30 = arith.constant 0 : index
    %62 = vector.load %arg8[%c0_29, %c0_30] : memref<8x512xf32, #tpu.memory_space<vmem>>, vector<8x512xf32>
    %c0_31 = arith.constant 0 : index
    %c0_32 = arith.constant 0 : index
    %63 = vector.load %arg9[%c0_31, %c0_32] : memref<1x512xf32, #tpu.memory_space<vmem>>, vector<1x512xf32>
    %c0_33 = arith.constant 0 : index
    %c0_34 = arith.constant 0 : index
    %64 = vector.load %arg10[%c0_33, %c0_34] : memref<1x512xf32, #tpu.memory_space<vmem>>, vector<1x512xf32>
    %c0_35 = arith.constant 0 : index
    %c0_36 = arith.constant 0 : index
    %65 = vector.load %arg11[%c0_35, %c0_36] : memref<1x512xf32, #tpu.memory_space<vmem>>, vector<1x512xf32>
    %c0_37 = arith.constant 0 : index
    %c0_38 = arith.constant 0 : index
    %66 = vector.load %arg12[%c0_37, %c0_38] : memref<512x512xbf16, #tpu.memory_space<vmem>>, vector<512x512xbf16>
    %c0_39 = arith.constant 0 : index
    %c0_40 = arith.constant 0 : index
    %67 = vector.load %arg13[%c0_39, %c0_40] : memref<1x512xf32, #tpu.memory_space<vmem>>, vector<1x512xf32>
    %cst_41 = arith.constant dense<0.000000e+00> : vector<64x512xf32>
    %68 = tpu.matmul %2, %62, %cst_41 {dimension_numbers = #tpu.dot_dimension_numbers<[1], [0], [0], [1], [0, 0, 1, 1], [], []>} : vector<64x8xf32>, vector<8x512xf32>, vector<64x512xf32> -> vector<64x512xf32>
    %69 = vector.broadcast %63 : vector<1x512xf32> to vector<64x512xf32>
    %70 = arith.addf %68, %69 : vector<64x512xf32>
    %71 = vector.extract_strided_slice %70 {offsets = [0, 0], sizes = [32, 512], strides = [1, 1]} : vector<64x512xf32> to vector<32x512xf32>
    %cst_42 = arith.constant dense<0.000000e+00> : vector<512xf32>
    %72 = vector.multi_reduction <add>, %71, %cst_42 [0] : vector<32x512xf32> to vector<512xf32>
    %73 = vector.shape_cast %72 : vector<512xf32> to vector<1x512xf32>
    %cst_43 = arith.constant 3.200000e+01 : f32
    %74 = vector.broadcast %cst_43 : f32 to vector<1x512xf32>
    %75 = arith.divf %73, %74 : vector<1x512xf32>
    %76 = vector.broadcast %75 : vector<1x512xf32> to vector<32x512xf32>
    %77 = arith.subf %71, %76 : vector<32x512xf32>
    %78 = arith.mulf %77, %77 : vector<32x512xf32>
    %cst_44 = arith.constant dense<0.000000e+00> : vector<512xf32>
    %79 = vector.multi_reduction <add>, %78, %cst_44 [0] : vector<32x512xf32> to vector<512xf32>
    %80 = vector.shape_cast %79 : vector<512xf32> to vector<1x512xf32>
    %cst_45 = arith.constant 3.200000e+01 : f32
    %81 = vector.broadcast %cst_45 : f32 to vector<1x512xf32>
    %82 = arith.divf %80, %81 : vector<1x512xf32>
    %83 = vector.broadcast %75 : vector<1x512xf32> to vector<32x512xf32>
    %84 = arith.subf %71, %83 : vector<32x512xf32>
    %cst_46 = arith.constant 9.99999974E-6 : f32
    %85 = vector.broadcast %cst_46 : f32 to vector<1x512xf32>
    %86 = arith.addf %82, %85 : vector<1x512xf32>
    %87 = math.rsqrt %86 : vector<1x512xf32>
    %88 = vector.broadcast %87 : vector<1x512xf32> to vector<32x512xf32>
    %89 = arith.mulf %84, %88 : vector<32x512xf32>
    %90 = vector.extract_strided_slice %70 {offsets = [32, 0], sizes = [32, 512], strides = [1, 1]} : vector<64x512xf32> to vector<32x512xf32>
    %cst_47 = arith.constant dense<0.000000e+00> : vector<512xf32>
    %91 = vector.multi_reduction <add>, %90, %cst_47 [0] : vector<32x512xf32> to vector<512xf32>
    %92 = vector.shape_cast %91 : vector<512xf32> to vector<1x512xf32>
    %cst_48 = arith.constant 3.200000e+01 : f32
    %93 = vector.broadcast %cst_48 : f32 to vector<1x512xf32>
    %94 = arith.divf %92, %93 : vector<1x512xf32>
    %95 = vector.broadcast %94 : vector<1x512xf32> to vector<32x512xf32>
    %96 = arith.subf %90, %95 : vector<32x512xf32>
    %97 = arith.mulf %96, %96 : vector<32x512xf32>
    %cst_49 = arith.constant dense<0.000000e+00> : vector<512xf32>
    %98 = vector.multi_reduction <add>, %97, %cst_49 [0] : vector<32x512xf32> to vector<512xf32>
    %99 = vector.shape_cast %98 : vector<512xf32> to vector<1x512xf32>
    %cst_50 = arith.constant 3.200000e+01 : f32
    %100 = vector.broadcast %cst_50 : f32 to vector<1x512xf32>
    %101 = arith.divf %99, %100 : vector<1x512xf32>
    %102 = vector.broadcast %94 : vector<1x512xf32> to vector<32x512xf32>
    %103 = arith.subf %90, %102 : vector<32x512xf32>
    %cst_51 = arith.constant 9.99999974E-6 : f32
    %104 = vector.broadcast %cst_51 : f32 to vector<1x512xf32>
    %105 = arith.addf %101, %104 : vector<1x512xf32>
    %106 = math.rsqrt %105 : vector<1x512xf32>
    %107 = vector.broadcast %106 : vector<1x512xf32> to vector<32x512xf32>
    %108 = arith.mulf %103, %107 : vector<32x512xf32>
    %109 = tpu.concatenate %89, %108 in 0 : vector<32x512xf32>, vector<32x512xf32> -> vector<64x512xf32>
    %110 = vector.broadcast %64 : vector<1x512xf32> to vector<64x512xf32>
    %111 = arith.mulf %109, %110 : vector<64x512xf32>
    %112 = vector.broadcast %65 : vector<1x512xf32> to vector<64x512xf32>
    %113 = arith.addf %111, %112 : vector<64x512xf32>
    %cst_52 = arith.constant 0.000000e+00 : f32
    %114 = vector.broadcast %cst_52 : f32 to vector<64x512xf32>
    %115 = arith.maximumf %113, %114 : vector<64x512xf32>
    %116 = arith.truncf %115 : vector<64x512xf32> to vector<64x512xbf16>
    %cst_53 = arith.constant dense<0.000000e+00> : vector<64x512xf32>
    %117 = tpu.matmul %116, %66, %cst_53 {dimension_numbers = #tpu.dot_dimension_numbers<[1], [0], [0], [1], [0, 0, 1, 1], [], []>} : vector<64x512xbf16>, vector<512x512xbf16>, vector<64x512xf32> -> vector<64x512xf32>
    %118 = vector.broadcast %67 : vector<1x512xf32> to vector<64x512xf32>
    %119 = arith.addf %117, %118 : vector<64x512xf32>
    %c0_54 = arith.constant 0 : index
    %c0_55 = arith.constant 0 : index
    %120 = vector.load %arg15[%c0_54, %c0_55] : memref<64x512xf32, #tpu.memory_space<vmem>>, vector<64x512xf32>
    tpu.vector_store %arg15[%c0_54, %c0_55], %119 {strides = array<i32>} : memref<64x512xf32, #tpu.memory_space<vmem>>, vector<64x512xf32>,
    return
  }
}

module attributes {stable_mosaic.version = 11 : i64} {
  func.func @_mha_infonce_kernel(%arg0: memref<64x512xf32, #tpu.memory_space<vmem>>, %arg1: memref<512x512xbf16, #tpu.memory_space<vmem>>, %arg2: memref<1x512xf32, #tpu.memory_space<vmem>>, %arg3: memref<512x512xbf16, #tpu.memory_space<vmem>>, %arg4: memref<1x512xf32, #tpu.memory_space<vmem>>, %arg5: memref<1x1xf32, #tpu.memory_space<vmem>>) attributes {dimension_semantics = [], scalar_prefetch = 0 : i64, scratch_operands = 0 : i64, tpu.core_type = #tpu.core_type<tc>} {
    %c0 = arith.constant 0 : index
    %c0_0 = arith.constant 0 : index
    %0 = vector.load %arg0[%c0, %c0_0] : memref<64x512xf32, #tpu.memory_space<vmem>>, vector<64x512xf32>
    %1 = arith.truncf %0 : vector<64x512xf32> to vector<64x512xbf16>
    %c0_1 = arith.constant 0 : index
    %c0_2 = arith.constant 0 : index
    %2 = vector.load %arg1[%c0_1, %c0_2] : memref<512x512xbf16, #tpu.memory_space<vmem>>, vector<512x512xbf16>
    %cst = arith.constant dense<0.000000e+00> : vector<64x512xf32>
    %3 = tpu.matmul %1, %2, %cst {dimension_numbers = #tpu.dot_dimension_numbers<[1], [0], [0], [1], [0, 0, 1, 1], [], []>} : vector<64x512xbf16>, vector<512x512xbf16>, vector<64x512xf32> -> vector<64x512xf32>
    %c0_3 = arith.constant 0 : index
    %c0_4 = arith.constant 0 : index
    %4 = vector.load %arg2[%c0_3, %c0_4] : memref<1x512xf32, #tpu.memory_space<vmem>>, vector<1x512xf32>
    %5 = vector.broadcast %4 : vector<1x512xf32> to vector<64x512xf32>
    %6 = arith.addf %3, %5 : vector<64x512xf32>
    %7 = arith.truncf %6 : vector<64x512xf32> to vector<64x512xbf16>
    %c0_5 = arith.constant 0 : index
    %c0_6 = arith.constant 0 : index
    %8 = vector.load %arg3[%c0_5, %c0_6] : memref<512x512xbf16, #tpu.memory_space<vmem>>, vector<512x512xbf16>
    %cst_7 = arith.constant dense<0.000000e+00> : vector<64x512xf32>
    %9 = tpu.matmul %7, %8, %cst_7 {dimension_numbers = #tpu.dot_dimension_numbers<[1], [0], [0], [1], [0, 0, 1, 1], [], []>} : vector<64x512xbf16>, vector<512x512xbf16>, vector<64x512xf32> -> vector<64x512xf32>
    %c0_8 = arith.constant 0 : index
    %c0_9 = arith.constant 0 : index
    %10 = vector.load %arg4[%c0_8, %c0_9] : memref<1x512xf32, #tpu.memory_space<vmem>>, vector<1x512xf32>
    %11 = vector.broadcast %10 : vector<1x512xf32> to vector<64x512xf32>
    %12 = arith.addf %9, %11 : vector<64x512xf32>
    %13 = vector.extract_strided_slice %0 {offsets = [0, 0], sizes = [32, 512], strides = [1, 1]} : vector<64x512xf32> to vector<32x512xf32>
    %14 = vector.extract_strided_slice %0 {offsets = [32, 0], sizes = [32, 512], strides = [1, 1]} : vector<64x512xf32> to vector<32x512xf32>
    %15 = vector.extract_strided_slice %12 {offsets = [0, 0], sizes = [32, 512], strides = [1, 1]} : vector<64x512xf32> to vector<32x512xf32>
    %16 = vector.extract_strided_slice %12 {offsets = [32, 0], sizes = [32, 512], strides = [1, 1]} : vector<64x512xf32> to vector<32x512xf32>
    %17 = arith.mulf %16, %16 : vector<32x512xf32>
    %cst_10 = arith.constant dense<0.000000e+00> : vector<32xf32>
    %18 = vector.multi_reduction <add>, %17, %cst_10 [1] : vector<32x512xf32> to vector<32xf32>
    %19 = vector.shape_cast %18 : vector<32xf32> to vector<32x1xf32>
    %20 = math.sqrt %19 : vector<32x1xf32>
    %cst_11 = arith.constant 9.99999996E-13 : f32
    %21 = vector.broadcast %cst_11 : f32 to vector<32x1xf32>
    %22 = arith.maximumf %20, %21 : vector<32x1xf32>
    %23 = vector.broadcast %22 : vector<32x1xf32> to vector<32x512xf32>
    %24 = arith.divf %16, %23 : vector<32x512xf32>
    %25 = arith.mulf %14, %14 : vector<32x512xf32>
    %cst_12 = arith.constant dense<0.000000e+00> : vector<32xf32>
    %26 = vector.multi_reduction <add>, %25, %cst_12 [1] : vector<32x512xf32> to vector<32xf32>
    %27 = vector.shape_cast %26 : vector<32xf32> to vector<32x1xf32>
    %28 = math.sqrt %27 : vector<32x1xf32>
    %cst_13 = arith.constant 9.99999996E-13 : f32
    %29 = vector.broadcast %cst_13 : f32 to vector<32x1xf32>
    %30 = arith.maximumf %28, %29 : vector<32x1xf32>
    %31 = vector.broadcast %30 : vector<32x1xf32> to vector<32x512xf32>
    %32 = arith.divf %14, %31 : vector<32x512xf32>
    %cst_14 = arith.constant dense<0.000000e+00> : vector<32x32xf32>
    %33 = tpu.matmul %24, %32, %cst_14 {dimension_numbers = #tpu.dot_dimension_numbers<[1], [1], [0], [0], [0, 0, 1, 0], [], []>} : vector<32x512xf32>, vector<32x512xf32>, vector<32x32xf32> -> vector<32x32xf32>
    %cst_15 = arith.constant 7.000000e-02 : f32
    %34 = vector.broadcast %cst_15 : f32 to vector<32x32xf32>
    %35 = arith.divf %33, %34 : vector<32x32xf32>
    %cst_16 = arith.constant dense<0xFF800000> : vector<32xf32>
    %36 = vector.multi_reduction <maximumf>, %35, %cst_16 [1] : vector<32x32xf32> to vector<32xf32>
    %37 = vector.shape_cast %36 : vector<32xf32> to vector<32x1xf32>
    %38 = vector.broadcast %37 : vector<32x1xf32> to vector<32x32xf32>
    %39 = arith.subf %35, %38 : vector<32x32xf32>
    %40 = math.exp %39 : vector<32x32xf32>
    %cst_17 = arith.constant dense<0.000000e+00> : vector<32xf32>
    %41 = vector.multi_reduction <add>, %40, %cst_17 [1] : vector<32x32xf32> to vector<32xf32>
    %42 = vector.shape_cast %41 : vector<32xf32> to vector<32x1xf32>
    %43 = math.log %42 : vector<32x1xf32>
    %44 = arith.addf %43, %37 : vector<32x1xf32>
    %45 = tpu.iota {dimensions = array<i32: 0>} : vector<32x32xi32>
    %46 = tpu.iota {dimensions = array<i32: 1>} : vector<32x32xi32>
    %47 = arith.cmpi eq, %45, %46 : vector<32x32xi32>
    %cst_18 = arith.constant 0.000000e+00 : f32
    %48 = vector.broadcast %cst_18 : f32 to vector<32x32xf32>
    %49 = arith.select %47, %35, %48 : vector<32x32xi1>, vector<32x32xf32>
    %cst_19 = arith.constant dense<0.000000e+00> : vector<32xf32>
    %50 = vector.multi_reduction <add>, %49, %cst_19 [1] : vector<32x32xf32> to vector<32xf32>
    %51 = vector.shape_cast %50 : vector<32xf32> to vector<32x1xf32>
    %52 = arith.subf %44, %51 : vector<32x1xf32>
    %cst_20 = arith.constant dense<0.000000e+00> : vector<1xf32>
    %53 = vector.multi_reduction <add>, %52, %cst_20 [0] : vector<32x1xf32> to vector<1xf32>
    %54 = vector.shape_cast %53 : vector<1xf32> to vector<1x1xf32>
    %cst_21 = arith.constant 3.200000e+01 : f32
    %55 = vector.broadcast %cst_21 : f32 to vector<1x1xf32>
    %56 = arith.divf %54, %55 : vector<1x1xf32>
    %57 = arith.mulf %15, %15 : vector<32x512xf32>
    %cst_22 = arith.constant dense<0.000000e+00> : vector<32xf32>
    %58 = vector.multi_reduction <add>, %57, %cst_22 [1] : vector<32x512xf32> to vector<32xf32>
    %59 = vector.shape_cast %58 : vector<32xf32> to vector<32x1xf32>
    %60 = math.sqrt %59 : vector<32x1xf32>
    %cst_23 = arith.constant 9.99999996E-13 : f32
    %61 = vector.broadcast %cst_23 : f32 to vector<32x1xf32>
    %62 = arith.maximumf %60, %61 : vector<32x1xf32>
    %63 = vector.broadcast %62 : vector<32x1xf32> to vector<32x512xf32>
    %64 = arith.divf %15, %63 : vector<32x512xf32>
    %65 = arith.mulf %13, %13 : vector<32x512xf32>
    %cst_24 = arith.constant dense<0.000000e+00> : vector<32xf32>
    %66 = vector.multi_reduction <add>, %65, %cst_24 [1] : vector<32x512xf32> to vector<32xf32>
    %67 = vector.shape_cast %66 : vector<32xf32> to vector<32x1xf32>
    %68 = math.sqrt %67 : vector<32x1xf32>
    %cst_25 = arith.constant 9.99999996E-13 : f32
    %69 = vector.broadcast %cst_25 : f32 to vector<32x1xf32>
    %70 = arith.maximumf %68, %69 : vector<32x1xf32>
    %71 = vector.broadcast %70 : vector<32x1xf32> to vector<32x512xf32>
    %72 = arith.divf %13, %71 : vector<32x512xf32>
    %cst_26 = arith.constant dense<0.000000e+00> : vector<32x32xf32>
    %73 = tpu.matmul %64, %72, %cst_26 {dimension_numbers = #tpu.dot_dimension_numbers<[1], [1], [0], [0], [0, 0, 1, 0], [], []>} : vector<32x512xf32>, vector<32x512xf32>, vector<32x32xf32> -> vector<32x32xf32>
    %cst_27 = arith.constant 7.000000e-02 : f32
    %74 = vector.broadcast %cst_27 : f32 to vector<32x32xf32>
    %75 = arith.divf %73, %74 : vector<32x32xf32>
    %cst_28 = arith.constant dense<0xFF800000> : vector<32xf32>
    %76 = vector.multi_reduction <maximumf>, %75, %cst_28 [1] : vector<32x32xf32> to vector<32xf32>
    %77 = vector.shape_cast %76 : vector<32xf32> to vector<32x1xf32>
    %78 = vector.broadcast %77 : vector<32x1xf32> to vector<32x32xf32>
    %79 = arith.subf %75, %78 : vector<32x32xf32>
    %80 = math.exp %79 : vector<32x32xf32>
    %cst_29 = arith.constant dense<0.000000e+00> : vector<32xf32>
    %81 = vector.multi_reduction <add>, %80, %cst_29 [1] : vector<32x32xf32> to vector<32xf32>
    %82 = vector.shape_cast %81 : vector<32xf32> to vector<32x1xf32>
    %83 = math.log %82 : vector<32x1xf32>
    %84 = arith.addf %83, %77 : vector<32x1xf32>
    %85 = tpu.iota {dimensions = array<i32: 0>} : vector<32x32xi32>
    %86 = tpu.iota {dimensions = array<i32: 1>} : vector<32x32xi32>
    %87 = arith.cmpi eq, %85, %86 : vector<32x32xi32>
    %cst_30 = arith.constant 0.000000e+00 : f32
    %88 = vector.broadcast %cst_30 : f32 to vector<32x32xf32>
    %89 = arith.select %87, %75, %88 : vector<32x32xi1>, vector<32x32xf32>
    %cst_31 = arith.constant dense<0.000000e+00> : vector<32xf32>
    %90 = vector.multi_reduction <add>, %89, %cst_31 [1] : vector<32x32xf32> to vector<32xf32>
    %91 = vector.shape_cast %90 : vector<32xf32> to vector<32x1xf32>
    %92 = arith.subf %84, %91 : vector<32x1xf32>
    %cst_32 = arith.constant dense<0.000000e+00> : vector<1xf32>
    %93 = vector.multi_reduction <add>, %92, %cst_32 [0] : vector<32x1xf32> to vector<1xf32>
    %94 = vector.shape_cast %93 : vector<1xf32> to vector<1x1xf32>
    %cst_33 = arith.constant 3.200000e+01 : f32
    %95 = vector.broadcast %cst_33 : f32 to vector<1x1xf32>
    %96 = arith.divf %94, %95 : vector<1x1xf32>
    %97 = arith.addf %56, %96 : vector<1x1xf32>
    %c0_34 = arith.constant 0 : index
    %c0_35 = arith.constant 0 : index
    %98 = vector.load %arg5[%c0_34, %c0_35] : memref<1x1xf32, #tpu.memory_space<vmem>>, vector<1x1xf32>
    tpu.vector_store %arg5[%c0_34, %c0_35], %97 {strides = array<i32>} : memref<1x1xf32, #tpu.memory_space<vmem>>, vector<1x1xf32>,
    return
  }
}

</mosaic_0001>

<llo_original>
// kernel: _moca_forward.5
$region0: #{_moca_forward.5}
  #allocation0 [shape = 'u32[]', space=smem, size = 0x4, offset = 0x4, fixed_abs, tag = 'smem constant byte address 0x4 - core index']
  #allocation1 [shape = 'u32[144,128]{1,0:T(1,128)}', space=vmem, size = 0x12000, scoped, tag = 'internal scratch']
  %s0 = inlined_call_operand.vmem [shape: f32[32,16], index: 0, kind: input, shape index: {}]
  %s1 = inlined_call_operand.vmem [shape: f32[32,32], index: 1, kind: input, shape index: {}]
  %s2 = inlined_call_operand.vmem [shape: f32[16,32], index: 2, kind: input, shape index: {}]
  %s3 = inlined_call_operand.vmem [shape: f32[1,32], index: 3, kind: input, shape index: {}]
  %s4 = inlined_call_operand.vmem [shape: f32[1,32], index: 4, kind: input, shape index: {}]
  %s5 = inlined_call_operand.vmem [shape: f32[32,8], index: 5, kind: input, shape index: {}]
  %s6 = inlined_call_operand.vmem [shape: f32[8,8], index: 6, kind: input, shape index: {}]
  %s7 = inlined_call_operand.vmem [shape: f32[32,8], index: 7, kind: output, shape index: {}]
  %s8 = sld [smem:[#allocation0]]
  $region38: #{_moca_forward.5} parent=0
    _
  %s10 = ssub.s32 1, %s8
  %s11 = scalar_select 0, %s10, %s8
  // Predicated region
  $region2: #{_moca_forward.5} parent=0 // pred_check
    _
  $region3: #{_moca_forward.5} parent=0 // pred_check_branch
    %13 = sbr.rel (0) target = $region5
  $region4: #{_moca_forward.5} parent=0 // pred_region
    _
  $region5: #{_moca_forward.5} parent=0 // pred_fallthru
    _
  // Predicated region
  $region6: #{_moca_forward.5} parent=0 // pred_check
    _
  $region7: #{_moca_forward.5} parent=0 // pred_check_branch
    %15 = sbr.rel (0) target = $region9
  $region8: #{_moca_forward.5} parent=0 // pred_region
    _
  $region9: #{_moca_forward.5} parent=0 // pred_fallthru
    _
  // Predicated region
  $region10: #{_moca_forward.5} parent=0 // pred_check
    _
  $region11: #{_moca_forward.5} parent=0 // pred_check_branch
    %17 = sbr.rel (0) target = $region13
  $region12: #{_moca_forward.5} parent=0 // pred_region
    _
  $region13: #{_moca_forward.5} parent=0 // pred_fallthru
    _
  // Predicated region
  $region14: #{_moca_forward.5} parent=0 // pred_check
    _
  $region15: #{_moca_forward.5} parent=0 // pred_check_branch
    %19 = sbr.rel (0) target = $region17
  $region16: #{_moca_forward.5} parent=0 // pred_region
    _
  $region17: #{_moca_forward.5} parent=0 // pred_fallthru
    _
  // Predicated region
  $region18: #{_moca_forward.5} parent=0 // pred_check
    _
  $region19: #{_moca_forward.5} parent=0 // pred_check_branch
    %21 = sbr.rel (0) target = $region21
  $region20: #{_moca_forward.5} parent=0 // pred_region
    _
  $region21: #{_moca_forward.5} parent=0 // pred_fallthru
    _
  // Predicated region
  $region22: #{_moca_forward.5} parent=0 // pred_check
    _
  $region23: #{_moca_forward.5} parent=0 // pred_check_branch
    %23 = sbr.rel (0) target = $region25
  $region24: #{_moca_forward.5} parent=0 // pred_region
    _
  $region25: #{_moca_forward.5} parent=0 // pred_fallthru
    _
  // Predicated region
  $region26: #{_moca_forward.5} parent=0 // pred_check
    _
  $region27: #{_moca_forward.5} parent=0 // pred_check_branch
    %25 = sbr.rel (0) target = $region29
  $region28: #{_moca_forward.5} parent=0 // pred_region
    _
  $region29: #{_moca_forward.5} parent=0 // pred_fallthru
    _
  %v26 = vld [vmem:[%s0] sm:$0xff]
  %v27 = vld [vmem:[%s0 + $0x8] sm:$0xff]
  %v28 = vld [vmem:[%s0 + $0x10] sm:$0xff]
  %v29 = vld [vmem:[%s0 + $0x18] sm:$0xff]
  %v30 = vld [vmem:[%s1] sm:$0xff]
  %v31 = vld [vmem:[%s1 + $0x8] sm:$0xff]
  %v32 = vld [vmem:[%s1 + $0x10] sm:$0xff]
  %v33 = vld [vmem:[%s1 + $0x18] sm:$0xff]
  %v34 = vld [vmem:[%s2] sm:$0xff]
  %v35 = vld [vmem:[%s2 + $0x8] sm:$0xff]
  %v36 = vld [vmem:[%s3] sm:$0x1]
  %v37 = vld [vmem:[%s4] sm:$0x1]
  %vm38 = vcmask 130048
  %v40 = vsel %vm38, %v26, 0
  %v43 = vsel %vm38, %v27, 0
  %v46 = vsel %vm38, %v28, 0
  %v49 = vsel %vm38, %v29, 0
  %51 = vmatprep.subr.mxu0 0.0
  %52 = vmatpush1.msra.mxu0 %v34
  %53 = vmatprep.subr.mxu0 0.0
  %54 = vmatpush1.msra.mxu0 %v35
  %55 = vmatprep.subr.mxu0 0.0
  %56 = vmatpush1.msra.mxu0 0.0
  %57 = vmatprep.subr.mxu0 0.0
  %58 = vmatpush1.msra.mxu0 0.0
  %59 = vmatprep.subr.mxu0 0.0
  %60 = vmatpush1.msra.mxu0 0.0
  %61 = vmatprep.subr.mxu0 0.0
  %62 = vmatpush1.msra.mxu0 0.0
  %63 = vmatprep.subr.mxu0 0.0
  %64 = vmatpush1.msra.mxu0 0.0
  %65 = vmatprep.subr.mxu0 0.0
  %66 = vmatpush1.msra.mxu0 0.0
  %67 = vmatprep.subr.mxu0 0.0
  %68 = vmatpush1.msra.mxu0 0.0
  %69 = vmatprep.subr.mxu0 0.0
  %70 = vmatpush1.msra.mxu0 0.0
  %71 = vmatprep.subr.mxu0 0.0
  %72 = vmatpush1.msra.mxu0 0.0
  %73 = vmatprep.subr.mxu0 0.0
  %74 = vmatpush1.msra.mxu0 0.0
  %75 = vmatprep.subr.mxu0 0.0
  %76 = vmatpush1.msra.mxu0 0.0
  %77 = vmatprep.subr.mxu0 0.0
  %78 = vmatpush1.msra.mxu0 0.0
  %79 = vmatprep.subr.mxu0 0.0
  %80 = vmatpush1.msra.mxu0 0.0
  %81 = vmatprep.subr.mxu0 0.0
  %82 = vmatpush1.msra.mxu0 0.0
  %83 = vmatprep.subr.mxu0 0.0
  %84 = vmatpush1.msra.mxu0 0.0
  %85 = vmatprep.subr.mxu0 0.0
  %86 = vmatpush1.msra.mxu0 0.0
  %87 = vmatprep.subr.mxu0 0.0
  %88 = vmatpush1.msra.mxu0 0.0
  %89 = vmatprep.subr.mxu0 0.0
  %90 = vmatpush1.msra.mxu0 0.0
  %91 = vmatprep.subr.mxu0 0.0
  %92 = vmatpush1.msra.mxu0 0.0
  %93 = vmatprep.subr.mxu0 0.0
  %94 = vmatpush1.msra.mxu0 0.0
  %95 = vmatprep.subr.mxu0 0.0
  %96 = vmatpush1.msra.mxu0 0.0
  %97 = vmatprep.subr.mxu0 0.0
  %98 = vmatpush1.msra.mxu0 0.0
  %99 = vmatprep.subr.mxu0 0.0
  %100 = vmatpush1.msra.mxu0 0.0
  %101 = vmatprep.subr.mxu0 0.0
  %102 = vmatpush1.msra.mxu0 0.0
  %103 = vmatprep.subr.mxu0 0.0
  %104 = vmatpush1.msra.mxu0 0.0
  %105 = vmatprep.subr.mxu0 0.0
  %106 = vmatpush1.msra.mxu0 0.0
  %107 = vmatprep.subr.mxu0 0.0
  %108 = vmatpush1.msra.mxu0 0.0
  %109 = vmatprep.subr.mxu0 0.0
  %110 = vmatpush1.msra.mxu0 0.0
  %111 = vmatprep.subr.mxu0 0.0
  %112 = vmatpush1.msra.mxu0 0.0
  %113 = vmatprep.subr.mxu0 0.0
  %114 = vmatpush1.msra.mxu0 0.0
  %115 = vmatprep.mubr.f32.mxu0 0.0
  %116 = vmatmul.mubr.f32.gmra.mrb[0].mxu0 %v40
  %v117 = vpop.f32.mrb[0].mxu0
  %v118 = vadd.f32 0.0, %v117
  %v119 = vpop.f32.mrb[0].mxu0
  %120 = vmatprep.mubr.f32.mxu0 0.0
  %121 = vmatmul.mubr.f32.gmra.mrb[0].mxu0 %v43
  %v122 = vpop.f32.mrb[0].mxu0
  %v123 = vadd.f32 0.0, %v122
  %v124 = vpop.f32.mrb[0].mxu0
  %125 = vmatprep.mubr.f32.mxu0 0.0
  %126 = vmatmul.mubr.f32.gmra.mrb[0].mxu0 %v46
  %v127 = vpop.f32.mrb[0].mxu0
  %v128 = vadd.f32 0.0, %v127
  %v129 = vpop.f32.mrb[0].mxu0
  %130 = vmatprep.mubr.f32.mxu0 0.0
  %131 = vmatmul.mubr.f32.gmra.mrb[0].mxu0 %v49
  %v132 = vpop.f32.mrb[0].mxu0
  %v133 = vadd.f32 0.0, %v132
  %v134 = vpop.f32.mrb[0].mxu0
  %135 = vdwg.mxu0
  %v137 = vlaneseq
  %v138 = vshrl.u32 %v137, 7
  %v139 = vsub.s32 0, %v138
  %v140 = vrot.slane %v37, %v139
  %v142 = vmul.f32 %v118, %v140
  %v143 = vmul.f32 %v123, %v140
  %v144 = vmul.f32 %v128, %v140
  %v145 = vmul.f32 %v133, %v140
  %vm146 = vcmask 261120
  %v147 = vsel %vm146, %v142, 0.0
  %148 = vadd.xlane.f32.xlu0 %v147
  %v149 = vpop.xlane.xlu0 %148
  %v150 = vsel %vm146, %v143, 0.0
  %151 = vadd.xlane.f32.xlu0 %v150
  %v152 = vpop.xlane.xlu0 %151
  %v153 = vsel %vm146, %v144, 0.0
  %154 = vadd.xlane.f32.xlu0 %v153
  %v155 = vpop.xlane.xlu0 %154
  %v156 = vsel %vm146, %v145, 0.0
  %157 = vadd.xlane.f32.xlu0 %v156
  %v158 = vpop.xlane.xlu0 %157
  %v160 = vsel %vm146, %v36, 0
  %v163 = vsel %vm146, %v118, 0
  %v166 = vsel %vm146, %v123, 0
  %v169 = vsel %vm146, %v128, 0
  %v172 = vsel %vm146, %v133, 0
  %174 = vmatprep.subr.mxu0 0.0
  %175 = vmatpush1.xpose.msra.mxu0 %v163
  %176 = vmatprep.subr.mxu0 0.0
  %177 = vmatpush1.xpose.msra.mxu0 %v166
  %178 = vmatprep.subr.mxu0 0.0
  %179 = vmatpush1.xpose.msra.mxu0 %v169
  %180 = vmatprep.subr.mxu0 0.0
  %181 = vmatpush1.xpose.msra.mxu0 %v172
  %182 = vmatprep.subr.mxu0 0.0
  %183 = vmatpush1.xpose.msra.mxu0 0.0
  %184 = vmatprep.subr.mxu0 0.0
  %185 = vmatpush1.xpose.msra.mxu0 0.0
  %186 = vmatprep.subr.mxu0 0.0
  %187 = vmatpush1.xpose.msra.mxu0 0.0
  %188 = vmatprep.subr.mxu0 0.0
  %189 = vmatpush1.xpose.msra.mxu0 0.0
  %190 = vmatprep.subr.mxu0 0.0
  %191 = vmatpush1.xpose.msra.mxu0 0.0
  %192 = vmatprep.subr.mxu0 0.0
  %193 = vmatpush1.xpose.msra.mxu0 0.0
  %194 = vmatprep.subr.mxu0 0.0
  %195 = vmatpush1.xpose.msra.mxu0 0.0
  %196 = vmatprep.subr.mxu0 0.0
  %197 = vmatpush1.xpose.msra.mxu0 0.0
  %198 = vmatprep.subr.mxu0 0.0
  %199 = vmatpush1.xpose.msra.mxu0 0.0
  %200 = vmatprep.subr.mxu0 0.0
  %201 = vmatpush1.xpose.msra.mxu0 0.0
  %202 = vmatprep.subr.mxu0 0.0
  %203 = vmatpush1.xpose.msra.mxu0 0.0
  %204 = vmatprep.subr.mxu0 0.0
  %205 = vmatpush1.xpose.msra.mxu0 0.0
  %206 = vmatprep.subr.mxu0 0.0
  %207 = vmatpush1.xpose.msra.mxu0 0.0
  %208 = vmatprep.subr.mxu0 0.0
  %209 = vmatpush1.xpose.msra.mxu0 0.0
  %210 = vmatprep.subr.mxu0 0.0
  %211 = vmatpush1.xpose.msra.mxu0 0.0
  %212 = vmatprep.subr.mxu0 0.0
  %213 = vmatpush1.xpose.msra.mxu0 0.0
  %214 = vmatprep.subr.mxu0 0.0
  %215 = vmatpush1.xpose.msra.mxu0 0.0
  %216 = vmatprep.subr.mxu0 0.0
  %217 = vmatpush1.xpose.msra.mxu0 0.0
  %218 = vmatprep.subr.mxu0 0.0
  %219 = vmatpush1.xpose.msra.mxu0 0.0
  %220 = vmatprep.subr.mxu0 0.0
  %221 = vmatpush1.xpose.msra.mxu0 0.0
  %222 = vmatprep.subr.mxu0 0.0
  %223 = vmatpush1.xpose.msra.mxu0 0.0
  %224 = vmatprep.subr.mxu0 0.0
  %225 = vmatpush1.xpose.msra.mxu0 0.0
  %226 = vmatprep.subr.mxu0 0.0
  %227 = vmatpush1.xpose.msra.mxu0 0.0
  %228 = vmatprep.subr.mxu0 0.0
  %229 = vmatpush1.xpose.msra.mxu0 0.0
  %230 = vmatprep.subr.mxu0 0.0
  %231 = vmatpush1.xpose.msra.mxu0 0.0
  %232 = vmatprep.subr.mxu0 0.0
  %233 = vmatpush1.xpose.msra.mxu0 0.0
  %234 = vmatprep.subr.mxu0 0.0
  %235 = vmatpush1.xpose.msra.mxu0 0.0
  %236 = vmatprep.subr.mxu0 0.0
  %237 = vmatpush1.xpose.msra.mxu0 0.0
  %238 = vmatprep.mubr.f32.mxu0 0.0
  %239 = vmatmul.mubr.f32.gmra.mrb[0].mxu0 %v160
  %v240 = vpop.f32.mrb[0].mxu0
  %v241 = vadd.f32 0.0, %v240
  %v242 = vpop.f32.mrb[0].mxu0
  %243 = vdwg.mxu0
  %v244 = vlaneseq
  %v245 = vshrl.u32 %v244, 7
  %v246 = vsub.s32 0, %v245
  %v247 = vrot.slane %v241, %v246
  %v248 = vadd.f32 %v149, %v247
  %v249 = vadd.f32 %v152, %v247
  %v250 = vadd.f32 %v155, %v247
  %v251 = vadd.f32 %v158, %v247
  %v252 = vxor.u32 %v248, 2147483648
  %v253 = vxor.u32 %v249, 2147483648
  %v254 = vxor.u32 %v250, 2147483648
  %v255 = vxor.u32 %v251, 2147483648
  %v256 = vmul.f32 %v252, 1.442695
  %v257 = vpow.pop %v256
  %v258 = vmul.f32 %v253, 1.442695
  %v259 = vpow.pop %v258
  %v260 = vmul.f32 %v254, 1.442695
  %v261 = vpow.pop %v260
  %v262 = vmul.f32 %v255, 1.442695
  %v263 = vpow.pop %v262
  %v264 = vadd.f32 %v257, 1.0
  %v265 = vadd.f32 %v259, 1.0
  %v266 = vadd.f32 %v261, 1.0
  %v267 = vadd.f32 %v263, 1.0
  %v268 = vrcp.pop %v264
  %v269 = vmul.f32 1.0, %v268
  %v270 = vrcp.pop %v265
  %v271 = vmul.f32 1.0, %v270
  %v272 = vrcp.pop %v266
  %v273 = vmul.f32 1.0, %v272
  %v274 = vrcp.pop %v267
  %v275 = vmul.f32 1.0, %v274
  %vm276 = vcmp.gt.f32.partialorder %v30, 0.0
  %vm277 = vcmp.gt.f32.partialorder %v31, 0.0
  %vm278 = vcmp.gt.f32.partialorder %v32, 0.0
  %vm279 = vcmp.gt.f32.partialorder %v33, 0.0
  %v280 = vsel %vm276, %v269, -1e+30
  %v281 = vsel %vm277, %v271, -1e+30
  %v282 = vsel %vm278, %v273, -1e+30
  %v283 = vsel %vm279, %v275, -1e+30
  %v284 = vsel %vm146, %v280, -inf
  %285 = vmax.xlane.f32.xlu0 %v284
  %v286 = vpop.xlane.xlu0 %285
  %v287 = vsel %vm146, %v281, -inf
  %288 = vmax.xlane.f32.xlu0 %v287
  %v289 = vpop.xlane.xlu0 %288
  %v290 = vsel %vm146, %v282, -inf
  %291 = vmax.xlane.f32.xlu0 %v290
  %v292 = vpop.xlane.xlu0 %291
  %v293 = vsel %vm146, %v283, -inf
  %294 = vmax.xlane.f32.xlu0 %v293
  %v295 = vpop.xlane.xlu0 %294
  %v296 = vsub.f32 %v280, %v286
  %v297 = vsub.f32 %v281, %v289
  %v298 = vsub.f32 %v282, %v292
  %v299 = vsub.f32 %v283, %v295
  %v300 = vmul.f32 %v296, 1.442695
  %v301 = vpow.pop %v300
  %v302 = vmul.f32 %v297, 1.442695
  %v303 = vpow.pop %v302
  %v304 = vmul.f32 %v298, 1.442695
  %v305 = vpow.pop %v304
  %v306 = vmul.f32 %v299, 1.442695
  %v307 = vpow.pop %v306
  %v308 = vsel %vm146, %v301, 0.0
  %309 = vadd.xlane.f32.xlu0 %v308
  %v310 = vpop.xlane.xlu0 %309
  %v311 = vsel %vm146, %v303, 0.0
  %312 = vadd.xlane.f32.xlu0 %v311
  %v313 = vpop.xlane.xlu0 %312
  %v314 = vsel %vm146, %v305, 0.0
  %315 = vadd.xlane.f32.xlu0 %v314
  %v316 = vpop.xlane.xlu0 %315
  %v317 = vsel %vm146, %v307, 0.0
  %318 = vadd.xlane.f32.xlu0 %v317
  %v319 = vpop.xlane.xlu0 %318
  %v320 = vmax.f32 %v310, 1e-30
  %v321 = vmax.f32 %v313, 1e-30
  %v322 = vmax.f32 %v316, 1e-30
  %v323 = vmax.f32 %v319, 1e-30
  %v324 = vrcp.pop %v320
  %v325 = vmul.f32 %v301, %v324
  %v326 = vrcp.pop %v321
  %v327 = vmul.f32 %v303, %v326
  %v328 = vrcp.pop %v322
  %v329 = vmul.f32 %v305, %v328
  %v330 = vrcp.pop %v323
  %v331 = vmul.f32 %v307, %v330
  %v333 = vsel %vm146, %v325, 0
  %v336 = vsel %vm146, %v327, 0
  %v339 = vsel %vm146, %v329, 0
  %v342 = vsel %vm146, %v331, 0
  %344 = vmatprep.subr.mxu0 0.0
  %345 = vmatpush1.msra.mxu0 %v118
  %346 = vmatprep.subr.mxu0 0.0
  %347 = vmatpush1.msra.mxu0 %v123
  %348 = vmatprep.subr.mxu0 0.0
  %349 = vmatpush1.msra.mxu0 %v128
  %350 = vmatprep.subr.mxu0 0.0
  %351 = vmatpush1.msra.mxu0 %v133
  %352 = vmatprep.subr.mxu0 0.0
  %353 = vmatpush1.msra.mxu0 0.0
  %354 = vmatprep.subr.mxu0 0.0
  %355 = vmatpush1.msra.mxu0 0.0
  %356 = vmatprep.subr.mxu0 0.0
  %357 = vmatpush1.msra.mxu0 0.0
  %358 = vmatprep.subr.mxu0 0.0
  %359 = vmatpush1.msra.mxu0 0.0
  %360 = vmatprep.subr.mxu0 0.0
  %361 = vmatpush1.msra.mxu0 0.0
  %362 = vmatprep.subr.mxu0 0.0
  %363 = vmatpush1.msra.mxu0 0.0
  %364 = vmatprep.subr.mxu0 0.0
  %365 = vmatpush1.msra.mxu0 0.0
  %366 = vmatprep.subr.mxu0 0.0
  %367 = vmatpush1.msra.mxu0 0.0
  %368 = vmatprep.subr.mxu0 0.0
  %369 = vmatpush1.msra.mxu0 0.0
  %370 = vmatprep.subr.mxu0 0.0
  %371 = vmatpush1.msra.mxu0 0.0
  %372 = vmatprep.subr.mxu0 0.0
  %373 = vmatpush1.msra.mxu0 0.0
  %374 = vmatprep.subr.mxu0 0.0
  %375 = vmatpush1.msra.mxu0 0.0
  %376 = vmatprep.subr.mxu0 0.0
  %377 = vmatpush1.msra.mxu0 0.0
  %378 = vmatprep.subr.mxu0 0.0
  %379 = vmatpush1.msra.mxu0 0.0
  %380 = vmatprep.subr.mxu0 0.0
  %381 = vmatpush1.msra.mxu0 0.0
  %382 = vmatprep.subr.mxu0 0.0
  %383 = vmatpush1.msra.mxu0 0.0
  %384 = vmatprep.subr.mxu0 0.0
  %385 = vmatpush1.msra.mxu0 0.0
  %386 = vmatprep.subr.mxu0 0.0
  %387 = vmatpush1.msra.mxu0 0.0
  %388 = vmatprep.subr.mxu0 0.0
  %389 = vmatpush1.msra.mxu0 0.0
  %390 = vmatprep.subr.mxu0 0.0
  %391 = vmatpush1.msra.mxu0 0.0
  %392 = vmatprep.subr.mxu0 0.0
  %393 = vmatpush1.msra.mxu0 0.0
  %394 = vmatprep.subr.mxu0 0.0
  %395 = vmatpush1.msra.mxu0 0.0
  %396 = vmatprep.subr.mxu0 0.0
  %397 = vmatpush1.msra.mxu0 0.0
  %398 = vmatprep.subr.mxu0 0.0
  %399 = vmatpush1.msra.mxu0 0.0
  %400 = vmatprep.subr.mxu0 0.0
  %401 = vmatpush1.msra.mxu0 0.0
  %402 = vmatprep.subr.mxu0 0.0
  %403 = vmatpush1.msra.mxu0 0.0
  %404 = vmatprep.subr.mxu0 0.0
  %405 = vmatpush1.msra.mxu0 0.0
  %406 = vmatprep.subr.mxu0 0.0
  %407 = vmatpush1.msra.mxu0 0.0
  %408 = vmatprep.mubr.f32.mxu0 0.0
  %409 = vmatmul.mubr.f32.gmra.mrb[0].mxu0 %v333
  %v410 = vpop.f32.mrb[0].mxu0
  %v411 = vadd.f32 0.0, %v410
  %v412 = vpop.f32.mrb[0].mxu0
  %413 = vmatprep.mubr.f32.mxu0 0.0
  %414 = vmatmul.mubr.f32.gmra.mrb[0].mxu0 %v336
  %v415 = vpop.f32.mrb[0].mxu0
  %v416 = vadd.f32 0.0, %v415
  %v417 = vpop.f32.mrb[0].mxu0
  %418 = vmatprep.mubr.f32.mxu0 0.0
  %419 = vmatmul.mubr.f32.gmra.mrb[0].mxu0 %v339
  %v420 = vpop.f32.mrb[0].mxu0
  %v421 = vadd.f32 0.0, %v420
  %v422 = vpop.f32.mrb[0].mxu0
  %423 = vmatprep.mubr.f32.mxu0 0.0
  %424 = vmatmul.mubr.f32.gmra.mrb[0].mxu0 %v342
  %v425 = vpop.f32.mrb[0].mxu0
  %v426 = vadd.f32 0.0, %v425
  %v427 = vpop.f32.mrb[0].mxu0
  %428 = vdwg.mxu0
  %vm429 = vcmp.gt.f32.partialorder %v411, 0.0
  %vm430 = vcmp.gt.f32.partialorder %v416, 0.0
  %vm431 = vcmp.gt.f32.partialorder %v421, 0.0
  %vm432 = vcmp.gt.f32.partialorder %v426, 0.0
  %v433 = vmin.f32 %v411, 0.0
  %v434 = vmin.f32 %v416, 0.0
  %v435 = vmin.f32 %v421, 0.0
  %v436 = vmin.f32 %v426, 0.0
  %v437 = vmul.f32 %v433, 1.442695
  %v438 = vpow.pop %v437
  %v439 = vmul.f32 %v434, 1.442695
  %v440 = vpow.pop %v439
  %v441 = vmul.f32 %v435, 1.442695
  %v442 = vpow.pop %v441
  %v443 = vmul.f32 %v436, 1.442695
  %v444 = vpow.pop %v443
  %v445 = vsub.f32 %v438, 1.0
  %v446 = vsub.f32 %v440, 1.0
  %v447 = vsub.f32 %v442, 1.0
  %v448 = vsub.f32 %v444, 1.0
  %v449 = vsel %vm429, %v411, %v445
  %v450 = vsel %vm430, %v416, %v446
  %v451 = vsel %vm431, %v421, %v447
  %v452 = vsel %vm432, %v426, %v448
  %v453 = vld [vmem:[%s5] sm:$0xff]
  %v454 = vld [vmem:[%s5 + $0x8] sm:$0xff]
  %v455 = vld [vmem:[%s5 + $0x10] sm:$0xff]
  %v456 = vld [vmem:[%s5 + $0x18] sm:$0xff]
  %v458 = vsel %vm146, %v449, 0
  %v461 = vsel %vm146, %v450, 0
  %v464 = vsel %vm146, %v451, 0
  %v467 = vsel %vm146, %v452, 0
  %469 = vmatprep.subr.mxu0 0.0
  %470 = vmatpush1.msra.mxu0 %v453
  %471 = vmatprep.subr.mxu0 0.0
  %472 = vmatpush1.msra.mxu0 %v454
  %473 = vmatprep.subr.mxu0 0.0
  %474 = vmatpush1.msra.mxu0 %v455
  %475 = vmatprep.subr.mxu0 0.0
  %476 = vmatpush1.msra.mxu0 %v456
  %477 = vmatprep.subr.mxu0 0.0
  %478 = vmatpush1.msra.mxu0 0.0
  %479 = vmatprep.subr.mxu0 0.0
  %480 = vmatpush1.msra.mxu0 0.0
  %481 = vmatprep.subr.mxu0 0.0
  %482 = vmatpush1.msra.mxu0 0.0
  %483 = vmatprep.subr.mxu0 0.0
  %484 = vmatpush1.msra.mxu0 0.0
  %485 = vmatprep.subr.mxu0 0.0
  %486 = vmatpush1.msra.mxu0 0.0
  %487 = vmatprep.subr.mxu0 0.0
  %488 = vmatpush1.msra.mxu0 0.0
  %489 = vmatprep.subr.mxu0 0.0
  %490 = vmatpush1.msra.mxu0 0.0
  %491 = vmatprep.subr.mxu0 0.0
  %492 = vmatpush1.msra.mxu0 0.0
  %493 = vmatprep.subr.mxu0 0.0
  %494 = vmatpush1.msra.mxu0 0.0
  %495 = vmatprep.subr.mxu0 0.0
  %496 = vmatpush1.msra.mxu0 0.0
  %497 = vmatprep.subr.mxu0 0.0
  %498 = vmatpush1.msra.mxu0 0.0
  %499 = vmatprep.subr.mxu0 0.0
  %500 = vmatpush1.msra.mxu0 0.0
  %501 = vmatprep.subr.mxu0 0.0
  %502 = vmatpush1.msra.mxu0 0.0
  %503 = vmatprep.subr.mxu0 0.0
  %504 = vmatpush1.msra.mxu0 0.0
  %505 = vmatprep.subr.mxu0 0.0
  %506 = vmatpush1.msra.mxu0 0.0
  %507 = vmatprep.subr.mxu0 0.0
  %508 = vmatpush1.msra.mxu0 0.0
  %509 = vmatprep.subr.mxu0 0.0
  %510 = vmatpush1.msra.mxu0 0.0
  %511 = vmatprep.subr.mxu0 0.0
  %512 = vmatpush1.msra.mxu0 0.0
  %513 = vmatprep.subr.mxu0 0.0
  %514 = vmatpush1.msra.mxu0 0.0
  %515 = vmatprep.subr.mxu0 0.0
  %516 = vmatpush1.msra.mxu0 0.0
  %517 = vmatprep.subr.mxu0 0.0
  %518 = vmatpush1.msra.mxu0 0.0
  %519 = vmatprep.subr.mxu0 0.0
  %520 = vmatpush1.msra.mxu0 0.0
  %521 = vmatprep.subr.mxu0 0.0
  %522 = vmatpush1.msra.mxu0 0.0
  %523 = vmatprep.subr.mxu0 0.0
  %524 = vmatpush1.msra.mxu0 0.0
  %525 = vmatprep.subr.mxu0 0.0
  %526 = vmatpush1.msra.mxu0 0.0
  %527 = vmatprep.subr.mxu0 0.0
  %528 = vmatpush1.msra.mxu0 0.0
  %529 = vmatprep.subr.mxu0 0.0
  %530 = vmatpush1.msra.mxu0 0.0
  %531 = vmatprep.subr.mxu0 0.0
  %532 = vmatpush1.msra.mxu0 0.0
  %533 = vmatprep.mubr.f32.mxu0 0.0
  %534 = vmatmul.mubr.f32.gmra.mrb[0].mxu0 %v458
  %v535 = vpop.f32.mrb[0].mxu0
  %v536 = vadd.f32 0.0, %v535
  %v537 = vpop.f32.mrb[0].mxu0
  %538 = vmatprep.mubr.f32.mxu0 0.0
  %539 = vmatmul.mubr.f32.gmra.mrb[0].mxu0 %v461
  %v540 = vpop.f32.mrb[0].mxu0
  %v541 = vadd.f32 0.0, %v540
  %v542 = vpop.f32.mrb[0].mxu0
  %543 = vmatprep.mubr.f32.mxu0 0.0
  %544 = vmatmul.mubr.f32.gmra.mrb[0].mxu0 %v464
  %v545 = vpop.f32.mrb[0].mxu0
  %v546 = vadd.f32 0.0, %v545
  %v547 = vpop.f32.mrb[0].mxu0
  %548 = vmatprep.mubr.f32.mxu0 0.0
  %549 = vmatmul.mubr.f32.gmra.mrb[0].mxu0 %v467
  %v550 = vpop.f32.mrb[0].mxu0
  %v551 = vadd.f32 0.0, %v550
  %v552 = vpop.f32.mrb[0].mxu0
  %553 = vdwg.mxu0
  %v554 = vld [vmem:[%s6] sm:$0xff]
  %vm555 = vcmask 64512
  %v557 = vsel %vm555, %v536, 0
  %v560 = vsel %vm555, %v541, 0
  %v563 = vsel %vm555, %v546, 0
  %v566 = vsel %vm555, %v551, 0
  %568 = vmatprep.subr.mxu0 0.0
  %569 = vmatpush1.msra.mxu0 %v554
  %570 = vmatprep.subr.mxu0 0.0
  %571 = vmatpush1.msra.mxu0 0.0
  %572 = vmatprep.subr.mxu0 0.0
  %573 = vmatpush1.msra.mxu0 0.0
  %574 = vmatprep.subr.mxu0 0.0
  %575 = vmatpush1.msra.mxu0 0.0
  %576 = vmatprep.subr.mxu0 0.0
  %577 = vmatpush1.msra.mxu0 0.0
  %578 = vmatprep.subr.mxu0 0.0
  %579 = vmatpush1.msra.mxu0 0.0
  %580 = vmatprep.subr.mxu0 0.0
  %581 = vmatpush1.msra.mxu0 0.0
  %582 = vmatprep.subr.mxu0 0.0
  %583 = vmatpush1.msra.mxu0 0.0
  %584 = vmatprep.subr.mxu0 0.0
  %585 = vmatpush1.msra.mxu0 0.0
  %586 = vmatprep.subr.mxu0 0.0
  %587 = vmatpush1.msra.mxu0 0.0
  %588 = vmatprep.subr.mxu0 0.0
  %589 = vmatpush1.msra.mxu0 0.0
  %590 = vmatprep.subr.mxu0 0.0
  %591 = vmatpush1.msra.mxu0 0.0
  %592 = vmatprep.subr.mxu0 0.0
  %593 = vmatpush1.msra.mxu0 0.0
  %594 = vmatprep.subr.mxu0 0.0
  %595 = vmatpush1.msra.mxu0 0.0
  %596 = vmatprep.subr.mxu0 0.0
  %597 = vmatpush1.msra.mxu0 0.0
  %598 = vmatprep.subr.mxu0 0.0
  %599 = vmatpush1.msra.mxu0 0.0
  %600 = vmatprep.subr.mxu0 0.0
  %601 = vmatpush1.msra.mxu0 0.0
  %602 = vmatprep.subr.mxu0 0.0
  %603 = vmatpush1.msra.mxu0 0.0
  %604 = vmatprep.subr.mxu0 0.0
  %605 = vmatpush1.msra.mxu0 0.0
  %606 = vmatprep.subr.mxu0 0.0
  %607 = vmatpush1.msra.mxu0 0.0
  %608 = vmatprep.subr.mxu0 0.0
  %609 = vmatpush1.msra.mxu0 0.0
  %610 = vmatprep.subr.mxu0 0.0
  %611 = vmatpush1.msra.mxu0 0.0
  %612 = vmatprep.subr.mxu0 0.0
  %613 = vmatpush1.msra.mxu0 0.0
  %614 = vmatprep.subr.mxu0 0.0
  %615 = vmatpush1.msra.mxu0 0.0
  %616 = vmatprep.subr.mxu0 0.0
  %617 = vmatpush1.msra.mxu0 0.0
  %618 = vmatprep.subr.mxu0 0.0
  %619 = vmatpush1.msra.mxu0 0.0
  %620 = vmatprep.subr.mxu0 0.0
  %621 = vmatpush1.msra.mxu0 0.0
  %622 = vmatprep.subr.mxu0 0.0
  %623 = vmatpush1.msra.mxu0 0.0
  %624 = vmatprep.subr.mxu0 0.0
  %625 = vmatpush1.msra.mxu0 0.0
  %626 = vmatprep.subr.mxu0 0.0
  %627 = vmatpush1.msra.mxu0 0.0
  %628 = vmatprep.subr.mxu0 0.0
  %629 = vmatpush1.msra.mxu0 0.0
  %630 = vmatprep.subr.mxu0 0.0
  %631 = vmatpush1.msra.mxu0 0.0
  %632 = vmatprep.mubr.f32.mxu0 0.0
  %633 = vmatmul.mubr.f32.gmra.mrb[0].mxu0 %v557
  %v634 = vpop.f32.mrb[0].mxu0
  %v635 = vadd.f32 0.0, %v634
  %v636 = vpop.f32.mrb[0].mxu0
  %637 = vmatprep.mubr.f32.mxu0 0.0
  %638 = vmatmul.mubr.f32.gmra.mrb[0].mxu0 %v560
  %v639 = vpop.f32.mrb[0].mxu0
  %v640 = vadd.f32 0.0, %v639
  %v641 = vpop.f32.mrb[0].mxu0
  %642 = vmatprep.mubr.f32.mxu0 0.0
  %643 = vmatmul.mubr.f32.gmra.mrb[0].mxu0 %v563
  %v644 = vpop.f32.mrb[0].mxu0
  %v645 = vadd.f32 0.0, %v644
  %v646 = vpop.f32.mrb[0].mxu0
  %647 = vmatprep.mubr.f32.mxu0 0.0
  %648 = vmatmul.mubr.f32.gmra.mrb[0].mxu0 %v566
  %v649 = vpop.f32.mrb[0].mxu0
  %v650 = vadd.f32 0.0, %v649
  %v651 = vpop.f32.mrb[0].mxu0
  %652 = vdwg.mxu0
  %v653 = vmul.f32 %v635, %v635
  %v654 = vmul.f32 %v640, %v640
  %v655 = vmul.f32 %v645, %v645
  %v656 = vmul.f32 %v650, %v650
  %v657 = vsel %vm555, %v653, 0.0
  %658 = vadd.xlane.f32.xlu0 %v657
  %v659 = vpop.xlane.xlu0 %658
  %v660 = vsel %vm555, %v654, 0.0
  %661 = vadd.xlane.f32.xlu0 %v660
  %v662 = vpop.xlane.xlu0 %661
  %v663 = vsel %vm555, %v655, 0.0
  %664 = vadd.xlane.f32.xlu0 %v663
  %v665 = vpop.xlane.xlu0 %664
  %v666 = vsel %vm555, %v656, 0.0
  %667 = vadd.xlane.f32.xlu0 %v666
  %v668 = vpop.xlane.xlu0 %667
  %v669 = vrsqrt.pop %v659
  %v670 = vmul.f32 %v659, %v669
  %vm671 = vcmp.eq.f32.partialorder %v659, inf
  %v672 = vsel %vm671, %v659, %v670
  %vm673 = vcmp.eq.f32.partialorder %v659, 0.0
  %v674 = vand.u32 %v659, 2147483648
  %v675 = vsel %vm673, %v674, %v672
  %v676 = vrsqrt.pop %v662
  %v677 = vmul.f32 %v662, %v676
  %vm678 = vcmp.eq.f32.partialorder %v662, inf
  %v679 = vsel %vm678, %v662, %v677
  %vm680 = vcmp.eq.f32.partialorder %v662, 0.0
  %v681 = vand.u32 %v662, 2147483648
  %v682 = vsel %vm680, %v681, %v679
  %v683 = vrsqrt.pop %v665
  %v684 = vmul.f32 %v665, %v683
  %vm685 = vcmp.eq.f32.partialorder %v665, inf
  %v686 = vsel %vm685, %v665, %v684
  %vm687 = vcmp.eq.f32.partialorder %v665, 0.0
  %v688 = vand.u32 %v665, 2147483648
  %v689 = vsel %vm687, %v688, %v686
  %v690 = vrsqrt.pop %v668
  %v691 = vmul.f32 %v668, %v690
  %vm692 = vcmp.eq.f32.partialorder %v668, inf
  %v693 = vsel %vm692, %v668, %v691
  %vm694 = vcmp.eq.f32.partialorder %v668, 0.0
  %v695 = vand.u32 %v668, 2147483648
  %v696 = vsel %vm694, %v695, %v693
  %v697 = vmax.f32 %v675, 1e-12
  %v698 = vmax.f32 %v682, 1e-12
  %v699 = vmax.f32 %v689, 1e-12
  %v700 = vmax.f32 %v696, 1e-12
  %v701 = vrcp.pop %v697
  %v702 = vmul.f32 %v635, %v701
  %v703 = vrcp.pop %v698
  %v704 = vmul.f32 %v640, %v703
  %v705 = vrcp.pop %v699
  %v706 = vmul.f32 %v645, %v705
  %v707 = vrcp.pop %v700
  %v708 = vmul.f32 %v650, %v707
  %709 = vst.msk [vmem:[%s7] sm:$0xff] %vm555, %v702
  %710 = vst.msk [vmem:[%s7 + $0x8] sm:$0xff] %vm555, %v704
  %711 = vst.msk [vmem:[%s7 + $0x10] sm:$0xff] %vm555, %v706
  %712 = vst.msk [vmem:[%s7 + $0x18] sm:$0xff] %vm555, %v708
  // Predicated region
  $region30: #{_moca_forward.5} parent=0 // pred_check
    _
  $region31: #{_moca_forward.5} parent=0 // pred_check_branch
    %714 = sbr.rel (0) target = $region33
  $region32: #{_moca_forward.5} parent=0 // pred_region
    _
  $region33: #{_moca_forward.5} parent=0 // pred_fallthru
    _
  // Predicated region
  $region34: #{_moca_forward.5} parent=0 // pred_check
    _
  $region35: #{_moca_forward.5} parent=0 // pred_check_branch
    %716 = sbr.rel (0) target = $region37
  $region36: #{_moca_forward.5} parent=0 // pred_region
    _
  $region37: #{_moca_forward.5} parent=0 // pred_fallthru
    _

// kernel: _moca_forward.4
$region0: #{_moca_forward.4}
  #allocation0 [shape = 'u32[]', space=smem, size = 0x4, offset = 0x4, fixed_abs, tag = 'smem constant byte address 0x4 - core index']
  #allocation1 [shape = 'u32[144,128]{1,0:T(1,128)}', space=vmem, size = 0x12000, scoped, tag = 'internal scratch']
  %s0 = inlined_call_operand.vmem [shape: f32[32,16], index: 0, kind: input, shape index: {}]
  %s1 = inlined_call_operand.vmem [shape: f32[32,32], index: 1, kind: input, shape index: {}]
  %s2 = inlined_call_operand.vmem [shape: f32[16,32], index: 2, kind: input, shape index: {}]
  %s3 = inlined_call_operand.vmem [shape: f32[1,32], index: 3, kind: input, shape index: {}]
  %s4 = inlined_call_operand.vmem [shape: f32[1,32], index: 4, kind: input, shape index: {}]
  %s5 = inlined_call_operand.vmem [shape: f32[32,8], index: 5, kind: input, shape index: {}]
  %s6 = inlined_call_operand.vmem [shape: f32[8,8], index: 6, kind: input, shape index: {}]
  %s7 = inlined_call_operand.vmem [shape: f32[8,32], index: 7, kind: input, shape index: {}]
  %s8 = inlined_call_operand.vmem [shape: f32[32,16], index: 8, kind: input, shape index: {}]
  %s9 = inlined_call_operand.vmem [shape: f32[32,32], index: 9, kind: input, shape index: {}]
  %s10 = inlined_call_operand.vmem [shape: f32[32,32], index: 10, kind: input, shape index: {}]
  %s11 = inlined_call_operand.vmem [shape: f32[32,8], index: 11, kind: output, shape index: {0}]
  %s12 = inlined_call_operand.vmem [shape: f32[32,16], index: 12, kind: output, shape index: {1}]
  %s13 = inlined_call_operand.vmem [shape: f32[32,8], index: 13, kind: output, shape index: {2}]
  %s14 = inlined_call_operand.hbm [shape: f32[1,1], index: 14, kind: output, shape index: {3}]
  %15 = xla_tuple %s11, %s12, %s13, %s14
  %s16 = sld [smem:[#allocation0]]
  $region78: #{_moca_forward.4} parent=0
    _
  %s18 = ssub.s32 1, %s16
  %s19 = scalar_select 0, %s18, %s16
  $region1: #{_moca_forward.4} parent=0
    #allocation2 [shape = 'u8[512]{0}', space=vmem, size = 0x400, scoped, tag = 'output window, operand 3, single buffered']
    #allocation3 [shape = 's32[1]{0}', space=sflag, size = 0x4, scoped, tag = 'scoped memory for _moca_forward.4']
    %20 = vsyncpa [#allocation3], 0
    // Predicated region
    $region2: #{_moca_forward.4} parent=1 // pred_check
      _
    $region3: #{_moca_forward.4} parent=1 // pred_check_branch
      %22 = sbr.rel (0) target = $region5
    $region4: #{_moca_forward.4} parent=1 // pred_region
      _
    $region5: #{_moca_forward.4} parent=1 // pred_fallthru
      _
    // Predicated region
    $region6: #{_moca_forward.4} parent=1 // pred_check
      _
    $region7: #{_moca_forward.4} parent=1 // pred_check_branch
      %24 = sbr.rel (0) target = $region9
    $region8: #{_moca_forward.4} parent=1 // pred_region
      _
    $region9: #{_moca_forward.4} parent=1 // pred_fallthru
      _
    // Predicated region
    $region10: #{_moca_forward.4} parent=1 // pred_check
      _
    $region11: #{_moca_forward.4} parent=1 // pred_check_branch
      %26 = sbr.rel (0) target = $region13
    $region12: #{_moca_forward.4} parent=1 // pred_region
      _
    $region13: #{_moca_forward.4} parent=1 // pred_fallthru
      _
    // Predicated region
    $region14: #{_moca_forward.4} parent=1 // pred_check
      _
    $region15: #{_moca_forward.4} parent=1 // pred_check_branch
      %28 = sbr.rel (0) target = $region17
    $region16: #{_moca_forward.4} parent=1 // pred_region
      _
    $region17: #{_moca_forward.4} parent=1 // pred_fallthru
      _
    // Predicated region
    $region18: #{_moca_forward.4} parent=1 // pred_check
      _
    $region19: #{_moca_forward.4} parent=1 // pred_check_branch
      %30 = sbr.rel (0) target = $region21
    $region20: #{_moca_forward.4} parent=1 // pred_region
      _
    $region21: #{_moca_forward.4} parent=1 // pred_fallthru
      _
    // Predicated region
    $region22: #{_moca_forward.4} parent=1 // pred_check
      _
    $region23: #{_moca_forward.4} parent=1 // pred_check_branch
      %32 = sbr.rel (0) target = $region25
    $region24: #{_moca_forward.4} parent=1 // pred_region
      _
    $region25: #{_moca_forward.4} parent=1 // pred_fallthru
      _
    // Predicated region
    $region26: #{_moca_forward.4} parent=1 // pred_check
      _
    $region27: #{_moca_forward.4} parent=1 // pred_check_branch
      %34 = sbr.rel (0) target = $region29
    $region28: #{_moca_forward.4} parent=1 // pred_region
      _
    $region29: #{_moca_forward.4} parent=1 // pred_fallthru
      _
    // Predicated region
    $region30: #{_moca_forward.4} parent=1 // pred_check
      _
    $region31: #{_moca_forward.4} parent=1 // pred_check_branch
      %36 = sbr.rel (0) target = $region33
    $region32: #{_moca_forward.4} parent=1 // pred_region
      _
    $region33: #{_moca_forward.4} parent=1 // pred_fallthru
      _
    // Predicated region
    $region34: #{_moca_forward.4} parent=1 // pred_check
      _
    $region35: #{_moca_forward.4} parent=1 // pred_check_branch
      %38 = sbr.rel (0) target = $region37
    $region36: #{_moca_forward.4} parent=1 // pred_region
      _
    $region37: #{_moca_forward.4} parent=1 // pred_fallthru
      _
    // Predicated region
    $region38: #{_moca_forward.4} parent=1 // pred_check
      _
    $region39: #{_moca_forward.4} parent=1 // pred_check_branch
      %40 = sbr.rel (0) target = $region41
    $region40: #{_moca_forward.4} parent=1 // pred_region
      _
    $region41: #{_moca_forward.4} parent=1 // pred_fallthru
      _
    // Predicated region
    $region42: #{_moca_forward.4} parent=1 // pred_check
      _
    $region43: #{_moca_forward.4} parent=1 // pred_check_branch
      %42 = sbr.rel (0) target = $region45
    $region44: #{_moca_forward.4} parent=1 // pred_region
      _
    $region45: #{_moca_forward.4} parent=1 // pred_fallthru
      _
    %v43 = vld [vmem:[%s0] sm:$0xff]
    %v44 = vld [vmem:[%s0 + $0x8] sm:$0xff]
    %v45 = vld [vmem:[%s0 + $0x10] sm:$0xff]
    %v46 = vld [vmem:[%s0 + $0x18] sm:$0xff]
    %v47 = vld [vmem:[%s1] sm:$0xff]
    %v48 = vld [vmem:[%s1 + $0x8] sm:$0xff]
    %v49 = vld [vmem:[%s1 + $0x10] sm:$0xff]
    %v50 = vld [vmem:[%s1 + $0x18] sm:$0xff]
    %v51 = vld [vmem:[%s2] sm:$0xff]
    %v52 = vld [vmem:[%s2 + $0x8] sm:$0xff]
    %v53 = vld [vmem:[%s3] sm:$0x1]
    %v54 = vld [vmem:[%s4] sm:$0x1]
    %vm55 = vcmask 130048
    %v57 = vsel %vm55, %v43, 0
    %v60 = vsel %vm55, %v44, 0
    %v63 = vsel %vm55, %v45, 0
    %v66 = vsel %vm55, %v46, 0
    %68 = vmatprep.subr.mxu0 0.0
    %69 = vmatpush1.msra.mxu0 %v51
    %70 = vmatprep.subr.mxu0 0.0
    %71 = vmatpush1.msra.mxu0 %v52
    %72 = vmatprep.subr.mxu0 0.0
    %73 = vmatpush1.msra.mxu0 0.0
    %74 = vmatprep.subr.mxu0 0.0
    %75 = vmatpush1.msra.mxu0 0.0
    %76 = vmatprep.subr.mxu0 0.0
    %77 = vmatpush1.msra.mxu0 0.0
    %78 = vmatprep.subr.mxu0 0.0
    %79 = vmatpush1.msra.mxu0 0.0
    %80 = vmatprep.subr.mxu0 0.0
    %81 = vmatpush1.msra.mxu0 0.0
    %82 = vmatprep.subr.mxu0 0.0
    %83 = vmatpush1.msra.mxu0 0.0
    %84 = vmatprep.subr.mxu0 0.0
    %85 = vmatpush1.msra.mxu0 0.0
    %86 = vmatprep.subr.mxu0 0.0
    %87 = vmatpush1.msra.mxu0 0.0
    %88 = vmatprep.subr.mxu0 0.0
    %89 = vmatpush1.msra.mxu0 0.0
    %90 = vmatprep.subr.mxu0 0.0
    %91 = vmatpush1.msra.mxu0 0.0
    %92 = vmatprep.subr.mxu0 0.0
    %93 = vmatpush1.msra.mxu0 0.0
    %94 = vmatprep.subr.mxu0 0.0
    %95 = vmatpush1.msra.mxu0 0.0
    %96 = vmatprep.subr.mxu0 0.0
    %97 = vmatpush1.msra.mxu0 0.0
    %98 = vmatprep.subr.mxu0 0.0
    %99 = vmatpush1.msra.mxu0 0.0
    %100 = vmatprep.subr.mxu0 0.0
    %101 = vmatpush1.msra.mxu0 0.0
    %102 = vmatprep.subr.mxu0 0.0
    %103 = vmatpush1.msra.mxu0 0.0
    %104 = vmatprep.subr.mxu0 0.0
    %105 = vmatpush1.msra.mxu0 0.0
    %106 = vmatprep.subr.mxu0 0.0
    %107 = vmatpush1.msra.mxu0 0.0
    %108 = vmatprep.subr.mxu0 0.0
    %109 = vmatpush1.msra.mxu0 0.0
    %110 = vmatprep.subr.mxu0 0.0
    %111 = vmatpush1.msra.mxu0 0.0
    %112 = vmatprep.subr.mxu0 0.0
    %113 = vmatpush1.msra.mxu0 0.0
    %114 = vmatprep.subr.mxu0 0.0
    %115 = vmatpush1.msra.mxu0 0.0
    %116 = vmatprep.subr.mxu0 0.0
    %117 = vmatpush1.msra.mxu0 0.0
    %118 = vmatprep.subr.mxu0 0.0
    %119 = vmatpush1.msra.mxu0 0.0
    %120 = vmatprep.subr.mxu0 0.0
    %121 = vmatpush1.msra.mxu0 0.0
    %122 = vmatprep.subr.mxu0 0.0
    %123 = vmatpush1.msra.mxu0 0.0
    %124 = vmatprep.subr.mxu0 0.0
    %125 = vmatpush1.msra.mxu0 0.0
    %126 = vmatprep.subr.mxu0 0.0
    %127 = vmatpush1.msra.mxu0 0.0
    %128 = vmatprep.subr.mxu0 0.0
    %129 = vmatpush1.msra.mxu0 0.0
    %130 = vmatprep.subr.mxu0 0.0
    %131 = vmatpush1.msra.mxu0 0.0
    %132 = vmatprep.mubr.f32.mxu0 0.0
    %133 = vmatmul.mubr.f32.gmra.mrb[0].mxu0 %v57
    %v134 = vpop.f32.mrb[0].mxu0
    %v135 = vadd.f32 0.0, %v134
    %v136 = vpop.f32.mrb[0].mxu0
    %137 = vmatprep.mubr.f32.mxu0 0.0
    %138 = vmatmul.mubr.f32.gmra.mrb[0].mxu0 %v60
    %v139 = vpop.f32.mrb[0].mxu0
    %v140 = vadd.f32 0.0, %v139
    %v141 = vpop.f32.mrb[0].mxu0
    %142 = vmatprep.mubr.f32.mxu0 0.0
    %143 = vmatmul.mubr.f32.gmra.mrb[0].mxu0 %v63
    %v144 = vpop.f32.mrb[0].mxu0
    %v145 = vadd.f32 0.0, %v144
    %v146 = vpop.f32.mrb[0].mxu0
    %147 = vmatprep.mubr.f32.mxu0 0.0
    %148 = vmatmul.mubr.f32.gmra.mrb[0].mxu0 %v66
    %v149 = vpop.f32.mrb[0].mxu0
    %v150 = vadd.f32 0.0, %v149
    %v151 = vpop.f32.mrb[0].mxu0
    %152 = vdwg.mxu0
    %v154 = vlaneseq
    %v155 = vshrl.u32 %v154, 7
    %v156 = vsub.s32 0, %v155
    %v157 = vrot.slane %v54, %v156
    %v159 = vmul.f32 %v135, %v157
    %v160 = vmul.f32 %v140, %v157
    %v161 = vmul.f32 %v145, %v157
    %v162 = vmul.f32 %v150, %v157
    %vm163 = vcmask 261120
    %v164 = vsel %vm163, %v159, 0.0
    %165 = vadd.xlane.f32.xlu0 %v164
    %v166 = vpop.xlane.xlu0 %165
    %v167 = vsel %vm163, %v160, 0.0
    %168 = vadd.xlane.f32.xlu0 %v167
    %v169 = vpop.xlane.xlu0 %168
    %v170 = vsel %vm163, %v161, 0.0
    %171 = vadd.xlane.f32.xlu0 %v170
    %v172 = vpop.xlane.xlu0 %171
    %v173 = vsel %vm163, %v162, 0.0
    %174 = vadd.xlane.f32.xlu0 %v173
    %v175 = vpop.xlane.xlu0 %174
    %v177 = vsel %vm163, %v53, 0
    %v180 = vsel %vm163, %v135, 0
    %v183 = vsel %vm163, %v140, 0
    %v186 = vsel %vm163, %v145, 0
    %v189 = vsel %vm163, %v150, 0
    %191 = vmatprep.subr.mxu0 0.0
    %192 = vmatpush1.xpose.msra.mxu0 %v180
    %193 = vmatprep.subr.mxu0 0.0
    %194 = vmatpush1.xpose.msra.mxu0 %v183
    %195 = vmatprep.subr.mxu0 0.0
    %196 = vmatpush1.xpose.msra.mxu0 %v186
    %197 = vmatprep.subr.mxu0 0.0
    %198 = vmatpush1.xpose.msra.mxu0 %v189
    %199 = vmatprep.subr.mxu0 0.0
    %200 = vmatpush1.xpose.msra.mxu0 0.0
    %201 = vmatprep.subr.mxu0 0.0
    %202 = vmatpush1.xpose.msra.mxu0 0.0
    %203 = vmatprep.subr.mxu0 0.0
    %204 = vmatpush1.xpose.msra.mxu0 0.0
    %205 = vmatprep.subr.mxu0 0.0
    %206 = vmatpush1.xpose.msra.mxu0 0.0
    %207 = vmatprep.subr.mxu0 0.0
    %208 = vmatpush1.xpose.msra.mxu0 0.0
    %209 = vmatprep.subr.mxu0 0.0
    %210 = vmatpush1.xpose.msra.mxu0 0.0
    %211 = vmatprep.subr.mxu0 0.0
    %212 = vmatpush1.xpose.msra.mxu0 0.0
    %213 = vmatprep.subr.mxu0 0.0
    %214 = vmatpush1.xpose.msra.mxu0 0.0
    %215 = vmatprep.subr.mxu0 0.0
    %216 = vmatpush1.xpose.msra.mxu0 0.0
    %217 = vmatprep.subr.mxu0 0.0
    %218 = vmatpush1.xpose.msra.mxu0 0.0
    %219 = vmatprep.subr.mxu0 0.0
    %220 = vmatpush1.xpose.msra.mxu0 0.0
    %221 = vmatprep.subr.mxu0 0.0
    %222 = vmatpush1.xpose.msra.mxu0 0.0
    %223 = vmatprep.subr.mxu0 0.0
    %224 = vmatpush1.xpose.msra.mxu0 0.0
    %225 = vmatprep.subr.mxu0 0.0
    %226 = vmatpush1.xpose.msra.mxu0 0.0
    %227 = vmatprep.subr.mxu0 0.0
    %228 = vmatpush1.xpose.msra.mxu0 0.0
    %229 = vmatprep.subr.mxu0 0.0
    %230 = vmatpush1.xpose.msra.mxu0 0.0
    %231 = vmatprep.subr.mxu0 0.0
    %232 = vmatpush1.xpose.msra.mxu0 0.0
    %233 = vmatprep.subr.mxu0 0.0
    %234 = vmatpush1.xpose.msra.mxu0 0.0
    %235 = vmatprep.subr.mxu0 0.0
    %236 = vmatpush1.xpose.msra.mxu0 0.0
    %237 = vmatprep.subr.mxu0 0.0
    %238 = vmatpush1.xpose.msra.mxu0 0.0
    %239 = vmatprep.subr.mxu0 0.0
    %240 = vmatpush1.xpose.msra.mxu0 0.0
    %241 = vmatprep.subr.mxu0 0.0
    %242 = vmatpush1.xpose.msra.mxu0 0.0
    %243 = vmatprep.subr.mxu0 0.0
    %244 = vmatpush1.xpose.msra.mxu0 0.0
    %245 = vmatprep.subr.mxu0 0.0
    %246 = vmatpush1.xpose.msra.mxu0 0.0
    %247 = vmatprep.subr.mxu0 0.0
    %248 = vmatpush1.xpose.msra.mxu0 0.0
    %249 = vmatprep.subr.mxu0 0.0
    %250 = vmatpush1.xpose.msra.mxu0 0.0
    %251 = vmatprep.subr.mxu0 0.0
    %252 = vmatpush1.xpose.msra.mxu0 0.0
    %253 = vmatprep.subr.mxu0 0.0
    %254 = vmatpush1.xpose.msra.mxu0 0.0
    %255 = vmatprep.mubr.f32.mxu0 0.0
    %256 = vmatmul.mubr.f32.gmra.mrb[0].mxu0 %v177
    %v257 = vpop.f32.mrb[0].mxu0
    %v258 = vadd.f32 0.0, %v257
    %v259 = vpop.f32.mrb[0].mxu0
    %260 = vdwg.mxu0
    %v261 = vlaneseq
    %v262 = vshrl.u32 %v261, 7
    %v263 = vsub.s32 0, %v262
    %v264 = vrot.slane %v258, %v263
    %v265 = vadd.f32 %v166, %v264
    %v266 = vadd.f32 %v169, %v264
    %v267 = vadd.f32 %v172, %v264
    %v268 = vadd.f32 %v175, %v264
    %v269 = vxor.u32 %v265, 2147483648
    %v270 = vxor.u32 %v266, 2147483648
    %v271 = vxor.u32 %v267, 2147483648
    %v272 = vxor.u32 %v268, 2147483648
    %v273 = vmul.f32 %v269, 1.442695
    %v274 = vpow.pop %v273
    %v275 = vmul.f32 %v270, 1.442695
    %v276 = vpow.pop %v275
    %v277 = vmul.f32 %v271, 1.442695
    %v278 = vpow.pop %v277
    %v279 = vmul.f32 %v272, 1.442695
    %v280 = vpow.pop %v279
    %v281 = vadd.f32 %v274, 1.0
    %v282 = vadd.f32 %v276, 1.0
    %v283 = vadd.f32 %v278, 1.0
    %v284 = vadd.f32 %v280, 1.0
    %v285 = vrcp.pop %v281
    %v286 = vmul.f32 1.0, %v285
    %v287 = vrcp.pop %v282
    %v288 = vmul.f32 1.0, %v287
    %v289 = vrcp.pop %v283
    %v290 = vmul.f32 1.0, %v289
    %v291 = vrcp.pop %v284
    %v292 = vmul.f32 1.0, %v291
    %vm293 = vcmp.gt.f32.partialorder %v47, 0.0
    %vm294 = vcmp.gt.f32.partialorder %v48, 0.0
    %vm295 = vcmp.gt.f32.partialorder %v49, 0.0
    %vm296 = vcmp.gt.f32.partialorder %v50, 0.0
    %v297 = vsel %vm293, %v286, -1e+30
    %v298 = vsel %vm294, %v288, -1e+30
    %v299 = vsel %vm295, %v290, -1e+30
    %v300 = vsel %vm296, %v292, -1e+30
    %v301 = vsel %vm163, %v297, -inf
    %302 = vmax.xlane.f32.xlu0 %v301
    %v303 = vpop.xlane.xlu0 %302
    %v304 = vsel %vm163, %v298, -inf
    %305 = vmax.xlane.f32.xlu0 %v304
    %v306 = vpop.xlane.xlu0 %305
    %v307 = vsel %vm163, %v299, -inf
    %308 = vmax.xlane.f32.xlu0 %v307
    %v309 = vpop.xlane.xlu0 %308
    %v310 = vsel %vm163, %v300, -inf
    %311 = vmax.xlane.f32.xlu0 %v310
    %v312 = vpop.xlane.xlu0 %311
    %v313 = vsub.f32 %v297, %v303
    %v314 = vsub.f32 %v298, %v306
    %v315 = vsub.f32 %v299, %v309
    %v316 = vsub.f32 %v300, %v312
    %v317 = vmul.f32 %v313, 1.442695
    %v318 = vpow.pop %v317
    %v319 = vmul.f32 %v314, 1.442695
    %v320 = vpow.pop %v319
    %v321 = vmul.f32 %v315, 1.442695
    %v322 = vpow.pop %v321
    %v323 = vmul.f32 %v316, 1.442695
    %v324 = vpow.pop %v323
    %v325 = vsel %vm163, %v318, 0.0
    %326 = vadd.xlane.f32.xlu0 %v325
    %v327 = vpop.xlane.xlu0 %326
    %v328 = vsel %vm163, %v320, 0.0
    %329 = vadd.xlane.f32.xlu0 %v328
    %v330 = vpop.xlane.xlu0 %329
    %v331 = vsel %vm163, %v322, 0.0
    %332 = vadd.xlane.f32.xlu0 %v331
    %v333 = vpop.xlane.xlu0 %332
    %v334 = vsel %vm163, %v324, 0.0
    %335 = vadd.xlane.f32.xlu0 %v334
    %v336 = vpop.xlane.xlu0 %335
    %v337 = vmax.f32 %v327, 1e-30
    %v338 = vmax.f32 %v330, 1e-30
    %v339 = vmax.f32 %v333, 1e-30
    %v340 = vmax.f32 %v336, 1e-30
    %v341 = vrcp.pop %v337
    %v342 = vmul.f32 %v318, %v341
    %v343 = vrcp.pop %v338
    %v344 = vmul.f32 %v320, %v343
    %v345 = vrcp.pop %v339
    %v346 = vmul.f32 %v322, %v345
    %v347 = vrcp.pop %v340
    %v348 = vmul.f32 %v324, %v347
    %v350 = vsel %vm163, %v342, 0
    %v353 = vsel %vm163, %v344, 0
    %v356 = vsel %vm163, %v346, 0
    %v359 = vsel %vm163, %v348, 0
    %361 = vmatprep.subr.mxu0 0.0
    %362 = vmatpush1.msra.mxu0 %v135
    %363 = vmatprep.subr.mxu0 0.0
    %364 = vmatpush1.msra.mxu0 %v140
    %365 = vmatprep.subr.mxu0 0.0
    %366 = vmatpush1.msra.mxu0 %v145
    %367 = vmatprep.subr.mxu0 0.0
    %368 = vmatpush1.msra.mxu0 %v150
    %369 = vmatprep.subr.mxu0 0.0
    %370 = vmatpush1.msra.mxu0 0.0
    %371 = vmatprep.subr.mxu0 0.0
    %372 = vmatpush1.msra.mxu0 0.0
    %373 = vmatprep.subr.mxu0 0.0
    %374 = vmatpush1.msra.mxu0 0.0
    %375 = vmatprep.subr.mxu0 0.0
    %376 = vmatpush1.msra.mxu0 0.0
    %377 = vmatprep.subr.mxu0 0.0
    %378 = vmatpush1.msra.mxu0 0.0
    %379 = vmatprep.subr.mxu0 0.0
    %380 = vmatpush1.msra.mxu0 0.0
    %381 = vmatprep.subr.mxu0 0.0
    %382 = vmatpush1.msra.mxu0 0.0
    %383 = vmatprep.subr.mxu0 0.0
    %384 = vmatpush1.msra.mxu0 0.0
    %385 = vmatprep.subr.mxu0 0.0
    %386 = vmatpush1.msra.mxu0 0.0
    %387 = vmatprep.subr.mxu0 0.0
    %388 = vmatpush1.msra.mxu0 0.0
    %389 = vmatprep.subr.mxu0 0.0
    %390 = vmatpush1.msra.mxu0 0.0
    %391 = vmatprep.subr.mxu0 0.0
    %392 = vmatpush1.msra.mxu0 0.0
    %393 = vmatprep.subr.mxu0 0.0
    %394 = vmatpush1.msra.mxu0 0.0
    %395 = vmatprep.subr.mxu0 0.0
    %396 = vmatpush1.msra.mxu0 0.0
    %397 = vmatprep.subr.mxu0 0.0
    %398 = vmatpush1.msra.mxu0 0.0
    %399 = vmatprep.subr.mxu0 0.0
    %400 = vmatpush1.msra.mxu0 0.0
    %401 = vmatprep.subr.mxu0 0.0
    %402 = vmatpush1.msra.mxu0 0.0
    %403 = vmatprep.subr.mxu0 0.0
    %404 = vmatpush1.msra.mxu0 0.0
    %405 = vmatprep.subr.mxu0 0.0
    %406 = vmatpush1.msra.mxu0 0.0
    %407 = vmatprep.subr.mxu0 0.0
    %408 = vmatpush1.msra.mxu0 0.0
    %409 = vmatprep.subr.mxu0 0.0
    %410 = vmatpush1.msra.mxu0 0.0
    %411 = vmatprep.subr.mxu0 0.0
    %412 = vmatpush1.msra.mxu0 0.0
    %413 = vmatprep.subr.mxu0 0.0
    %414 = vmatpush1.msra.mxu0 0.0
    %415 = vmatprep.subr.mxu0 0.0
    %416 = vmatpush1.msra.mxu0 0.0
    %417 = vmatprep.subr.mxu0 0.0
    %418 = vmatpush1.msra.mxu0 0.0
    %419 = vmatprep.subr.mxu0 0.0
    %420 = vmatpush1.msra.mxu0 0.0
    %421 = vmatprep.subr.mxu0 0.0
    %422 = vmatpush1.msra.mxu0 0.0
    %423 = vmatprep.subr.mxu0 0.0
    %424 = vmatpush1.msra.mxu0 0.0
    %425 = vmatprep.mubr.f32.mxu0 0.0
    %426 = vmatmul.mubr.f32.gmra.mrb[0].mxu0 %v350
    %v427 = vpop.f32.mrb[0].mxu0
    %v428 = vadd.f32 0.0, %v427
    %v429 = vpop.f32.mrb[0].mxu0
    %430 = vmatprep.mubr.f32.mxu0 0.0
    %431 = vmatmul.mubr.f32.gmra.mrb[0].mxu0 %v353
    %v432 = vpop.f32.mrb[0].mxu0
    %v433 = vadd.f32 0.0, %v432
    %v434 = vpop.f32.mrb[0].mxu0
    %435 = vmatprep.mubr.f32.mxu0 0.0
    %436 = vmatmul.mubr.f32.gmra.mrb[0].mxu0 %v356
    %v437 = vpop.f32.mrb[0].mxu0
    %v438 = vadd.f32 0.0, %v437
    %v439 = vpop.f32.mrb[0].mxu0
    %440 = vmatprep.mubr.f32.mxu0 0.0
    %441 = vmatmul.mubr.f32.gmra.mrb[0].mxu0 %v359
    %v442 = vpop.f32.mrb[0].mxu0
    %v443 = vadd.f32 0.0, %v442
    %v444 = vpop.f32.mrb[0].mxu0
    %445 = vdwg.mxu0
    %vm446 = vcmp.gt.f32.partialorder %v428, 0.0
    %vm447 = vcmp.gt.f32.partialorder %v433, 0.0
    %vm448 = vcmp.gt.f32.partialorder %v438, 0.0
    %vm449 = vcmp.gt.f32.partialorder %v443, 0.0
    %v450 = vmin.f32 %v428, 0.0
    %v451 = vmin.f32 %v433, 0.0
    %v452 = vmin.f32 %v438, 0.0
    %v453 = vmin.f32 %v443, 0.0
    %v454 = vmul.f32 %v450, 1.442695
    %v455 = vpow.pop %v454
    %v456 = vmul.f32 %v451, 1.442695
    %v457 = vpow.pop %v456
    %v458 = vmul.f32 %v452, 1.442695
    %v459 = vpow.pop %v458
    %v460 = vmul.f32 %v453, 1.442695
    %v461 = vpow.pop %v460
    %v462 = vsub.f32 %v455, 1.0
    %v463 = vsub.f32 %v457, 1.0
    %v464 = vsub.f32 %v459, 1.0
    %v465 = vsub.f32 %v461, 1.0
    %v466 = vsel %vm446, %v428, %v462
    %v467 = vsel %vm447, %v433, %v463
    %v468 = vsel %vm448, %v438, %v464
    %v469 = vsel %vm449, %v443, %v465
    %v470 = vld [vmem:[%s5] sm:$0xff]
    %v471 = vld [vmem:[%s5 + $0x8] sm:$0xff]
    %v472 = vld [vmem:[%s5 + $0x10] sm:$0xff]
    %v473 = vld [vmem:[%s5 + $0x18] sm:$0xff]
    %v475 = vsel %vm163, %v466, 0
    %v478 = vsel %vm163, %v467, 0
    %v481 = vsel %vm163, %v468, 0
    %v484 = vsel %vm163, %v469, 0
    %486 = vmatprep.subr.mxu0 0.0
    %487 = vmatpush1.msra.mxu0 %v470
    %488 = vmatprep.subr.mxu0 0.0
    %489 = vmatpush1.msra.mxu0 %v471
    %490 = vmatprep.subr.mxu0 0.0
    %491 = vmatpush1.msra.mxu0 %v472
    %492 = vmatprep.subr.mxu0 0.0
    %493 = vmatpush1.msra.mxu0 %v473
    %494 = vmatprep.subr.mxu0 0.0
    %495 = vmatpush1.msra.mxu0 0.0
    %496 = vmatprep.subr.mxu0 0.0
    %497 = vmatpush1.msra.mxu0 0.0
    %498 = vmatprep.subr.mxu0 0.0
    %499 = vmatpush1.msra.mxu0 0.0
    %500 = vmatprep.subr.mxu0 0.0
    %501 = vmatpush1.msra.mxu0 0.0
    %502 = vmatprep.subr.mxu0 0.0
    %503 = vmatpush1.msra.mxu0 0.0
    %504 = vmatprep.subr.mxu0 0.0
    %505 = vmatpush1.msra.mxu0 0.0
    %506 = vmatprep.subr.mxu0 0.0
    %507 = vmatpush1.msra.mxu0 0.0
    %508 = vmatprep.subr.mxu0 0.0
    %509 = vmatpush1.msra.mxu0 0.0
    %510 = vmatprep.subr.mxu0 0.0
    %511 = vmatpush1.msra.mxu0 0.0
    %512 = vmatprep.subr.mxu0 0.0
    %513 = vmatpush1.msra.mxu0 0.0
    %514 = vmatprep.subr.mxu0 0.0
    %515 = vmatpush1.msra.mxu0 0.0
    %516 = vmatprep.subr.mxu0 0.0
    %517 = vmatpush1.msra.mxu0 0.0
    %518 = vmatprep.subr.mxu0 0.0
    %519 = vmatpush1.msra.mxu0 0.0
    %520 = vmatprep.subr.mxu0 0.0
    %521 = vmatpush1.msra.mxu0 0.0
    %522 = vmatprep.subr.mxu0 0.0
    %523 = vmatpush1.msra.mxu0 0.0
    %524 = vmatprep.subr.mxu0 0.0
    %525 = vmatpush1.msra.mxu0 0.0
    %526 = vmatprep.subr.mxu0 0.0
    %527 = vmatpush1.msra.mxu0 0.0
    %528 = vmatprep.subr.mxu0 0.0
    %529 = vmatpush1.msra.mxu0 0.0
    %530 = vmatprep.subr.mxu0 0.0
    %531 = vmatpush1.msra.mxu0 0.0
    %532 = vmatprep.subr.mxu0 0.0
    %533 = vmatpush1.msra.mxu0 0.0
    %534 = vmatprep.subr.mxu0 0.0
    %535 = vmatpush1.msra.mxu0 0.0
    %536 = vmatprep.subr.mxu0 0.0
    %537 = vmatpush1.msra.mxu0 0.0
    %538 = vmatprep.subr.mxu0 0.0
    %539 = vmatpush1.msra.mxu0 0.0
    %540 = vmatprep.subr.mxu0 0.0
    %541 = vmatpush1.msra.mxu0 0.0
    %542 = vmatprep.subr.mxu0 0.0
    %543 = vmatpush1.msra.mxu0 0.0
    %544 = vmatprep.subr.mxu0 0.0
    %545 = vmatpush1.msra.mxu0 0.0
    %546 = vmatprep.subr.mxu0 0.0
    %547 = vmatpush1.msra.mxu0 0.0
    %548 = vmatprep.subr.mxu0 0.0
    %549 = vmatpush1.msra.mxu0 0.0
    %550 = vmatprep.mubr.f32.mxu0 0.0
    %551 = vmatmul.mubr.f32.gmra.mrb[0].mxu0 %v475
    %v552 = vpop.f32.mrb[0].mxu0
    %v553 = vadd.f32 0.0, %v552
    %v554 = vpop.f32.mrb[0].mxu0
    %555 = vmatprep.mubr.f32.mxu0 0.0
    %556 = vmatmul.mubr.f32.gmra.mrb[0].mxu0 %v478
    %v557 = vpop.f32.mrb[0].mxu0
    %v558 = vadd.f32 0.0, %v557
    %v559 = vpop.f32.mrb[0].mxu0
    %560 = vmatprep.mubr.f32.mxu0 0.0
    %561 = vmatmul.mubr.f32.gmra.mrb[0].mxu0 %v481
    %v562 = vpop.f32.mrb[0].mxu0
    %v563 = vadd.f32 0.0, %v562
    %v564 = vpop.f32.mrb[0].mxu0
    %565 = vmatprep.mubr.f32.mxu0 0.0
    %566 = vmatmul.mubr.f32.gmra.mrb[0].mxu0 %v484
    %v567 = vpop.f32.mrb[0].mxu0
    %v568 = vadd.f32 0.0, %v567
    %v569 = vpop.f32.mrb[0].mxu0
    %570 = vdwg.mxu0
    %v571 = vld [vmem:[%s6] sm:$0xff]
    %vm572 = vcmask 64512
    %v574 = vsel %vm572, %v553, 0
    %v577 = vsel %vm572, %v558, 0
    %v580 = vsel %vm572, %v563, 0
    %v583 = vsel %vm572, %v568, 0
    %585 = vmatprep.subr.mxu0 0.0
    %586 = vmatpush1.msra.mxu0 %v571
    %587 = vmatprep.subr.mxu0 0.0
    %588 = vmatpush1.msra.mxu0 0.0
    %589 = vmatprep.subr.mxu0 0.0
    %590 = vmatpush1.msra.mxu0 0.0
    %591 = vmatprep.subr.mxu0 0.0
    %592 = vmatpush1.msra.mxu0 0.0
    %593 = vmatprep.subr.mxu0 0.0
    %594 = vmatpush1.msra.mxu0 0.0
    %595 = vmatprep.subr.mxu0 0.0
    %596 = vmatpush1.msra.mxu0 0.0
    %597 = vmatprep.subr.mxu0 0.0
    %598 = vmatpush1.msra.mxu0 0.0
    %599 = vmatprep.subr.mxu0 0.0
    %600 = vmatpush1.msra.mxu0 0.0
    %601 = vmatprep.subr.mxu0 0.0
    %602 = vmatpush1.msra.mxu0 0.0
    %603 = vmatprep.subr.mxu0 0.0
    %604 = vmatpush1.msra.mxu0 0.0
    %605 = vmatprep.subr.mxu0 0.0
    %606 = vmatpush1.msra.mxu0 0.0
    %607 = vmatprep.subr.mxu0 0.0
    %608 = vmatpush1.msra.mxu0 0.0
    %609 = vmatprep.subr.mxu0 0.0
    %610 = vmatpush1.msra.mxu0 0.0
    %611 = vmatprep.subr.mxu0 0.0
    %612 = vmatpush1.msra.mxu0 0.0
    %613 = vmatprep.subr.mxu0 0.0
    %614 = vmatpush1.msra.mxu0 0.0
    %615 = vmatprep.subr.mxu0 0.0
    %616 = vmatpush1.msra.mxu0 0.0
    %617 = vmatprep.subr.mxu0 0.0
    %618 = vmatpush1.msra.mxu0 0.0
    %619 = vmatprep.subr.mxu0 0.0
    %620 = vmatpush1.msra.mxu0 0.0
    %621 = vmatprep.subr.mxu0 0.0
    %622 = vmatpush1.msra.mxu0 0.0
    %623 = vmatprep.subr.mxu0 0.0
    %624 = vmatpush1.msra.mxu0 0.0
    %625 = vmatprep.subr.mxu0 0.0
    %626 = vmatpush1.msra.mxu0 0.0
    %627 = vmatprep.subr.mxu0 0.0
    %628 = vmatpush1.msra.mxu0 0.0
    %629 = vmatprep.subr.mxu0 0.0
    %630 = vmatpush1.msra.mxu0 0.0
    %631 = vmatprep.subr.mxu0 0.0
    %632 = vmatpush1.msra.mxu0 0.0
    %633 = vmatprep.subr.mxu0 0.0
    %634 = vmatpush1.msra.mxu0 0.0
    %635 = vmatprep.subr.mxu0 0.0
    %636 = vmatpush1.msra.mxu0 0.0
    %637 = vmatprep.subr.mxu0 0.0
    %638 = vmatpush1.msra.mxu0 0.0
    %639 = vmatprep.subr.mxu0 0.0
    %640 = vmatpush1.msra.mxu0 0.0
    %641 = vmatprep.subr.mxu0 0.0
    %642 = vmatpush1.msra.mxu0 0.0
    %643 = vmatprep.subr.mxu0 0.0
    %644 = vmatpush1.msra.mxu0 0.0
    %645 = vmatprep.subr.mxu0 0.0
    %646 = vmatpush1.msra.mxu0 0.0
    %647 = vmatprep.subr.mxu0 0.0
    %648 = vmatpush1.msra.mxu0 0.0
    %649 = vmatprep.mubr.f32.mxu0 0.0
    %650 = vmatmul.mubr.f32.gmra.mrb[0].mxu0 %v574
    %v651 = vpop.f32.mrb[0].mxu0
    %v652 = vadd.f32 0.0, %v651
    %v653 = vpop.f32.mrb[0].mxu0
    %654 = vmatprep.mubr.f32.mxu0 0.0
    %655 = vmatmul.mubr.f32.gmra.mrb[0].mxu0 %v577
    %v656 = vpop.f32.mrb[0].mxu0
    %v657 = vadd.f32 0.0, %v656
    %v658 = vpop.f32.mrb[0].mxu0
    %659 = vmatprep.mubr.f32.mxu0 0.0
    %660 = vmatmul.mubr.f32.gmra.mrb[0].mxu0 %v580
    %v661 = vpop.f32.mrb[0].mxu0
    %v662 = vadd.f32 0.0, %v661
    %v663 = vpop.f32.mrb[0].mxu0
    %664 = vmatprep.mubr.f32.mxu0 0.0
    %665 = vmatmul.mubr.f32.gmra.mrb[0].mxu0 %v583
    %v666 = vpop.f32.mrb[0].mxu0
    %v667 = vadd.f32 0.0, %v666
    %v668 = vpop.f32.mrb[0].mxu0
    %669 = vdwg.mxu0
    %v670 = vmul.f32 %v652, %v652
    %v671 = vmul.f32 %v657, %v657
    %v672 = vmul.f32 %v662, %v662
    %v673 = vmul.f32 %v667, %v667
    %v674 = vsel %vm572, %v670, 0.0
    %675 = vadd.xlane.f32.xlu0 %v674
    %v676 = vpop.xlane.xlu0 %675
    %v677 = vsel %vm572, %v671, 0.0
    %678 = vadd.xlane.f32.xlu0 %v677
    %v679 = vpop.xlane.xlu0 %678
    %v680 = vsel %vm572, %v672, 0.0
    %681 = vadd.xlane.f32.xlu0 %v680
    %v682 = vpop.xlane.xlu0 %681
    %v683 = vsel %vm572, %v673, 0.0
    %684 = vadd.xlane.f32.xlu0 %v683
    %v685 = vpop.xlane.xlu0 %684
    %v686 = vrsqrt.pop %v676
    %v687 = vmul.f32 %v676, %v686
    %vm688 = vcmp.eq.f32.partialorder %v676, inf
    %v689 = vsel %vm688, %v676, %v687
    %vm690 = vcmp.eq.f32.partialorder %v676, 0.0
    %v691 = vand.u32 %v676, 2147483648
    %v692 = vsel %vm690, %v691, %v689
    %v693 = vrsqrt.pop %v679
    %v694 = vmul.f32 %v679, %v693
    %vm695 = vcmp.eq.f32.partialorder %v679, inf
    %v696 = vsel %vm695, %v679, %v694
    %vm697 = vcmp.eq.f32.partialorder %v679, 0.0
    %v698 = vand.u32 %v679, 2147483648
    %v699 = vsel %vm697, %v698, %v696
    %v700 = vrsqrt.pop %v682
    %v701 = vmul.f32 %v682, %v700
    %vm702 = vcmp.eq.f32.partialorder %v682, inf
    %v703 = vsel %vm702, %v682, %v701
    %vm704 = vcmp.eq.f32.partialorder %v682, 0.0
    %v705 = vand.u32 %v682, 2147483648
    %v706 = vsel %vm704, %v705, %v703
    %v707 = vrsqrt.pop %v685
    %v708 = vmul.f32 %v685, %v707
    %vm709 = vcmp.eq.f32.partialorder %v685, inf
    %v710 = vsel %vm709, %v685, %v708
    %vm711 = vcmp.eq.f32.partialorder %v685, 0.0
    %v712 = vand.u32 %v685, 2147483648
    %v713 = vsel %vm711, %v712, %v710
    %v714 = vmax.f32 %v692, 1e-12
    %v715 = vmax.f32 %v699, 1e-12
    %v716 = vmax.f32 %v706, 1e-12
    %v717 = vmax.f32 %v713, 1e-12
    %v718 = vrcp.pop %v714
    %v719 = vmul.f32 %v652, %v718
    %v720 = vrcp.pop %v715
    %v721 = vmul.f32 %v657, %v720
    %v722 = vrcp.pop %v716
    %v723 = vmul.f32 %v662, %v722
    %v724 = vrcp.pop %v717
    %v725 = vmul.f32 %v667, %v724
    %726 = vst.msk [vmem:[%s11] sm:$0xff] %vm572, %v719
    %727 = vst.msk [vmem:[%s11 + $0x8] sm:$0xff] %vm572, %v721
    %728 = vst.msk [vmem:[%s11 + $0x10] sm:$0xff] %vm572, %v723
    %729 = vst.msk [vmem:[%s11 + $0x18] sm:$0xff] %vm572, %v725
    %v730 = vld [vmem:[%s7] sm:$0xff]
    %731 = vmatprep.subr.mxu0 0.0
    %732 = vmatpush1.msra.mxu0 %v730
    %733 = vmatprep.subr.mxu0 0.0
    %734 = vmatpush1.msra.mxu0 0.0
    %735 = vmatprep.subr.mxu0 0.0
    %736 = vmatpush1.msra.mxu0 0.0
    %737 = vmatprep.subr.mxu0 0.0
    %738 = vmatpush1.msra.mxu0 0.0
    %739 = vmatprep.subr.mxu0 0.0
    %740 = vmatpush1.msra.mxu0 0.0
    %741 = vmatprep.subr.mxu0 0.0
    %742 = vmatpush1.msra.mxu0 0.0
    %743 = vmatprep.subr.mxu0 0.0
    %744 = vmatpush1.msra.mxu0 0.0
    %745 = vmatprep.subr.mxu0 0.0
    %746 = vmatpush1.msra.mxu0 0.0
    %747 = vmatprep.subr.mxu0 0.0
    %748 = vmatpush1.msra.mxu0 0.0
    %749 = vmatprep.subr.mxu0 0.0
    %750 = vmatpush1.msra.mxu0 0.0
    %751 = vmatprep.subr.mxu0 0.0
    %752 = vmatpush1.msra.mxu0 0.0
    %753 = vmatprep.subr.mxu0 0.0
    %754 = vmatpush1.msra.mxu0 0.0
    %755 = vmatprep.subr.mxu0 0.0
    %756 = vmatpush1.msra.mxu0 0.0
    %757 = vmatprep.subr.mxu0 0.0
    %758 = vmatpush1.msra.mxu0 0.0
    %759 = vmatprep.subr.mxu0 0.0
    %760 = vmatpush1.msra.mxu0 0.0
    %761 = vmatprep.subr.mxu0 0.0
    %762 = vmatpush1.msra.mxu0 0.0
    %763 = vmatprep.subr.mxu0 0.0
    %764 = vmatpush1.msra.mxu0 0.0
    %765 = vmatprep.subr.mxu0 0.0
    %766 = vmatpush1.msra.mxu0 0.0
    %767 = vmatprep.subr.mxu0 0.0
    %768 = vmatpush1.msra.mxu0 0.0
    %769 = vmatprep.subr.mxu0 0.0
    %770 = vmatpush1.msra.mxu0 0.0
    %771 = vmatprep.subr.mxu0 0.0
    %772 = vmatpush1.msra.mxu0 0.0
    %773 = vmatprep.subr.mxu0 0.0
    %774 = vmatpush1.msra.mxu0 0.0
    %775 = vmatprep.subr.mxu0 0.0
    %776 = vmatpush1.msra.mxu0 0.0
    %777 = vmatprep.subr.mxu0 0.0
    %778 = vmatpush1.msra.mxu0 0.0
    %779 = vmatprep.subr.mxu0 0.0
    %780 = vmatpush1.msra.mxu0 0.0
    %781 = vmatprep.subr.mxu0 0.0
    %782 = vmatpush1.msra.mxu0 0.0
    %783 = vmatprep.subr.mxu0 0.0
    %784 = vmatpush1.msra.mxu0 0.0
    %785 = vmatprep.subr.mxu0 0.0
    %786 = vmatpush1.msra.mxu0 0.0
    %787 = vmatprep.subr.mxu0 0.0
    %788 = vmatpush1.msra.mxu0 0.0
    %789 = vmatprep.subr.mxu0 0.0
    %790 = vmatpush1.msra.mxu0 0.0
    %791 = vmatprep.subr.mxu0 0.0
    %792 = vmatpush1.msra.mxu0 0.0
    %793 = vmatprep.subr.mxu0 0.0
    %794 = vmatpush1.msra.mxu0 0.0
    %795 = vmatprep.mubr.f32.mxu0 0.0
    %796 = vmatmul.mubr.f32.gmra.mrb[0].mxu0 %v574
    %v797 = vpop.f32.mrb[0].mxu0
    %v798 = vadd.f32 0.0, %v797
    %v799 = vpop.f32.mrb[0].mxu0
    %800 = vmatprep.mubr.f32.mxu0 0.0
    %801 = vmatmul.mubr.f32.gmra.mrb[0].mxu0 %v577
    %v802 = vpop.f32.mrb[0].mxu0
    %v803 = vadd.f32 0.0, %v802
    %v804 = vpop.f32.mrb[0].mxu0
    %805 = vmatprep.mubr.f32.mxu0 0.0
    %806 = vmatmul.mubr.f32.gmra.mrb[0].mxu0 %v580
    %v807 = vpop.f32.mrb[0].mxu0
    %v808 = vadd.f32 0.0, %v807
    %v809 = vpop.f32.mrb[0].mxu0
    %810 = vmatprep.mubr.f32.mxu0 0.0
    %811 = vmatmul.mubr.f32.gmra.mrb[0].mxu0 %v583
    %v812 = vpop.f32.mrb[0].mxu0
    %v813 = vadd.f32 0.0, %v812
    %v814 = vpop.f32.mrb[0].mxu0
    %815 = vdwg.mxu0
    %816 = vmatprep.subr.mxu0 0.0
    %817 = vmatpush1.msra.mxu0 %v798
    %818 = vmatprep.subr.mxu0 0.0
    %819 = vmatpush1.msra.mxu0 %v803
    %820 = vmatprep.subr.mxu0 0.0
    %821 = vmatpush1.msra.mxu0 %v808
    %822 = vmatprep.subr.mxu0 0.0
    %823 = vmatpush1.msra.mxu0 %v813
    %824 = vmatprep.subr.mxu0 0.0
    %825 = vmatpush1.msra.mxu0 0.0
    %826 = vmatprep.subr.mxu0 0.0
    %827 = vmatpush1.msra.mxu0 0.0
    %828 = vmatprep.subr.mxu0 0.0
    %829 = vmatpush1.msra.mxu0 0.0
    %830 = vmatprep.subr.mxu0 0.0
    %831 = vmatpush1.msra.mxu0 0.0
    %832 = vmatprep.subr.mxu0 0.0
    %833 = vmatpush1.msra.mxu0 0.0
    %834 = vmatprep.subr.mxu0 0.0
    %835 = vmatpush1.msra.mxu0 0.0
    %836 = vmatprep.subr.mxu0 0.0
    %837 = vmatpush1.msra.mxu0 0.0
    %838 = vmatprep.subr.mxu0 0.0
    %839 = vmatpush1.msra.mxu0 0.0
    %840 = vmatprep.subr.mxu0 0.0
    %841 = vmatpush1.msra.mxu0 0.0
    %842 = vmatprep.subr.mxu0 0.0
    %843 = vmatpush1.msra.mxu0 0.0
    %844 = vmatprep.subr.mxu0 0.0
    %845 = vmatpush1.msra.mxu0 0.0
    %846 = vmatprep.subr.mxu0 0.0
    %847 = vmatpush1.msra.mxu0 0.0
    %848 = vmatprep.subr.mxu0 0.0
    %849 = vmatpush1.msra.mxu0 0.0
    %850 = vmatprep.subr.mxu0 0.0
    %851 = vmatpush1.msra.mxu0 0.0
    %852 = vmatprep.subr.mxu0 0.0
    %853 = vmatpush1.msra.mxu0 0.0
    %854 = vmatprep.subr.mxu0 0.0
    %855 = vmatpush1.msra.mxu0 0.0
    %856 = vmatprep.subr.mxu0 0.0
    %857 = vmatpush1.msra.mxu0 0.0
    %858 = vmatprep.subr.mxu0 0.0
    %859 = vmatpush1.msra.mxu0 0.0
    %860 = vmatprep.subr.mxu0 0.0
    %861 = vmatpush1.msra.mxu0 0.0
    %862 = vmatprep.subr.mxu0 0.0
    %863 = vmatpush1.msra.mxu0 0.0
    %864 = vmatprep.subr.mxu0 0.0
    %865 = vmatpush1.msra.mxu0 0.0
    %866 = vmatprep.subr.mxu0 0.0
    %867 = vmatpush1.msra.mxu0 0.0
    %868 = vmatprep.subr.mxu0 0.0
    %869 = vmatpush1.msra.mxu0 0.0
    %870 = vmatprep.subr.mxu0 0.0
    %871 = vmatpush1.msra.mxu0 0.0
    %872 = vmatprep.subr.mxu0 0.0
    %873 = vmatpush1.msra.mxu0 0.0
    %874 = vmatprep.subr.mxu0 0.0
    %875 = vmatpush1.msra.mxu0 0.0
    %876 = vmatprep.subr.mxu0 0.0
    %877 = vmatpush1.msra.mxu0 0.0
    %878 = vmatprep.subr.mxu0 0.0
    %879 = vmatpush1.msra.mxu0 0.0
    %880 = vmatprep.mubr.f32.mxu0 0.0
    %881 = vmatmul.mubr.f32.gmra.mrb[0].mxu0 %v350
    %v882 = vpop.f32.mrb[0].mxu0
    %v883 = vadd.f32 0.0, %v882
    %v884 = vpop.f32.mrb[0].mxu0
    %885 = vmatprep.mubr.f32.mxu0 0.0
    %886 = vmatmul.mubr.f32.gmra.mrb[0].mxu0 %v353
    %v887 = vpop.f32.mrb[0].mxu0
    %v888 = vadd.f32 0.0, %v887
    %v889 = vpop.f32.mrb[0].mxu0
    %890 = vmatprep.mubr.f32.mxu0 0.0
    %891 = vmatmul.mubr.f32.gmra.mrb[0].mxu0 %v356
    %v892 = vpop.f32.mrb[0].mxu0
    %v893 = vadd.f32 0.0, %v892
    %v894 = vpop.f32.mrb[0].mxu0
    %895 = vmatprep.mubr.f32.mxu0 0.0
    %896 = vmatmul.mubr.f32.gmra.mrb[0].mxu0 %v359
    %v897 = vpop.f32.mrb[0].mxu0
    %v898 = vadd.f32 0.0, %v897
    %v899 = vpop.f32.mrb[0].mxu0
    %900 = vdwg.mxu0
    %vm901 = vcmp.gt.f32.partialorder %v883, 0.0
    %vm902 = vcmp.gt.f32.partialorder %v888, 0.0
    %vm903 = vcmp.gt.f32.partialorder %v893, 0.0
    %vm904 = vcmp.gt.f32.partialorder %v898, 0.0
    %v905 = vmin.f32 %v883, 0.0
    %v906 = vmin.f32 %v888, 0.0
    %v907 = vmin.f32 %v893, 0.0
    %v908 = vmin.f32 %v898, 0.0
    %v909 = vmul.f32 %v905, 1.442695
    %v910 = vpow.pop %v909
    %v911 = vmul.f32 %v906, 1.442695
    %v912 = vpow.pop %v911
    %v913 = vmul.f32 %v907, 1.442695
    %v914 = vpow.pop %v913
    %v915 = vmul.f32 %v908, 1.442695
    %v916 = vpow.pop %v915
    %v917 = vsub.f32 %v910, 1.0
    %v918 = vsub.f32 %v912, 1.0
    %v919 = vsub.f32 %v914, 1.0
    %v920 = vsub.f32 %v916, 1.0
    %v921 = vsel %vm901, %v883, %v917
    %v922 = vsel %vm902, %v888, %v918
    %v923 = vsel %vm903, %v893, %v919
    %v924 = vsel %vm904, %v898, %v920
    %v925 = vld [vmem:[%s8] sm:$0xff]
    %v926 = vld [vmem:[%s8 + $0x8] sm:$0xff]
    %v927 = vld [vmem:[%s8 + $0x10] sm:$0xff]
    %v928 = vld [vmem:[%s8 + $0x18] sm:$0xff]
    %v930 = vsel %vm163, %v921, 0
    %v933 = vsel %vm163, %v922, 0
    %v936 = vsel %vm163, %v923, 0
    %v939 = vsel %vm163, %v924, 0
    %941 = vmatprep.subr.mxu0 0.0
    %942 = vmatpush1.msra.mxu0 %v925
    %943 = vmatprep.subr.mxu0 0.0
    %944 = vmatpush1.msra.mxu0 %v926
    %945 = vmatprep.subr.mxu0 0.0
    %946 = vmatpush1.msra.mxu0 %v927
    %947 = vmatprep.subr.mxu0 0.0
    %948 = vmatpush1.msra.mxu0 %v928
    %949 = vmatprep.subr.mxu0 0.0
    %950 = vmatpush1.msra.mxu0 0.0
    %951 = vmatprep.subr.mxu0 0.0
    %952 = vmatpush1.msra.mxu0 0.0
    %953 = vmatprep.subr.mxu0 0.0
    %954 = vmatpush1.msra.mxu0 0.0
    %955 = vmatprep.subr.mxu0 0.0
    %956 = vmatpush1.msra.mxu0 0.0
    %957 = vmatprep.subr.mxu0 0.0
    %958 = vmatpush1.msra.mxu0 0.0
    %959 = vmatprep.subr.mxu0 0.0
    %960 = vmatpush1.msra.mxu0 0.0
    %961 = vmatprep.subr.mxu0 0.0
    %962 = vmatpush1.msra.mxu0 0.0
    %963 = vmatprep.subr.mxu0 0.0
    %964 = vmatpush1.msra.mxu0 0.0
    %965 = vmatprep.subr.mxu0 0.0
    %966 = vmatpush1.msra.mxu0 0.0
    %967 = vmatprep.subr.mxu0 0.0
    %968 = vmatpush1.msra.mxu0 0.0
    %969 = vmatprep.subr.mxu0 0.0
    %970 = vmatpush1.msra.mxu0 0.0
    %971 = vmatprep.subr.mxu0 0.0
    %972 = vmatpush1.msra.mxu0 0.0
    %973 = vmatprep.subr.mxu0 0.0
    %974 = vmatpush1.msra.mxu0 0.0
    %975 = vmatprep.subr.mxu0 0.0
    %976 = vmatpush1.msra.mxu0 0.0
    %977 = vmatprep.subr.mxu0 0.0
    %978 = vmatpush1.msra.mxu0 0.0
    %979 = vmatprep.subr.mxu0 0.0
    %980 = vmatpush1.msra.mxu0 0.0
    %981 = vmatprep.subr.mxu0 0.0
    %982 = vmatpush1.msra.mxu0 0.0
    %983 = vmatprep.subr.mxu0 0.0
    %984 = vmatpush1.msra.mxu0 0.0
    %985 = vmatprep.subr.mxu0 0.0
    %986 = vmatpush1.msra.mxu0 0.0
    %987 = vmatprep.subr.mxu0 0.0
    %988 = vmatpush1.msra.mxu0 0.0
    %989 = vmatprep.subr.mxu0 0.0
    %990 = vmatpush1.msra.mxu0 0.0
    %991 = vmatprep.subr.mxu0 0.0
    %992 = vmatpush1.msra.mxu0 0.0
    %993 = vmatprep.subr.mxu0 0.0
    %994 = vmatpush1.msra.mxu0 0.0
    %995 = vmatprep.subr.mxu0 0.0
    %996 = vmatpush1.msra.mxu0 0.0
    %997 = vmatprep.subr.mxu0 0.0
    %998 = vmatpush1.msra.mxu0 0.0
    %999 = vmatprep.subr.mxu0 0.0
    %1000 = vmatpush1.msra.mxu0 0.0
    %1001 = vmatprep.subr.mxu0 0.0
    %1002 = vmatpush1.msra.mxu0 0.0
    %1003 = vmatprep.subr.mxu0 0.0
    %1004 = vmatpush1.msra.mxu0 0.0
    %1005 = vmatprep.mubr.f32.mxu0 0.0
    %1006 = vmatmul.mubr.f32.gmra.mrb[0].mxu0 %v930
    %v1007 = vpop.f32.mrb[0].mxu0
    %v1008 = vadd.f32 0.0, %v1007
    %v1009 = vpop.f32.mrb[0].mxu0
    %1010 = vmatprep.mubr.f32.mxu0 0.0
    %1011 = vmatmul.mubr.f32.gmra.mrb[0].mxu0 %v933
    %v1012 = vpop.f32.mrb[0].mxu0
    %v1013 = vadd.f32 0.0, %v1012
    %v1014 = vpop.f32.mrb[0].mxu0
    %1015 = vmatprep.mubr.f32.mxu0 0.0
    %1016 = vmatmul.mubr.f32.gmra.mrb[0].mxu0 %v936
    %v1017 = vpop.f32.mrb[0].mxu0
    %v1018 = vadd.f32 0.0, %v1017
    %v1019 = vpop.f32.mrb[0].mxu0
    %1020 = vmatprep.mubr.f32.mxu0 0.0
    %1021 = vmatmul.mubr.f32.gmra.mrb[0].mxu0 %v939
    %v1022 = vpop.f32.mrb[0].mxu0
    %v1023 = vadd.f32 0.0, %v1022
    %v1024 = vpop.f32.mrb[0].mxu0
    %1025 = vdwg.mxu0
    %1026 = vst.msk [vmem:[%s12] sm:$0xff] %vm55, %v1008
    %1027 = vst.msk [vmem:[%s12 + $0x8] sm:$0xff] %vm55, %v1013
    %1028 = vst.msk [vmem:[%s12 + $0x10] sm:$0xff] %vm55, %v1018
    %1029 = vst.msk [vmem:[%s12 + $0x18] sm:$0xff] %vm55, %v1023
    %v1031 = vsel %vm163, %v47, 0
    %v1034 = vsel %vm163, %v48, 0
    %v1037 = vsel %vm163, %v49, 0
    %v1040 = vsel %vm163, %v50, 0
    %1042 = vmatprep.subr.mxu0 0.0
    %1043 = vmatpush1.msra.mxu0 %v719
    %1044 = vmatprep.subr.mxu0 0.0
    %1045 = vmatpush1.msra.mxu0 %v721
    %1046 = vmatprep.subr.mxu0 0.0
    %1047 = vmatpush1.msra.mxu0 %v723
    %1048 = vmatprep.subr.mxu0 0.0
    %1049 = vmatpush1.msra.mxu0 %v725
    %1050 = vmatprep.subr.mxu0 0.0
    %1051 = vmatpush1.msra.mxu0 0.0
    %1052 = vmatprep.subr.mxu0 0.0
    %1053 = vmatpush1.msra.mxu0 0.0
    %1054 = vmatprep.subr.mxu0 0.0
    %1055 = vmatpush1.msra.mxu0 0.0
    %1056 = vmatprep.subr.mxu0 0.0
    %1057 = vmatpush1.msra.mxu0 0.0
    %1058 = vmatprep.subr.mxu0 0.0
    %1059 = vmatpush1.msra.mxu0 0.0
    %1060 = vmatprep.subr.mxu0 0.0
    %1061 = vmatpush1.msra.mxu0 0.0
    %1062 = vmatprep.subr.mxu0 0.0
    %1063 = vmatpush1.msra.mxu0 0.0
    %1064 = vmatprep.subr.mxu0 0.0
    %1065 = vmatpush1.msra.mxu0 0.0
    %1066 = vmatprep.subr.mxu0 0.0
    %1067 = vmatpush1.msra.mxu0 0.0
    %1068 = vmatprep.subr.mxu0 0.0
    %1069 = vmatpush1.msra.mxu0 0.0
    %1070 = vmatprep.subr.mxu0 0.0
    %1071 = vmatpush1.msra.mxu0 0.0
    %1072 = vmatprep.subr.mxu0 0.0
    %1073 = vmatpush1.msra.mxu0 0.0
    %1074 = vmatprep.subr.mxu0 0.0
    %1075 = vmatpush1.msra.mxu0 0.0
    %1076 = vmatprep.subr.mxu0 0.0
    %1077 = vmatpush1.msra.mxu0 0.0
    %1078 = vmatprep.subr.mxu0 0.0
    %1079 = vmatpush1.msra.mxu0 0.0
    %1080 = vmatprep.subr.mxu0 0.0
    %1081 = vmatpush1.msra.mxu0 0.0
    %1082 = vmatprep.subr.mxu0 0.0
    %1083 = vmatpush1.msra.mxu0 0.0
    %1084 = vmatprep.subr.mxu0 0.0
    %1085 = vmatpush1.msra.mxu0 0.0
    %1086 = vmatprep.subr.mxu0 0.0
    %1087 = vmatpush1.msra.mxu0 0.0
    %1088 = vmatprep.subr.mxu0 0.0
    %1089 = vmatpush1.msra.mxu0 0.0
    %1090 = vmatprep.subr.mxu0 0.0
    %1091 = vmatpush1.msra.mxu0 0.0
    %1092 = vmatprep.subr.mxu0 0.0
    %1093 = vmatpush1.msra.mxu0 0.0
    %1094 = vmatprep.subr.mxu0 0.0
    %1095 = vmatpush1.msra.mxu0 0.0
    %1096 = vmatprep.subr.mxu0 0.0
    %1097 = vmatpush1.msra.mxu0 0.0
    %1098 = vmatprep.subr.mxu0 0.0
    %1099 = vmatpush1.msra.mxu0 0.0
    %1100 = vmatprep.subr.mxu0 0.0
    %1101 = vmatpush1.msra.mxu0 0.0
    %1102 = vmatprep.subr.mxu0 0.0
    %1103 = vmatpush1.msra.mxu0 0.0
    %1104 = vmatprep.subr.mxu0 0.0
    %1105 = vmatpush1.msra.mxu0 0.0
    %1106 = vmatprep.mubr.f32.mxu0 0.0
    %1107 = vmatmul.mubr.f32.gmra.mrb[0].mxu0 %v1031
    %v1108 = vpop.f32.mrb[0].mxu0
    %v1109 = vadd.f32 0.0, %v1108
    %v1110 = vpop.f32.mrb[0].mxu0
    %1111 = vmatprep.mubr.f32.mxu0 0.0
    %1112 = vmatmul.mubr.f32.gmra.mrb[0].mxu0 %v1034
    %v1113 = vpop.f32.mrb[0].mxu0
    %v1114 = vadd.f32 0.0, %v1113
    %v1115 = vpop.f32.mrb[0].mxu0
    %1116 = vmatprep.mubr.f32.mxu0 0.0
    %1117 = vmatmul.mubr.f32.gmra.mrb[0].mxu0 %v1037
    %v1118 = vpop.f32.mrb[0].mxu0
    %v1119 = vadd.f32 0.0, %v1118
    %v1120 = vpop.f32.mrb[0].mxu0
    %1121 = vmatprep.mubr.f32.mxu0 0.0
    %1122 = vmatmul.mubr.f32.gmra.mrb[0].mxu0 %v1040
    %v1123 = vpop.f32.mrb[0].mxu0
    %v1124 = vadd.f32 0.0, %v1123
    %v1125 = vpop.f32.mrb[0].mxu0
    %1126 = vdwg.mxu0
    %v1127 = vsel %vm163, %v47, 0.0
    %1128 = vadd.xlane.f32.xlu0 %v1127
    %v1129 = vpop.xlane.xlu0 %1128
    %v1130 = vsel %vm163, %v48, 0.0
    %1131 = vadd.xlane.f32.xlu0 %v1130
    %v1132 = vpop.xlane.xlu0 %1131
    %v1133 = vsel %vm163, %v49, 0.0
    %1134 = vadd.xlane.f32.xlu0 %v1133
    %v1135 = vpop.xlane.xlu0 %1134
    %v1136 = vsel %vm163, %v50, 0.0
    %1137 = vadd.xlane.f32.xlu0 %v1136
    %v1138 = vpop.xlane.xlu0 %1137
    %v1139 = vrcp.pop %v1129
    %v1140 = vmul.f32 %v1109, %v1139
    %v1141 = vrcp.pop %v1132
    %v1142 = vmul.f32 %v1114, %v1141
    %v1143 = vrcp.pop %v1135
    %v1144 = vmul.f32 %v1119, %v1143
    %v1145 = vrcp.pop %v1138
    %v1146 = vmul.f32 %v1124, %v1145
    %v1147 = vmul.f32 %v1140, %v1140
    %v1148 = vmul.f32 %v1142, %v1142
    %v1149 = vmul.f32 %v1144, %v1144
    %v1150 = vmul.f32 %v1146, %v1146
    %v1151 = vsel %vm572, %v1147, 0.0
    %1152 = vadd.xlane.f32.xlu0 %v1151
    %v1153 = vpop.xlane.xlu0 %1152
    %v1154 = vsel %vm572, %v1148, 0.0
    %1155 = vadd.xlane.f32.xlu0 %v1154
    %v1156 = vpop.xlane.xlu0 %1155
    %v1157 = vsel %vm572, %v1149, 0.0
    %1158 = vadd.xlane.f32.xlu0 %v1157
    %v1159 = vpop.xlane.xlu0 %1158
    %v1160 = vsel %vm572, %v1150, 0.0
    %1161 = vadd.xlane.f32.xlu0 %v1160
    %v1162 = vpop.xlane.xlu0 %1161
    %v1163 = vrsqrt.pop %v1153
    %v1164 = vmul.f32 %v1153, %v1163
    %vm1165 = vcmp.eq.f32.partialorder %v1153, inf
    %v1166 = vsel %vm1165, %v1153, %v1164
    %vm1167 = vcmp.eq.f32.partialorder %v1153, 0.0
    %v1168 = vand.u32 %v1153, 2147483648
    %v1169 = vsel %vm1167, %v1168, %v1166
    %v1170 = vrsqrt.pop %v1156
    %v1171 = vmul.f32 %v1156, %v1170
    %vm1172 = vcmp.eq.f32.partialorder %v1156, inf
    %v1173 = vsel %vm1172, %v1156, %v1171
    %vm1174 = vcmp.eq.f32.partialorder %v1156, 0.0
    %v1175 = vand.u32 %v1156, 2147483648
    %v1176 = vsel %vm1174, %v1175, %v1173
    %v1177 = vrsqrt.pop %v1159
    %v1178 = vmul.f32 %v1159, %v1177
    %vm1179 = vcmp.eq.f32.partialorder %v1159, inf
    %v1180 = vsel %vm1179, %v1159, %v1178
    %vm1181 = vcmp.eq.f32.partialorder %v1159, 0.0
    %v1182 = vand.u32 %v1159, 2147483648
    %v1183 = vsel %vm1181, %v1182, %v1180
    %v1184 = vrsqrt.pop %v1162
    %v1185 = vmul.f32 %v1162, %v1184
    %vm1186 = vcmp.eq.f32.partialorder %v1162, inf
    %v1187 = vsel %vm1186, %v1162, %v1185
    %vm1188 = vcmp.eq.f32.partialorder %v1162, 0.0
    %v1189 = vand.u32 %v1162, 2147483648
    %v1190 = vsel %vm1188, %v1189, %v1187
    %v1191 = vmax.f32 %v1169, 1e-12
    %v1192 = vmax.f32 %v1176, 1e-12
    %v1193 = vmax.f32 %v1183, 1e-12
    %v1194 = vmax.f32 %v1190, 1e-12
    %v1195 = vrcp.pop %v1191
    %v1196 = vmul.f32 %v1140, %v1195
    %v1197 = vrcp.pop %v1192
    %v1198 = vmul.f32 %v1142, %v1197
    %v1199 = vrcp.pop %v1193
    %v1200 = vmul.f32 %v1144, %v1199
    %v1201 = vrcp.pop %v1194
    %v1202 = vmul.f32 %v1146, %v1201
    %v1203 = vxor.u32 %v1196, 2147483648
    %v1204 = vxor.u32 %v1198, 2147483648
    %v1205 = vxor.u32 %v1200, 2147483648
    %v1206 = vxor.u32 %v1202, 2147483648
    %v1207 = vmul.f32 %v1203, 1.442695
    %v1208 = vpow.pop %v1207
    %v1209 = vmul.f32 %v1204, 1.442695
    %v1210 = vpow.pop %v1209
    %v1211 = vmul.f32 %v1205, 1.442695
    %v1212 = vpow.pop %v1211
    %v1213 = vmul.f32 %v1206, 1.442695
    %v1214 = vpow.pop %v1213
    %v1215 = vadd.f32 %v1208, 1.0
    %v1216 = vadd.f32 %v1210, 1.0
    %v1217 = vadd.f32 %v1212, 1.0
    %v1218 = vadd.f32 %v1214, 1.0
    %v1219 = vrcp.pop %v1215
    %v1220 = vmul.f32 1.0, %v1219
    %v1221 = vrcp.pop %v1216
    %v1222 = vmul.f32 1.0, %v1221
    %v1223 = vrcp.pop %v1217
    %v1224 = vmul.f32 1.0, %v1223
    %v1225 = vrcp.pop %v1218
    %v1226 = vmul.f32 1.0, %v1225
    %1227 = vst.msk [vmem:[%s13] sm:$0xff] %vm572, %v1220
    %1228 = vst.msk [vmem:[%s13 + $0x8] sm:$0xff] %vm572, %v1222
    %1229 = vst.msk [vmem:[%s13 + $0x10] sm:$0xff] %vm572, %v1224
    %1230 = vst.msk [vmem:[%s13 + $0x18] sm:$0xff] %vm572, %v1226
    %v1231 = vmul.f32 %v1220, %v1220
    %v1232 = vmul.f32 %v1222, %v1222
    %v1233 = vmul.f32 %v1224, %v1224
    %v1234 = vmul.f32 %v1226, %v1226
    %v1235 = vsel %vm572, %v1231, 0.0
    %1236 = vadd.xlane.f32.xlu0 %v1235
    %v1237 = vpop.xlane.xlu0 %1236
    %v1238 = vsel %vm572, %v1232, 0.0
    %1239 = vadd.xlane.f32.xlu0 %v1238
    %v1240 = vpop.xlane.xlu0 %1239
    %v1241 = vsel %vm572, %v1233, 0.0
    %1242 = vadd.xlane.f32.xlu0 %v1241
    %v1243 = vpop.xlane.xlu0 %1242
    %v1244 = vsel %vm572, %v1234, 0.0
    %1245 = vadd.xlane.f32.xlu0 %v1244
    %v1246 = vpop.xlane.xlu0 %1245
    %v1247 = vrsqrt.pop %v1237
    %v1248 = vmul.f32 %v1237, %v1247
    %vm1249 = vcmp.eq.f32.partialorder %v1237, inf
    %v1250 = vsel %vm1249, %v1237, %v1248
    %vm1251 = vcmp.eq.f32.partialorder %v1237, 0.0
    %v1252 = vand.u32 %v1237, 2147483648
    %v1253 = vsel %vm1251, %v1252, %v1250
    %v1254 = vrsqrt.pop %v1240
    %v1255 = vmul.f32 %v1240, %v1254
    %vm1256 = vcmp.eq.f32.partialorder %v1240, inf
    %v1257 = vsel %vm1256, %v1240, %v1255
    %vm1258 = vcmp.eq.f32.partialorder %v1240, 0.0
    %v1259 = vand.u32 %v1240, 2147483648
    %v1260 = vsel %vm1258, %v1259, %v1257
    %v1261 = vrsqrt.pop %v1243
    %v1262 = vmul.f32 %v1243, %v1261
    %vm1263 = vcmp.eq.f32.partialorder %v1243, inf
    %v1264 = vsel %vm1263, %v1243, %v1262
    %vm1265 = vcmp.eq.f32.partialorder %v1243, 0.0
    %v1266 = vand.u32 %v1243, 2147483648
    %v1267 = vsel %vm1265, %v1266, %v1264
    %v1268 = vrsqrt.pop %v1246
    %v1269 = vmul.f32 %v1246, %v1268
    %vm1270 = vcmp.eq.f32.partialorder %v1246, inf
    %v1271 = vsel %vm1270, %v1246, %v1269
    %vm1272 = vcmp.eq.f32.partialorder %v1246, 0.0
    %v1273 = vand.u32 %v1246, 2147483648
    %v1274 = vsel %vm1272, %v1273, %v1271
    %v1275 = vmax.f32 %v1253, 1e-12
    %v1276 = vmax.f32 %v1260, 1e-12
    %v1277 = vmax.f32 %v1267, 1e-12
    %v1278 = vmax.f32 %v1274, 1e-12
    %v1279 = vrcp.pop %v1275
    %v1280 = vmul.f32 %v1220, %v1279
    %v1281 = vrcp.pop %v1276
    %v1282 = vmul.f32 %v1222, %v1281
    %v1283 = vrcp.pop %v1277
    %v1284 = vmul.f32 %v1224, %v1283
    %v1285 = vrcp.pop %v1278
    %v1286 = vmul.f32 %v1226, %v1285
    %v1288 = vsel %vm572, %v1280, 0
    %v1291 = vsel %vm572, %v1282, 0
    %v1294 = vsel %vm572, %v1284, 0
    %v1297 = vsel %vm572, %v1286, 0
    %1299 = vmatprep.subr.mxu0 0.0
    %1300 = vmatpush1.xpose.msra.mxu0 %v1288
    %1301 = vmatprep.subr.mxu0 0.0
    %1302 = vmatpush1.xpose.msra.mxu0 %v1291
    %1303 = vmatprep.subr.mxu0 0.0
    %1304 = vmatpush1.xpose.msra.mxu0 %v1294
    %1305 = vmatprep.subr.mxu0 0.0
    %1306 = vmatpush1.xpose.msra.mxu0 %v1297
    %1307 = vmatprep.subr.mxu0 0.0
    %1308 = vmatpush1.xpose.msra.mxu0 0.0
    %1309 = vmatprep.subr.mxu0 0.0
    %1310 = vmatpush1.xpose.msra.mxu0 0.0
    %1311 = vmatprep.subr.mxu0 0.0
    %1312 = vmatpush1.xpose.msra.mxu0 0.0
    %1313 = vmatprep.subr.mxu0 0.0
    %1314 = vmatpush1.xpose.msra.mxu0 0.0
    %1315 = vmatprep.subr.mxu0 0.0
    %1316 = vmatpush1.xpose.msra.mxu0 0.0
    %1317 = vmatprep.subr.mxu0 0.0
    %1318 = vmatpush1.xpose.msra.mxu0 0.0
    %1319 = vmatprep.subr.mxu0 0.0
    %1320 = vmatpush1.xpose.msra.mxu0 0.0
    %1321 = vmatprep.subr.mxu0 0.0
    %1322 = vmatpush1.xpose.msra.mxu0 0.0
    %1323 = vmatprep.subr.mxu0 0.0
    %1324 = vmatpush1.xpose.msra.mxu0 0.0
    %1325 = vmatprep.subr.mxu0 0.0
    %1326 = vmatpush1.xpose.msra.mxu0 0.0
    %1327 = vmatprep.subr.mxu0 0.0
    %1328 = vmatpush1.xpose.msra.mxu0 0.0
    %1329 = vmatprep.subr.mxu0 0.0
    %1330 = vmatpush1.xpose.msra.mxu0 0.0
    %1331 = vmatprep.subr.mxu0 0.0
    %1332 = vmatpush1.xpose.msra.mxu0 0.0
    %1333 = vmatprep.subr.mxu0 0.0
    %1334 = vmatpush1.xpose.msra.mxu0 0.0
    %1335 = vmatprep.subr.mxu0 0.0
    %1336 = vmatpush1.xpose.msra.mxu0 0.0
    %1337 = vmatprep.subr.mxu0 0.0
    %1338 = vmatpush1.xpose.msra.mxu0 0.0
    %1339 = vmatprep.subr.mxu0 0.0
    %1340 = vmatpush1.xpose.msra.mxu0 0.0
    %1341 = vmatprep.subr.mxu0 0.0
    %1342 = vmatpush1.xpose.msra.mxu0 0.0
    %1343 = vmatprep.subr.mxu0 0.0
    %1344 = vmatpush1.xpose.msra.mxu0 0.0
    %1345 = vmatprep.subr.mxu0 0.0
    %1346 = vmatpush1.xpose.msra.mxu0 0.0
    %1347 = vmatprep.subr.mxu0 0.0
    %1348 = vmatpush1.xpose.msra.mxu0 0.0
    %1349 = vmatprep.subr.mxu0 0.0
    %1350 = vmatpush1.xpose.msra.mxu0 0.0
    %1351 = vmatprep.subr.mxu0 0.0
    %1352 = vmatpush1.xpose.msra.mxu0 0.0
    %1353 = vmatprep.subr.mxu0 0.0
    %1354 = vmatpush1.xpose.msra.mxu0 0.0
    %1355 = vmatprep.subr.mxu0 0.0
    %1356 = vmatpush1.xpose.msra.mxu0 0.0
    %1357 = vmatprep.subr.mxu0 0.0
    %1358 = vmatpush1.xpose.msra.mxu0 0.0
    %1359 = vmatprep.subr.mxu0 0.0
    %1360 = vmatpush1.xpose.msra.mxu0 0.0
    %1361 = vmatprep.subr.mxu0 0.0
    %1362 = vmatpush1.xpose.msra.mxu0 0.0
    %1363 = vmatprep.mubr.f32.mxu0 0.0
    %1364 = vmatmul.mubr.f32.gmra.mrb[0].mxu0 %v1288
    %v1365 = vpop.f32.mrb[0].mxu0
    %v1366 = vadd.f32 0.0, %v1365
    %v1367 = vpop.f32.mrb[0].mxu0
    %1368 = vmatprep.mubr.f32.mxu0 0.0
    %1369 = vmatmul.mubr.f32.gmra.mrb[0].mxu0 %v1291
    %v1370 = vpop.f32.mrb[0].mxu0
    %v1371 = vadd.f32 0.0, %v1370
    %v1372 = vpop.f32.mrb[0].mxu0
    %1373 = vmatprep.mubr.f32.mxu0 0.0
    %1374 = vmatmul.mubr.f32.gmra.mrb[0].mxu0 %v1294
    %v1375 = vpop.f32.mrb[0].mxu0
    %v1376 = vadd.f32 0.0, %v1375
    %v1377 = vpop.f32.mrb[0].mxu0
    %1378 = vmatprep.mubr.f32.mxu0 0.0
    %1379 = vmatmul.mubr.f32.gmra.mrb[0].mxu0 %v1297
    %v1380 = vpop.f32.mrb[0].mxu0
    %v1381 = vadd.f32 0.0, %v1380
    %v1382 = vpop.f32.mrb[0].mxu0
    %1383 = vdwg.mxu0
    %v1384 = vxor.u32 %v1366, 2147483648
    %v1385 = vxor.u32 %v1371, 2147483648
    %v1386 = vxor.u32 %v1376, 2147483648
    %v1387 = vxor.u32 %v1381, 2147483648
    %v1388 = vmul.f32 %v1384, 1.442695
    %v1389 = vpow.pop %v1388
    %v1390 = vmul.f32 %v1385, 1.442695
    %v1391 = vpow.pop %v1390
    %v1392 = vmul.f32 %v1386, 1.442695
    %v1393 = vpow.pop %v1392
    %v1394 = vmul.f32 %v1387, 1.442695
    %v1395 = vpow.pop %v1394
    %v1396 = vadd.f32 %v1389, 1.0
    %v1397 = vadd.f32 %v1391, 1.0
    %v1398 = vadd.f32 %v1393, 1.0
    %v1399 = vadd.f32 %v1395, 1.0
    %v1400 = vrcp.pop %v1396
    %v1401 = vmul.f32 1.0, %v1400
    %v1402 = vrcp.pop %v1397
    %v1403 = vmul.f32 1.0, %v1402
    %v1404 = vrcp.pop %v1398
    %v1405 = vmul.f32 1.0, %v1404
    %v1406 = vrcp.pop %v1399
    %v1407 = vmul.f32 1.0, %v1406
    %v1408 = vld [vmem:[%s9] sm:$0xff]
    %v1409 = vld [vmem:[%s9 + $0x8] sm:$0xff]
    %v1410 = vld [vmem:[%s9 + $0x10] sm:$0xff]
    %v1411 = vld [vmem:[%s9 + $0x18] sm:$0xff]
    %v1412 = vlog2.pop %v1401
    %v1413 = vmul.f32 %v1412, 0.6931472
    %v1414 = vlog2.pop %v1403
    %v1415 = vmul.f32 %v1414, 0.6931472
    %v1416 = vlog2.pop %v1405
    %v1417 = vmul.f32 %v1416, 0.6931472
    %v1418 = vlog2.pop %v1407
    %v1419 = vmul.f32 %v1418, 0.6931472
    %v1420 = vmul.f32 %v1408, %v1413
    %v1421 = vmul.f32 %v1409, %v1415
    %v1422 = vmul.f32 %v1410, %v1417
    %v1423 = vmul.f32 %v1411, %v1419
    %v1424 = vsel %vm163, %v1420, 0.0
    %1425 = vadd.xlane.f32.xlu0 %v1424
    %v1426 = vpop.xlane.xlu0 %1425
    %v1427 = vsel %vm163, %v1421, 0.0
    %1428 = vadd.xlane.f32.xlu0 %v1427
    %v1429 = vpop.xlane.xlu0 %1428
    %v1430 = vsel %vm163, %v1422, 0.0
    %1431 = vadd.xlane.f32.xlu0 %v1430
    %v1432 = vpop.xlane.xlu0 %1431
    %v1433 = vsel %vm163, %v1423, 0.0
    %1434 = vadd.xlane.f32.xlu0 %v1433
    %v1435 = vpop.xlane.xlu0 %1434
    %v1436 = vadd.f32 %v1426, %v1429
    %v1437 = vadd.f32 %v1436, %v1432
    %v1438 = vadd.f32 %v1437, %v1435
    %v1439 = vrot.slane %v1438, 4
    %v1440 = vadd.f32 %v1438, %v1439
    %v1441 = vrot.slane %v1440, 2
    %v1442 = vadd.f32 %v1440, %v1441
    %v1443 = vrot.slane %v1442, 1
    %v1444 = vadd.f32 %v1442, %v1443
    %v1445 = vrcp.pop 1024.0
    %v1446 = vmul.f32 %v1444, %v1445
    %v1447 = vld [vmem:[%s10] sm:$0xff]
    %v1448 = vld [vmem:[%s10 + $0x8] sm:$0xff]
    %v1449 = vld [vmem:[%s10 + $0x10] sm:$0xff]
    %v1450 = vld [vmem:[%s10 + $0x18] sm:$0xff]
    %v1451 = vsub.f32 1.0, %v1401
    %v1452 = vsub.f32 1.0, %v1403
    %v1453 = vsub.f32 1.0, %v1405
    %v1454 = vsub.f32 1.0, %v1407
    %v1455 = vlog2.pop %v1451
    %v1456 = vmul.f32 %v1455, 0.6931472
    %v1457 = vlog2.pop %v1452
    %v1458 = vmul.f32 %v1457, 0.6931472
    %v1459 = vlog2.pop %v1453
    %v1460 = vmul.f32 %v1459, 0.6931472
    %v1461 = vlog2.pop %v1454
    %v1462 = vmul.f32 %v1461, 0.6931472
    %v1463 = vmul.f32 %v1447, %v1456
    %v1464 = vmul.f32 %v1448, %v1458
    %v1465 = vmul.f32 %v1449, %v1460
    %v1466 = vmul.f32 %v1450, %v1462
    %v1467 = vsel %vm163, %v1463, 0.0
    %1468 = vadd.xlane.f32.xlu0 %v1467
    %v1469 = vpop.xlane.xlu0 %1468
    %v1470 = vsel %vm163, %v1464, 0.0
    %1471 = vadd.xlane.f32.xlu0 %v1470
    %v1472 = vpop.xlane.xlu0 %1471
    %v1473 = vsel %vm163, %v1465, 0.0
    %1474 = vadd.xlane.f32.xlu0 %v1473
    %v1475 = vpop.xlane.xlu0 %1474
    %v1476 = vsel %vm163, %v1466, 0.0
    %1477 = vadd.xlane.f32.xlu0 %v1476
    %v1478 = vpop.xlane.xlu0 %1477
    %v1479 = vadd.f32 %v1469, %v1472
    %v1480 = vadd.f32 %v1479, %v1475
    %v1481 = vadd.f32 %v1480, %v1478
    %v1482 = vrot.slane %v1481, 4
    %v1483 = vadd.f32 %v1481, %v1482
    %v1484 = vrot.slane %v1483, 2
    %v1485 = vadd.f32 %v1483, %v1484
    %v1486 = vrot.slane %v1485, 1
    %v1487 = vadd.f32 %v1485, %v1486
    %v1488 = vmul.f32 %v1487, %v1445
    %v1489 = vadd.f32 %v1446, %v1488
    %v1490 = vsub.f32 0.0, %v1489
    %v1491 = vmul.f32 %v1490, 0.5
    %vm1492 = vcmask 0
    %1493 = vst.msk [vmem:[#allocation2] sm:$0x1] %vm1492, %v1491
    // Predicated region
    $region46: #{_moca_forward.4} parent=1 // pred_check
      _
    $region47: #{_moca_forward.4} parent=1 // pred_check_branch
      %1495 = sbr.rel (0) target = $region49
    $region48: #{_moca_forward.4} parent=1 // pred_region
      _
    $region49: #{_moca_forward.4} parent=1 // pred_fallthru
      _
    // Predicated region
    $region50: #{_moca_forward.4} parent=1 // pred_check
      _
    $region51: #{_moca_forward.4} parent=1 // pred_check_branch
      %1497 = sbr.rel (0) target = $region53
    $region52: #{_moca_forward.4} parent=1 // pred_region
      _
    $region53: #{_moca_forward.4} parent=1 // pred_fallthru
      _
    // Predicated region
    $region54: #{_moca_forward.4} parent=1 // pred_check
      _
    $region55: #{_moca_forward.4} parent=1 // pred_check_branch
      %1499 = sbr.rel (0) target = $region57
    $region56: #{_moca_forward.4} parent=1 // pred_region
      _
    $region57: #{_moca_forward.4} parent=1 // pred_fallthru
      _
    // Predicated region
    $region58: #{_moca_forward.4} parent=1 // pred_check
      _
    $region59: #{_moca_forward.4} parent=1 // pred_check_branch
      %1501 = sbr.rel (0) target = $region61
    $region60: #{_moca_forward.4} parent=1 // pred_region
      %s1503 = ssub.s32 16, 16
      %1504 = vsyncadd [#allocation3], %s1503
      %s1506 = sshll.u32 [#allocation2], 4
      %s1507 = int_to_ptr.vmem [resolvable:$true] %s1506
      %1509 = dma.vmem_to_hbm [thread:$0]  %s1507, 16, %s14, [#allocation3]
    $region61: #{_moca_forward.4} parent=1 // pred_fallthru
      _
    // Predicated region
    $region62: #{_moca_forward.4} parent=1 // pred_check
      _
    $region63: #{_moca_forward.4} parent=1 // pred_check_branch
      %1511 = sbr.rel (0) target = $region65
    $region64: #{_moca_forward.4} parent=1 // pred_region
      _
    $region65: #{_moca_forward.4} parent=1 // pred_fallthru
      _
    // Predicated region
    $region66: #{_moca_forward.4} parent=1 // pred_check
      _
    $region67: #{_moca_forward.4} parent=1 // pred_check_branch
      %1513 = sbr.rel (0) target = $region69
    $region68: #{_moca_forward.4} parent=1 // pred_region
      _
    $region69: #{_moca_forward.4} parent=1 // pred_fallthru
      _
    // Predicated region
    $region70: #{_moca_forward.4} parent=1 // pred_check
      _
    $region71: #{_moca_forward.4} parent=1 // pred_check_branch
      %1515 = sbr.rel (0) target = $region73
    $region72: #{_moca_forward.4} parent=1 // pred_region
      _
    $region73: #{_moca_forward.4} parent=1 // pred_fallthru
      _
    // Predicated region
    $region74: #{_moca_forward.4} parent=1 // pred_check
      _
    $region75: #{_moca_forward.4} parent=1 // pred_check_branch
      %1517 = sbr.rel (0) target = $region77
    $region76: #{_moca_forward.4} parent=1 // pred_region
      %1518 = dma.done [#allocation3], 16
    $region77: #{_moca_forward.4} parent=1 // pred_fallthru
      _
    %1519 = vsyncpa [#allocation3], 1

// kernel: _moca_forward.6
$region0: #{_moca_forward.6}
  #allocation0 [shape = 'u32[]', space=smem, size = 0x4, offset = 0x4, fixed_abs, tag = 'smem constant byte address 0x4 - core index']
  #allocation1 [shape = 'u32[144,128]{1,0:T(1,128)}', space=vmem, size = 0x12000, scoped, tag = 'internal scratch']
  %s0 = inlined_call_operand.vmem [shape: f32[32,8], index: 0, kind: input, shape index: {}]
  %s1 = inlined_call_operand.vmem [shape: f32[32,8], index: 1, kind: input, shape index: {}]
  %s2 = inlined_call_operand.vmem [shape: f32[8,512], index: 2, kind: input, shape index: {}]
  %s3 = inlined_call_operand.vmem [shape: f32[1,512], index: 3, kind: input, shape index: {}]
  %s4 = inlined_call_operand.vmem [shape: f32[1,512], index: 4, kind: input, shape index: {}]
  %s5 = inlined_call_operand.vmem [shape: f32[1,512], index: 5, kind: input, shape index: {}]
  %s6 = inlined_call_operand.vmem [shape: bf16[512,512], index: 6, kind: input, shape index: {}]
  %s7 = inlined_call_operand.vmem [shape: f32[1,512], index: 7, kind: input, shape index: {}]
  %s8 = inlined_call_operand.vmem [shape: f32[8,512], index: 8, kind: input, shape index: {}]
  %s9 = inlined_call_operand.vmem [shape: f32[1,512], index: 9, kind: input, shape index: {}]
  %s10 = inlined_call_operand.vmem [shape: f32[1,512], index: 10, kind: input, shape index: {}]
  %s11 = inlined_call_operand.vmem [shape: f32[1,512], index: 11, kind: input, shape index: {}]
  %s12 = inlined_call_operand.vmem [shape: bf16[512,512], index: 12, kind: input, shape index: {}]
  %s13 = inlined_call_operand.vmem [shape: f32[1,512], index: 13, kind: input, shape index: {}]
  %s14 = inlined_call_operand.hbm [shape: f32[64,512], index: 14, kind: output, shape index: {0}]
  %s15 = inlined_call_operand.vmem [shape: f32[64,512], index: 15, kind: output, shape index: {1}]
  %16 = xla_tuple %s14, %s15
  %s17 = sld [smem:[#allocation0]]
  $region74: #{_moca_forward.6} parent=0
    _
  %s19 = ssub.s32 1, %s17
  %s20 = scalar_select 0, %s19, %s17
  $region1: #{_moca_forward.6} parent=0
    #allocation2 [shape = 'u8[131072]{0}', space=vmem, size = 0x20000, scoped, tag = 'output window, operand 0, single buffered']
    #allocation3 [shape = 's32[1]{0}', space=sflag, size = 0x4, scoped, tag = 'scoped memory for _moca_forward.6']
    %21 = vsyncpa [#allocation3], 0
    // Predicated region
    $region2: #{_moca_forward.6} parent=1 // pred_check
      _
    $region3: #{_moca_forward.6} parent=1 // pred_check_branch
      %23 = sbr.rel (0) target = $region5
    $region4: #{_moca_forward.6} parent=1 // pred_region
      _
    $region5: #{_moca_forward.6} parent=1 // pred_fallthru
      _
    // Predicated region
    $region6: #{_moca_forward.6} parent=1 // pred_check
      _
    $region7: #{_moca_forward.6} parent=1 // pred_check_branch
      %25 = sbr.rel (0) target = $region9
    $region8: #{_moca_forward.6} parent=1 // pred_region
      _
    $region9: #{_moca_forward.6} parent=1 // pred_fallthru
      _
    // Predicated region
    $region10: #{_moca_forward.6} parent=1 // pred_check
      _
    $region11: #{_moca_forward.6} parent=1 // pred_check_branch
      %27 = sbr.rel (0) target = $region13
    $region12: #{_moca_forward.6} parent=1 // pred_region
      _
    $region13: #{_moca_forward.6} parent=1 // pred_fallthru
      _
    // Predicated region
    $region14: #{_moca_forward.6} parent=1 // pred_check
      _
    $region15: #{_moca_forward.6} parent=1 // pred_check_branch
      %29 = sbr.rel (0) target = $region17
    $region16: #{_moca_forward.6} parent=1 // pred_region
      _
    $region17: #{_moca_forward.6} parent=1 // pred_fallthru
      _
    // Predicated region
    $region18: #{_moca_forward.6} parent=1 // pred_check
      _
    $region19: #{_moca_forward.6} parent=1 // pred_check_branch
      %31 = sbr.rel (0) target = $region21
    $region20: #{_moca_forward.6} parent=1 // pred_region
      _
    $region21: #{_moca_forward.6} parent=1 // pred_fallthru
      _
    // Predicated region
    $region22: #{_moca_forward.6} parent=1 // pred_check
      _
    $region23: #{_moca_forward.6} parent=1 // pred_check_branch
      %33 = sbr.rel (0) target = $region25
    $region24: #{_moca_forward.6} parent=1 // pred_region
      _
    $region25: #{_moca_forward.6} parent=1 // pred_fallthru
      _
    // Predicated region
    $region26: #{_moca_forward.6} parent=1 // pred_check
      _
    $region27: #{_moca_forward.6} parent=1 // pred_check_branch
      %35 = sbr.rel (0) target = $region29
    $region28: #{_moca_forward.6} parent=1 // pred_region
      _
    $region29: #{_moca_forward.6} parent=1 // pred_fallthru
      _
    // Predicated region
    $region30: #{_moca_forward.6} parent=1 // pred_check
      _
    $region31: #{_moca_forward.6} parent=1 // pred_check_branch
      %37 = sbr.rel (0) target = $region33
    $region32: #{_moca_forward.6} parent=1 // pred_region
      _
    $region33: #{_moca_forward.6} parent=1 // pred_fallthru
      _
    // Predicated region
    $region34: #{_moca_forward.6} parent=1 // pred_check
      _
    $region35: #{_moca_forward.6} parent=1 // pred_check_branch
      %39 = sbr.rel (0) target = $region37
    $region36: #{_moca_forward.6} parent=1 // pred_region
      _
    $region37: #{_moca_forward.6} parent=1 // pred_fallthru
      _
    // Predicated region
    $region38: #{_moca_forward.6} parent=1 // pred_check
      _
    $region39: #{_moca_forward.6} parent=1 // pred_check_branch
      %41 = sbr.rel (0) target = $region41
    $region40: #{_moca_forward.6} parent=1 // pred_region
      _
    $region41: #{_moca_forward.6} parent=1 // pred_fallthru
      _
    // Predicated region
    $region42: #{_moca_forward.6} parent=1 // pred_check
      _
    $region43: #{_moca_forward.6} parent=1 // pred_check_branch
      %43 = sbr.rel (0) target = $region45
    $region44: #{_moca_forward.6} parent=1 // pred_region
      _
    $region45: #{_moca_forward.6} parent=1 // pred_fallthru
      _
    // Predicated region
    $region46: #{_moca_forward.6} parent=1 // pred_check
      _
    $region47: #{_moca_forward.6} parent=1 // pred_check_branch
      %45 = sbr.rel (0) target = $region49
    $region48: #{_moca_forward.6} parent=1 // pred_region
      _
    $region49: #{_moca_forward.6} parent=1 // pred_fallthru
      _
    // Predicated region
    $region50: #{_moca_forward.6} parent=1 // pred_check
      _
    $region51: #{_moca_forward.6} parent=1 // pred_check_branch
      %47 = sbr.rel (0) target = $region53
    $region52: #{_moca_forward.6} parent=1 // pred_region
      _
    $region53: #{_moca_forward.6} parent=1 // pred_fallthru
      _
    // Predicated region
    $region54: #{_moca_forward.6} parent=1 // pred_check
      _
    $region55: #{_moca_forward.6} parent=1 // pred_check_branch
      %49 = sbr.rel (0) target = $region57
    $region56: #{_moca_forward.6} parent=1 // pred_region
      _
    $region57: #{_moca_forward.6} parent=1 // pred_fallthru
      _
    %v50 = vld [vmem:[%s0] sm:$0xff]
    %v51 = vld [vmem:[%s0 + $0x8] sm:$0xff]
    %v52 = vld [vmem:[%s0 + $0x10] sm:$0xff]
    %v53 = vld [vmem:[%s0 + $0x18] sm:$0xff]
    %v54 = vld [vmem:[%s1] sm:$0xff]
    %v55 = vld [vmem:[%s1 + $0x8] sm:$0xff]
    %v56 = vld [vmem:[%s1 + $0x10] sm:$0xff]
    %v57 = vld [vmem:[%s1 + $0x18] sm:$0xff]
    %v58 = vld [vmem:[%s2] sm:$0xff]
    %v59 = vld [vmem:[%s2 + $0x8] sm:$0xff]
    %v60 = vld [vmem:[%s2 + $0x10] sm:$0xff]
    %v61 = vld [vmem:[%s2 + $0x18] sm:$0xff]
    %v62 = vld [vmem:[%s3] sm:$0xf]
    %v63 = vld [vmem:[%s4] sm:$0xf]
    %v64 = vld [vmem:[%s5] sm:$0xf]
    %v65 = vld [vmem:[%s6] sm:$0xff]
    %v66 = vld [vmem:[%s6 + $0x8] sm:$0xff]
    %v67 = vld [vmem:[%s6 + $0x10] sm:$0xff]
    %v68 = vld [vmem:[%s6 + $0x18] sm:$0xff]
    %v69 = vld [vmem:[%s6 + $0x20] sm:$0xff]
    %v70 = vld [vmem:[%s6 + $0x28] sm:$0xff]
    %v71 = vld [vmem:[%s6 + $0x30] sm:$0xff]
    %v72 = vld [vmem:[%s6 + $0x38] sm:$0xff]
    %v73 = vld [vmem:[%s6 + $0x40] sm:$0xff]
    %v74 = vld [vmem:[%s6 + $0x48] sm:$0xff]
    %v75 = vld [vmem:[%s6 + $0x50] sm:$0xff]
    %v76 = vld [vmem:[%s6 + $0x58] sm:$0xff]
    %v77 = vld [vmem:[%s6 + $0x60] sm:$0xff]
    %v78 = vld [vmem:[%s6 + $0x68] sm:$0xff]
    %v79 = vld [vmem:[%s6 + $0x70] sm:$0xff]
    %v80 = vld [vmem:[%s6 + $0x78] sm:$0xff]
    %v81 = vld [vmem:[%s6 + $0x80] sm:$0xff]
    %v82 = vld [vmem:[%s6 + $0x88] sm:$0xff]
    %v83 = vld [vmem:[%s6 + $0x90] sm:$0xff]
    %v84 = vld [vmem:[%s6 + $0x98] sm:$0xff]
    %v85 = vld [vmem:[%s6 + $0xa0] sm:$0xff]
    %v86 = vld [vmem:[%s6 + $0xa8] sm:$0xff]
    %v87 = vld [vmem:[%s6 + $0xb0] sm:$0xff]
    %v88 = vld [vmem:[%s6 + $0xb8] sm:$0xff]
    %v89 = vld [vmem:[%s6 + $0xc0] sm:$0xff]
    %v90 = vld [vmem:[%s6 + $0xc8] sm:$0xff]
    %v91 = vld [vmem:[%s6 + $0xd0] sm:$0xff]
    %v92 = vld [vmem:[%s6 + $0xd8] sm:$0xff]
    %v93 = vld [vmem:[%s6 + $0xe0] sm:$0xff]
    %v94 = vld [vmem:[%s6 + $0xe8] sm:$0xff]
    %v95 = vld [vmem:[%s6 + $0xf0] sm:$0xff]
    %v96 = vld [vmem:[%s6 + $0xf8] sm:$0xff]
    %v97 = vld [vmem:[%s6 + $0x100] sm:$0xff]
    %v98 = vld [vmem:[%s6 + $0x108] sm:$0xff]
    %v99 = vld [vmem:[%s6 + $0x110] sm:$0xff]
    %v100 = vld [vmem:[%s6 + $0x118] sm:$0xff]
    %v101 = vld [vmem:[%s6 + $0x120] sm:$0xff]
    %v102 = vld [vmem:[%s6 + $0x128] sm:$0xff]
    %v103 = vld [vmem:[%s6 + $0x130] sm:$0xff]
    %v104 = vld [vmem:[%s6 + $0x138] sm:$0xff]
    %v105 = vld [vmem:[%s6 + $0x140] sm:$0xff]
    %v106 = vld [vmem:[%s6 + $0x148] sm:$0xff]
    %v107 = vld [vmem:[%s6 + $0x150] sm:$0xff]
    %v108 = vld [vmem:[%s6 + $0x158] sm:$0xff]
    %v109 = vld [vmem:[%s6 + $0x160] sm:$0xff]
    %v110 = vld [vmem:[%s6 + $0x168] sm:$0xff]
    %v111 = vld [vmem:[%s6 + $0x170] sm:$0xff]
    %v112 = vld [vmem:[%s6 + $0x178] sm:$0xff]
    %v113 = vld [vmem:[%s6 + $0x180] sm:$0xff]
    %v114 = vld [vmem:[%s6 + $0x188] sm:$0xff]
    %v115 = vld [vmem:[%s6 + $0x190] sm:$0xff]
    %v116 = vld [vmem:[%s6 + $0x198] sm:$0xff]
    %v117 = vld [vmem:[%s6 + $0x1a0] sm:$0xff]
    %v118 = vld [vmem:[%s6 + $0x1a8] sm:$0xff]
    %v119 = vld [vmem:[%s6 + $0x1b0] sm:$0xff]
    %v120 = vld [vmem:[%s6 + $0x1b8] sm:$0xff]
    %v121 = vld [vmem:[%s6 + $0x1c0] sm:$0xff]
    %v122 = vld [vmem:[%s6 + $0x1c8] sm:$0xff]
    %v123 = vld [vmem:[%s6 + $0x1d0] sm:$0xff]
    %v124 = vld [vmem:[%s6 + $0x1d8] sm:$0xff]
    %v125 = vld [vmem:[%s6 + $0x1e0] sm:$0xff]
    %v126 = vld [vmem:[%s6 + $0x1e8] sm:$0xff]
    %v127 = vld [vmem:[%s6 + $0x1f0] sm:$0xff]
    %v128 = vld [vmem:[%s6 + $0x1f8] sm:$0xff]
    %v129 = vld [vmem:[%s6 + $0x200] sm:$0xff]
    %v130 = vld [vmem:[%s6 + $0x208] sm:$0xff]
    %v131 = vld [vmem:[%s6 + $0x210] sm:$0xff]
    %v132 = vld [vmem:[%s6 + $0x218] sm:$0xff]
    %v133 = vld [vmem:[%s6 + $0x220] sm:$0xff]
    %v134 = vld [vmem:[%s6 + $0x228] sm:$0xff]
    %v135 = vld [vmem:[%s6 + $0x230] sm:$0xff]
    %v136 = vld [vmem:[%s6 + $0x238] sm:$0xff]
    %v137 = vld [vmem:[%s6 + $0x240] sm:$0xff]
    %v138 = vld [vmem:[%s6 + $0x248] sm:$0xff]
    %v139 = vld [vmem:[%s6 + $0x250] sm:$0xff]
    %v140 = vld [vmem:[%s6 + $0x258] sm:$0xff]
    %v141 = vld [vmem:[%s6 + $0x260] sm:$0xff]
    %v142 = vld [vmem:[%s6 + $0x268] sm:$0xff]
    %v143 = vld [vmem:[%s6 + $0x270] sm:$0xff]
    %v144 = vld [vmem:[%s6 + $0x278] sm:$0xff]
    %v145 = vld [vmem:[%s6 + $0x280] sm:$0xff]
    %v146 = vld [vmem:[%s6 + $0x288] sm:$0xff]
    %v147 = vld [vmem:[%s6 + $0x290] sm:$0xff]
    %v148 = vld [vmem:[%s6 + $0x298] sm:$0xff]
    %v149 = vld [vmem:[%s6 + $0x2a0] sm:$0xff]
    %v150 = vld [vmem:[%s6 + $0x2a8] sm:$0xff]
    %v151 = vld [vmem:[%s6 + $0x2b0] sm:$0xff]
    %v152 = vld [vmem:[%s6 + $0x2b8] sm:$0xff]
    %v153 = vld [vmem:[%s6 + $0x2c0] sm:$0xff]
    %v154 = vld [vmem:[%s6 + $0x2c8] sm:$0xff]
    %v155 = vld [vmem:[%s6 + $0x2d0] sm:$0xff]
    %v156 = vld [vmem:[%s6 + $0x2d8] sm:$0xff]
    %v157 = vld [vmem:[%s6 + $0x2e0] sm:$0xff]
    %v158 = vld [vmem:[%s6 + $0x2e8] sm:$0xff]
    %v159 = vld [vmem:[%s6 + $0x2f0] sm:$0xff]
    %v160 = vld [vmem:[%s6 + $0x2f8] sm:$0xff]
    %v161 = vld [vmem:[%s6 + $0x300] sm:$0xff]
    %v162 = vld [vmem:[%s6 + $0x308] sm:$0xff]
    %v163 = vld [vmem:[%s6 + $0x310] sm:$0xff]
    %v164 = vld [vmem:[%s6 + $0x318] sm:$0xff]
    %v165 = vld [vmem:[%s6 + $0x320] sm:$0xff]
    %v166 = vld [vmem:[%s6 + $0x328] sm:$0xff]
    %v167 = vld [vmem:[%s6 + $0x330] sm:$0xff]
    %v168 = vld [vmem:[%s6 + $0x338] sm:$0xff]
    %v169 = vld [vmem:[%s6 + $0x340] sm:$0xff]
    %v170 = vld [vmem:[%s6 + $0x348] sm:$0xff]
    %v171 = vld [vmem:[%s6 + $0x350] sm:$0xff]
    %v172 = vld [vmem:[%s6 + $0x358] sm:$0xff]
    %v173 = vld [vmem:[%s6 + $0x360] sm:$0xff]
    %v174 = vld [vmem:[%s6 + $0x368] sm:$0xff]
    %v175 = vld [vmem:[%s6 + $0x370] sm:$0xff]
    %v176 = vld [vmem:[%s6 + $0x378] sm:$0xff]
    %v177 = vld [vmem:[%s6 + $0x380] sm:$0xff]
    %v178 = vld [vmem:[%s6 + $0x388] sm:$0xff]
    %v179 = vld [vmem:[%s6 + $0x390] sm:$0xff]
    %v180 = vld [vmem:[%s6 + $0x398] sm:$0xff]
    %v181 = vld [vmem:[%s6 + $0x3a0] sm:$0xff]
    %v182 = vld [vmem:[%s6 + $0x3a8] sm:$0xff]
    %v183 = vld [vmem:[%s6 + $0x3b0] sm:$0xff]
    %v184 = vld [vmem:[%s6 + $0x3b8] sm:$0xff]
    %v185 = vld [vmem:[%s6 + $0x3c0] sm:$0xff]
    %v186 = vld [vmem:[%s6 + $0x3c8] sm:$0xff]
    %v187 = vld [vmem:[%s6 + $0x3d0] sm:$0xff]
    %v188 = vld [vmem:[%s6 + $0x3d8] sm:$0xff]
    %v189 = vld [vmem:[%s6 + $0x3e0] sm:$0xff]
    %v190 = vld [vmem:[%s6 + $0x3e8] sm:$0xff]
    %v191 = vld [vmem:[%s6 + $0x3f0] sm:$0xff]
    %v192 = vld [vmem:[%s6 + $0x3f8] sm:$0xff]
    %v193 = vld [vmem:[%s7] sm:$0xf]
    %v195 = vlaneseq
    %v196 = vshrl.u32 %v195, 7
    %v197 = vsub.s32 0, %v196
    %v198 = vrot.slane %v62, %v197
    %v199 = vlaneseq
    %v200 = vshrl.u32 %v199, 7
    %v201 = vsub.s32 1, %v200
    %v202 = vrot.slane %v62, %v201
    %v203 = vlaneseq
    %v204 = vshrl.u32 %v203, 7
    %v205 = vsub.s32 2, %v204
    %v206 = vrot.slane %v62, %v205
    %v207 = vlaneseq
    %v208 = vshrl.u32 %v207, 7
    %v209 = vsub.s32 3, %v208
    %v210 = vrot.slane %v62, %v209
    %vm215 = vcmask 64512
    %v217 = vsel %vm215, %v50, 0
    %v220 = vsel %vm215, %v51, 0
    %v223 = vsel %vm215, %v52, 0
    %v226 = vsel %vm215, %v53, 0
    %v229 = vsel %vm215, %v54, 0
    %v232 = vsel %vm215, %v55, 0
    %v235 = vsel %vm215, %v56, 0
    %v238 = vsel %vm215, %v57, 0
    %240 = vmatprep.subr.mxu0 %v59
    %241 = vmatpush1.msra.mxu0 %v58
    %242 = vmatprep.subr.mxu0 0.0
    %243 = vmatpush1.msra.mxu0 0.0
    %244 = vmatprep.subr.mxu0 0.0
    %245 = vmatpush1.msra.mxu0 0.0
    %246 = vmatprep.subr.mxu0 0.0
    %247 = vmatpush1.msra.mxu0 0.0
    %248 = vmatprep.subr.mxu0 0.0
    %249 = vmatpush1.msra.mxu0 0.0
    %250 = vmatprep.subr.mxu0 0.0
    %251 = vmatpush1.msra.mxu0 0.0
    %252 = vmatprep.subr.mxu0 0.0
    %253 = vmatpush1.msra.mxu0 0.0
    %254 = vmatprep.subr.mxu0 0.0
    %255 = vmatpush1.msra.mxu0 0.0
    %256 = vmatprep.subr.mxu0 0.0
    %257 = vmatpush1.msra.mxu0 0.0
    %258 = vmatprep.subr.mxu0 0.0
    %259 = vmatpush1.msra.mxu0 0.0
    %260 = vmatprep.subr.mxu0 0.0
    %261 = vmatpush1.msra.mxu0 0.0
    %262 = vmatprep.subr.mxu0 0.0
    %263 = vmatpush1.msra.mxu0 0.0
    %264 = vmatprep.subr.mxu0 0.0
    %265 = vmatpush1.msra.mxu0 0.0
    %266 = vmatprep.subr.mxu0 0.0
    %267 = vmatpush1.msra.mxu0 0.0
    %268 = vmatprep.subr.mxu0 0.0
    %269 = vmatpush1.msra.mxu0 0.0
    %270 = vmatprep.subr.mxu0 0.0
    %271 = vmatpush1.msra.mxu0 0.0
    %272 = vmatprep.subr.mxu0 0.0
    %273 = vmatpush1.msra.mxu0 0.0
    %274 = vmatprep.subr.mxu0 0.0
    %275 = vmatpush1.msra.mxu0 0.0
    %276 = vmatprep.subr.mxu0 0.0
    %277 = vmatpush1.msra.mxu0 0.0
    %278 = vmatprep.subr.mxu0 0.0
    %279 = vmatpush1.msra.mxu0 0.0
    %280 = vmatprep.subr.mxu0 0.0
    %281 = vmatpush1.msra.mxu0 0.0
    %282 = vmatprep.subr.mxu0 0.0
    %283 = vmatpush1.msra.mxu0 0.0
    %284 = vmatprep.subr.mxu0 0.0
    %285 = vmatpush1.msra.mxu0 0.0
    %286 = vmatprep.subr.mxu0 0.0
    %287 = vmatpush1.msra.mxu0 0.0
    %288 = vmatprep.subr.mxu0 0.0
    %289 = vmatpush1.msra.mxu0 0.0
    %290 = vmatprep.subr.mxu0 0.0
    %291 = vmatpush1.msra.mxu0 0.0
    %292 = vmatprep.subr.mxu0 0.0
    %293 = vmatpush1.msra.mxu0 0.0
    %294 = vmatprep.subr.mxu0 0.0
    %295 = vmatpush1.msra.mxu0 0.0
    %296 = vmatprep.subr.mxu0 0.0
    %297 = vmatpush1.msra.mxu0 0.0
    %298 = vmatprep.subr.mxu0 0.0
    %299 = vmatpush1.msra.mxu0 0.0
    %300 = vmatprep.subr.mxu0 0.0
    %301 = vmatpush1.msra.mxu0 0.0
    %302 = vmatprep.subr.mxu0 0.0
    %303 = vmatpush1.msra.mxu0 0.0
    %304 = vmatprep.mubr.f32.mxu0 0.0
    %305 = vmatmul.mubr.f32.gmra.mrb[0].mxu0 %v217
    %v306 = vpop.f32.mrb[0].mxu0
    %v307 = vadd.f32 %v198, %v306
    %v308 = vpop.f32.mrb[0].mxu0
    %v309 = vadd.f32 %v202, %v308
    %310 = vmatprep.mubr.f32.mxu0 0.0
    %311 = vmatmul.mubr.f32.gmra.mrb[0].mxu0 %v220
    %v312 = vpop.f32.mrb[0].mxu0
    %v313 = vadd.f32 %v198, %v312
    %v314 = vpop.f32.mrb[0].mxu0
    %v315 = vadd.f32 %v202, %v314
    %316 = vmatprep.mubr.f32.mxu0 0.0
    %317 = vmatmul.mubr.f32.gmra.mrb[0].mxu0 %v223
    %v318 = vpop.f32.mrb[0].mxu0
    %v319 = vadd.f32 %v198, %v318
    %v320 = vpop.f32.mrb[0].mxu0
    %v321 = vadd.f32 %v202, %v320
    %322 = vmatprep.mubr.f32.mxu0 0.0
    %323 = vmatmul.mubr.f32.gmra.mrb[0].mxu0 %v226
    %v324 = vpop.f32.mrb[0].mxu0
    %v325 = vadd.f32 %v198, %v324
    %v326 = vpop.f32.mrb[0].mxu0
    %v327 = vadd.f32 %v202, %v326
    %328 = vmatprep.mubr.f32.mxu0 0.0
    %329 = vmatmul.mubr.f32.gmra.mrb[0].mxu0 %v229
    %v330 = vpop.f32.mrb[0].mxu0
    %v331 = vadd.f32 %v198, %v330
    %v332 = vpop.f32.mrb[0].mxu0
    %v333 = vadd.f32 %v202, %v332
    %334 = vmatprep.mubr.f32.mxu0 0.0
    %335 = vmatmul.mubr.f32.gmra.mrb[0].mxu0 %v232
    %v336 = vpop.f32.mrb[0].mxu0
    %v337 = vadd.f32 %v198, %v336
    %v338 = vpop.f32.mrb[0].mxu0
    %v339 = vadd.f32 %v202, %v338
    %340 = vmatprep.mubr.f32.mxu0 0.0
    %341 = vmatmul.mubr.f32.gmra.mrb[0].mxu0 %v235
    %v342 = vpop.f32.mrb[0].mxu0
    %v343 = vadd.f32 %v198, %v342
    %v344 = vpop.f32.mrb[0].mxu0
    %v345 = vadd.f32 %v202, %v344
    %346 = vmatprep.mubr.f32.mxu0 0.0
    %347 = vmatmul.mubr.f32.gmra.mrb[0].mxu0 %v238
    %v348 = vpop.f32.mrb[0].mxu0
    %v349 = vadd.f32 %v198, %v348
    %v350 = vpop.f32.mrb[0].mxu0
    %v351 = vadd.f32 %v202, %v350
    %352 = vdwg.mxu0
    %353 = vmatprep.subr.mxu0 %v61
    %354 = vmatpush1.msra.mxu0 %v60
    %355 = vmatprep.subr.mxu0 0.0
    %356 = vmatpush1.msra.mxu0 0.0
    %357 = vmatprep.subr.mxu0 0.0
    %358 = vmatpush1.msra.mxu0 0.0
    %359 = vmatprep.subr.mxu0 0.0
    %360 = vmatpush1.msra.mxu0 0.0
    %361 = vmatprep.subr.mxu0 0.0
    %362 = vmatpush1.msra.mxu0 0.0
    %363 = vmatprep.subr.mxu0 0.0
    %364 = vmatpush1.msra.mxu0 0.0
    %365 = vmatprep.subr.mxu0 0.0
    %366 = vmatpush1.msra.mxu0 0.0
    %367 = vmatprep.subr.mxu0 0.0
    %368 = vmatpush1.msra.mxu0 0.0
    %369 = vmatprep.subr.mxu0 0.0
    %370 = vmatpush1.msra.mxu0 0.0
    %371 = vmatprep.subr.mxu0 0.0
    %372 = vmatpush1.msra.mxu0 0.0
    %373 = vmatprep.subr.mxu0 0.0
    %374 = vmatpush1.msra.mxu0 0.0
    %375 = vmatprep.subr.mxu0 0.0
    %376 = vmatpush1.msra.mxu0 0.0
    %377 = vmatprep.subr.mxu0 0.0
    %378 = vmatpush1.msra.mxu0 0.0
    %379 = vmatprep.subr.mxu0 0.0
    %380 = vmatpush1.msra.mxu0 0.0
    %381 = vmatprep.subr.mxu0 0.0
    %382 = vmatpush1.msra.mxu0 0.0
    %383 = vmatprep.subr.mxu0 0.0
    %384 = vmatpush1.msra.mxu0 0.0
    %385 = vmatprep.subr.mxu0 0.0
    %386 = vmatpush1.msra.mxu0 0.0
    %387 = vmatprep.subr.mxu0 0.0
    %388 = vmatpush1.msra.mxu0 0.0
    %389 = vmatprep.subr.mxu0 0.0
    %390 = vmatpush1.msra.mxu0 0.0
    %391 = vmatprep.subr.mxu0 0.0
    %392 = vmatpush1.msra.mxu0 0.0
    %393 = vmatprep.subr.mxu0 0.0
    %394 = vmatpush1.msra.mxu0 0.0
    %395 = vmatprep.subr.mxu0 0.0
    %396 = vmatpush1.msra.mxu0 0.0
    %397 = vmatprep.subr.mxu0 0.0
    %398 = vmatpush1.msra.mxu0 0.0
    %399 = vmatprep.subr.mxu0 0.0
    %400 = vmatpush1.msra.mxu0 0.0
    %401 = vmatprep.subr.mxu0 0.0
    %402 = vmatpush1.msra.mxu0 0.0
    %403 = vmatprep.subr.mxu0 0.0
    %404 = vmatpush1.msra.mxu0 0.0
    %405 = vmatprep.subr.mxu0 0.0
    %406 = vmatpush1.msra.mxu0 0.0
    %407 = vmatprep.subr.mxu0 0.0
    %408 = vmatpush1.msra.mxu0 0.0
    %409 = vmatprep.subr.mxu0 0.0
    %410 = vmatpush1.msra.mxu0 0.0
    %411 = vmatprep.subr.mxu0 0.0
    %412 = vmatpush1.msra.mxu0 0.0
    %413 = vmatprep.subr.mxu0 0.0
    %414 = vmatpush1.msra.mxu0 0.0
    %415 = vmatprep.subr.mxu0 0.0
    %416 = vmatpush1.msra.mxu0 0.0
    %417 = vmatprep.mubr.f32.mxu0 0.0
    %418 = vmatmul.mubr.f32.gmra.mrb[0].mxu0 %v217
    %v419 = vpop.f32.mrb[0].mxu0
    %v420 = vadd.f32 %v206, %v419
    %v421 = vpop.f32.mrb[0].mxu0
    %v422 = vadd.f32 %v210, %v421
    %423 = vmatprep.mubr.f32.mxu0 0.0
    %424 = vmatmul.mubr.f32.gmra.mrb[0].mxu0 %v220
    %v425 = vpop.f32.mrb[0].mxu0
    %v426 = vadd.f32 %v206, %v425
    %v427 = vpop.f32.mrb[0].mxu0
    %v428 = vadd.f32 %v210, %v427
    %429 = vmatprep.mubr.f32.mxu0 0.0
    %430 = vmatmul.mubr.f32.gmra.mrb[0].mxu0 %v223
    %v431 = vpop.f32.mrb[0].mxu0
    %v432 = vadd.f32 %v206, %v431
    %v433 = vpop.f32.mrb[0].mxu0
    %v434 = vadd.f32 %v210, %v433
    %435 = vmatprep.mubr.f32.mxu0 0.0
    %436 = vmatmul.mubr.f32.gmra.mrb[0].mxu0 %v226
    %v437 = vpop.f32.mrb[0].mxu0
    %v438 = vadd.f32 %v206, %v437
    %v439 = vpop.f32.mrb[0].mxu0
    %v440 = vadd.f32 %v210, %v439
    %441 = vmatprep.mubr.f32.mxu0 0.0
    %442 = vmatmul.mubr.f32.gmra.mrb[0].mxu0 %v229
    %v443 = vpop.f32.mrb[0].mxu0
    %v444 = vadd.f32 %v206, %v443
    %v445 = vpop.f32.mrb[0].mxu0
    %v446 = vadd.f32 %v210, %v445
    %447 = vmatprep.mubr.f32.mxu0 0.0
    %448 = vmatmul.mubr.f32.gmra.mrb[0].mxu0 %v232
    %v449 = vpop.f32.mrb[0].mxu0
    %v450 = vadd.f32 %v206, %v449
    %v451 = vpop.f32.mrb[0].mxu0
    %v452 = vadd.f32 %v210, %v451
    %453 = vmatprep.mubr.f32.mxu0 0.0
    %454 = vmatmul.mubr.f32.gmra.mrb[0].mxu0 %v235
    %v455 = vpop.f32.mrb[0].mxu0
    %v456 = vadd.f32 %v206, %v455
    %v457 = vpop.f32.mrb[0].mxu0
    %v458 = vadd.f32 %v210, %v457
    %459 = vmatprep.mubr.f32.mxu0 0.0
    %460 = vmatmul.mubr.f32.gmra.mrb[0].mxu0 %v238
    %v461 = vpop.f32.mrb[0].mxu0
    %v462 = vadd.f32 %v206, %v461
    %v463 = vpop.f32.mrb[0].mxu0
    %v464 = vadd.f32 %v210, %v463
    %465 = vdwg.mxu0
    %v466 = vadd.f32 %v307, %v313
    %v467 = vadd.f32 %v466, %v319
    %v468 = vadd.f32 %v467, %v325
    %v469 = vrot.slane %v468, 4
    %v470 = vadd.f32 %v468, %v469
    %v471 = vrot.slane %v470, 2
    %v472 = vadd.f32 %v470, %v471
    %v473 = vrot.slane %v472, 1
    %v474 = vadd.f32 %v472, %v473
    %v475 = vadd.f32 %v309, %v315
    %v476 = vadd.f32 %v475, %v321
    %v477 = vadd.f32 %v476, %v327
    %v478 = vrot.slane %v477, 4
    %v479 = vadd.f32 %v477, %v478
    %v480 = vrot.slane %v479, 2
    %v481 = vadd.f32 %v479, %v480
    %v482 = vrot.slane %v481, 1
    %v483 = vadd.f32 %v481, %v482
    %v484 = vadd.f32 %v420, %v426
    %v485 = vadd.f32 %v484, %v432
    %v486 = vadd.f32 %v485, %v438
    %v487 = vrot.slane %v486, 4
    %v488 = vadd.f32 %v486, %v487
    %v489 = vrot.slane %v488, 2
    %v490 = vadd.f32 %v488, %v489
    %v491 = vrot.slane %v490, 1
    %v492 = vadd.f32 %v490, %v491
    %v493 = vadd.f32 %v422, %v428
    %v494 = vadd.f32 %v493, %v434
    %v495 = vadd.f32 %v494, %v440
    %v496 = vrot.slane %v495, 4
    %v497 = vadd.f32 %v495, %v496
    %v498 = vrot.slane %v497, 2
    %v499 = vadd.f32 %v497, %v498
    %v500 = vrot.slane %v499, 1
    %v501 = vadd.f32 %v499, %v500
    %v502 = vrcp.pop 32.0
    %v503 = vmul.f32 %v474, %v502
    %v504 = vmul.f32 %v483, %v502
    %v505 = vmul.f32 %v492, %v502
    %v506 = vmul.f32 %v501, %v502
    %v507 = vsub.f32 %v307, %v503
    %v508 = vsub.f32 %v309, %v504
    %v509 = vsub.f32 %v420, %v505
    %v510 = vsub.f32 %v422, %v506
    %v511 = vsub.f32 %v313, %v503
    %v512 = vsub.f32 %v315, %v504
    %v513 = vsub.f32 %v426, %v505
    %v514 = vsub.f32 %v428, %v506
    %v515 = vsub.f32 %v319, %v503
    %v516 = vsub.f32 %v321, %v504
    %v517 = vsub.f32 %v432, %v505
    %v518 = vsub.f32 %v434, %v506
    %v519 = vsub.f32 %v325, %v503
    %v520 = vsub.f32 %v327, %v504
    %v521 = vsub.f32 %v438, %v505
    %v522 = vsub.f32 %v440, %v506
    %v523 = vmul.f32 %v507, %v507
    %v524 = vmul.f32 %v508, %v508
    %v525 = vmul.f32 %v509, %v509
    %v526 = vmul.f32 %v510, %v510
    %v527 = vmul.f32 %v511, %v511
    %v528 = vmul.f32 %v512, %v512
    %v529 = vmul.f32 %v513, %v513
    %v530 = vmul.f32 %v514, %v514
    %v531 = vmul.f32 %v515, %v515
    %v532 = vmul.f32 %v516, %v516
    %v533 = vmul.f32 %v517, %v517
    %v534 = vmul.f32 %v518, %v518
    %v535 = vmul.f32 %v519, %v519
    %v536 = vmul.f32 %v520, %v520
    %v537 = vmul.f32 %v521, %v521
    %v538 = vmul.f32 %v522, %v522
    %v539 = vadd.f32 %v523, %v527
    %v540 = vadd.f32 %v539, %v531
    %v541 = vadd.f32 %v540, %v535
    %v542 = vrot.slane %v541, 4
    %v543 = vadd.f32 %v541, %v542
    %v544 = vrot.slane %v543, 2
    %v545 = vadd.f32 %v543, %v544
    %v546 = vrot.slane %v545, 1
    %v547 = vadd.f32 %v545, %v546
    %v548 = vadd.f32 %v524, %v528
    %v549 = vadd.f32 %v548, %v532
    %v550 = vadd.f32 %v549, %v536
    %v551 = vrot.slane %v550, 4
    %v552 = vadd.f32 %v550, %v551
    %v553 = vrot.slane %v552, 2
    %v554 = vadd.f32 %v552, %v553
    %v555 = vrot.slane %v554, 1
    %v556 = vadd.f32 %v554, %v555
    %v557 = vadd.f32 %v525, %v529
    %v558 = vadd.f32 %v557, %v533
    %v559 = vadd.f32 %v558, %v537
    %v560 = vrot.slane %v559, 4
    %v561 = vadd.f32 %v559, %v560
    %v562 = vrot.slane %v561, 2
    %v563 = vadd.f32 %v561, %v562
    %v564 = vrot.slane %v563, 1
    %v565 = vadd.f32 %v563, %v564
    %v566 = vadd.f32 %v526, %v530
    %v567 = vadd.f32 %v566, %v534
    %v568 = vadd.f32 %v567, %v538
    %v569 = vrot.slane %v568, 4
    %v570 = vadd.f32 %v568, %v569
    %v571 = vrot.slane %v570, 2
    %v572 = vadd.f32 %v570, %v571
    %v573 = vrot.slane %v572, 1
    %v574 = vadd.f32 %v572, %v573
    %v575 = vmul.f32 %v547, %v502
    %v576 = vmul.f32 %v556, %v502
    %v577 = vmul.f32 %v565, %v502
    %v578 = vmul.f32 %v574, %v502
    %v579 = vadd.f32 %v575, 1e-05
    %v580 = vadd.f32 %v576, 1e-05
    %v581 = vadd.f32 %v577, 1e-05
    %v582 = vadd.f32 %v578, 1e-05
    %v583 = vrsqrt.pop %v579
    %v584 = vrsqrt.pop %v580
    %v585 = vrsqrt.pop %v581
    %v586 = vrsqrt.pop %v582
    %v587 = vmul.f32 %v507, %v583
    %v588 = vmul.f32 %v508, %v584
    %v589 = vmul.f32 %v509, %v585
    %v590 = vmul.f32 %v510, %v586
    %v591 = vmul.f32 %v511, %v583
    %v592 = vmul.f32 %v512, %v584
    %v593 = vmul.f32 %v513, %v585
    %v594 = vmul.f32 %v514, %v586
    %v595 = vmul.f32 %v515, %v583
    %v596 = vmul.f32 %v516, %v584
    %v597 = vmul.f32 %v517, %v585
    %v598 = vmul.f32 %v518, %v586
    %v599 = vmul.f32 %v519, %v583
    %v600 = vmul.f32 %v520, %v584
    %v601 = vmul.f32 %v521, %v585
    %v602 = vmul.f32 %v522, %v586
    %v603 = vadd.f32 %v331, %v337
    %v604 = vadd.f32 %v603, %v343
    %v605 = vadd.f32 %v604, %v349
    %v606 = vrot.slane %v605, 4
    %v607 = vadd.f32 %v605, %v606
    %v608 = vrot.slane %v607, 2
    %v609 = vadd.f32 %v607, %v608
    %v610 = vrot.slane %v609, 1
    %v611 = vadd.f32 %v609, %v610
    %v612 = vadd.f32 %v333, %v339
    %v613 = vadd.f32 %v612, %v345
    %v614 = vadd.f32 %v613, %v351
    %v615 = vrot.slane %v614, 4
    %v616 = vadd.f32 %v614, %v615
    %v617 = vrot.slane %v616, 2
    %v618 = vadd.f32 %v616, %v617
    %v619 = vrot.slane %v618, 1
    %v620 = vadd.f32 %v618, %v619
    %v621 = vadd.f32 %v444, %v450
    %v622 = vadd.f32 %v621, %v456
    %v623 = vadd.f32 %v622, %v462
    %v624 = vrot.slane %v623, 4
    %v625 = vadd.f32 %v623, %v624
    %v626 = vrot.slane %v625, 2
    %v627 = vadd.f32 %v625, %v626
    %v628 = vrot.slane %v627, 1
    %v629 = vadd.f32 %v627, %v628
    %v630 = vadd.f32 %v446, %v452
    %v631 = vadd.f32 %v630, %v458
    %v632 = vadd.f32 %v631, %v464
    %v633 = vrot.slane %v632, 4
    %v634 = vadd.f32 %v632, %v633
    %v635 = vrot.slane %v634, 2
    %v636 = vadd.f32 %v634, %v635
    %v637 = vrot.slane %v636, 1
    %v638 = vadd.f32 %v636, %v637
    %v639 = vmul.f32 %v611, %v502
    %v640 = vmul.f32 %v620, %v502
    %v641 = vmul.f32 %v629, %v502
    %v642 = vmul.f32 %v638, %v502
    %v643 = vsub.f32 %v331, %v639
    %v644 = vsub.f32 %v333, %v640
    %v645 = vsub.f32 %v444, %v641
    %v646 = vsub.f32 %v446, %v642
    %v647 = vsub.f32 %v337, %v639
    %v648 = vsub.f32 %v339, %v640
    %v649 = vsub.f32 %v450, %v641
    %v650 = vsub.f32 %v452, %v642
    %v651 = vsub.f32 %v343, %v639
    %v652 = vsub.f32 %v345, %v640
    %v653 = vsub.f32 %v456, %v641
    %v654 = vsub.f32 %v458, %v642
    %v655 = vsub.f32 %v349, %v639
    %v656 = vsub.f32 %v351, %v640
    %v657 = vsub.f32 %v462, %v641
    %v658 = vsub.f32 %v464, %v642
    %v659 = vmul.f32 %v643, %v643
    %v660 = vmul.f32 %v644, %v644
    %v661 = vmul.f32 %v645, %v645
    %v662 = vmul.f32 %v646, %v646
    %v663 = vmul.f32 %v647, %v647
    %v664 = vmul.f32 %v648, %v648
    %v665 = vmul.f32 %v649, %v649
    %v666 = vmul.f32 %v650, %v650
    %v667 = vmul.f32 %v651, %v651
    %v668 = vmul.f32 %v652, %v652
    %v669 = vmul.f32 %v653, %v653
    %v670 = vmul.f32 %v654, %v654
    %v671 = vmul.f32 %v655, %v655
    %v672 = vmul.f32 %v656, %v656
    %v673 = vmul.f32 %v657, %v657
    %v674 = vmul.f32 %v658, %v658
    %v675 = vadd.f32 %v659, %v663
    %v676 = vadd.f32 %v675, %v667
    %v677 = vadd.f32 %v676, %v671
    %v678 = vrot.slane %v677, 4
    %v679 = vadd.f32 %v677, %v678
    %v680 = vrot.slane %v679, 2
    %v681 = vadd.f32 %v679, %v680
    %v682 = vrot.slane %v681, 1
    %v683 = vadd.f32 %v681, %v682
    %v684 = vadd.f32 %v660, %v664
    %v685 = vadd.f32 %v684, %v668
    %v686 = vadd.f32 %v685, %v672
    %v687 = vrot.slane %v686, 4
    %v688 = vadd.f32 %v686, %v687
    %v689 = vrot.slane %v688, 2
    %v690 = vadd.f32 %v688, %v689
    %v691 = vrot.slane %v690, 1
    %v692 = vadd.f32 %v690, %v691
    %v693 = vadd.f32 %v661, %v665
    %v694 = vadd.f32 %v693, %v669
    %v695 = vadd.f32 %v694, %v673
    %v696 = vrot.slane %v695, 4
    %v697 = vadd.f32 %v695, %v696
    %v698 = vrot.slane %v697, 2
    %v699 = vadd.f32 %v697, %v698
    %v700 = vrot.slane %v699, 1
    %v701 = vadd.f32 %v699, %v700
    %v702 = vadd.f32 %v662, %v666
    %v703 = vadd.f32 %v702, %v670
    %v704 = vadd.f32 %v703, %v674
    %v705 = vrot.slane %v704, 4
    %v706 = vadd.f32 %v704, %v705
    %v707 = vrot.slane %v706, 2
    %v708 = vadd.f32 %v706, %v707
    %v709 = vrot.slane %v708, 1
    %v710 = vadd.f32 %v708, %v709
    %v711 = vmul.f32 %v683, %v502
    %v712 = vmul.f32 %v692, %v502
    %v713 = vmul.f32 %v701, %v502
    %v714 = vmul.f32 %v710, %v502
    %v715 = vadd.f32 %v711, 1e-05
    %v716 = vadd.f32 %v712, 1e-05
    %v717 = vadd.f32 %v713, 1e-05
    %v718 = vadd.f32 %v714, 1e-05
    %v719 = vrsqrt.pop %v715
    %v720 = vrsqrt.pop %v716
    %v721 = vrsqrt.pop %v717
    %v722 = vrsqrt.pop %v718
    %v723 = vmul.f32 %v643, %v719
    %v724 = vmul.f32 %v644, %v720
    %v725 = vmul.f32 %v645, %v721
    %v726 = vmul.f32 %v646, %v722
    %v727 = vmul.f32 %v647, %v719
    %v728 = vmul.f32 %v648, %v720
    %v729 = vmul.f32 %v649, %v721
    %v730 = vmul.f32 %v650, %v722
    %v731 = vmul.f32 %v651, %v719
    %v732 = vmul.f32 %v652, %v720
    %v733 = vmul.f32 %v653, %v721
    %v734 = vmul.f32 %v654, %v722
    %v735 = vmul.f32 %v655, %v719
    %v736 = vmul.f32 %v656, %v720
    %v737 = vmul.f32 %v657, %v721
    %v738 = vmul.f32 %v658, %v722
    %v740 = vlaneseq
    %v741 = vshrl.u32 %v740, 7
    %v742 = vsub.s32 0, %v741
    %v743 = vrot.slane %v63, %v742
    %v744 = vlaneseq
    %v745 = vshrl.u32 %v744, 7
    %v746 = vsub.s32 1, %v745
    %v747 = vrot.slane %v63, %v746
    %v748 = vlaneseq
    %v749 = vshrl.u32 %v748, 7
    %v750 = vsub.s32 2, %v749
    %v751 = vrot.slane %v63, %v750
    %v752 = vlaneseq
    %v753 = vshrl.u32 %v752, 7
    %v754 = vsub.s32 3, %v753
    %v755 = vrot.slane %v63, %v754
    %v760 = vmul.f32 %v587, %v743
    %v761 = vmul.f32 %v588, %v747
    %v762 = vmul.f32 %v589, %v751
    %v763 = vmul.f32 %v590, %v755
    %v764 = vmul.f32 %v591, %v743
    %v765 = vmul.f32 %v592, %v747
    %v766 = vmul.f32 %v593, %v751
    %v767 = vmul.f32 %v594, %v755
    %v768 = vmul.f32 %v595, %v743
    %v769 = vmul.f32 %v596, %v747
    %v770 = vmul.f32 %v597, %v751
    %v771 = vmul.f32 %v598, %v755
    %v772 = vmul.f32 %v599, %v743
    %v773 = vmul.f32 %v600, %v747
    %v774 = vmul.f32 %v601, %v751
    %v775 = vmul.f32 %v602, %v755
    %v776 = vmul.f32 %v723, %v743
    %v777 = vmul.f32 %v724, %v747
    %v778 = vmul.f32 %v725, %v751
    %v779 = vmul.f32 %v726, %v755
    %v780 = vmul.f32 %v727, %v743
    %v781 = vmul.f32 %v728, %v747
    %v782 = vmul.f32 %v729, %v751
    %v783 = vmul.f32 %v730, %v755
    %v784 = vmul.f32 %v731, %v743
    %v785 = vmul.f32 %v732, %v747
    %v786 = vmul.f32 %v733, %v751
    %v787 = vmul.f32 %v734, %v755
    %v788 = vmul.f32 %v735, %v743
    %v789 = vmul.f32 %v736, %v747
    %v790 = vmul.f32 %v737, %v751
    %v791 = vmul.f32 %v738, %v755
    %v793 = vlaneseq
    %v794 = vshrl.u32 %v793, 7
    %v795 = vsub.s32 0, %v794
    %v796 = vrot.slane %v64, %v795
    %v797 = vlaneseq
    %v798 = vshrl.u32 %v797, 7
    %v799 = vsub.s32 1, %v798
    %v800 = vrot.slane %v64, %v799
    %v801 = vlaneseq
    %v802 = vshrl.u32 %v801, 7
    %v803 = vsub.s32 2, %v802
    %v804 = vrot.slane %v64, %v803
    %v805 = vlaneseq
    %v806 = vshrl.u32 %v805, 7
    %v807 = vsub.s32 3, %v806
    %v808 = vrot.slane %v64, %v807
    %v813 = vadd.f32 %v760, %v796
    %v814 = vadd.f32 %v761, %v800
    %v815 = vadd.f32 %v762, %v804
    %v816 = vadd.f32 %v763, %v808
    %v817 = vadd.f32 %v764, %v796
    %v818 = vadd.f32 %v765, %v800
    %v819 = vadd.f32 %v766, %v804
    %v820 = vadd.f32 %v767, %v808
    %v821 = vadd.f32 %v768, %v796
    %v822 = vadd.f32 %v769, %v800
    %v823 = vadd.f32 %v770, %v804
    %v824 = vadd.f32 %v771, %v808
    %v825 = vadd.f32 %v772, %v796
    %v826 = vadd.f32 %v773, %v800
    %v827 = vadd.f32 %v774, %v804
    %v828 = vadd.f32 %v775, %v808
    %v829 = vadd.f32 %v776, %v796
    %v830 = vadd.f32 %v777, %v800
    %v831 = vadd.f32 %v778, %v804
    %v832 = vadd.f32 %v779, %v808
    %v833 = vadd.f32 %v780, %v796
    %v834 = vadd.f32 %v781, %v800
    %v835 = vadd.f32 %v782, %v804
    %v836 = vadd.f32 %v783, %v808
    %v837 = vadd.f32 %v784, %v796
    %v838 = vadd.f32 %v785, %v800
    %v839 = vadd.f32 %v786, %v804
    %v840 = vadd.f32 %v787, %v808
    %v841 = vadd.f32 %v788, %v796
    %v842 = vadd.f32 %v789, %v800
    %v843 = vadd.f32 %v790, %v804
    %v844 = vadd.f32 %v791, %v808
    %v845 = vmax.f32 %v813, 0.0
    %v846 = vmax.f32 %v814, 0.0
    %v847 = vmax.f32 %v815, 0.0
    %v848 = vmax.f32 %v816, 0.0
    %v849 = vmax.f32 %v817, 0.0
    %v850 = vmax.f32 %v818, 0.0
    %v851 = vmax.f32 %v819, 0.0
    %v852 = vmax.f32 %v820, 0.0
    %v853 = vmax.f32 %v821, 0.0
    %v854 = vmax.f32 %v822, 0.0
    %v855 = vmax.f32 %v823, 0.0
    %v856 = vmax.f32 %v824, 0.0
    %v857 = vmax.f32 %v825, 0.0
    %v858 = vmax.f32 %v826, 0.0
    %v859 = vmax.f32 %v827, 0.0
    %v860 = vmax.f32 %v828, 0.0
    %v861 = vmax.f32 %v829, 0.0
    %v862 = vmax.f32 %v830, 0.0
    %v863 = vmax.f32 %v831, 0.0
    %v864 = vmax.f32 %v832, 0.0
    %v865 = vmax.f32 %v833, 0.0
    %v866 = vmax.f32 %v834, 0.0
    %v867 = vmax.f32 %v835, 0.0
    %v868 = vmax.f32 %v836, 0.0
    %v869 = vmax.f32 %v837, 0.0
    %v870 = vmax.f32 %v838, 0.0
    %v871 = vmax.f32 %v839, 0.0
    %v872 = vmax.f32 %v840, 0.0
    %v873 = vmax.f32 %v841, 0.0
    %v874 = vmax.f32 %v842, 0.0
    %v875 = vmax.f32 %v843, 0.0
    %v876 = vmax.f32 %v844, 0.0
    %v877 = vpack.c.bf16 %v849, %v845
    %v878 = vpack.c.bf16 %v850, %v846
    %v879 = vpack.c.bf16 %v851, %v847
    %v880 = vpack.c.bf16 %v852, %v848
    %v881 = vpack.c.bf16 %v857, %v853
    %v882 = vpack.c.bf16 %v858, %v854
    %v883 = vpack.c.bf16 %v859, %v855
    %v884 = vpack.c.bf16 %v860, %v856
    %v885 = vpack.c.bf16 %v865, %v861
    %v886 = vpack.c.bf16 %v866, %v862
    %v887 = vpack.c.bf16 %v867, %v863
    %v888 = vpack.c.bf16 %v868, %v864
    %v889 = vpack.c.bf16 %v873, %v869
    %v890 = vpack.c.bf16 %v874, %v870
    %v891 = vpack.c.bf16 %v875, %v871
    %v892 = vpack.c.bf16 %v876, %v872
    %v894 = vlaneseq
    %v895 = vshrl.u32 %v894, 7
    %v896 = vsub.s32 0, %v895
    %v897 = vrot.slane %v193, %v896
    %v898 = vlaneseq
    %v899 = vshrl.u32 %v898, 7
    %v900 = vsub.s32 1, %v899
    %v901 = vrot.slane %v193, %v900
    %v902 = vlaneseq
    %v903 = vshrl.u32 %v902, 7
    %v904 = vsub.s32 2, %v903
    %v905 = vrot.slane %v193, %v904
    %v906 = vlaneseq
    %v907 = vshrl.u32 %v906, 7
    %v908 = vsub.s32 3, %v907
    %v909 = vrot.slane %v193, %v908
    %v1042 = vunpack.c.l.b16 %v65
    %v1043 = vunpack.c.h.b16 %v65
    %v1044 = vunpack.c.l.b16 %v66
    %v1045 = vunpack.c.h.b16 %v66
    %v1046 = vunpack.c.l.b16 %v67
    %v1047 = vunpack.c.h.b16 %v67
    %v1048 = vunpack.c.l.b16 %v68
    %v1049 = vunpack.c.h.b16 %v68
    %v1050 = vunpack.c.l.b16 %v69
    %v1051 = vunpack.c.h.b16 %v69
    %v1052 = vunpack.c.l.b16 %v70
    %v1053 = vunpack.c.h.b16 %v70
    %v1054 = vunpack.c.l.b16 %v71
    %v1055 = vunpack.c.h.b16 %v71
    %v1056 = vunpack.c.l.b16 %v72
    %v1057 = vunpack.c.h.b16 %v72
    %v1058 = vunpack.c.l.b16 %v73
    %v1059 = vunpack.c.h.b16 %v73
    %v1060 = vunpack.c.l.b16 %v74
    %v1061 = vunpack.c.h.b16 %v74
    %v1062 = vunpack.c.l.b16 %v75
    %v1063 = vunpack.c.h.b16 %v75
    %v1064 = vunpack.c.l.b16 %v76
    %v1065 = vunpack.c.h.b16 %v76
    %v1066 = vunpack.c.l.b16 %v77
    %v1067 = vunpack.c.h.b16 %v77
    %v1068 = vunpack.c.l.b16 %v78
    %v1069 = vunpack.c.h.b16 %v78
    %v1070 = vunpack.c.l.b16 %v79
    %v1071 = vunpack.c.h.b16 %v79
    %v1072 = vunpack.c.l.b16 %v80
    %v1073 = vunpack.c.h.b16 %v80
    %v1074 = vunpack.c.l.b16 %v81
    %v1075 = vunpack.c.h.b16 %v81
    %v1076 = vunpack.c.l.b16 %v82
    %v1077 = vunpack.c.h.b16 %v82
    %v1078 = vunpack.c.l.b16 %v83
    %v1079 = vunpack.c.h.b16 %v83
    %v1080 = vunpack.c.l.b16 %v84
    %v1081 = vunpack.c.h.b16 %v84
    %v1082 = vunpack.c.l.b16 %v85
    %v1083 = vunpack.c.h.b16 %v85
    %v1084 = vunpack.c.l.b16 %v86
    %v1085 = vunpack.c.h.b16 %v86
    %v1086 = vunpack.c.l.b16 %v87
    %v1087 = vunpack.c.h.b16 %v87
    %v1088 = vunpack.c.l.b16 %v88
    %v1089 = vunpack.c.h.b16 %v88
    %v1090 = vunpack.c.l.b16 %v89
    %v1091 = vunpack.c.h.b16 %v89
    %v1092 = vunpack.c.l.b16 %v90
    %v1093 = vunpack.c.h.b16 %v90
    %v1094 = vunpack.c.l.b16 %v91
    %v1095 = vunpack.c.h.b16 %v91
    %v1096 = vunpack.c.l.b16 %v92
    %v1097 = vunpack.c.h.b16 %v92
    %v1098 = vunpack.c.l.b16 %v93
    %v1099 = vunpack.c.h.b16 %v93
    %v1100 = vunpack.c.l.b16 %v94
    %v1101 = vunpack.c.h.b16 %v94
    %v1102 = vunpack.c.l.b16 %v95
    %v1103 = vunpack.c.h.b16 %v95
    %v1104 = vunpack.c.l.b16 %v96
    %v1105 = vunpack.c.h.b16 %v96
    %v1106 = vunpack.c.l.b16 %v97
    %v1107 = vunpack.c.h.b16 %v97
    %v1108 = vunpack.c.l.b16 %v98
    %v1109 = vunpack.c.h.b16 %v98
    %v1110 = vunpack.c.l.b16 %v99
    %v1111 = vunpack.c.h.b16 %v99
    %v1112 = vunpack.c.l.b16 %v100
    %v1113 = vunpack.c.h.b16 %v100
    %v1114 = vunpack.c.l.b16 %v101
    %v1115 = vunpack.c.h.b16 %v101
    %v1116 = vunpack.c.l.b16 %v102
    %v1117 = vunpack.c.h.b16 %v102
    %v1118 = vunpack.c.l.b16 %v103
    %v1119 = vunpack.c.h.b16 %v103
    %v1120 = vunpack.c.l.b16 %v104
    %v1121 = vunpack.c.h.b16 %v104
    %v1122 = vunpack.c.l.b16 %v105
    %v1123 = vunpack.c.h.b16 %v105
    %v1124 = vunpack.c.l.b16 %v106
    %v1125 = vunpack.c.h.b16 %v106
    %v1126 = vunpack.c.l.b16 %v107
    %v1127 = vunpack.c.h.b16 %v107
    %v1128 = vunpack.c.l.b16 %v108
    %v1129 = vunpack.c.h.b16 %v108
    %v1130 = vunpack.c.l.b16 %v109
    %v1131 = vunpack.c.h.b16 %v109
    %v1132 = vunpack.c.l.b16 %v110
    %v1133 = vunpack.c.h.b16 %v110
    %v1134 = vunpack.c.l.b16 %v111
    %v1135 = vunpack.c.h.b16 %v111
    %v1136 = vunpack.c.l.b16 %v112
    %v1137 = vunpack.c.h.b16 %v112
    %v1138 = vunpack.c.l.b16 %v113
    %v1139 = vunpack.c.h.b16 %v113
    %v1140 = vunpack.c.l.b16 %v114
    %v1141 = vunpack.c.h.b16 %v114
    %v1142 = vunpack.c.l.b16 %v115
    %v1143 = vunpack.c.h.b16 %v115
    %v1144 = vunpack.c.l.b16 %v116
    %v1145 = vunpack.c.h.b16 %v116
    %v1146 = vunpack.c.l.b16 %v117
    %v1147 = vunpack.c.h.b16 %v117
    %v1148 = vunpack.c.l.b16 %v118
    %v1149 = vunpack.c.h.b16 %v118
    %v1150 = vunpack.c.l.b16 %v119
    %v1151 = vunpack.c.h.b16 %v119
    %v1152 = vunpack.c.l.b16 %v120
    %v1153 = vunpack.c.h.b16 %v120
    %v1154 = vunpack.c.l.b16 %v121
    %v1155 = vunpack.c.h.b16 %v121
    %v1156 = vunpack.c.l.b16 %v122
    %v1157 = vunpack.c.h.b16 %v122
    %v1158 = vunpack.c.l.b16 %v123
    %v1159 = vunpack.c.h.b16 %v123
    %v1160 = vunpack.c.l.b16 %v124
    %v1161 = vunpack.c.h.b16 %v124
    %v1162 = vunpack.c.l.b16 %v125
    %v1163 = vunpack.c.h.b16 %v125
    %v1164 = vunpack.c.l.b16 %v126
    %v1165 = vunpack.c.h.b16 %v126
    %v1166 = vunpack.c.l.b16 %v127
    %v1167 = vunpack.c.h.b16 %v127
    %v1168 = vunpack.c.l.b16 %v128
    %v1169 = vunpack.c.h.b16 %v128
    %v1170 = vunpack.c.l.b16 %v129
    %v1171 = vunpack.c.h.b16 %v129
    %v1172 = vunpack.c.l.b16 %v130
    %v1173 = vunpack.c.h.b16 %v130
    %v1174 = vunpack.c.l.b16 %v131
    %v1175 = vunpack.c.h.b16 %v131
    %v1176 = vunpack.c.l.b16 %v132
    %v1177 = vunpack.c.h.b16 %v132
    %v1178 = vunpack.c.l.b16 %v133
    %v1179 = vunpack.c.h.b16 %v133
    %v1180 = vunpack.c.l.b16 %v134
    %v1181 = vunpack.c.h.b16 %v134
    %v1182 = vunpack.c.l.b16 %v135
    %v1183 = vunpack.c.h.b16 %v135
    %v1184 = vunpack.c.l.b16 %v136
    %v1185 = vunpack.c.h.b16 %v136
    %v1186 = vunpack.c.l.b16 %v137
    %v1187 = vunpack.c.h.b16 %v137
    %v1188 = vunpack.c.l.b16 %v138
    %v1189 = vunpack.c.h.b16 %v138
    %v1190 = vunpack.c.l.b16 %v139
    %v1191 = vunpack.c.h.b16 %v139
    %v1192 = vunpack.c.l.b16 %v140
    %v1193 = vunpack.c.h.b16 %v140
    %v1194 = vunpack.c.l.b16 %v141
    %v1195 = vunpack.c.h.b16 %v141
    %v1196 = vunpack.c.l.b16 %v142
    %v1197 = vunpack.c.h.b16 %v142
    %v1198 = vunpack.c.l.b16 %v143
    %v1199 = vunpack.c.h.b16 %v143
    %v1200 = vunpack.c.l.b16 %v144
    %v1201 = vunpack.c.h.b16 %v144
    %v1202 = vunpack.c.l.b16 %v145
    %v1203 = vunpack.c.h.b16 %v145
    %v1204 = vunpack.c.l.b16 %v146
    %v1205 = vunpack.c.h.b16 %v146
    %v1206 = vunpack.c.l.b16 %v147
    %v1207 = vunpack.c.h.b16 %v147
    %v1208 = vunpack.c.l.b16 %v148
    %v1209 = vunpack.c.h.b16 %v148
    %v1210 = vunpack.c.l.b16 %v149
    %v1211 = vunpack.c.h.b16 %v149
    %v1212 = vunpack.c.l.b16 %v150
    %v1213 = vunpack.c.h.b16 %v150
    %v1214 = vunpack.c.l.b16 %v151
    %v1215 = vunpack.c.h.b16 %v151
    %v1216 = vunpack.c.l.b16 %v152
    %v1217 = vunpack.c.h.b16 %v152
    %v1218 = vunpack.c.l.b16 %v153
    %v1219 = vunpack.c.h.b16 %v153
    %v1220 = vunpack.c.l.b16 %v154
    %v1221 = vunpack.c.h.b16 %v154
    %v1222 = vunpack.c.l.b16 %v155
    %v1223 = vunpack.c.h.b16 %v155
    %v1224 = vunpack.c.l.b16 %v156
    %v1225 = vunpack.c.h.b16 %v156
    %v1226 = vunpack.c.l.b16 %v157
    %v1227 = vunpack.c.h.b16 %v157
    %v1228 = vunpack.c.l.b16 %v158
    %v1229 = vunpack.c.h.b16 %v158
    %v1230 = vunpack.c.l.b16 %v159
    %v1231 = vunpack.c.h.b16 %v159
    %v1232 = vunpack.c.l.b16 %v160
    %v1233 = vunpack.c.h.b16 %v160
    %v1234 = vunpack.c.l.b16 %v161
    %v1235 = vunpack.c.h.b16 %v161
    %v1236 = vunpack.c.l.b16 %v162
    %v1237 = vunpack.c.h.b16 %v162
    %v1238 = vunpack.c.l.b16 %v163
    %v1239 = vunpack.c.h.b16 %v163
    %v1240 = vunpack.c.l.b16 %v164
    %v1241 = vunpack.c.h.b16 %v164
    %v1242 = vunpack.c.l.b16 %v165
    %v1243 = vunpack.c.h.b16 %v165
    %v1244 = vunpack.c.l.b16 %v166
    %v1245 = vunpack.c.h.b16 %v166
    %v1246 = vunpack.c.l.b16 %v167
    %v1247 = vunpack.c.h.b16 %v167
    %v1248 = vunpack.c.l.b16 %v168
    %v1249 = vunpack.c.h.b16 %v168
    %v1250 = vunpack.c.l.b16 %v169
    %v1251 = vunpack.c.h.b16 %v169
    %v1252 = vunpack.c.l.b16 %v170
    %v1253 = vunpack.c.h.b16 %v170
    %v1254 = vunpack.c.l.b16 %v171
    %v1255 = vunpack.c.h.b16 %v171
    %v1256 = vunpack.c.l.b16 %v172
    %v1257 = vunpack.c.h.b16 %v172
    %v1258 = vunpack.c.l.b16 %v173
    %v1259 = vunpack.c.h.b16 %v173
    %v1260 = vunpack.c.l.b16 %v174
    %v1261 = vunpack.c.h.b16 %v174
    %v1262 = vunpack.c.l.b16 %v175
    %v1263 = vunpack.c.h.b16 %v175
    %v1264 = vunpack.c.l.b16 %v176
    %v1265 = vunpack.c.h.b16 %v176
    %v1266 = vunpack.c.l.b16 %v177
    %v1267 = vunpack.c.h.b16 %v177
    %v1268 = vunpack.c.l.b16 %v178
    %v1269 = vunpack.c.h.b16 %v178
    %v1270 = vunpack.c.l.b16 %v179
    %v1271 = vunpack.c.h.b16 %v179
    %v1272 = vunpack.c.l.b16 %v180
    %v1273 = vunpack.c.h.b16 %v180
    %v1274 = vunpack.c.l.b16 %v181
    %v1275 = vunpack.c.h.b16 %v181
    %v1276 = vunpack.c.l.b16 %v182
    %v1277 = vunpack.c.h.b16 %v182
    %v1278 = vunpack.c.l.b16 %v183
    %v1279 = vunpack.c.h.b16 %v183
    %v1280 = vunpack.c.l.b16 %v184
    %v1281 = vunpack.c.h.b16 %v184
    %v1282 = vunpack.c.l.b16 %v185
    %v1283 = vunpack.c.h.b16 %v185
    %v1284 = vunpack.c.l.b16 %v186
    %v1285 = vunpack.c.h.b16 %v186
    %v1286 = vunpack.c.l.b16 %v187
    %v1287 = vunpack.c.h.b16 %v187
    %v1288 = vunpack.c.l.b16 %v188
    %v1289 = vunpack.c.h.b16 %v188
    %v1290 = vunpack.c.l.b16 %v189
    %v1291 = vunpack.c.h.b16 %v189
    %v1292 = vunpack.c.l.b16 %v190
    %v1293 = vunpack.c.h.b16 %v190
    %v1294 = vunpack.c.l.b16 %v191
    %v1295 = vunpack.c.h.b16 %v191
    %v1296 = vunpack.c.l.b16 %v192
    %v1297 = vunpack.c.h.b16 %v192
    %v1298 = vpack.c.b16 %v1046, %v1042
    %v1299 = vpack.c.b16 %v1047, %v1043
    %v1300 = vpack.c.b16 %v1048, %v1044
    %v1301 = vpack.c.b16 %v1049, %v1045
    %v1302 = vpack.c.b16 %v1054, %v1050
    %v1303 = vpack.c.b16 %v1055, %v1051
    %v1304 = vpack.c.b16 %v1056, %v1052
    %v1305 = vpack.c.b16 %v1057, %v1053
    %v1306 = vpack.c.b16 %v1062, %v1058
    %v1307 = vpack.c.b16 %v1063, %v1059
    %v1308 = vpack.c.b16 %v1064, %v1060
    %v1309 = vpack.c.b16 %v1065, %v1061
    %v1310 = vpack.c.b16 %v1070, %v1066
    %v1311 = vpack.c.b16 %v1071, %v1067
    %v1312 = vpack.c.b16 %v1072, %v1068
    %v1313 = vpack.c.b16 %v1073, %v1069
    %v1314 = vpack.c.b16 %v1078, %v1074
    %v1315 = vpack.c.b16 %v1079, %v1075
    %v1316 = vpack.c.b16 %v1080, %v1076
    %v1317 = vpack.c.b16 %v1081, %v1077
    %v1318 = vpack.c.b16 %v1086, %v1082
    %v1319 = vpack.c.b16 %v1087, %v1083
    %v1320 = vpack.c.b16 %v1088, %v1084
    %v1321 = vpack.c.b16 %v1089, %v1085
    %v1322 = vpack.c.b16 %v1094, %v1090
    %v1323 = vpack.c.b16 %v1095, %v1091
    %v1324 = vpack.c.b16 %v1096, %v1092
    %v1325 = vpack.c.b16 %v1097, %v1093
    %v1326 = vpack.c.b16 %v1102, %v1098
    %v1327 = vpack.c.b16 %v1103, %v1099
    %v1328 = vpack.c.b16 %v1104, %v1100
    %v1329 = vpack.c.b16 %v1105, %v1101
    %v1330 = vpack.c.b16 %v1110, %v1106
    %v1331 = vpack.c.b16 %v1111, %v1107
    %v1332 = vpack.c.b16 %v1112, %v1108
    %v1333 = vpack.c.b16 %v1113, %v1109
    %v1334 = vpack.c.b16 %v1118, %v1114
    %v1335 = vpack.c.b16 %v1119, %v1115
    %v1336 = vpack.c.b16 %v1120, %v1116
    %v1337 = vpack.c.b16 %v1121, %v1117
    %v1338 = vpack.c.b16 %v1126, %v1122
    %v1339 = vpack.c.b16 %v1127, %v1123
    %v1340 = vpack.c.b16 %v1128, %v1124
    %v1341 = vpack.c.b16 %v1129, %v1125
    %v1342 = vpack.c.b16 %v1134, %v1130
    %v1343 = vpack.c.b16 %v1135, %v1131
    %v1344 = vpack.c.b16 %v1136, %v1132
    %v1345 = vpack.c.b16 %v1137, %v1133
    %v1346 = vpack.c.b16 %v1142, %v1138
    %v1347 = vpack.c.b16 %v1143, %v1139
    %v1348 = vpack.c.b16 %v1144, %v1140
    %v1349 = vpack.c.b16 %v1145, %v1141
    %v1350 = vpack.c.b16 %v1150, %v1146
    %v1351 = vpack.c.b16 %v1151, %v1147
    %v1352 = vpack.c.b16 %v1152, %v1148
    %v1353 = vpack.c.b16 %v1153, %v1149
    %v1354 = vpack.c.b16 %v1158, %v1154
    %v1355 = vpack.c.b16 %v1159, %v1155
    %v1356 = vpack.c.b16 %v1160, %v1156
    %v1357 = vpack.c.b16 %v1161, %v1157
    %v1358 = vpack.c.b16 %v1166, %v1162
    %v1359 = vpack.c.b16 %v1167, %v1163
    %v1360 = vpack.c.b16 %v1168, %v1164
    %v1361 = vpack.c.b16 %v1169, %v1165
    %v1362 = vpack.c.b16 %v1174, %v1170
    %v1363 = vpack.c.b16 %v1175, %v1171
    %v1364 = vpack.c.b16 %v1176, %v1172
    %v1365 = vpack.c.b16 %v1177, %v1173
    %v1366 = vpack.c.b16 %v1182, %v1178
    %v1367 = vpack.c.b16 %v1183, %v1179
    %v1368 = vpack.c.b16 %v1184, %v1180
    %v1369 = vpack.c.b16 %v1185, %v1181
    %v1370 = vpack.c.b16 %v1190, %v1186
    %v1371 = vpack.c.b16 %v1191, %v1187
    %v1372 = vpack.c.b16 %v1192, %v1188
    %v1373 = vpack.c.b16 %v1193, %v1189
    %v1374 = vpack.c.b16 %v1198, %v1194
    %v1375 = vpack.c.b16 %v1199, %v1195
    %v1376 = vpack.c.b16 %v1200, %v1196
    %v1377 = vpack.c.b16 %v1201, %v1197
    %v1378 = vpack.c.b16 %v1206, %v1202
    %v1379 = vpack.c.b16 %v1207, %v1203
    %v1380 = vpack.c.b16 %v1208, %v1204
    %v1381 = vpack.c.b16 %v1209, %v1205
    %v1382 = vpack.c.b16 %v1214, %v1210
    %v1383 = vpack.c.b16 %v1215, %v1211
    %v1384 = vpack.c.b16 %v1216, %v1212
    %v1385 = vpack.c.b16 %v1217, %v1213
    %v1386 = vpack.c.b16 %v1222, %v1218
    %v1387 = vpack.c.b16 %v1223, %v1219
    %v1388 = vpack.c.b16 %v1224, %v1220
    %v1389 = vpack.c.b16 %v1225, %v1221
    %v1390 = vpack.c.b16 %v1230, %v1226
    %v1391 = vpack.c.b16 %v1231, %v1227
    %v1392 = vpack.c.b16 %v1232, %v1228
    %v1393 = vpack.c.b16 %v1233, %v1229
    %v1394 = vpack.c.b16 %v1238, %v1234
    %v1395 = vpack.c.b16 %v1239, %v1235
    %v1396 = vpack.c.b16 %v1240, %v1236
    %v1397 = vpack.c.b16 %v1241, %v1237
    %v1398 = vpack.c.b16 %v1246, %v1242
    %v1399 = vpack.c.b16 %v1247, %v1243
    %v1400 = vpack.c.b16 %v1248, %v1244
    %v1401 = vpack.c.b16 %v1249, %v1245
    %v1402 = vpack.c.b16 %v1254, %v1250
    %v1403 = vpack.c.b16 %v1255, %v1251
    %v1404 = vpack.c.b16 %v1256, %v1252
    %v1405 = vpack.c.b16 %v1257, %v1253
    %v1406 = vpack.c.b16 %v1262, %v1258
    %v1407 = vpack.c.b16 %v1263, %v1259
    %v1408 = vpack.c.b16 %v1264, %v1260
    %v1409 = vpack.c.b16 %v1265, %v1261
    %v1410 = vpack.c.b16 %v1270, %v1266
    %v1411 = vpack.c.b16 %v1271, %v1267
    %v1412 = vpack.c.b16 %v1272, %v1268
    %v1413 = vpack.c.b16 %v1273, %v1269
    %v1414 = vpack.c.b16 %v1278, %v1274
    %v1415 = vpack.c.b16 %v1279, %v1275
    %v1416 = vpack.c.b16 %v1280, %v1276
    %v1417 = vpack.c.b16 %v1281, %v1277
    %v1418 = vpack.c.b16 %v1286, %v1282
    %v1419 = vpack.c.b16 %v1287, %v1283
    %v1420 = vpack.c.b16 %v1288, %v1284
    %v1421 = vpack.c.b16 %v1289, %v1285
    %v1422 = vpack.c.b16 %v1294, %v1290
    %v1423 = vpack.c.b16 %v1295, %v1291
    %v1424 = vpack.c.b16 %v1296, %v1292
    %v1425 = vpack.c.b16 %v1297, %v1293
    %1554 = vmatprep.subr.bf16.mxu0 %v1299
    %1555 = vmatpush1.bf16.msra.mxu0 %v1298
    %1556 = vmatprep.subr.bf16.mxu0 %v1303
    %1557 = vmatpush1.bf16.msra.mxu0 %v1302
    %1558 = vmatprep.subr.bf16.mxu0 %v1307
    %1559 = vmatpush1.bf16.msra.mxu0 %v1306
    %1560 = vmatprep.subr.bf16.mxu0 %v1311
    %1561 = vmatpush1.bf16.msra.mxu0 %v1310
    %1562 = vmatprep.subr.bf16.mxu0 %v1315
    %1563 = vmatpush1.bf16.msra.mxu0 %v1314
    %1564 = vmatprep.subr.bf16.mxu0 %v1319
    %1565 = vmatpush1.bf16.msra.mxu0 %v1318
    %1566 = vmatprep.subr.bf16.mxu0 %v1323
    %1567 = vmatpush1.bf16.msra.mxu0 %v1322
    %1568 = vmatprep.subr.bf16.mxu0 %v1327
    %1569 = vmatpush1.bf16.msra.mxu0 %v1326
    %1570 = vmatprep.subr.bf16.mxu0 %v1331
    %1571 = vmatpush1.bf16.msra.mxu0 %v1330
    %1572 = vmatprep.subr.bf16.mxu0 %v1335
    %1573 = vmatpush1.bf16.msra.mxu0 %v1334
    %1574 = vmatprep.subr.bf16.mxu0 %v1339
    %1575 = vmatpush1.bf16.msra.mxu0 %v1338
    %1576 = vmatprep.subr.bf16.mxu0 %v1343
    %1577 = vmatpush1.bf16.msra.mxu0 %v1342
    %1578 = vmatprep.subr.bf16.mxu0 %v1347
    %1579 = vmatpush1.bf16.msra.mxu0 %v1346
    %1580 = vmatprep.subr.bf16.mxu0 %v1351
    %1581 = vmatpush1.bf16.msra.mxu0 %v1350
    %1582 = vmatprep.subr.bf16.mxu0 %v1355
    %1583 = vmatpush1.bf16.msra.mxu0 %v1354
    %1584 = vmatprep.subr.bf16.mxu0 %v1359
    %1585 = vmatpush1.bf16.msra.mxu0 %v1358
    %1586 = vmatprep.mubr.bf16.mxu0 %v878
    %1587 = vmatmul.mubr.bf16.gmra.mrb[0].mxu0 %v877
    %v1588 = vpop.f32.mrb[0].mxu0
    %v1589 = vadd.f32 %v897, %v1588
    %v1590 = vpop.f32.mrb[0].mxu0
    %v1591 = vadd.f32 %v901, %v1590
    %v1592 = vpop.f32.mrb[0].mxu0
    %v1593 = vadd.f32 %v897, %v1592
    %v1594 = vpop.f32.mrb[0].mxu0
    %v1595 = vadd.f32 %v901, %v1594
    %1596 = vmatprep.mubr.bf16.mxu0 %v882
    %1597 = vmatmul.mubr.bf16.gmra.mrb[0].mxu0 %v881
    %v1598 = vpop.f32.mrb[0].mxu0
    %v1599 = vadd.f32 %v897, %v1598
    %v1600 = vpop.f32.mrb[0].mxu0
    %v1601 = vadd.f32 %v901, %v1600
    %v1602 = vpop.f32.mrb[0].mxu0
    %v1603 = vadd.f32 %v897, %v1602
    %v1604 = vpop.f32.mrb[0].mxu0
    %v1605 = vadd.f32 %v901, %v1604
    %1606 = vmatprep.mubr.bf16.mxu0 %v886
    %1607 = vmatmul.mubr.bf16.gmra.mrb[0].mxu0 %v885
    %v1608 = vpop.f32.mrb[0].mxu0
    %v1609 = vadd.f32 %v897, %v1608
    %v1610 = vpop.f32.mrb[0].mxu0
    %v1611 = vadd.f32 %v901, %v1610
    %v1612 = vpop.f32.mrb[0].mxu0
    %v1613 = vadd.f32 %v897, %v1612
    %v1614 = vpop.f32.mrb[0].mxu0
    %v1615 = vadd.f32 %v901, %v1614
    %1616 = vmatprep.mubr.bf16.mxu0 %v890
    %1617 = vmatmul.mubr.bf16.gmra.mrb[0].mxu0 %v889
    %v1618 = vpop.f32.mrb[0].mxu0
    %v1619 = vadd.f32 %v897, %v1618
    %v1620 = vpop.f32.mrb[0].mxu0
    %v1621 = vadd.f32 %v901, %v1620
    %v1622 = vpop.f32.mrb[0].mxu0
    %v1623 = vadd.f32 %v897, %v1622
    %v1624 = vpop.f32.mrb[0].mxu0
    %v1625 = vadd.f32 %v901, %v1624
    %1626 = vdwg.mxu0
    %1627 = vmatprep.subr.bf16.mxu0 %v1363
    %1628 = vmatpush1.bf16.msra.mxu0 %v1362
    %1629 = vmatprep.subr.bf16.mxu0 %v1367
    %1630 = vmatpush1.bf16.msra.mxu0 %v1366
    %1631 = vmatprep.subr.bf16.mxu0 %v1371
    %1632 = vmatpush1.bf16.msra.mxu0 %v1370
    %1633 = vmatprep.subr.bf16.mxu0 %v1375
    %1634 = vmatpush1.bf16.msra.mxu0 %v1374
    %1635 = vmatprep.subr.bf16.mxu0 %v1379
    %1636 = vmatpush1.bf16.msra.mxu0 %v1378
    %1637 = vmatprep.subr.bf16.mxu0 %v1383
    %1638 = vmatpush1.bf16.msra.mxu0 %v1382
    %1639 = vmatprep.subr.bf16.mxu0 %v1387
    %1640 = vmatpush1.bf16.msra.mxu0 %v1386
    %1641 = vmatprep.subr.bf16.mxu0 %v1391
    %1642 = vmatpush1.bf16.msra.mxu0 %v1390
    %1643 = vmatprep.subr.bf16.mxu0 %v1395
    %1644 = vmatpush1.bf16.msra.mxu0 %v1394
    %1645 = vmatprep.subr.bf16.mxu0 %v1399
    %1646 = vmatpush1.bf16.msra.mxu0 %v1398
    %1647 = vmatprep.subr.bf16.mxu0 %v1403
    %1648 = vmatpush1.bf16.msra.mxu0 %v1402
    %1649 = vmatprep.subr.bf16.mxu0 %v1407
    %1650 = vmatpush1.bf16.msra.mxu0 %v1406
    %1651 = vmatprep.subr.bf16.mxu0 %v1411
    %1652 = vmatpush1.bf16.msra.mxu0 %v1410
    %1653 = vmatprep.subr.bf16.mxu0 %v1415
    %1654 = vmatpush1.bf16.msra.mxu0 %v1414
    %1655 = vmatprep.subr.bf16.mxu0 %v1419
    %1656 = vmatpush1.bf16.msra.mxu0 %v1418
    %1657 = vmatprep.subr.bf16.mxu0 %v1423
    %1658 = vmatpush1.bf16.msra.mxu0 %v1422
    %1659 = vmatprep.mubr.bf16.mxu0 %v880
    %1660 = vmatmul.mubr.bf16.gmra.mrb[0].mxu0 %v879
    %v1661 = vpop.f32.mrb[0].mxu0
    %v1662 = vadd.f32 %v1589, %v1661
    %v1663 = vpop.f32.mrb[0].mxu0
    %v1664 = vadd.f32 %v1591, %v1663
    %v1665 = vpop.f32.mrb[0].mxu0
    %v1666 = vadd.f32 %v1593, %v1665
    %v1667 = vpop.f32.mrb[0].mxu0
    %v1668 = vadd.f32 %v1595, %v1667
    %1669 = vmatprep.mubr.bf16.mxu0 %v884
    %1670 = vmatmul.mubr.bf16.gmra.mrb[0].mxu0 %v883
    %v1671 = vpop.f32.mrb[0].mxu0
    %v1672 = vadd.f32 %v1599, %v1671
    %v1673 = vpop.f32.mrb[0].mxu0
    %v1674 = vadd.f32 %v1601, %v1673
    %v1675 = vpop.f32.mrb[0].mxu0
    %v1676 = vadd.f32 %v1603, %v1675
    %v1677 = vpop.f32.mrb[0].mxu0
    %v1678 = vadd.f32 %v1605, %v1677
    %1679 = vmatprep.mubr.bf16.mxu0 %v888
    %1680 = vmatmul.mubr.bf16.gmra.mrb[0].mxu0 %v887
    %v1681 = vpop.f32.mrb[0].mxu0
    %v1682 = vadd.f32 %v1609, %v1681
    %v1683 = vpop.f32.mrb[0].mxu0
    %v1684 = vadd.f32 %v1611, %v1683
    %v1685 = vpop.f32.mrb[0].mxu0
    %v1686 = vadd.f32 %v1613, %v1685
    %v1687 = vpop.f32.mrb[0].mxu0
    %v1688 = vadd.f32 %v1615, %v1687
    %1689 = vmatprep.mubr.bf16.mxu0 %v892
    %1690 = vmatmul.mubr.bf16.gmra.mrb[0].mxu0 %v891
    %v1691 = vpop.f32.mrb[0].mxu0
    %v1692 = vadd.f32 %v1619, %v1691
    %v1693 = vpop.f32.mrb[0].mxu0
    %v1694 = vadd.f32 %v1621, %v1693
    %v1695 = vpop.f32.mrb[0].mxu0
    %v1696 = vadd.f32 %v1623, %v1695
    %v1697 = vpop.f32.mrb[0].mxu0
    %v1698 = vadd.f32 %v1625, %v1697
    %1699 = vdwg.mxu0
    %1700 = vmatprep.subr.bf16.mxu0 %v1301
    %1701 = vmatpush1.bf16.msra.mxu0 %v1300
    %1702 = vmatprep.subr.bf16.mxu0 %v1305
    %1703 = vmatpush1.bf16.msra.mxu0 %v1304
    %1704 = vmatprep.subr.bf16.mxu0 %v1309
    %1705 = vmatpush1.bf16.msra.mxu0 %v1308
    %1706 = vmatprep.subr.bf16.mxu0 %v1313
    %1707 = vmatpush1.bf16.msra.mxu0 %v1312
    %1708 = vmatprep.subr.bf16.mxu0 %v1317
    %1709 = vmatpush1.bf16.msra.mxu0 %v1316
    %1710 = vmatprep.subr.bf16.mxu0 %v1321
    %1711 = vmatpush1.bf16.msra.mxu0 %v1320
    %1712 = vmatprep.subr.bf16.mxu0 %v1325
    %1713 = vmatpush1.bf16.msra.mxu0 %v1324
    %1714 = vmatprep.subr.bf16.mxu0 %v1329
    %1715 = vmatpush1.bf16.msra.mxu0 %v1328
    %1716 = vmatprep.subr.bf16.mxu0 %v1333
    %1717 = vmatpush1.bf16.msra.mxu0 %v1332
    %1718 = vmatprep.subr.bf16.mxu0 %v1337
    %1719 = vmatpush1.bf16.msra.mxu0 %v1336
    %1720 = vmatprep.subr.bf16.mxu0 %v1341
    %1721 = vmatpush1.bf16.msra.mxu0 %v1340
    %1722 = vmatprep.subr.bf16.mxu0 %v1345
    %1723 = vmatpush1.bf16.msra.mxu0 %v1344
    %1724 = vmatprep.subr.bf16.mxu0 %v1349
    %1725 = vmatpush1.bf16.msra.mxu0 %v1348
    %1726 = vmatprep.subr.bf16.mxu0 %v1353
    %1727 = vmatpush1.bf16.msra.mxu0 %v1352
    %1728 = vmatprep.subr.bf16.mxu0 %v1357
    %1729 = vmatpush1.bf16.msra.mxu0 %v1356
    %1730 = vmatprep.subr.bf16.mxu0 %v1361
    %1731 = vmatpush1.bf16.msra.mxu0 %v1360
    %1732 = vmatprep.mubr.bf16.mxu0 %v878
    %1733 = vmatmul.mubr.bf16.gmra.mrb[0].mxu0 %v877
    %v1734 = vpop.f32.mrb[0].mxu0
    %v1735 = vadd.f32 %v905, %v1734
    %v1736 = vpop.f32.mrb[0].mxu0
    %v1737 = vadd.f32 %v909, %v1736
    %v1738 = vpop.f32.mrb[0].mxu0
    %v1739 = vadd.f32 %v905, %v1738
    %v1740 = vpop.f32.mrb[0].mxu0
    %v1741 = vadd.f32 %v909, %v1740
    %1742 = vmatprep.mubr.bf16.mxu0 %v882
    %1743 = vmatmul.mubr.bf16.gmra.mrb[0].mxu0 %v881
    %v1744 = vpop.f32.mrb[0].mxu0
    %v1745 = vadd.f32 %v905, %v1744
    %v1746 = vpop.f32.mrb[0].mxu0
    %v1747 = vadd.f32 %v909, %v1746
    %v1748 = vpop.f32.mrb[0].mxu0
    %v1749 = vadd.f32 %v905, %v1748
    %v1750 = vpop.f32.mrb[0].mxu0
    %v1751 = vadd.f32 %v909, %v1750
    %1752 = vmatprep.mubr.bf16.mxu0 %v886
    %1753 = vmatmul.mubr.bf16.gmra.mrb[0].mxu0 %v885
    %v1754 = vpop.f32.mrb[0].mxu0
    %v1755 = vadd.f32 %v905, %v1754
    %v1756 = vpop.f32.mrb[0].mxu0
    %v1757 = vadd.f32 %v909, %v1756
    %v1758 = vpop.f32.mrb[0].mxu0
    %v1759 = vadd.f32 %v905, %v1758
    %v1760 = vpop.f32.mrb[0].mxu0
    %v1761 = vadd.f32 %v909, %v1760
    %1762 = vmatprep.mubr.bf16.mxu0 %v890
    %1763 = vmatmul.mubr.bf16.gmra.mrb[0].mxu0 %v889
    %v1764 = vpop.f32.mrb[0].mxu0
    %v1765 = vadd.f32 %v905, %v1764
    %v1766 = vpop.f32.mrb[0].mxu0
    %v1767 = vadd.f32 %v909, %v1766
    %v1768 = vpop.f32.mrb[0].mxu0
    %v1769 = vadd.f32 %v905, %v1768
    %v1770 = vpop.f32.mrb[0].mxu0
    %v1771 = vadd.f32 %v909, %v1770
    %1772 = vdwg.mxu0
    %1773 = vmatprep.subr.bf16.mxu0 %v1365
    %1774 = vmatpush1.bf16.msra.mxu0 %v1364
    %1775 = vmatprep.subr.bf16.mxu0 %v1369
    %1776 = vmatpush1.bf16.msra.mxu0 %v1368
    %1777 = vmatprep.subr.bf16.mxu0 %v1373
    %1778 = vmatpush1.bf16.msra.mxu0 %v1372
    %1779 = vmatprep.subr.bf16.mxu0 %v1377
    %1780 = vmatpush1.bf16.msra.mxu0 %v1376
    %1781 = vmatprep.subr.bf16.mxu0 %v1381
    %1782 = vmatpush1.bf16.msra.mxu0 %v1380
    %1783 = vmatprep.subr.bf16.mxu0 %v1385
    %1784 = vmatpush1.bf16.msra.mxu0 %v1384
    %1785 = vmatprep.subr.bf16.mxu0 %v1389
    %1786 = vmatpush1.bf16.msra.mxu0 %v1388
    %1787 = vmatprep.subr.bf16.mxu0 %v1393
    %1788 = vmatpush1.bf16.msra.mxu0 %v1392
    %1789 = vmatprep.subr.bf16.mxu0 %v1397
    %1790 = vmatpush1.bf16.msra.mxu0 %v1396
    %1791 = vmatprep.subr.bf16.mxu0 %v1401
    %1792 = vmatpush1.bf16.msra.mxu0 %v1400
    %1793 = vmatprep.subr.bf16.mxu0 %v1405
    %1794 = vmatpush1.bf16.msra.mxu0 %v1404
    %1795 = vmatprep.subr.bf16.mxu0 %v1409
    %1796 = vmatpush1.bf16.msra.mxu0 %v1408
    %1797 = vmatprep.subr.bf16.mxu0 %v1413
    %1798 = vmatpush1.bf16.msra.mxu0 %v1412
    %1799 = vmatprep.subr.bf16.mxu0 %v1417
    %1800 = vmatpush1.bf16.msra.mxu0 %v1416
    %1801 = vmatprep.subr.bf16.mxu0 %v1421
    %1802 = vmatpush1.bf16.msra.mxu0 %v1420
    %1803 = vmatprep.subr.bf16.mxu0 %v1425
    %1804 = vmatpush1.bf16.msra.mxu0 %v1424
    %1805 = vmatprep.mubr.bf16.mxu0 %v880
    %1806 = vmatmul.mubr.bf16.gmra.mrb[0].mxu0 %v879
    %v1807 = vpop.f32.mrb[0].mxu0
    %v1808 = vadd.f32 %v1735, %v1807
    %v1809 = vpop.f32.mrb[0].mxu0
    %v1810 = vadd.f32 %v1737, %v1809
    %v1811 = vpop.f32.mrb[0].mxu0
    %v1812 = vadd.f32 %v1739, %v1811
    %v1813 = vpop.f32.mrb[0].mxu0
    %v1814 = vadd.f32 %v1741, %v1813
    %1815 = vmatprep.mubr.bf16.mxu0 %v884
    %1816 = vmatmul.mubr.bf16.gmra.mrb[0].mxu0 %v883
    %v1817 = vpop.f32.mrb[0].mxu0
    %v1818 = vadd.f32 %v1745, %v1817
    %v1819 = vpop.f32.mrb[0].mxu0
    %v1820 = vadd.f32 %v1747, %v1819
    %v1821 = vpop.f32.mrb[0].mxu0
    %v1822 = vadd.f32 %v1749, %v1821
    %v1823 = vpop.f32.mrb[0].mxu0
    %v1824 = vadd.f32 %v1751, %v1823
    %1825 = vmatprep.mubr.bf16.mxu0 %v888
    %1826 = vmatmul.mubr.bf16.gmra.mrb[0].mxu0 %v887
    %v1827 = vpop.f32.mrb[0].mxu0
    %v1828 = vadd.f32 %v1755, %v1827
    %v1829 = vpop.f32.mrb[0].mxu0
    %v1830 = vadd.f32 %v1757, %v1829
    %v1831 = vpop.f32.mrb[0].mxu0
    %v1832 = vadd.f32 %v1759, %v1831
    %v1833 = vpop.f32.mrb[0].mxu0
    %v1834 = vadd.f32 %v1761, %v1833
    %1835 = vmatprep.mubr.bf16.mxu0 %v892
    %1836 = vmatmul.mubr.bf16.gmra.mrb[0].mxu0 %v891
    %v1837 = vpop.f32.mrb[0].mxu0
    %v1838 = vadd.f32 %v1765, %v1837
    %v1839 = vpop.f32.mrb[0].mxu0
    %v1840 = vadd.f32 %v1767, %v1839
    %v1841 = vpop.f32.mrb[0].mxu0
    %v1842 = vadd.f32 %v1769, %v1841
    %v1843 = vpop.f32.mrb[0].mxu0
    %v1844 = vadd.f32 %v1771, %v1843
    %1845 = vdwg.mxu0
    %1846 = vst [vmem:[#allocation2] sm:$0xff] %v1662
    %1847 = vst [vmem:[#allocation2 + $0x8] sm:$0xff] %v1664
    %1848 = vst [vmem:[#allocation2 + $0x10] sm:$0xff] %v1808
    %1849 = vst [vmem:[#allocation2 + $0x18] sm:$0xff] %v1810
    %1850 = vst [vmem:[#allocation2 + $0x20] sm:$0xff] %v1666
    %1851 = vst [vmem:[#allocation2 + $0x28] sm:$0xff] %v1668
    %1852 = vst [vmem:[#allocation2 + $0x30] sm:$0xff] %v1812
    %1853 = vst [vmem:[#allocation2 + $0x38] sm:$0xff] %v1814
    %1854 = vst [vmem:[#allocation2 + $0x40] sm:$0xff] %v1672
    %1855 = vst [vmem:[#allocation2 + $0x48] sm:$0xff] %v1674
    %1856 = vst [vmem:[#allocation2 + $0x50] sm:$0xff] %v1818
    %1857 = vst [vmem:[#allocation2 + $0x58] sm:$0xff] %v1820
    %1858 = vst [vmem:[#allocation2 + $0x60] sm:$0xff] %v1676
    %1859 = vst [vmem:[#allocation2 + $0x68] sm:$0xff] %v1678
    %1860 = vst [vmem:[#allocation2 + $0x70] sm:$0xff] %v1822
    %1861 = vst [vmem:[#allocation2 + $0x78] sm:$0xff] %v1824
    %1862 = vst [vmem:[#allocation2 + $0x80] sm:$0xff] %v1682
    %1863 = vst [vmem:[#allocation2 + $0x88] sm:$0xff] %v1684
    %1864 = vst [vmem:[#allocation2 + $0x90] sm:$0xff] %v1828
    %1865 = vst [vmem:[#allocation2 + $0x98] sm:$0xff] %v1830
    %1866 = vst [vmem:[#allocation2 + $0xa0] sm:$0xff] %v1686
    %1867 = vst [vmem:[#allocation2 + $0xa8] sm:$0xff] %v1688
    %1868 = vst [vmem:[#allocation2 + $0xb0] sm:$0xff] %v1832
    %1869 = vst [vmem:[#allocation2 + $0xb8] sm:$0xff] %v1834
    %1870 = vst [vmem:[#allocation2 + $0xc0] sm:$0xff] %v1692
    %1871 = vst [vmem:[#allocation2 + $0xc8] sm:$0xff] %v1694
    %1872 = vst [vmem:[#allocation2 + $0xd0] sm:$0xff] %v1838
    %1873 = vst [vmem:[#allocation2 + $0xd8] sm:$0xff] %v1840
    %1874 = vst [vmem:[#allocation2 + $0xe0] sm:$0xff] %v1696
    %1875 = vst [vmem:[#allocation2 + $0xe8] sm:$0xff] %v1698
    %1876 = vst [vmem:[#allocation2 + $0xf0] sm:$0xff] %v1842
    %1877 = vst [vmem:[#allocation2 + $0xf8] sm:$0xff] %v1844
    %v1878 = vld [vmem:[%s8] sm:$0xff]
    %v1879 = vld [vmem:[%s8 + $0x8] sm:$0xff]
    %v1880 = vld [vmem:[%s8 + $0x10] sm:$0xff]
    %v1881 = vld [vmem:[%s8 + $0x18] sm:$0xff]
    %v1882 = vld [vmem:[%s9] sm:$0xf]
    %v1883 = vld [vmem:[%s10] sm:$0xf]
    %v1884 = vld [vmem:[%s11] sm:$0xf]
    %v1885 = vld [vmem:[%s12] sm:$0xff]
    %v1886 = vld [vmem:[%s12 + $0x8] sm:$0xff]
    %v1887 = vld [vmem:[%s12 + $0x10] sm:$0xff]
    %v1888 = vld [vmem:[%s12 + $0x18] sm:$0xff]
    %v1889 = vld [vmem:[%s12 + $0x20] sm:$0xff]
    %v1890 = vld [vmem:[%s12 + $0x28] sm:$0xff]
    %v1891 = vld [vmem:[%s12 + $0x30] sm:$0xff]
    %v1892 = vld [vmem:[%s12 + $0x38] sm:$0xff]
    %v1893 = vld [vmem:[%s12 + $0x40] sm:$0xff]
    %v1894 = vld [vmem:[%s12 + $0x48] sm:$0xff]
    %v1895 = vld [vmem:[%s12 + $0x50] sm:$0xff]
    %v1896 = vld [vmem:[%s12 + $0x58] sm:$0xff]
    %v1897 = vld [vmem:[%s12 + $0x60] sm:$0xff]
    %v1898 = vld [vmem:[%s12 + $0x68] sm:$0xff]
    %v1899 = vld [vmem:[%s12 + $0x70] sm:$0xff]
    %v1900 = vld [vmem:[%s12 + $0x78] sm:$0xff]
    %v1901 = vld [vmem:[%s12 + $0x80] sm:$0xff]
    %v1902 = vld [vmem:[%s12 + $0x88] sm:$0xff]
    %v1903 = vld [vmem:[%s12 + $0x90] sm:$0xff]
    %v1904 = vld [vmem:[%s12 + $0x98] sm:$0xff]
    %v1905 = vld [vmem:[%s12 + $0xa0] sm:$0xff]
    %v1906 = vld [vmem:[%s12 + $0xa8] sm:$0xff]
    %v1907 = vld [vmem:[%s12 + $0xb0] sm:$0xff]
    %v1908 = vld [vmem:[%s12 + $0xb8] sm:$0xff]
    %v1909 = vld [vmem:[%s12 + $0xc0] sm:$0xff]
    %v1910 = vld [vmem:[%s12 + $0xc8] sm:$0xff]
    %v1911 = vld [vmem:[%s12 + $0xd0] sm:$0xff]
    %v1912 = vld [vmem:[%s12 + $0xd8] sm:$0xff]
    %v1913 = vld [vmem:[%s12 + $0xe0] sm:$0xff]
    %v1914 = vld [vmem:[%s12 + $0xe8] sm:$0xff]
    %v1915 = vld [vmem:[%s12 + $0xf0] sm:$0xff]
    %v1916 = vld [vmem:[%s12 + $0xf8] sm:$0xff]
    %v1917 = vld [vmem:[%s12 + $0x100] sm:$0xff]
    %v1918 = vld [vmem:[%s12 + $0x108] sm:$0xff]
    %v1919 = vld [vmem:[%s12 + $0x110] sm:$0xff]
    %v1920 = vld [vmem:[%s12 + $0x118] sm:$0xff]
    %v1921 = vld [vmem:[%s12 + $0x120] sm:$0xff]
    %v1922 = vld [vmem:[%s12 + $0x128] sm:$0xff]
    %v1923 = vld [vmem:[%s12 + $0x130] sm:$0xff]
    %v1924 = vld [vmem:[%s12 + $0x138] sm:$0xff]
    %v1925 = vld [vmem:[%s12 + $0x140] sm:$0xff]
    %v1926 = vld [vmem:[%s12 + $0x148] sm:$0xff]
    %v1927 = vld [vmem:[%s12 + $0x150] sm:$0xff]
    %v1928 = vld [vmem:[%s12 + $0x158] sm:$0xff]
    %v1929 = vld [vmem:[%s12 + $0x160] sm:$0xff]
    %v1930 = vld [vmem:[%s12 + $0x168] sm:$0xff]
    %v1931 = vld [vmem:[%s12 + $0x170] sm:$0xff]
    %v1932 = vld [vmem:[%s12 + $0x178] sm:$0xff]
    %v1933 = vld [vmem:[%s12 + $0x180] sm:$0xff]
    %v1934 = vld [vmem:[%s12 + $0x188] sm:$0xff]
    %v1935 = vld [vmem:[%s12 + $0x190] sm:$0xff]
    %v1936 = vld [vmem:[%s12 + $0x198] sm:$0xff]
    %v1937 = vld [vmem:[%s12 + $0x1a0] sm:$0xff]
    %v1938 = vld [vmem:[%s12 + $0x1a8] sm:$0xff]
    %v1939 = vld [vmem:[%s12 + $0x1b0] sm:$0xff]
    %v1940 = vld [vmem:[%s12 + $0x1b8] sm:$0xff]
    %v1941 = vld [vmem:[%s12 + $0x1c0] sm:$0xff]
    %v1942 = vld [vmem:[%s12 + $0x1c8] sm:$0xff]
    %v1943 = vld [vmem:[%s12 + $0x1d0] sm:$0xff]
    %v1944 = vld [vmem:[%s12 + $0x1d8] sm:$0xff]
    %v1945 = vld [vmem:[%s12 + $0x1e0] sm:$0xff]
    %v1946 = vld [vmem:[%s12 + $0x1e8] sm:$0xff]
    %v1947 = vld [vmem:[%s12 + $0x1f0] sm:$0xff]
    %v1948 = vld [vmem:[%s12 + $0x1f8] sm:$0xff]
    %v1949 = vld [vmem:[%s12 + $0x200] sm:$0xff]
    %v1950 = vld [vmem:[%s12 + $0x208] sm:$0xff]
    %v1951 = vld [vmem:[%s12 + $0x210] sm:$0xff]
    %v1952 = vld [vmem:[%s12 + $0x218] sm:$0xff]
    %v1953 = vld [vmem:[%s12 + $0x220] sm:$0xff]
    %v1954 = vld [vmem:[%s12 + $0x228] sm:$0xff]
    %v1955 = vld [vmem:[%s12 + $0x230] sm:$0xff]
    %v1956 = vld [vmem:[%s12 + $0x238] sm:$0xff]
    %v1957 = vld [vmem:[%s12 + $0x240] sm:$0xff]
    %v1958 = vld [vmem:[%s12 + $0x248] sm:$0xff]
    %v1959 = vld [vmem:[%s12 + $0x250] sm:$0xff]
    %v1960 = vld [vmem:[%s12 + $0x258] sm:$0xff]
    %v1961 = vld [vmem:[%s12 + $0x260] sm:$0xff]
    %v1962 = vld [vmem:[%s12 + $0x268] sm:$0xff]
    %v1963 = vld [vmem:[%s12 + $0x270] sm:$0xff]
    %v1964 = vld [vmem:[%s12 + $0x278] sm:$0xff]
    %v1965 = vld [vmem:[%s12 + $0x280] sm:$0xff]
    %v1966 = vld [vmem:[%s12 + $0x288] sm:$0xff]
    %v1967 = vld [vmem:[%s12 + $0x290] sm:$0xff]
    %v1968 = vld [vmem:[%s12 + $0x298] sm:$0xff]
    %v1969 = vld [vmem:[%s12 + $0x2a0] sm:$0xff]
    %v1970 = vld [vmem:[%s12 + $0x2a8] sm:$0xff]
    %v1971 = vld [vmem:[%s12 + $0x2b0] sm:$0xff]
    %v1972 = vld [vmem:[%s12 + $0x2b8] sm:$0xff]
    %v1973 = vld [vmem:[%s12 + $0x2c0] sm:$0xff]
    %v1974 = vld [vmem:[%s12 + $0x2c8] sm:$0xff]
    %v1975 = vld [vmem:[%s12 + $0x2d0] sm:$0xff]
    %v1976 = vld [vmem:[%s12 + $0x2d8] sm:$0xff]
    %v1977 = vld [vmem:[%s12 + $0x2e0] sm:$0xff]
    %v1978 = vld [vmem:[%s12 + $0x2e8] sm:$0xff]
    %v1979 = vld [vmem:[%s12 + $0x2f0] sm:$0xff]
    %v1980 = vld [vmem:[%s12 + $0x2f8] sm:$0xff]
    %v1981 = vld [vmem:[%s12 + $0x300] sm:$0xff]
    %v1982 = vld [vmem:[%s12 + $0x308] sm:$0xff]
    %v1983 = vld [vmem:[%s12 + $0x310] sm:$0xff]
    %v1984 = vld [vmem:[%s12 + $0x318] sm:$0xff]
    %v1985 = vld [vmem:[%s12 + $0x320] sm:$0xff]
    %v1986 = vld [vmem:[%s12 + $0x328] sm:$0xff]
    %v1987 = vld [vmem:[%s12 + $0x330] sm:$0xff]
    %v1988 = vld [vmem:[%s12 + $0x338] sm:$0xff]
    %v1989 = vld [vmem:[%s12 + $0x340] sm:$0xff]
    %v1990 = vld [vmem:[%s12 + $0x348] sm:$0xff]
    %v1991 = vld [vmem:[%s12 + $0x350] sm:$0xff]
    %v1992 = vld [vmem:[%s12 + $0x358] sm:$0xff]
    %v1993 = vld [vmem:[%s12 + $0x360] sm:$0xff]
    %v1994 = vld [vmem:[%s12 + $0x368] sm:$0xff]
    %v1995 = vld [vmem:[%s12 + $0x370] sm:$0xff]
    %v1996 = vld [vmem:[%s12 + $0x378] sm:$0xff]
    %v1997 = vld [vmem:[%s12 + $0x380] sm:$0xff]
    %v1998 = vld [vmem:[%s12 + $0x388] sm:$0xff]
    %v1999 = vld [vmem:[%s12 + $0x390] sm:$0xff]
    %v2000 = vld [vmem:[%s12 + $0x398] sm:$0xff]
    %v2001 = vld [vmem:[%s12 + $0x3a0] sm:$0xff]
    %v2002 = vld [vmem:[%s12 + $0x3a8] sm:$0xff]
    %v2003 = vld [vmem:[%s12 + $0x3b0] sm:$0xff]
    %v2004 = vld [vmem:[%s12 + $0x3b8] sm:$0xff]
    %v2005 = vld [vmem:[%s12 + $0x3c0] sm:$0xff]
    %v2006 = vld [vmem:[%s12 + $0x3c8] sm:$0xff]
    %v2007 = vld [vmem:[%s12 + $0x3d0] sm:$0xff]
    %v2008 = vld [vmem:[%s12 + $0x3d8] sm:$0xff]
    %v2009 = vld [vmem:[%s12 + $0x3e0] sm:$0xff]
    %v2010 = vld [vmem:[%s12 + $0x3e8] sm:$0xff]
    %v2011 = vld [vmem:[%s12 + $0x3f0] sm:$0xff]
    %v2012 = vld [vmem:[%s12 + $0x3f8] sm:$0xff]
    %v2013 = vld [vmem:[%s13] sm:$0xf]
    %v2015 = vlaneseq
    %v2016 = vshrl.u32 %v2015, 7
    %v2017 = vsub.s32 0, %v2016
    %v2018 = vrot.slane %v1882, %v2017
    %v2019 = vlaneseq
    %v2020 = vshrl.u32 %v2019, 7
    %v2021 = vsub.s32 1, %v2020
    %v2022 = vrot.slane %v1882, %v2021
    %v2023 = vlaneseq
    %v2024 = vshrl.u32 %v2023, 7
    %v2025 = vsub.s32 2, %v2024
    %v2026 = vrot.slane %v1882, %v2025
    %v2027 = vlaneseq
    %v2028 = vshrl.u32 %v2027, 7
    %v2029 = vsub.s32 3, %v2028
    %v2030 = vrot.slane %v1882, %v2029
    %2035 = vmatprep.subr.mxu0 %v1879
    %2036 = vmatpush1.msra.mxu0 %v1878
    %2037 = vmatprep.subr.mxu0 0.0
    %2038 = vmatpush1.msra.mxu0 0.0
    %2039 = vmatprep.subr.mxu0 0.0
    %2040 = vmatpush1.msra.mxu0 0.0
    %2041 = vmatprep.subr.mxu0 0.0
    %2042 = vmatpush1.msra.mxu0 0.0
    %2043 = vmatprep.subr.mxu0 0.0
    %2044 = vmatpush1.msra.mxu0 0.0
    %2045 = vmatprep.subr.mxu0 0.0
    %2046 = vmatpush1.msra.mxu0 0.0
    %2047 = vmatprep.subr.mxu0 0.0
    %2048 = vmatpush1.msra.mxu0 0.0
    %2049 = vmatprep.subr.mxu0 0.0
    %2050 = vmatpush1.msra.mxu0 0.0
    %2051 = vmatprep.subr.mxu0 0.0
    %2052 = vmatpush1.msra.mxu0 0.0
    %2053 = vmatprep.subr.mxu0 0.0
    %2054 = vmatpush1.msra.mxu0 0.0
    %2055 = vmatprep.subr.mxu0 0.0
    %2056 = vmatpush1.msra.mxu0 0.0
    %2057 = vmatprep.subr.mxu0 0.0
    %2058 = vmatpush1.msra.mxu0 0.0
    %2059 = vmatprep.subr.mxu0 0.0
    %2060 = vmatpush1.msra.mxu0 0.0
    %2061 = vmatprep.subr.mxu0 0.0
    %2062 = vmatpush1.msra.mxu0 0.0
    %2063 = vmatprep.subr.mxu0 0.0
    %2064 = vmatpush1.msra.mxu0 0.0
    %2065 = vmatprep.subr.mxu0 0.0
    %2066 = vmatpush1.msra.mxu0 0.0
    %2067 = vmatprep.subr.mxu0 0.0
    %2068 = vmatpush1.msra.mxu0 0.0
    %2069 = vmatprep.subr.mxu0 0.0
    %2070 = vmatpush1.msra.mxu0 0.0
    %2071 = vmatprep.subr.mxu0 0.0
    %2072 = vmatpush1.msra.mxu0 0.0
    %2073 = vmatprep.subr.mxu0 0.0
    %2074 = vmatpush1.msra.mxu0 0.0
    %2075 = vmatprep.subr.mxu0 0.0
    %2076 = vmatpush1.msra.mxu0 0.0
    %2077 = vmatprep.subr.mxu0 0.0
    %2078 = vmatpush1.msra.mxu0 0.0
    %2079 = vmatprep.subr.mxu0 0.0
    %2080 = vmatpush1.msra.mxu0 0.0
    %2081 = vmatprep.subr.mxu0 0.0
    %2082 = vmatpush1.msra.mxu0 0.0
    %2083 = vmatprep.subr.mxu0 0.0
    %2084 = vmatpush1.msra.mxu0 0.0
    %2085 = vmatprep.subr.mxu0 0.0
    %2086 = vmatpush1.msra.mxu0 0.0
    %2087 = vmatprep.subr.mxu0 0.0
    %2088 = vmatpush1.msra.mxu0 0.0
    %2089 = vmatprep.subr.mxu0 0.0
    %2090 = vmatpush1.msra.mxu0 0.0
    %2091 = vmatprep.subr.mxu0 0.0
    %2092 = vmatpush1.msra.mxu0 0.0
    %2093 = vmatprep.subr.mxu0 0.0
    %2094 = vmatpush1.msra.mxu0 0.0
    %2095 = vmatprep.subr.mxu0 0.0
    %2096 = vmatpush1.msra.mxu0 0.0
    %2097 = vmatprep.subr.mxu0 0.0
    %2098 = vmatpush1.msra.mxu0 0.0
    %2099 = vmatprep.mubr.f32.mxu0 0.0
    %2100 = vmatmul.mubr.f32.gmra.mrb[0].mxu0 %v217
    %v2101 = vpop.f32.mrb[0].mxu0
    %v2102 = vadd.f32 %v2018, %v2101
    %v2103 = vpop.f32.mrb[0].mxu0
    %v2104 = vadd.f32 %v2022, %v2103
    %2105 = vmatprep.mubr.f32.mxu0 0.0
    %2106 = vmatmul.mubr.f32.gmra.mrb[0].mxu0 %v220
    %v2107 = vpop.f32.mrb[0].mxu0
    %v2108 = vadd.f32 %v2018, %v2107
    %v2109 = vpop.f32.mrb[0].mxu0
    %v2110 = vadd.f32 %v2022, %v2109
    %2111 = vmatprep.mubr.f32.mxu0 0.0
    %2112 = vmatmul.mubr.f32.gmra.mrb[0].mxu0 %v223
    %v2113 = vpop.f32.mrb[0].mxu0
    %v2114 = vadd.f32 %v2018, %v2113
    %v2115 = vpop.f32.mrb[0].mxu0
    %v2116 = vadd.f32 %v2022, %v2115
    %2117 = vmatprep.mubr.f32.mxu0 0.0
    %2118 = vmatmul.mubr.f32.gmra.mrb[0].mxu0 %v226
    %v2119 = vpop.f32.mrb[0].mxu0
    %v2120 = vadd.f32 %v2018, %v2119
    %v2121 = vpop.f32.mrb[0].mxu0
    %v2122 = vadd.f32 %v2022, %v2121
    %2123 = vmatprep.mubr.f32.mxu0 0.0
    %2124 = vmatmul.mubr.f32.gmra.mrb[0].mxu0 %v229
    %v2125 = vpop.f32.mrb[0].mxu0
    %v2126 = vadd.f32 %v2018, %v2125
    %v2127 = vpop.f32.mrb[0].mxu0
    %v2128 = vadd.f32 %v2022, %v2127
    %2129 = vmatprep.mubr.f32.mxu0 0.0
    %2130 = vmatmul.mubr.f32.gmra.mrb[0].mxu0 %v232
    %v2131 = vpop.f32.mrb[0].mxu0
    %v2132 = vadd.f32 %v2018, %v2131
    %v2133 = vpop.f32.mrb[0].mxu0
    %v2134 = vadd.f32 %v2022, %v2133
    %2135 = vmatprep.mubr.f32.mxu0 0.0
    %2136 = vmatmul.mubr.f32.gmra.mrb[0].mxu0 %v235
    %v2137 = vpop.f32.mrb[0].mxu0
    %v2138 = vadd.f32 %v2018, %v2137
    %v2139 = vpop.f32.mrb[0].mxu0
    %v2140 = vadd.f32 %v2022, %v2139
    %2141 = vmatprep.mubr.f32.mxu0 0.0
    %2142 = vmatmul.mubr.f32.gmra.mrb[0].mxu0 %v238
    %v2143 = vpop.f32.mrb[0].mxu0
    %v2144 = vadd.f32 %v2018, %v2143
    %v2145 = vpop.f32.mrb[0].mxu0
    %v2146 = vadd.f32 %v2022, %v2145
    %2147 = vdwg.mxu0
    %2148 = vmatprep.subr.mxu0 %v1881
    %2149 = vmatpush1.msra.mxu0 %v1880
    %2150 = vmatprep.subr.mxu0 0.0
    %2151 = vmatpush1.msra.mxu0 0.0
    %2152 = vmatprep.subr.mxu0 0.0
    %2153 = vmatpush1.msra.mxu0 0.0
    %2154 = vmatprep.subr.mxu0 0.0
    %2155 = vmatpush1.msra.mxu0 0.0
    %2156 = vmatprep.subr.mxu0 0.0
    %2157 = vmatpush1.msra.mxu0 0.0
    %2158 = vmatprep.subr.mxu0 0.0
    %2159 = vmatpush1.msra.mxu0 0.0
    %2160 = vmatprep.subr.mxu0 0.0
    %2161 = vmatpush1.msra.mxu0 0.0
    %2162 = vmatprep.subr.mxu0 0.0
    %2163 = vmatpush1.msra.mxu0 0.0
    %2164 = vmatprep.subr.mxu0 0.0
    %2165 = vmatpush1.msra.mxu0 0.0
    %2166 = vmatprep.subr.mxu0 0.0
    %2167 = vmatpush1.msra.mxu0 0.0
    %2168 = vmatprep.subr.mxu0 0.0
    %2169 = vmatpush1.msra.mxu0 0.0
    %2170 = vmatprep.subr.mxu0 0.0
    %2171 = vmatpush1.msra.mxu0 0.0
    %2172 = vmatprep.subr.mxu0 0.0
    %2173 = vmatpush1.msra.mxu0 0.0
    %2174 = vmatprep.subr.mxu0 0.0
    %2175 = vmatpush1.msra.mxu0 0.0
    %2176 = vmatprep.subr.mxu0 0.0
    %2177 = vmatpush1.msra.mxu0 0.0
    %2178 = vmatprep.subr.mxu0 0.0
    %2179 = vmatpush1.msra.mxu0 0.0
    %2180 = vmatprep.subr.mxu0 0.0
    %2181 = vmatpush1.msra.mxu0 0.0
    %2182 = vmatprep.subr.mxu0 0.0
    %2183 = vmatpush1.msra.mxu0 0.0
    %2184 = vmatprep.subr.mxu0 0.0
    %2185 = vmatpush1.msra.mxu0 0.0
    %2186 = vmatprep.subr.mxu0 0.0
    %2187 = vmatpush1.msra.mxu0 0.0
    %2188 = vmatprep.subr.mxu0 0.0
    %2189 = vmatpush1.msra.mxu0 0.0
    %2190 = vmatprep.subr.mxu0 0.0
    %2191 = vmatpush1.msra.mxu0 0.0
    %2192 = vmatprep.subr.mxu0 0.0
    %2193 = vmatpush1.msra.mxu0 0.0
    %2194 = vmatprep.subr.mxu0 0.0
    %2195 = vmatpush1.msra.mxu0 0.0
    %2196 = vmatprep.subr.mxu0 0.0
    %2197 = vmatpush1.msra.mxu0 0.0
    %2198 = vmatprep.subr.mxu0 0.0
    %2199 = vmatpush1.msra.mxu0 0.0
    %2200 = vmatprep.subr.mxu0 0.0
    %2201 = vmatpush1.msra.mxu0 0.0
    %2202 = vmatprep.subr.mxu0 0.0
    %2203 = vmatpush1.msra.mxu0 0.0
    %2204 = vmatprep.subr.mxu0 0.0
    %2205 = vmatpush1.msra.mxu0 0.0
    %2206 = vmatprep.subr.mxu0 0.0
    %2207 = vmatpush1.msra.mxu0 0.0
    %2208 = vmatprep.subr.mxu0 0.0
    %2209 = vmatpush1.msra.mxu0 0.0
    %2210 = vmatprep.subr.mxu0 0.0
    %2211 = vmatpush1.msra.mxu0 0.0
    %2212 = vmatprep.mubr.f32.mxu0 0.0
    %2213 = vmatmul.mubr.f32.gmra.mrb[0].mxu0 %v217
    %v2214 = vpop.f32.mrb[0].mxu0
    %v2215 = vadd.f32 %v2026, %v2214
    %v2216 = vpop.f32.mrb[0].mxu0
    %v2217 = vadd.f32 %v2030, %v2216
    %2218 = vmatprep.mubr.f32.mxu0 0.0
    %2219 = vmatmul.mubr.f32.gmra.mrb[0].mxu0 %v220
    %v2220 = vpop.f32.mrb[0].mxu0
    %v2221 = vadd.f32 %v2026, %v2220
    %v2222 = vpop.f32.mrb[0].mxu0
    %v2223 = vadd.f32 %v2030, %v2222
    %2224 = vmatprep.mubr.f32.mxu0 0.0
    %2225 = vmatmul.mubr.f32.gmra.mrb[0].mxu0 %v223
    %v2226 = vpop.f32.mrb[0].mxu0
    %v2227 = vadd.f32 %v2026, %v2226
    %v2228 = vpop.f32.mrb[0].mxu0
    %v2229 = vadd.f32 %v2030, %v2228
    %2230 = vmatprep.mubr.f32.mxu0 0.0
    %2231 = vmatmul.mubr.f32.gmra.mrb[0].mxu0 %v226
    %v2232 = vpop.f32.mrb[0].mxu0
    %v2233 = vadd.f32 %v2026, %v2232
    %v2234 = vpop.f32.mrb[0].mxu0
    %v2235 = vadd.f32 %v2030, %v2234
    %2236 = vmatprep.mubr.f32.mxu0 0.0
    %2237 = vmatmul.mubr.f32.gmra.mrb[0].mxu0 %v229
    %v2238 = vpop.f32.mrb[0].mxu0
    %v2239 = vadd.f32 %v2026, %v2238
    %v2240 = vpop.f32.mrb[0].mxu0
    %v2241 = vadd.f32 %v2030, %v2240
    %2242 = vmatprep.mubr.f32.mxu0 0.0
    %2243 = vmatmul.mubr.f32.gmra.mrb[0].mxu0 %v232
    %v2244 = vpop.f32.mrb[0].mxu0
    %v2245 = vadd.f32 %v2026, %v2244
    %v2246 = vpop.f32.mrb[0].mxu0
    %v2247 = vadd.f32 %v2030, %v2246
    %2248 = vmatprep.mubr.f32.mxu0 0.0
    %2249 = vmatmul.mubr.f32.gmra.mrb[0].mxu0 %v235
    %v2250 = vpop.f32.mrb[0].mxu0
    %v2251 = vadd.f32 %v2026, %v2250
    %v2252 = vpop.f32.mrb[0].mxu0
    %v2253 = vadd.f32 %v2030, %v2252
    %2254 = vmatprep.mubr.f32.mxu0 0.0
    %2255 = vmatmul.mubr.f32.gmra.mrb[0].mxu0 %v238
    %v2256 = vpop.f32.mrb[0].mxu0
    %v2257 = vadd.f32 %v2026, %v2256
    %v2258 = vpop.f32.mrb[0].mxu0
    %v2259 = vadd.f32 %v2030, %v2258
    %2260 = vdwg.mxu0
    %v2261 = vadd.f32 %v2102, %v2108
    %v2262 = vadd.f32 %v2261, %v2114
    %v2263 = vadd.f32 %v2262, %v2120
    %v2264 = vrot.slane %v2263, 4
    %v2265 = vadd.f32 %v2263, %v2264
    %v2266 = vrot.slane %v2265, 2
    %v2267 = vadd.f32 %v2265, %v2266
    %v2268 = vrot.slane %v2267, 1
    %v2269 = vadd.f32 %v2267, %v2268
    %v2270 = vadd.f32 %v2104, %v2110
    %v2271 = vadd.f32 %v2270, %v2116
    %v2272 = vadd.f32 %v2271, %v2122
    %v2273 = vrot.slane %v2272, 4
    %v2274 = vadd.f32 %v2272, %v2273
    %v2275 = vrot.slane %v2274, 2
    %v2276 = vadd.f32 %v2274, %v2275
    %v2277 = vrot.slane %v2276, 1
    %v2278 = vadd.f32 %v2276, %v2277
    %v2279 = vadd.f32 %v2215, %v2221
    %v2280 = vadd.f32 %v2279, %v2227
    %v2281 = vadd.f32 %v2280, %v2233
    %v2282 = vrot.slane %v2281, 4
    %v2283 = vadd.f32 %v2281, %v2282
    %v2284 = vrot.slane %v2283, 2
    %v2285 = vadd.f32 %v2283, %v2284
    %v2286 = vrot.slane %v2285, 1
    %v2287 = vadd.f32 %v2285, %v2286
    %v2288 = vadd.f32 %v2217, %v2223
    %v2289 = vadd.f32 %v2288, %v2229
    %v2290 = vadd.f32 %v2289, %v2235
    %v2291 = vrot.slane %v2290, 4
    %v2292 = vadd.f32 %v2290, %v2291
    %v2293 = vrot.slane %v2292, 2
    %v2294 = vadd.f32 %v2292, %v2293
    %v2295 = vrot.slane %v2294, 1
    %v2296 = vadd.f32 %v2294, %v2295
    %v2297 = vmul.f32 %v2269, %v502
    %v2298 = vmul.f32 %v2278, %v502
    %v2299 = vmul.f32 %v2287, %v502
    %v2300 = vmul.f32 %v2296, %v502
    %v2301 = vsub.f32 %v2102, %v2297
    %v2302 = vsub.f32 %v2104, %v2298
    %v2303 = vsub.f32 %v2215, %v2299
    %v2304 = vsub.f32 %v2217, %v2300
    %v2305 = vsub.f32 %v2108, %v2297
    %v2306 = vsub.f32 %v2110, %v2298
    %v2307 = vsub.f32 %v2221, %v2299
    %v2308 = vsub.f32 %v2223, %v2300
    %v2309 = vsub.f32 %v2114, %v2297
    %v2310 = vsub.f32 %v2116, %v2298
    %v2311 = vsub.f32 %v2227, %v2299
    %v2312 = vsub.f32 %v2229, %v2300
    %v2313 = vsub.f32 %v2120, %v2297
    %v2314 = vsub.f32 %v2122, %v2298
    %v2315 = vsub.f32 %v2233, %v2299
    %v2316 = vsub.f32 %v2235, %v2300
    %v2317 = vmul.f32 %v2301, %v2301
    %v2318 = vmul.f32 %v2302, %v2302
    %v2319 = vmul.f32 %v2303, %v2303
    %v2320 = vmul.f32 %v2304, %v2304
    %v2321 = vmul.f32 %v2305, %v2305
    %v2322 = vmul.f32 %v2306, %v2306
    %v2323 = vmul.f32 %v2307, %v2307
    %v2324 = vmul.f32 %v2308, %v2308
    %v2325 = vmul.f32 %v2309, %v2309
    %v2326 = vmul.f32 %v2310, %v2310
    %v2327 = vmul.f32 %v2311, %v2311
    %v2328 = vmul.f32 %v2312, %v2312
    %v2329 = vmul.f32 %v2313, %v2313
    %v2330 = vmul.f32 %v2314, %v2314
    %v2331 = vmul.f32 %v2315, %v2315
    %v2332 = vmul.f32 %v2316, %v2316
    %v2333 = vadd.f32 %v2317, %v2321
    %v2334 = vadd.f32 %v2333, %v2325
    %v2335 = vadd.f32 %v2334, %v2329
    %v2336 = vrot.slane %v2335, 4
    %v2337 = vadd.f32 %v2335, %v2336
    %v2338 = vrot.slane %v2337, 2
    %v2339 = vadd.f32 %v2337, %v2338
    %v2340 = vrot.slane %v2339, 1
    %v2341 = vadd.f32 %v2339, %v2340
    %v2342 = vadd.f32 %v2318, %v2322
    %v2343 = vadd.f32 %v2342, %v2326
    %v2344 = vadd.f32 %v2343, %v2330
    %v2345 = vrot.slane %v2344, 4
    %v2346 = vadd.f32 %v2344, %v2345
    %v2347 = vrot.slane %v2346, 2
    %v2348 = vadd.f32 %v2346, %v2347
    %v2349 = vrot.slane %v2348, 1
    %v2350 = vadd.f32 %v2348, %v2349
    %v2351 = vadd.f32 %v2319, %v2323
    %v2352 = vadd.f32 %v2351, %v2327
    %v2353 = vadd.f32 %v2352, %v2331
    %v2354 = vrot.slane %v2353, 4
    %v2355 = vadd.f32 %v2353, %v2354
    %v2356 = vrot.slane %v2355, 2
    %v2357 = vadd.f32 %v2355, %v2356
    %v2358 = vrot.slane %v2357, 1
    %v2359 = vadd.f32 %v2357, %v2358
    %v2360 = vadd.f32 %v2320, %v2324
    %v2361 = vadd.f32 %v2360, %v2328
    %v2362 = vadd.f32 %v2361, %v2332
    %v2363 = vrot.slane %v2362, 4
    %v2364 = vadd.f32 %v2362, %v2363
    %v2365 = vrot.slane %v2364, 2
    %v2366 = vadd.f32 %v2364, %v2365
    %v2367 = vrot.slane %v2366, 1
    %v2368 = vadd.f32 %v2366, %v2367
    %v2369 = vmul.f32 %v2341, %v502
    %v2370 = vmul.f32 %v2350, %v502
    %v2371 = vmul.f32 %v2359, %v502
    %v2372 = vmul.f32 %v2368, %v502
    %v2373 = vadd.f32 %v2369, 1e-05
    %v2374 = vadd.f32 %v2370, 1e-05
    %v2375 = vadd.f32 %v2371, 1e-05
    %v2376 = vadd.f32 %v2372, 1e-05
    %v2377 = vrsqrt.pop %v2373
    %v2378 = vrsqrt.pop %v2374
    %v2379 = vrsqrt.pop %v2375
    %v2380 = vrsqrt.pop %v2376
    %v2381 = vmul.f32 %v2301, %v2377
    %v2382 = vmul.f32 %v2302, %v2378
    %v2383 = vmul.f32 %v2303, %v2379
    %v2384 = vmul.f32 %v2304, %v2380
    %v2385 = vmul.f32 %v2305, %v2377
    %v2386 = vmul.f32 %v2306, %v2378
    %v2387 = vmul.f32 %v2307, %v2379
    %v2388 = vmul.f32 %v2308, %v2380
    %v2389 = vmul.f32 %v2309, %v2377
    %v2390 = vmul.f32 %v2310, %v2378
    %v2391 = vmul.f32 %v2311, %v2379
    %v2392 = vmul.f32 %v2312, %v2380
    %v2393 = vmul.f32 %v2313, %v2377
    %v2394 = vmul.f32 %v2314, %v2378
    %v2395 = vmul.f32 %v2315, %v2379
    %v2396 = vmul.f32 %v2316, %v2380
    %v2397 = vadd.f32 %v2126, %v2132
    %v2398 = vadd.f32 %v2397, %v2138
    %v2399 = vadd.f32 %v2398, %v2144
    %v2400 = vrot.slane %v2399, 4
    %v2401 = vadd.f32 %v2399, %v2400
    %v2402 = vrot.slane %v2401, 2
    %v2403 = vadd.f32 %v2401, %v2402
    %v2404 = vrot.slane %v2403, 1
    %v2405 = vadd.f32 %v2403, %v2404
    %v2406 = vadd.f32 %v2128, %v2134
    %v2407 = vadd.f32 %v2406, %v2140
    %v2408 = vadd.f32 %v2407, %v2146
    %v2409 = vrot.slane %v2408, 4
    %v2410 = vadd.f32 %v2408, %v2409
    %v2411 = vrot.slane %v2410, 2
    %v2412 = vadd.f32 %v2410, %v2411
    %v2413 = vrot.slane %v2412, 1
    %v2414 = vadd.f32 %v2412, %v2413
    %v2415 = vadd.f32 %v2239, %v2245
    %v2416 = vadd.f32 %v2415, %v2251
    %v2417 = vadd.f32 %v2416, %v2257
    %v2418 = vrot.slane %v2417, 4
    %v2419 = vadd.f32 %v2417, %v2418
    %v2420 = vrot.slane %v2419, 2
    %v2421 = vadd.f32 %v2419, %v2420
    %v2422 = vrot.slane %v2421, 1
    %v2423 = vadd.f32 %v2421, %v2422
    %v2424 = vadd.f32 %v2241, %v2247
    %v2425 = vadd.f32 %v2424, %v2253
    %v2426 = vadd.f32 %v2425, %v2259
    %v2427 = vrot.slane %v2426, 4
    %v2428 = vadd.f32 %v2426, %v2427
    %v2429 = vrot.slane %v2428, 2
    %v2430 = vadd.f32 %v2428, %v2429
    %v2431 = vrot.slane %v2430, 1
    %v2432 = vadd.f32 %v2430, %v2431
    %v2433 = vmul.f32 %v2405, %v502
    %v2434 = vmul.f32 %v2414, %v502
    %v2435 = vmul.f32 %v2423, %v502
    %v2436 = vmul.f32 %v2432, %v502
    %v2437 = vsub.f32 %v2126, %v2433
    %v2438 = vsub.f32 %v2128, %v2434
    %v2439 = vsub.f32 %v2239, %v2435
    %v2440 = vsub.f32 %v2241, %v2436
    %v2441 = vsub.f32 %v2132, %v2433
    %v2442 = vsub.f32 %v2134, %v2434
    %v2443 = vsub.f32 %v2245, %v2435
    %v2444 = vsub.f32 %v2247, %v2436
    %v2445 = vsub.f32 %v2138, %v2433
    %v2446 = vsub.f32 %v2140, %v2434
    %v2447 = vsub.f32 %v2251, %v2435
    %v2448 = vsub.f32 %v2253, %v2436
    %v2449 = vsub.f32 %v2144, %v2433
    %v2450 = vsub.f32 %v2146, %v2434
    %v2451 = vsub.f32 %v2257, %v2435
    %v2452 = vsub.f32 %v2259, %v2436
    %v2453 = vmul.f32 %v2437, %v2437
    %v2454 = vmul.f32 %v2438, %v2438
    %v2455 = vmul.f32 %v2439, %v2439
    %v2456 = vmul.f32 %v2440, %v2440
    %v2457 = vmul.f32 %v2441, %v2441
    %v2458 = vmul.f32 %v2442, %v2442
    %v2459 = vmul.f32 %v2443, %v2443
    %v2460 = vmul.f32 %v2444, %v2444
    %v2461 = vmul.f32 %v2445, %v2445
    %v2462 = vmul.f32 %v2446, %v2446
    %v2463 = vmul.f32 %v2447, %v2447
    %v2464 = vmul.f32 %v2448, %v2448
    %v2465 = vmul.f32 %v2449, %v2449
    %v2466 = vmul.f32 %v2450, %v2450
    %v2467 = vmul.f32 %v2451, %v2451
    %v2468 = vmul.f32 %v2452, %v2452
    %v2469 = vadd.f32 %v2453, %v2457
    %v2470 = vadd.f32 %v2469, %v2461
    %v2471 = vadd.f32 %v2470, %v2465
    %v2472 = vrot.slane %v2471, 4
    %v2473 = vadd.f32 %v2471, %v2472
    %v2474 = vrot.slane %v2473, 2
    %v2475 = vadd.f32 %v2473, %v2474
    %v2476 = vrot.slane %v2475, 1
    %v2477 = vadd.f32 %v2475, %v2476
    %v2478 = vadd.f32 %v2454, %v2458
    %v2479 = vadd.f32 %v2478, %v2462
    %v2480 = vadd.f32 %v2479, %v2466
    %v2481 = vrot.slane %v2480, 4
    %v2482 = vadd.f32 %v2480, %v2481
    %v2483 = vrot.slane %v2482, 2
    %v2484 = vadd.f32 %v2482, %v2483
    %v2485 = vrot.slane %v2484, 1
    %v2486 = vadd.f32 %v2484, %v2485
    %v2487 = vadd.f32 %v2455, %v2459
    %v2488 = vadd.f32 %v2487, %v2463
    %v2489 = vadd.f32 %v2488, %v2467
    %v2490 = vrot.slane %v2489, 4
    %v2491 = vadd.f32 %v2489, %v2490
    %v2492 = vrot.slane %v2491, 2
    %v2493 = vadd.f32 %v2491, %v2492
    %v2494 = vrot.slane %v2493, 1
    %v2495 = vadd.f32 %v2493, %v2494
    %v2496 = vadd.f32 %v2456, %v2460
    %v2497 = vadd.f32 %v2496, %v2464
    %v2498 = vadd.f32 %v2497, %v2468
    %v2499 = vrot.slane %v2498, 4
    %v2500 = vadd.f32 %v2498, %v2499
    %v2501 = vrot.slane %v2500, 2
    %v2502 = vadd.f32 %v2500, %v2501
    %v2503 = vrot.slane %v2502, 1
    %v2504 = vadd.f32 %v2502, %v2503
    %v2505 = vmul.f32 %v2477, %v502
    %v2506 = vmul.f32 %v2486, %v502
    %v2507 = vmul.f32 %v2495, %v502
    %v2508 = vmul.f32 %v2504, %v502
    %v2509 = vadd.f32 %v2505, 1e-05
    %v2510 = vadd.f32 %v2506, 1e-05
    %v2511 = vadd.f32 %v2507, 1e-05
    %v2512 = vadd.f32 %v2508, 1e-05
    %v2513 = vrsqrt.pop %v2509
    %v2514 = vrsqrt.pop %v2510
    %v2515 = vrsqrt.pop %v2511
    %v2516 = vrsqrt.pop %v2512
    %v2517 = vmul.f32 %v2437, %v2513
    %v2518 = vmul.f32 %v2438, %v2514
    %v2519 = vmul.f32 %v2439, %v2515
    %v2520 = vmul.f32 %v2440, %v2516
    %v2521 = vmul.f32 %v2441, %v2513
    %v2522 = vmul.f32 %v2442, %v2514
    %v2523 = vmul.f32 %v2443, %v2515
    %v2524 = vmul.f32 %v2444, %v2516
    %v2525 = vmul.f32 %v2445, %v2513
    %v2526 = vmul.f32 %v2446, %v2514
    %v2527 = vmul.f32 %v2447, %v2515
    %v2528 = vmul.f32 %v2448, %v2516
    %v2529 = vmul.f32 %v2449, %v2513
    %v2530 = vmul.f32 %v2450, %v2514
    %v2531 = vmul.f32 %v2451, %v2515
    %v2532 = vmul.f32 %v2452, %v2516
    %v2534 = vlaneseq
    %v2535 = vshrl.u32 %v2534, 7
    %v2536 = vsub.s32 0, %v2535
    %v2537 = vrot.slane %v1883, %v2536
    %v2538 = vlaneseq
    %v2539 = vshrl.u32 %v2538, 7
    %v2540 = vsub.s32 1, %v2539
    %v2541 = vrot.slane %v1883, %v2540
    %v2542 = vlaneseq
    %v2543 = vshrl.u32 %v2542, 7
    %v2544 = vsub.s32 2, %v2543
    %v2545 = vrot.slane %v1883, %v2544
    %v2546 = vlaneseq
    %v2547 = vshrl.u32 %v2546, 7
    %v2548 = vsub.s32 3, %v2547
    %v2549 = vrot.slane %v1883, %v2548
    %v2554 = vmul.f32 %v2381, %v2537
    %v2555 = vmul.f32 %v2382, %v2541
    %v2556 = vmul.f32 %v2383, %v2545
    %v2557 = vmul.f32 %v2384, %v2549
    %v2558 = vmul.f32 %v2385, %v2537
    %v2559 = vmul.f32 %v2386, %v2541
    %v2560 = vmul.f32 %v2387, %v2545
    %v2561 = vmul.f32 %v2388, %v2549
    %v2562 = vmul.f32 %v2389, %v2537
    %v2563 = vmul.f32 %v2390, %v2541
    %v2564 = vmul.f32 %v2391, %v2545
    %v2565 = vmul.f32 %v2392, %v2549
    %v2566 = vmul.f32 %v2393, %v2537
    %v2567 = vmul.f32 %v2394, %v2541
    %v2568 = vmul.f32 %v2395, %v2545
    %v2569 = vmul.f32 %v2396, %v2549
    %v2570 = vmul.f32 %v2517, %v2537
    %v2571 = vmul.f32 %v2518, %v2541
    %v2572 = vmul.f32 %v2519, %v2545
    %v2573 = vmul.f32 %v2520, %v2549
    %v2574 = vmul.f32 %v2521, %v2537
    %v2575 = vmul.f32 %v2522, %v2541
    %v2576 = vmul.f32 %v2523, %v2545
    %v2577 = vmul.f32 %v2524, %v2549
    %v2578 = vmul.f32 %v2525, %v2537
    %v2579 = vmul.f32 %v2526, %v2541
    %v2580 = vmul.f32 %v2527, %v2545
    %v2581 = vmul.f32 %v2528, %v2549
    %v2582 = vmul.f32 %v2529, %v2537
    %v2583 = vmul.f32 %v2530, %v2541
    %v2584 = vmul.f32 %v2531, %v2545
    %v2585 = vmul.f32 %v2532, %v2549
    %v2587 = vlaneseq
    %v2588 = vshrl.u32 %v2587, 7
    %v2589 = vsub.s32 0, %v2588
    %v2590 = vrot.slane %v1884, %v2589
    %v2591 = vlaneseq
    %v2592 = vshrl.u32 %v2591, 7
    %v2593 = vsub.s32 1, %v2592
    %v2594 = vrot.slane %v1884, %v2593
    %v2595 = vlaneseq
    %v2596 = vshrl.u32 %v2595, 7
    %v2597 = vsub.s32 2, %v2596
    %v2598 = vrot.slane %v1884, %v2597
    %v2599 = vlaneseq
    %v2600 = vshrl.u32 %v2599, 7
    %v2601 = vsub.s32 3, %v2600
    %v2602 = vrot.slane %v1884, %v2601
    %v2607 = vadd.f32 %v2554, %v2590
    %v2608 = vadd.f32 %v2555, %v2594
    %v2609 = vadd.f32 %v2556, %v2598
    %v2610 = vadd.f32 %v2557, %v2602
    %v2611 = vadd.f32 %v2558, %v2590
    %v2612 = vadd.f32 %v2559, %v2594
    %v2613 = vadd.f32 %v2560, %v2598
    %v2614 = vadd.f32 %v2561, %v2602
    %v2615 = vadd.f32 %v2562, %v2590
    %v2616 = vadd.f32 %v2563, %v2594
    %v2617 = vadd.f32 %v2564, %v2598
    %v2618 = vadd.f32 %v2565, %v2602
    %v2619 = vadd.f32 %v2566, %v2590
    %v2620 = vadd.f32 %v2567, %v2594
    %v2621 = vadd.f32 %v2568, %v2598
    %v2622 = vadd.f32 %v2569, %v2602
    %v2623 = vadd.f32 %v2570, %v2590
    %v2624 = vadd.f32 %v2571, %v2594
    %v2625 = vadd.f32 %v2572, %v2598
    %v2626 = vadd.f32 %v2573, %v2602
    %v2627 = vadd.f32 %v2574, %v2590
    %v2628 = vadd.f32 %v2575, %v2594
    %v2629 = vadd.f32 %v2576, %v2598
    %v2630 = vadd.f32 %v2577, %v2602
    %v2631 = vadd.f32 %v2578, %v2590
    %v2632 = vadd.f32 %v2579, %v2594
    %v2633 = vadd.f32 %v2580, %v2598
    %v2634 = vadd.f32 %v2581, %v2602
    %v2635 = vadd.f32 %v2582, %v2590
    %v2636 = vadd.f32 %v2583, %v2594
    %v2637 = vadd.f32 %v2584, %v2598
    %v2638 = vadd.f32 %v2585, %v2602
    %v2639 = vmax.f32 %v2607, 0.0
    %v2640 = vmax.f32 %v2608, 0.0
    %v2641 = vmax.f32 %v2609, 0.0
    %v2642 = vmax.f32 %v2610, 0.0
    %v2643 = vmax.f32 %v2611, 0.0
    %v2644 = vmax.f32 %v2612, 0.0
    %v2645 = vmax.f32 %v2613, 0.0
    %v2646 = vmax.f32 %v2614, 0.0
    %v2647 = vmax.f32 %v2615, 0.0
    %v2648 = vmax.f32 %v2616, 0.0
    %v2649 = vmax.f32 %v2617, 0.0
    %v2650 = vmax.f32 %v2618, 0.0
    %v2651 = vmax.f32 %v2619, 0.0
    %v2652 = vmax.f32 %v2620, 0.0
    %v2653 = vmax.f32 %v2621, 0.0
    %v2654 = vmax.f32 %v2622, 0.0
    %v2655 = vmax.f32 %v2623, 0.0
    %v2656 = vmax.f32 %v2624, 0.0
    %v2657 = vmax.f32 %v2625, 0.0
    %v2658 = vmax.f32 %v2626, 0.0
    %v2659 = vmax.f32 %v2627, 0.0
    %v2660 = vmax.f32 %v2628, 0.0
    %v2661 = vmax.f32 %v2629, 0.0
    %v2662 = vmax.f32 %v2630, 0.0
    %v2663 = vmax.f32 %v2631, 0.0
    %v2664 = vmax.f32 %v2632, 0.0
    %v2665 = vmax.f32 %v2633, 0.0
    %v2666 = vmax.f32 %v2634, 0.0
    %v2667 = vmax.f32 %v2635, 0.0
    %v2668 = vmax.f32 %v2636, 0.0
    %v2669 = vmax.f32 %v2637, 0.0
    %v2670 = vmax.f32 %v2638, 0.0
    %v2671 = vpack.c.bf16 %v2643, %v2639
    %v2672 = vpack.c.bf16 %v2644, %v2640
    %v2673 = vpack.c.bf16 %v2645, %v2641
    %v2674 = vpack.c.bf16 %v2646, %v2642
    %v2675 = vpack.c.bf16 %v2651, %v2647
    %v2676 = vpack.c.bf16 %v2652, %v2648
    %v2677 = vpack.c.bf16 %v2653, %v2649
    %v2678 = vpack.c.bf16 %v2654, %v2650
    %v2679 = vpack.c.bf16 %v2659, %v2655
    %v2680 = vpack.c.bf16 %v2660, %v2656
    %v2681 = vpack.c.bf16 %v2661, %v2657
    %v2682 = vpack.c.bf16 %v2662, %v2658
    %v2683 = vpack.c.bf16 %v2667, %v2663
    %v2684 = vpack.c.bf16 %v2668, %v2664
    %v2685 = vpack.c.bf16 %v2669, %v2665
    %v2686 = vpack.c.bf16 %v2670, %v2666
    %v2688 = vlaneseq
    %v2689 = vshrl.u32 %v2688, 7
    %v2690 = vsub.s32 0, %v2689
    %v2691 = vrot.slane %v2013, %v2690
    %v2692 = vlaneseq
    %v2693 = vshrl.u32 %v2692, 7
    %v2694 = vsub.s32 1, %v2693
    %v2695 = vrot.slane %v2013, %v2694
    %v2696 = vlaneseq
    %v2697 = vshrl.u32 %v2696, 7
    %v2698 = vsub.s32 2, %v2697
    %v2699 = vrot.slane %v2013, %v2698
    %v2700 = vlaneseq
    %v2701 = vshrl.u32 %v2700, 7
    %v2702 = vsub.s32 3, %v2701
    %v2703 = vrot.slane %v2013, %v2702
    %v2836 = vunpack.c.l.b16 %v1885
    %v2837 = vunpack.c.h.b16 %v1885
    %v2838 = vunpack.c.l.b16 %v1886
    %v2839 = vunpack.c.h.b16 %v1886
    %v2840 = vunpack.c.l.b16 %v1887
    %v2841 = vunpack.c.h.b16 %v1887
    %v2842 = vunpack.c.l.b16 %v1888
    %v2843 = vunpack.c.h.b16 %v1888
    %v2844 = vunpack.c.l.b16 %v1889
    %v2845 = vunpack.c.h.b16 %v1889
    %v2846 = vunpack.c.l.b16 %v1890
    %v2847 = vunpack.c.h.b16 %v1890
    %v2848 = vunpack.c.l.b16 %v1891
    %v2849 = vunpack.c.h.b16 %v1891
    %v2850 = vunpack.c.l.b16 %v1892
    %v2851 = vunpack.c.h.b16 %v1892
    %v2852 = vunpack.c.l.b16 %v1893
    %v2853 = vunpack.c.h.b16 %v1893
    %v2854 = vunpack.c.l.b16 %v1894
    %v2855 = vunpack.c.h.b16 %v1894
    %v2856 = vunpack.c.l.b16 %v1895
    %v2857 = vunpack.c.h.b16 %v1895
    %v2858 = vunpack.c.l.b16 %v1896
    %v2859 = vunpack.c.h.b16 %v1896
    %v2860 = vunpack.c.l.b16 %v1897
    %v2861 = vunpack.c.h.b16 %v1897
    %v2862 = vunpack.c.l.b16 %v1898
    %v2863 = vunpack.c.h.b16 %v1898
    %v2864 = vunpack.c.l.b16 %v1899
    %v2865 = vunpack.c.h.b16 %v1899
    %v2866 = vunpack.c.l.b16 %v1900
    %v2867 = vunpack.c.h.b16 %v1900
    %v2868 = vunpack.c.l.b16 %v1901
    %v2869 = vunpack.c.h.b16 %v1901
    %v2870 = vunpack.c.l.b16 %v1902
    %v2871 = vunpack.c.h.b16 %v1902
    %v2872 = vunpack.c.l.b16 %v1903
    %v2873 = vunpack.c.h.b16 %v1903
    %v2874 = vunpack.c.l.b16 %v1904
    %v2875 = vunpack.c.h.b16 %v1904
    %v2876 = vunpack.c.l.b16 %v1905
    %v2877 = vunpack.c.h.b16 %v1905
    %v2878 = vunpack.c.l.b16 %v1906
    %v2879 = vunpack.c.h.b16 %v1906
    %v2880 = vunpack.c.l.b16 %v1907
    %v2881 = vunpack.c.h.b16 %v1907
    %v2882 = vunpack.c.l.b16 %v1908
    %v2883 = vunpack.c.h.b16 %v1908
    %v2884 = vunpack.c.l.b16 %v1909
    %v2885 = vunpack.c.h.b16 %v1909
    %v2886 = vunpack.c.l.b16 %v1910
    %v2887 = vunpack.c.h.b16 %v1910
    %v2888 = vunpack.c.l.b16 %v1911
    %v2889 = vunpack.c.h.b16 %v1911
    %v2890 = vunpack.c.l.b16 %v1912
    %v2891 = vunpack.c.h.b16 %v1912
    %v2892 = vunpack.c.l.b16 %v1913
    %v2893 = vunpack.c.h.b16 %v1913
    %v2894 = vunpack.c.l.b16 %v1914
    %v2895 = vunpack.c.h.b16 %v1914
    %v2896 = vunpack.c.l.b16 %v1915
    %v2897 = vunpack.c.h.b16 %v1915
    %v2898 = vunpack.c.l.b16 %v1916
    %v2899 = vunpack.c.h.b16 %v1916
    %v2900 = vunpack.c.l.b16 %v1917
    %v2901 = vunpack.c.h.b16 %v1917
    %v2902 = vunpack.c.l.b16 %v1918
    %v2903 = vunpack.c.h.b16 %v1918
    %v2904 = vunpack.c.l.b16 %v1919
    %v2905 = vunpack.c.h.b16 %v1919
    %v2906 = vunpack.c.l.b16 %v1920
    %v2907 = vunpack.c.h.b16 %v1920
    %v2908 = vunpack.c.l.b16 %v1921
    %v2909 = vunpack.c.h.b16 %v1921
    %v2910 = vunpack.c.l.b16 %v1922
    %v2911 = vunpack.c.h.b16 %v1922
    %v2912 = vunpack.c.l.b16 %v1923
    %v2913 = vunpack.c.h.b16 %v1923
    %v2914 = vunpack.c.l.b16 %v1924
    %v2915 = vunpack.c.h.b16 %v1924
    %v2916 = vunpack.c.l.b16 %v1925
    %v2917 = vunpack.c.h.b16 %v1925
    %v2918 = vunpack.c.l.b16 %v1926
    %v2919 = vunpack.c.h.b16 %v1926
    %v2920 = vunpack.c.l.b16 %v1927
    %v2921 = vunpack.c.h.b16 %v1927
    %v2922 = vunpack.c.l.b16 %v1928
    %v2923 = vunpack.c.h.b16 %v1928
    %v2924 = vunpack.c.l.b16 %v1929
    %v2925 = vunpack.c.h.b16 %v1929
    %v2926 = vunpack.c.l.b16 %v1930
    %v2927 = vunpack.c.h.b16 %v1930
    %v2928 = vunpack.c.l.b16 %v1931
    %v2929 = vunpack.c.h.b16 %v1931
    %v2930 = vunpack.c.l.b16 %v1932
    %v2931 = vunpack.c.h.b16 %v1932
    %v2932 = vunpack.c.l.b16 %v1933
    %v2933 = vunpack.c.h.b16 %v1933
    %v2934 = vunpack.c.l.b16 %v1934
    %v2935 = vunpack.c.h.b16 %v1934
    %v2936 = vunpack.c.l.b16 %v1935
    %v2937 = vunpack.c.h.b16 %v1935
    %v2938 = vunpack.c.l.b16 %v1936
    %v2939 = vunpack.c.h.b16 %v1936
    %v2940 = vunpack.c.l.b16 %v1937
    %v2941 = vunpack.c.h.b16 %v1937
    %v2942 = vunpack.c.l.b16 %v1938
    %v2943 = vunpack.c.h.b16 %v1938
    %v2944 = vunpack.c.l.b16 %v1939
    %v2945 = vunpack.c.h.b16 %v1939
    %v2946 = vunpack.c.l.b16 %v1940
    %v2947 = vunpack.c.h.b16 %v1940
    %v2948 = vunpack.c.l.b16 %v1941
    %v2949 = vunpack.c.h.b16 %v1941
    %v2950 = vunpack.c.l.b16 %v1942
    %v2951 = vunpack.c.h.b16 %v1942
    %v2952 = vunpack.c.l.b16 %v1943
    %v2953 = vunpack.c.h.b16 %v1943
    %v2954 = vunpack.c.l.b16 %v1944
    %v2955 = vunpack.c.h.b16 %v1944
    %v2956 = vunpack.c.l.b16 %v1945
    %v2957 = vunpack.c.h.b16 %v1945
    %v2958 = vunpack.c.l.b16 %v1946
    %v2959 = vunpack.c.h.b16 %v1946
    %v2960 = vunpack.c.l.b16 %v1947
    %v2961 = vunpack.c.h.b16 %v1947
    %v2962 = vunpack.c.l.b16 %v1948
    %v2963 = vunpack.c.h.b16 %v1948
    %v2964 = vunpack.c.l.b16 %v1949
    %v2965 = vunpack.c.h.b16 %v1949
    %v2966 = vunpack.c.l.b16 %v1950
    %v2967 = vunpack.c.h.b16 %v1950
    %v2968 = vunpack.c.l.b16 %v1951
    %v2969 = vunpack.c.h.b16 %v1951
    %v2970 = vunpack.c.l.b16 %v1952
    %v2971 = vunpack.c.h.b16 %v1952
    %v2972 = vunpack.c.l.b16 %v1953
    %v2973 = vunpack.c.h.b16 %v1953
    %v2974 = vunpack.c.l.b16 %v1954
    %v2975 = vunpack.c.h.b16 %v1954
    %v2976 = vunpack.c.l.b16 %v1955
    %v2977 = vunpack.c.h.b16 %v1955
    %v2978 = vunpack.c.l.b16 %v1956
    %v2979 = vunpack.c.h.b16 %v1956
    %v2980 = vunpack.c.l.b16 %v1957
    %v2981 = vunpack.c.h.b16 %v1957
    %v2982 = vunpack.c.l.b16 %v1958
    %v2983 = vunpack.c.h.b16 %v1958
    %v2984 = vunpack.c.l.b16 %v1959
    %v2985 = vunpack.c.h.b16 %v1959
    %v2986 = vunpack.c.l.b16 %v1960
    %v2987 = vunpack.c.h.b16 %v1960
    %v2988 = vunpack.c.l.b16 %v1961
    %v2989 = vunpack.c.h.b16 %v1961
    %v2990 = vunpack.c.l.b16 %v1962
    %v2991 = vunpack.c.h.b16 %v1962
    %v2992 = vunpack.c.l.b16 %v1963
    %v2993 = vunpack.c.h.b16 %v1963
    %v2994 = vunpack.c.l.b16 %v1964
    %v2995 = vunpack.c.h.b16 %v1964
    %v2996 = vunpack.c.l.b16 %v1965
    %v2997 = vunpack.c.h.b16 %v1965
    %v2998 = vunpack.c.l.b16 %v1966
    %v2999 = vunpack.c.h.b16 %v1966
    %v3000 = vunpack.c.l.b16 %v1967
    %v3001 = vunpack.c.h.b16 %v1967
    %v3002 = vunpack.c.l.b16 %v1968
    %v3003 = vunpack.c.h.b16 %v1968
    %v3004 = vunpack.c.l.b16 %v1969
    %v3005 = vunpack.c.h.b16 %v1969
    %v3006 = vunpack.c.l.b16 %v1970
    %v3007 = vunpack.c.h.b16 %v1970
    %v3008 = vunpack.c.l.b16 %v1971
    %v3009 = vunpack.c.h.b16 %v1971
    %v3010 = vunpack.c.l.b16 %v1972
    %v3011 = vunpack.c.h.b16 %v1972
    %v3012 = vunpack.c.l.b16 %v1973
    %v3013 = vunpack.c.h.b16 %v1973
    %v3014 = vunpack.c.l.b16 %v1974
    %v3015 = vunpack.c.h.b16 %v1974
    %v3016 = vunpack.c.l.b16 %v1975
    %v3017 = vunpack.c.h.b16 %v1975
    %v3018 = vunpack.c.l.b16 %v1976
    %v3019 = vunpack.c.h.b16 %v1976
    %v3020 = vunpack.c.l.b16 %v1977
    %v3021 = vunpack.c.h.b16 %v1977
    %v3022 = vunpack.c.l.b16 %v1978
    %v3023 = vunpack.c.h.b16 %v1978
    %v3024 = vunpack.c.l.b16 %v1979
    %v3025 = vunpack.c.h.b16 %v1979
    %v3026 = vunpack.c.l.b16 %v1980
    %v3027 = vunpack.c.h.b16 %v1980
    %v3028 = vunpack.c.l.b16 %v1981
    %v3029 = vunpack.c.h.b16 %v1981
    %v3030 = vunpack.c.l.b16 %v1982
    %v3031 = vunpack.c.h.b16 %v1982
    %v3032 = vunpack.c.l.b16 %v1983
    %v3033 = vunpack.c.h.b16 %v1983
    %v3034 = vunpack.c.l.b16 %v1984
    %v3035 = vunpack.c.h.b16 %v1984
    %v3036 = vunpack.c.l.b16 %v1985
    %v3037 = vunpack.c.h.b16 %v1985
    %v3038 = vunpack.c.l.b16 %v1986
    %v3039 = vunpack.c.h.b16 %v1986
    %v3040 = vunpack.c.l.b16 %v1987
    %v3041 = vunpack.c.h.b16 %v1987
    %v3042 = vunpack.c.l.b16 %v1988
    %v3043 = vunpack.c.h.b16 %v1988
    %v3044 = vunpack.c.l.b16 %v1989
    %v3045 = vunpack.c.h.b16 %v1989
    %v3046 = vunpack.c.l.b16 %v1990
    %v3047 = vunpack.c.h.b16 %v1990
    %v3048 = vunpack.c.l.b16 %v1991
    %v3049 = vunpack.c.h.b16 %v1991
    %v3050 = vunpack.c.l.b16 %v1992
    %v3051 = vunpack.c.h.b16 %v1992
    %v3052 = vunpack.c.l.b16 %v1993
    %v3053 = vunpack.c.h.b16 %v1993
    %v3054 = vunpack.c.l.b16 %v1994
    %v3055 = vunpack.c.h.b16 %v1994
    %v3056 = vunpack.c.l.b16 %v1995
    %v3057 = vunpack.c.h.b16 %v1995
    %v3058 = vunpack.c.l.b16 %v1996
    %v3059 = vunpack.c.h.b16 %v1996
    %v3060 = vunpack.c.l.b16 %v1997
    %v3061 = vunpack.c.h.b16 %v1997
    %v3062 = vunpack.c.l.b16 %v1998
    %v3063 = vunpack.c.h.b16 %v1998
    %v3064 = vunpack.c.l.b16 %v1999
    %v3065 = vunpack.c.h.b16 %v1999
    %v3066 = vunpack.c.l.b16 %v2000
    %v3067 = vunpack.c.h.b16 %v2000
    %v3068 = vunpack.c.l.b16 %v2001
    %v3069 = vunpack.c.h.b16 %v2001
    %v3070 = vunpack.c.l.b16 %v2002
    %v3071 = vunpack.c.h.b16 %v2002
    %v3072 = vunpack.c.l.b16 %v2003
    %v3073 = vunpack.c.h.b16 %v2003
    %v3074 = vunpack.c.l.b16 %v2004
    %v3075 = vunpack.c.h.b16 %v2004
    %v3076 = vunpack.c.l.b16 %v2005
    %v3077 = vunpack.c.h.b16 %v2005
    %v3078 = vunpack.c.l.b16 %v2006
    %v3079 = vunpack.c.h.b16 %v2006
    %v3080 = vunpack.c.l.b16 %v2007
    %v3081 = vunpack.c.h.b16 %v2007
    %v3082 = vunpack.c.l.b16 %v2008
    %v3083 = vunpack.c.h.b16 %v2008
    %v3084 = vunpack.c.l.b16 %v2009
    %v3085 = vunpack.c.h.b16 %v2009
    %v3086 = vunpack.c.l.b16 %v2010
    %v3087 = vunpack.c.h.b16 %v2010
    %v3088 = vunpack.c.l.b16 %v2011
    %v3089 = vunpack.c.h.b16 %v2011
    %v3090 = vunpack.c.l.b16 %v2012
    %v3091 = vunpack.c.h.b16 %v2012
    %v3092 = vpack.c.b16 %v2840, %v2836
    %v3093 = vpack.c.b16 %v2841, %v2837
    %v3094 = vpack.c.b16 %v2842, %v2838
    %v3095 = vpack.c.b16 %v2843, %v2839
    %v3096 = vpack.c.b16 %v2848, %v2844
    %v3097 = vpack.c.b16 %v2849, %v2845
    %v3098 = vpack.c.b16 %v2850, %v2846
    %v3099 = vpack.c.b16 %v2851, %v2847
    %v3100 = vpack.c.b16 %v2856, %v2852
    %v3101 = vpack.c.b16 %v2857, %v2853
    %v3102 = vpack.c.b16 %v2858, %v2854
    %v3103 = vpack.c.b16 %v2859, %v2855
    %v3104 = vpack.c.b16 %v2864, %v2860
    %v3105 = vpack.c.b16 %v2865, %v2861
    %v3106 = vpack.c.b16 %v2866, %v2862
    %v3107 = vpack.c.b16 %v2867, %v2863
    %v3108 = vpack.c.b16 %v2872, %v2868
    %v3109 = vpack.c.b16 %v2873, %v2869
    %v3110 = vpack.c.b16 %v2874, %v2870
    %v3111 = vpack.c.b16 %v2875, %v2871
    %v3112 = vpack.c.b16 %v2880, %v2876
    %v3113 = vpack.c.b16 %v2881, %v2877
    %v3114 = vpack.c.b16 %v2882, %v2878
    %v3115 = vpack.c.b16 %v2883, %v2879
    %v3116 = vpack.c.b16 %v2888, %v2884
    %v3117 = vpack.c.b16 %v2889, %v2885
    %v3118 = vpack.c.b16 %v2890, %v2886
    %v3119 = vpack.c.b16 %v2891, %v2887
    %v3120 = vpack.c.b16 %v2896, %v2892
    %v3121 = vpack.c.b16 %v2897, %v2893
    %v3122 = vpack.c.b16 %v2898, %v2894
    %v3123 = vpack.c.b16 %v2899, %v2895
    %v3124 = vpack.c.b16 %v2904, %v2900
    %v3125 = vpack.c.b16 %v2905, %v2901
    %v3126 = vpack.c.b16 %v2906, %v2902
    %v3127 = vpack.c.b16 %v2907, %v2903
    %v3128 = vpack.c.b16 %v2912, %v2908
    %v3129 = vpack.c.b16 %v2913, %v2909
    %v3130 = vpack.c.b16 %v2914, %v2910
    %v3131 = vpack.c.b16 %v2915, %v2911
    %v3132 = vpack.c.b16 %v2920, %v2916
    %v3133 = vpack.c.b16 %v2921, %v2917
    %v3134 = vpack.c.b16 %v2922, %v2918
    %v3135 = vpack.c.b16 %v2923, %v2919
    %v3136 = vpack.c.b16 %v2928, %v2924
    %v3137 = vpack.c.b16 %v2929, %v2925
    %v3138 = vpack.c.b16 %v2930, %v2926
    %v3139 = vpack.c.b16 %v2931, %v2927
    %v3140 = vpack.c.b16 %v2936, %v2932
    %v3141 = vpack.c.b16 %v2937, %v2933
    %v3142 = vpack.c.b16 %v2938, %v2934
    %v3143 = vpack.c.b16 %v2939, %v2935
    %v3144 = vpack.c.b16 %v2944, %v2940
    %v3145 = vpack.c.b16 %v2945, %v2941
    %v3146 = vpack.c.b16 %v2946, %v2942
    %v3147 = vpack.c.b16 %v2947, %v2943
    %v3148 = vpack.c.b16 %v2952, %v2948
    %v3149 = vpack.c.b16 %v2953, %v2949
    %v3150 = vpack.c.b16 %v2954, %v2950
    %v3151 = vpack.c.b16 %v2955, %v2951
    %v3152 = vpack.c.b16 %v2960, %v2956
    %v3153 = vpack.c.b16 %v2961, %v2957
    %v3154 = vpack.c.b16 %v2962, %v2958
    %v3155 = vpack.c.b16 %v2963, %v2959
    %v3156 = vpack.c.b16 %v2968, %v2964
    %v3157 = vpack.c.b16 %v2969, %v2965
    %v3158 = vpack.c.b16 %v2970, %v2966
    %v3159 = vpack.c.b16 %v2971, %v2967
    %v3160 = vpack.c.b16 %v2976, %v2972
    %v3161 = vpack.c.b16 %v2977, %v2973
    %v3162 = vpack.c.b16 %v2978, %v2974
    %v3163 = vpack.c.b16 %v2979, %v2975
    %v3164 = vpack.c.b16 %v2984, %v2980
    %v3165 = vpack.c.b16 %v2985, %v2981
    %v3166 = vpack.c.b16 %v2986, %v2982
    %v3167 = vpack.c.b16 %v2987, %v2983
    %v3168 = vpack.c.b16 %v2992, %v2988
    %v3169 = vpack.c.b16 %v2993, %v2989
    %v3170 = vpack.c.b16 %v2994, %v2990
    %v3171 = vpack.c.b16 %v2995, %v2991
    %v3172 = vpack.c.b16 %v3000, %v2996
    %v3173 = vpack.c.b16 %v3001, %v2997
    %v3174 = vpack.c.b16 %v3002, %v2998
    %v3175 = vpack.c.b16 %v3003, %v2999
    %v3176 = vpack.c.b16 %v3008, %v3004
    %v3177 = vpack.c.b16 %v3009, %v3005
    %v3178 = vpack.c.b16 %v3010, %v3006
    %v3179 = vpack.c.b16 %v3011, %v3007
    %v3180 = vpack.c.b16 %v3016, %v3012
    %v3181 = vpack.c.b16 %v3017, %v3013
    %v3182 = vpack.c.b16 %v3018, %v3014
    %v3183 = vpack.c.b16 %v3019, %v3015
    %v3184 = vpack.c.b16 %v3024, %v3020
    %v3185 = vpack.c.b16 %v3025, %v3021
    %v3186 = vpack.c.b16 %v3026, %v3022
    %v3187 = vpack.c.b16 %v3027, %v3023
    %v3188 = vpack.c.b16 %v3032, %v3028
    %v3189 = vpack.c.b16 %v3033, %v3029
    %v3190 = vpack.c.b16 %v3034, %v3030
    %v3191 = vpack.c.b16 %v3035, %v3031
    %v3192 = vpack.c.b16 %v3040, %v3036
    %v3193 = vpack.c.b16 %v3041, %v3037
    %v3194 = vpack.c.b16 %v3042, %v3038
    %v3195 = vpack.c.b16 %v3043, %v3039
    %v3196 = vpack.c.b16 %v3048, %v3044
    %v3197 = vpack.c.b16 %v3049, %v3045
    %v3198 = vpack.c.b16 %v3050, %v3046
    %v3199 = vpack.c.b16 %v3051, %v3047
    %v3200 = vpack.c.b16 %v3056, %v3052
    %v3201 = vpack.c.b16 %v3057, %v3053
    %v3202 = vpack.c.b16 %v3058, %v3054
    %v3203 = vpack.c.b16 %v3059, %v3055
    %v3204 = vpack.c.b16 %v3064, %v3060
    %v3205 = vpack.c.b16 %v3065, %v3061
    %v3206 = vpack.c.b16 %v3066, %v3062
    %v3207 = vpack.c.b16 %v3067, %v3063
    %v3208 = vpack.c.b16 %v3072, %v3068
    %v3209 = vpack.c.b16 %v3073, %v3069
    %v3210 = vpack.c.b16 %v3074, %v3070
    %v3211 = vpack.c.b16 %v3075, %v3071
    %v3212 = vpack.c.b16 %v3080, %v3076
    %v3213 = vpack.c.b16 %v3081, %v3077
    %v3214 = vpack.c.b16 %v3082, %v3078
    %v3215 = vpack.c.b16 %v3083, %v3079
    %v3216 = vpack.c.b16 %v3088, %v3084
    %v3217 = vpack.c.b16 %v3089, %v3085
    %v3218 = vpack.c.b16 %v3090, %v3086
    %v3219 = vpack.c.b16 %v3091, %v3087
    %3348 = vmatprep.subr.bf16.mxu0 %v3093
    %3349 = vmatpush1.bf16.msra.mxu0 %v3092
    %3350 = vmatprep.subr.bf16.mxu0 %v3097
    %3351 = vmatpush1.bf16.msra.mxu0 %v3096
    %3352 = vmatprep.subr.bf16.mxu0 %v3101
    %3353 = vmatpush1.bf16.msra.mxu0 %v3100
    %3354 = vmatprep.subr.bf16.mxu0 %v3105
    %3355 = vmatpush1.bf16.msra.mxu0 %v3104
    %3356 = vmatprep.subr.bf16.mxu0 %v3109
    %3357 = vmatpush1.bf16.msra.mxu0 %v3108
    %3358 = vmatprep.subr.bf16.mxu0 %v3113
    %3359 = vmatpush1.bf16.msra.mxu0 %v3112
    %3360 = vmatprep.subr.bf16.mxu0 %v3117
    %3361 = vmatpush1.bf16.msra.mxu0 %v3116
    %3362 = vmatprep.subr.bf16.mxu0 %v3121
    %3363 = vmatpush1.bf16.msra.mxu0 %v3120
    %3364 = vmatprep.subr.bf16.mxu0 %v3125
    %3365 = vmatpush1.bf16.msra.mxu0 %v3124
    %3366 = vmatprep.subr.bf16.mxu0 %v3129
    %3367 = vmatpush1.bf16.msra.mxu0 %v3128
    %3368 = vmatprep.subr.bf16.mxu0 %v3133
    %3369 = vmatpush1.bf16.msra.mxu0 %v3132
    %3370 = vmatprep.subr.bf16.mxu0 %v3137
    %3371 = vmatpush1.bf16.msra.mxu0 %v3136
    %3372 = vmatprep.subr.bf16.mxu0 %v3141
    %3373 = vmatpush1.bf16.msra.mxu0 %v3140
    %3374 = vmatprep.subr.bf16.mxu0 %v3145
    %3375 = vmatpush1.bf16.msra.mxu0 %v3144
    %3376 = vmatprep.subr.bf16.mxu0 %v3149
    %3377 = vmatpush1.bf16.msra.mxu0 %v3148
    %3378 = vmatprep.subr.bf16.mxu0 %v3153
    %3379 = vmatpush1.bf16.msra.mxu0 %v3152
    %3380 = vmatprep.mubr.bf16.mxu0 %v2672
    %3381 = vmatmul.mubr.bf16.gmra.mrb[0].mxu0 %v2671
    %v3382 = vpop.f32.mrb[0].mxu0
    %v3383 = vadd.f32 %v2691, %v3382
    %v3384 = vpop.f32.mrb[0].mxu0
    %v3385 = vadd.f32 %v2695, %v3384
    %v3386 = vpop.f32.mrb[0].mxu0
    %v3387 = vadd.f32 %v2691, %v3386
    %v3388 = vpop.f32.mrb[0].mxu0
    %v3389 = vadd.f32 %v2695, %v3388
    %3390 = vmatprep.mubr.bf16.mxu0 %v2676
    %3391 = vmatmul.mubr.bf16.gmra.mrb[0].mxu0 %v2675
    %v3392 = vpop.f32.mrb[0].mxu0
    %v3393 = vadd.f32 %v2691, %v3392
    %v3394 = vpop.f32.mrb[0].mxu0
    %v3395 = vadd.f32 %v2695, %v3394
    %v3396 = vpop.f32.mrb[0].mxu0
    %v3397 = vadd.f32 %v2691, %v3396
    %v3398 = vpop.f32.mrb[0].mxu0
    %v3399 = vadd.f32 %v2695, %v3398
    %3400 = vmatprep.mubr.bf16.mxu0 %v2680
    %3401 = vmatmul.mubr.bf16.gmra.mrb[0].mxu0 %v2679
    %v3402 = vpop.f32.mrb[0].mxu0
    %v3403 = vadd.f32 %v2691, %v3402
    %v3404 = vpop.f32.mrb[0].mxu0
    %v3405 = vadd.f32 %v2695, %v3404
    %v3406 = vpop.f32.mrb[0].mxu0
    %v3407 = vadd.f32 %v2691, %v3406
    %v3408 = vpop.f32.mrb[0].mxu0
    %v3409 = vadd.f32 %v2695, %v3408
    %3410 = vmatprep.mubr.bf16.mxu0 %v2684
    %3411 = vmatmul.mubr.bf16.gmra.mrb[0].mxu0 %v2683
    %v3412 = vpop.f32.mrb[0].mxu0
    %v3413 = vadd.f32 %v2691, %v3412
    %v3414 = vpop.f32.mrb[0].mxu0
    %v3415 = vadd.f32 %v2695, %v3414
    %v3416 = vpop.f32.mrb[0].mxu0
    %v3417 = vadd.f32 %v2691, %v3416
    %v3418 = vpop.f32.mrb[0].mxu0
    %v3419 = vadd.f32 %v2695, %v3418
    %3420 = vdwg.mxu0
    %3421 = vmatprep.subr.bf16.mxu0 %v3157
    %3422 = vmatpush1.bf16.msra.mxu0 %v3156
    %3423 = vmatprep.subr.bf16.mxu0 %v3161
    %3424 = vmatpush1.bf16.msra.mxu0 %v3160
    %3425 = vmatprep.subr.bf16.mxu0 %v3165
    %3426 = vmatpush1.bf16.msra.mxu0 %v3164
    %3427 = vmatprep.subr.bf16.mxu0 %v3169
    %3428 = vmatpush1.bf16.msra.mxu0 %v3168
    %3429 = vmatprep.subr.bf16.mxu0 %v3173
    %3430 = vmatpush1.bf16.msra.mxu0 %v3172
    %3431 = vmatprep.subr.bf16.mxu0 %v3177
    %3432 = vmatpush1.bf16.msra.mxu0 %v3176
    %3433 = vmatprep.subr.bf16.mxu0 %v3181
    %3434 = vmatpush1.bf16.msra.mxu0 %v3180
    %3435 = vmatprep.subr.bf16.mxu0 %v3185
    %3436 = vmatpush1.bf16.msra.mxu0 %v3184
    %3437 = vmatprep.subr.bf16.mxu0 %v3189
    %3438 = vmatpush1.bf16.msra.mxu0 %v3188
    %3439 = vmatprep.subr.bf16.mxu0 %v3193
    %3440 = vmatpush1.bf16.msra.mxu0 %v3192
    %3441 = vmatprep.subr.bf16.mxu0 %v3197
    %3442 = vmatpush1.bf16.msra.mxu0 %v3196
    %3443 = vmatprep.subr.bf16.mxu0 %v3201
    %3444 = vmatpush1.bf16.msra.mxu0 %v3200
    %3445 = vmatprep.subr.bf16.mxu0 %v3205
    %3446 = vmatpush1.bf16.msra.mxu0 %v3204
    %3447 = vmatprep.subr.bf16.mxu0 %v3209
    %3448 = vmatpush1.bf16.msra.mxu0 %v3208
    %3449 = vmatprep.subr.bf16.mxu0 %v3213
    %3450 = vmatpush1.bf16.msra.mxu0 %v3212
    %3451 = vmatprep.subr.bf16.mxu0 %v3217
    %3452 = vmatpush1.bf16.msra.mxu0 %v3216
    %3453 = vmatprep.mubr.bf16.mxu0 %v2674
    %3454 = vmatmul.mubr.bf16.gmra.mrb[0].mxu0 %v2673
    %v3455 = vpop.f32.mrb[0].mxu0
    %v3456 = vadd.f32 %v3383, %v3455
    %v3457 = vpop.f32.mrb[0].mxu0
    %v3458 = vadd.f32 %v3385, %v3457
    %v3459 = vpop.f32.mrb[0].mxu0
    %v3460 = vadd.f32 %v3387, %v3459
    %v3461 = vpop.f32.mrb[0].mxu0
    %v3462 = vadd.f32 %v3389, %v3461
    %3463 = vmatprep.mubr.bf16.mxu0 %v2678
    %3464 = vmatmul.mubr.bf16.gmra.mrb[0].mxu0 %v2677
    %v3465 = vpop.f32.mrb[0].mxu0
    %v3466 = vadd.f32 %v3393, %v3465
    %v3467 = vpop.f32.mrb[0].mxu0
    %v3468 = vadd.f32 %v3395, %v3467
    %v3469 = vpop.f32.mrb[0].mxu0
    %v3470 = vadd.f32 %v3397, %v3469
    %v3471 = vpop.f32.mrb[0].mxu0
    %v3472 = vadd.f32 %v3399, %v3471
    %3473 = vmatprep.mubr.bf16.mxu0 %v2682
    %3474 = vmatmul.mubr.bf16.gmra.mrb[0].mxu0 %v2681
    %v3475 = vpop.f32.mrb[0].mxu0
    %v3476 = vadd.f32 %v3403, %v3475
    %v3477 = vpop.f32.mrb[0].mxu0
    %v3478 = vadd.f32 %v3405, %v3477
    %v3479 = vpop.f32.mrb[0].mxu0
    %v3480 = vadd.f32 %v3407, %v3479
    %v3481 = vpop.f32.mrb[0].mxu0
    %v3482 = vadd.f32 %v3409, %v3481
    %3483 = vmatprep.mubr.bf16.mxu0 %v2686
    %3484 = vmatmul.mubr.bf16.gmra.mrb[0].mxu0 %v2685
    %v3485 = vpop.f32.mrb[0].mxu0
    %v3486 = vadd.f32 %v3413, %v3485
    %v3487 = vpop.f32.mrb[0].mxu0
    %v3488 = vadd.f32 %v3415, %v3487
    %v3489 = vpop.f32.mrb[0].mxu0
    %v3490 = vadd.f32 %v3417, %v3489
    %v3491 = vpop.f32.mrb[0].mxu0
    %v3492 = vadd.f32 %v3419, %v3491
    %3493 = vdwg.mxu0
    %3494 = vmatprep.subr.bf16.mxu0 %v3095
    %3495 = vmatpush1.bf16.msra.mxu0 %v3094
    %3496 = vmatprep.subr.bf16.mxu0 %v3099
    %3497 = vmatpush1.bf16.msra.mxu0 %v3098
    %3498 = vmatprep.subr.bf16.mxu0 %v3103
    %3499 = vmatpush1.bf16.msra.mxu0 %v3102
    %3500 = vmatprep.subr.bf16.mxu0 %v3107
    %3501 = vmatpush1.bf16.msra.mxu0 %v3106
    %3502 = vmatprep.subr.bf16.mxu0 %v3111
    %3503 = vmatpush1.bf16.msra.mxu0 %v3110
    %3504 = vmatprep.subr.bf16.mxu0 %v3115
    %3505 = vmatpush1.bf16.msra.mxu0 %v3114
    %3506 = vmatprep.subr.bf16.mxu0 %v3119
    %3507 = vmatpush1.bf16.msra.mxu0 %v3118
    %3508 = vmatprep.subr.bf16.mxu0 %v3123
    %3509 = vmatpush1.bf16.msra.mxu0 %v3122
    %3510 = vmatprep.subr.bf16.mxu0 %v3127
    %3511 = vmatpush1.bf16.msra.mxu0 %v3126
    %3512 = vmatprep.subr.bf16.mxu0 %v3131
    %3513 = vmatpush1.bf16.msra.mxu0 %v3130
    %3514 = vmatprep.subr.bf16.mxu0 %v3135
    %3515 = vmatpush1.bf16.msra.mxu0 %v3134
    %3516 = vmatprep.subr.bf16.mxu0 %v3139
    %3517 = vmatpush1.bf16.msra.mxu0 %v3138
    %3518 = vmatprep.subr.bf16.mxu0 %v3143
    %3519 = vmatpush1.bf16.msra.mxu0 %v3142
    %3520 = vmatprep.subr.bf16.mxu0 %v3147
    %3521 = vmatpush1.bf16.msra.mxu0 %v3146
    %3522 = vmatprep.subr.bf16.mxu0 %v3151
    %3523 = vmatpush1.bf16.msra.mxu0 %v3150
    %3524 = vmatprep.subr.bf16.mxu0 %v3155
    %3525 = vmatpush1.bf16.msra.mxu0 %v3154
    %3526 = vmatprep.mubr.bf16.mxu0 %v2672
    %3527 = vmatmul.mubr.bf16.gmra.mrb[0].mxu0 %v2671
    %v3528 = vpop.f32.mrb[0].mxu0
    %v3529 = vadd.f32 %v2699, %v3528
    %v3530 = vpop.f32.mrb[0].mxu0
    %v3531 = vadd.f32 %v2703, %v3530
    %v3532 = vpop.f32.mrb[0].mxu0
    %v3533 = vadd.f32 %v2699, %v3532
    %v3534 = vpop.f32.mrb[0].mxu0
    %v3535 = vadd.f32 %v2703, %v3534
    %3536 = vmatprep.mubr.bf16.mxu0 %v2676
    %3537 = vmatmul.mubr.bf16.gmra.mrb[0].mxu0 %v2675
    %v3538 = vpop.f32.mrb[0].mxu0
    %v3539 = vadd.f32 %v2699, %v3538
    %v3540 = vpop.f32.mrb[0].mxu0
    %v3541 = vadd.f32 %v2703, %v3540
    %v3542 = vpop.f32.mrb[0].mxu0
    %v3543 = vadd.f32 %v2699, %v3542
    %v3544 = vpop.f32.mrb[0].mxu0
    %v3545 = vadd.f32 %v2703, %v3544
    %3546 = vmatprep.mubr.bf16.mxu0 %v2680
    %3547 = vmatmul.mubr.bf16.gmra.mrb[0].mxu0 %v2679
    %v3548 = vpop.f32.mrb[0].mxu0
    %v3549 = vadd.f32 %v2699, %v3548
    %v3550 = vpop.f32.mrb[0].mxu0
    %v3551 = vadd.f32 %v2703, %v3550
    %v3552 = vpop.f32.mrb[0].mxu0
    %v3553 = vadd.f32 %v2699, %v3552
    %v3554 = vpop.f32.mrb[0].mxu0
    %v3555 = vadd.f32 %v2703, %v3554
    %3556 = vmatprep.mubr.bf16.mxu0 %v2684
    %3557 = vmatmul.mubr.bf16.gmra.mrb[0].mxu0 %v2683
    %v3558 = vpop.f32.mrb[0].mxu0
    %v3559 = vadd.f32 %v2699, %v3558
    %v3560 = vpop.f32.mrb[0].mxu0
    %v3561 = vadd.f32 %v2703, %v3560
    %v3562 = vpop.f32.mrb[0].mxu0
    %v3563 = vadd.f32 %v2699, %v3562
    %v3564 = vpop.f32.mrb[0].mxu0
    %v3565 = vadd.f32 %v2703, %v3564
    %3566 = vdwg.mxu0
    %3567 = vmatprep.subr.bf16.mxu0 %v3159
    %3568 = vmatpush1.bf16.msra.mxu0 %v3158
    %3569 = vmatprep.subr.bf16.mxu0 %v3163
    %3570 = vmatpush1.bf16.msra.mxu0 %v3162
    %3571 = vmatprep.subr.bf16.mxu0 %v3167
    %3572 = vmatpush1.bf16.msra.mxu0 %v3166
    %3573 = vmatprep.subr.bf16.mxu0 %v3171
    %3574 = vmatpush1.bf16.msra.mxu0 %v3170
    %3575 = vmatprep.subr.bf16.mxu0 %v3175
    %3576 = vmatpush1.bf16.msra.mxu0 %v3174
    %3577 = vmatprep.subr.bf16.mxu0 %v3179
    %3578 = vmatpush1.bf16.msra.mxu0 %v3178
    %3579 = vmatprep.subr.bf16.mxu0 %v3183
    %3580 = vmatpush1.bf16.msra.mxu0 %v3182
    %3581 = vmatprep.subr.bf16.mxu0 %v3187
    %3582 = vmatpush1.bf16.msra.mxu0 %v3186
    %3583 = vmatprep.subr.bf16.mxu0 %v3191
    %3584 = vmatpush1.bf16.msra.mxu0 %v3190
    %3585 = vmatprep.subr.bf16.mxu0 %v3195
    %3586 = vmatpush1.bf16.msra.mxu0 %v3194
    %3587 = vmatprep.subr.bf16.mxu0 %v3199
    %3588 = vmatpush1.bf16.msra.mxu0 %v3198
    %3589 = vmatprep.subr.bf16.mxu0 %v3203
    %3590 = vmatpush1.bf16.msra.mxu0 %v3202
    %3591 = vmatprep.subr.bf16.mxu0 %v3207
    %3592 = vmatpush1.bf16.msra.mxu0 %v3206
    %3593 = vmatprep.subr.bf16.mxu0 %v3211
    %3594 = vmatpush1.bf16.msra.mxu0 %v3210
    %3595 = vmatprep.subr.bf16.mxu0 %v3215
    %3596 = vmatpush1.bf16.msra.mxu0 %v3214
    %3597 = vmatprep.subr.bf16.mxu0 %v3219
    %3598 = vmatpush1.bf16.msra.mxu0 %v3218
    %3599 = vmatprep.mubr.bf16.mxu0 %v2674
    %3600 = vmatmul.mubr.bf16.gmra.mrb[0].mxu0 %v2673
    %v3601 = vpop.f32.mrb[0].mxu0
    %v3602 = vadd.f32 %v3529, %v3601
    %v3603 = vpop.f32.mrb[0].mxu0
    %v3604 = vadd.f32 %v3531, %v3603
    %v3605 = vpop.f32.mrb[0].mxu0
    %v3606 = vadd.f32 %v3533, %v3605
    %v3607 = vpop.f32.mrb[0].mxu0
    %v3608 = vadd.f32 %v3535, %v3607
    %3609 = vmatprep.mubr.bf16.mxu0 %v2678
    %3610 = vmatmul.mubr.bf16.gmra.mrb[0].mxu0 %v2677
    %v3611 = vpop.f32.mrb[0].mxu0
    %v3612 = vadd.f32 %v3539, %v3611
    %v3613 = vpop.f32.mrb[0].mxu0
    %v3614 = vadd.f32 %v3541, %v3613
    %v3615 = vpop.f32.mrb[0].mxu0
    %v3616 = vadd.f32 %v3543, %v3615
    %v3617 = vpop.f32.mrb[0].mxu0
    %v3618 = vadd.f32 %v3545, %v3617
    %3619 = vmatprep.mubr.bf16.mxu0 %v2682
    %3620 = vmatmul.mubr.bf16.gmra.mrb[0].mxu0 %v2681
    %v3621 = vpop.f32.mrb[0].mxu0
    %v3622 = vadd.f32 %v3549, %v3621
    %v3623 = vpop.f32.mrb[0].mxu0
    %v3624 = vadd.f32 %v3551, %v3623
    %v3625 = vpop.f32.mrb[0].mxu0
    %v3626 = vadd.f32 %v3553, %v3625
    %v3627 = vpop.f32.mrb[0].mxu0
    %v3628 = vadd.f32 %v3555, %v3627
    %3629 = vmatprep.mubr.bf16.mxu0 %v2686
    %3630 = vmatmul.mubr.bf16.gmra.mrb[0].mxu0 %v2685
    %v3631 = vpop.f32.mrb[0].mxu0
    %v3632 = vadd.f32 %v3559, %v3631
    %v3633 = vpop.f32.mrb[0].mxu0
    %v3634 = vadd.f32 %v3561, %v3633
    %v3635 = vpop.f32.mrb[0].mxu0
    %v3636 = vadd.f32 %v3563, %v3635
    %v3637 = vpop.f32.mrb[0].mxu0
    %v3638 = vadd.f32 %v3565, %v3637
    %3639 = vdwg.mxu0
    %3640 = vst [vmem:[%s15] sm:$0xff] %v3456
    %3641 = vst [vmem:[%s15 + $0x8] sm:$0xff] %v3458
    %3642 = vst [vmem:[%s15 + $0x10] sm:$0xff] %v3602
    %3643 = vst [vmem:[%s15 + $0x18] sm:$0xff] %v3604
    %3644 = vst [vmem:[%s15 + $0x20] sm:$0xff] %v3460
    %3645 = vst [vmem:[%s15 + $0x28] sm:$0xff] %v3462
    %3646 = vst [vmem:[%s15 + $0x30] sm:$0xff] %v3606
    %3647 = vst [vmem:[%s15 + $0x38] sm:$0xff] %v3608
    %3648 = vst [vmem:[%s15 + $0x40] sm:$0xff] %v3466
    %3649 = vst [vmem:[%s15 + $0x48] sm:$0xff] %v3468
    %3650 = vst [vmem:[%s15 + $0x50] sm:$0xff] %v3612
    %3651 = vst [vmem:[%s15 + $0x58] sm:$0xff] %v3614
    %3652 = vst [vmem:[%s15 + $0x60] sm:$0xff] %v3470
    %3653 = vst [vmem:[%s15 + $0x68] sm:$0xff] %v3472
    %3654 = vst [vmem:[%s15 + $0x70] sm:$0xff] %v3616
    %3655 = vst [vmem:[%s15 + $0x78] sm:$0xff] %v3618
    %3656 = vst [vmem:[%s15 + $0x80] sm:$0xff] %v3476
    %3657 = vst [vmem:[%s15 + $0x88] sm:$0xff] %v3478
    %3658 = vst [vmem:[%s15 + $0x90] sm:$0xff] %v3622
    %3659 = vst [vmem:[%s15 + $0x98] sm:$0xff] %v3624
    %3660 = vst [vmem:[%s15 + $0xa0] sm:$0xff] %v3480
    %3661 = vst [vmem:[%s15 + $0xa8] sm:$0xff] %v3482
    %3662 = vst [vmem:[%s15 + $0xb0] sm:$0xff] %v3626
    %3663 = vst [vmem:[%s15 + $0xb8] sm:$0xff] %v3628
    %3664 = vst [vmem:[%s15 + $0xc0] sm:$0xff] %v3486
    %3665 = vst [vmem:[%s15 + $0xc8] sm:$0xff] %v3488
    %3666 = vst [vmem:[%s15 + $0xd0] sm:$0xff] %v3632
    %3667 = vst [vmem:[%s15 + $0xd8] sm:$0xff] %v3634
    %3668 = vst [vmem:[%s15 + $0xe0] sm:$0xff] %v3490
    %3669 = vst [vmem:[%s15 + $0xe8] sm:$0xff] %v3492
    %3670 = vst [vmem:[%s15 + $0xf0] sm:$0xff] %v3636
    %3671 = vst [vmem:[%s15 + $0xf8] sm:$0xff] %v3638
    // Predicated region
    $region58: #{_moca_forward.6} parent=1 // pred_check
      _
    $region59: #{_moca_forward.6} parent=1 // pred_check_branch
      %3673 = sbr.rel (0) target = $region61
    $region60: #{_moca_forward.6} parent=1 // pred_region
      %s3675 = ssub.s32 4096, 4096
      %3676 = vsyncadd [#allocation3], %s3675
      %s3677 = sshll.u32 [#allocation2], 4
      %s3678 = int_to_ptr.vmem [resolvable:$true] %s3677
      %3683 = dma.vmem_to_hbm [thread:$0]  %s3678, 4096, %s14, [#allocation3], 512, 512, 32
    $region61: #{_moca_forward.6} parent=1 // pred_fallthru
      _
    // Predicated region
    $region62: #{_moca_forward.6} parent=1 // pred_check
      _
    $region63: #{_moca_forward.6} parent=1 // pred_check_branch
      %3685 = sbr.rel (0) target = $region65
    $region64: #{_moca_forward.6} parent=1 // pred_region
      _
    $region65: #{_moca_forward.6} parent=1 // pred_fallthru
      _
    // Predicated region
    $region66: #{_moca_forward.6} parent=1 // pred_check
      _
    $region67: #{_moca_forward.6} parent=1 // pred_check_branch
      %3687 = sbr.rel (0) target = $region69
    $region68: #{_moca_forward.6} parent=1 // pred_region
      %3688 = dma.done [#allocation3], 4096
    $region69: #{_moca_forward.6} parent=1 // pred_fallthru
      _
    // Predicated region
    $region70: #{_moca_forward.6} parent=1 // pred_check
      _
    $region71: #{_moca_forward.6} parent=1 // pred_check_branch
      %3690 = sbr.rel (0) target = $region73
    $region72: #{_moca_forward.6} parent=1 // pred_region
      _
    $region73: #{_moca_forward.6} parent=1 // pred_fallthru
      _
    %3691 = vsyncpa [#allocation3], 1

// kernel: _moca_forward.7
$region0: #{_moca_forward.7}
  #allocation0 [shape = 'u32[]', space=smem, size = 0x4, offset = 0x4, fixed_abs, tag = 'smem constant byte address 0x4 - core index']
  #allocation1 [shape = 'u32[144,128]{1,0:T(1,128)}', space=vmem, size = 0x12000, scoped, tag = 'internal scratch']
  %s0 = inlined_call_operand.vmem [shape: f32[64,512], index: 0, kind: input, shape index: {}]
  %s1 = inlined_call_operand.vmem [shape: bf16[512,512], index: 1, kind: input, shape index: {}]
  %s2 = inlined_call_operand.vmem [shape: f32[1,512], index: 2, kind: input, shape index: {}]
  %s3 = inlined_call_operand.vmem [shape: bf16[512,512], index: 3, kind: input, shape index: {}]
  %s4 = inlined_call_operand.vmem [shape: f32[1,512], index: 4, kind: input, shape index: {}]
  %s5 = inlined_call_operand.hbm [shape: f32[1,1], index: 5, kind: output, shape index: {}]
  %s6 = sld [smem:[#allocation0]]
  $region30: #{_moca_forward.7} parent=0
    _
  %s8 = ssub.s32 1, %s6
  %s9 = scalar_select 0, %s8, %s6
  $region1: #{_moca_forward.7} parent=0
    #allocation2 [shape = 'u8[512]{0}', space=vmem, size = 0x400, scoped, tag = 'output window, operand 0, single buffered']
    #allocation3 [shape = 's32[1]{0}', space=sflag, size = 0x4, scoped, tag = 'scoped memory for _moca_forward.7']
    %10 = vsyncpa [#allocation3], 0
    // Predicated region
    $region2: #{_moca_forward.7} parent=1 // pred_check
      _
    $region3: #{_moca_forward.7} parent=1 // pred_check_branch
      %12 = sbr.rel (0) target = $region5
    $region4: #{_moca_forward.7} parent=1 // pred_region
      _
    $region5: #{_moca_forward.7} parent=1 // pred_fallthru
      _
    // Predicated region
    $region6: #{_moca_forward.7} parent=1 // pred_check
      _
    $region7: #{_moca_forward.7} parent=1 // pred_check_branch
      %14 = sbr.rel (0) target = $region9
    $region8: #{_moca_forward.7} parent=1 // pred_region
      _
    $region9: #{_moca_forward.7} parent=1 // pred_fallthru
      _
    // Predicated region
    $region10: #{_moca_forward.7} parent=1 // pred_check
      _
    $region11: #{_moca_forward.7} parent=1 // pred_check_branch
      %16 = sbr.rel (0) target = $region13
    $region12: #{_moca_forward.7} parent=1 // pred_region
      _
    $region13: #{_moca_forward.7} parent=1 // pred_fallthru
      _
    // Predicated region
    $region14: #{_moca_forward.7} parent=1 // pred_check
      _
    $region15: #{_moca_forward.7} parent=1 // pred_check_branch
      %18 = sbr.rel (0) target = $region17
    $region16: #{_moca_forward.7} parent=1 // pred_region
      _
    $region17: #{_moca_forward.7} parent=1 // pred_fallthru
      _
    // Predicated region
    $region18: #{_moca_forward.7} parent=1 // pred_check
      _
    $region19: #{_moca_forward.7} parent=1 // pred_check_branch
      %20 = sbr.rel (0) target = $region21
    $region20: #{_moca_forward.7} parent=1 // pred_region
      _
    $region21: #{_moca_forward.7} parent=1 // pred_fallthru
      _
    %v21 = vld [vmem:[%s0] sm:$0xff]
    %v22 = vld [vmem:[%s0 + $0x8] sm:$0xff]
    %v23 = vld [vmem:[%s0 + $0x10] sm:$0xff]
    %v24 = vld [vmem:[%s0 + $0x18] sm:$0xff]
    %v25 = vld [vmem:[%s0 + $0x20] sm:$0xff]
    %v26 = vld [vmem:[%s0 + $0x28] sm:$0xff]
    %v27 = vld [vmem:[%s0 + $0x30] sm:$0xff]
    %v28 = vld [vmem:[%s0 + $0x38] sm:$0xff]
    %v29 = vld [vmem:[%s0 + $0x40] sm:$0xff]
    %v30 = vld [vmem:[%s0 + $0x48] sm:$0xff]
    %v31 = vld [vmem:[%s0 + $0x50] sm:$0xff]
    %v32 = vld [vmem:[%s0 + $0x58] sm:$0xff]
    %v33 = vld [vmem:[%s0 + $0x60] sm:$0xff]
    %v34 = vld [vmem:[%s0 + $0x68] sm:$0xff]
    %v35 = vld [vmem:[%s0 + $0x70] sm:$0xff]
    %v36 = vld [vmem:[%s0 + $0x78] sm:$0xff]
    %v37 = vld [vmem:[%s0 + $0x80] sm:$0xff]
    %v38 = vld [vmem:[%s0 + $0x88] sm:$0xff]
    %v39 = vld [vmem:[%s0 + $0x90] sm:$0xff]
    %v40 = vld [vmem:[%s0 + $0x98] sm:$0xff]
    %v41 = vld [vmem:[%s0 + $0xa0] sm:$0xff]
    %v42 = vld [vmem:[%s0 + $0xa8] sm:$0xff]
    %v43 = vld [vmem:[%s0 + $0xb0] sm:$0xff]
    %v44 = vld [vmem:[%s0 + $0xb8] sm:$0xff]
    %v45 = vld [vmem:[%s0 + $0xc0] sm:$0xff]
    %v46 = vld [vmem:[%s0 + $0xc8] sm:$0xff]
    %v47 = vld [vmem:[%s0 + $0xd0] sm:$0xff]
    %v48 = vld [vmem:[%s0 + $0xd8] sm:$0xff]
    %v49 = vld [vmem:[%s0 + $0xe0] sm:$0xff]
    %v50 = vld [vmem:[%s0 + $0xe8] sm:$0xff]
    %v51 = vld [vmem:[%s0 + $0xf0] sm:$0xff]
    %v52 = vld [vmem:[%s0 + $0xf8] sm:$0xff]
    %v53 = vpack.c.bf16 %v25, %v21
    %v54 = vpack.c.bf16 %v26, %v22
    %v55 = vpack.c.bf16 %v27, %v23
    %v56 = vpack.c.bf16 %v28, %v24
    %v57 = vpack.c.bf16 %v33, %v29
    %v58 = vpack.c.bf16 %v34, %v30
    %v59 = vpack.c.bf16 %v35, %v31
    %v60 = vpack.c.bf16 %v36, %v32
    %v61 = vpack.c.bf16 %v41, %v37
    %v62 = vpack.c.bf16 %v42, %v38
    %v63 = vpack.c.bf16 %v43, %v39
    %v64 = vpack.c.bf16 %v44, %v40
    %v65 = vpack.c.bf16 %v49, %v45
    %v66 = vpack.c.bf16 %v50, %v46
    %v67 = vpack.c.bf16 %v51, %v47
    %v68 = vpack.c.bf16 %v52, %v48
    %v69 = vld [vmem:[%s1] sm:$0xff]
    %v70 = vld [vmem:[%s1 + $0x8] sm:$0xff]
    %v71 = vld [vmem:[%s1 + $0x10] sm:$0xff]
    %v72 = vld [vmem:[%s1 + $0x18] sm:$0xff]
    %v73 = vld [vmem:[%s1 + $0x20] sm:$0xff]
    %v74 = vld [vmem:[%s1 + $0x28] sm:$0xff]
    %v75 = vld [vmem:[%s1 + $0x30] sm:$0xff]
    %v76 = vld [vmem:[%s1 + $0x38] sm:$0xff]
    %v77 = vld [vmem:[%s1 + $0x40] sm:$0xff]
    %v78 = vld [vmem:[%s1 + $0x48] sm:$0xff]
    %v79 = vld [vmem:[%s1 + $0x50] sm:$0xff]
    %v80 = vld [vmem:[%s1 + $0x58] sm:$0xff]
    %v81 = vld [vmem:[%s1 + $0x60] sm:$0xff]
    %v82 = vld [vmem:[%s1 + $0x68] sm:$0xff]
    %v83 = vld [vmem:[%s1 + $0x70] sm:$0xff]
    %v84 = vld [vmem:[%s1 + $0x78] sm:$0xff]
    %v85 = vld [vmem:[%s1 + $0x80] sm:$0xff]
    %v86 = vld [vmem:[%s1 + $0x88] sm:$0xff]
    %v87 = vld [vmem:[%s1 + $0x90] sm:$0xff]
    %v88 = vld [vmem:[%s1 + $0x98] sm:$0xff]
    %v89 = vld [vmem:[%s1 + $0xa0] sm:$0xff]
    %v90 = vld [vmem:[%s1 + $0xa8] sm:$0xff]
    %v91 = vld [vmem:[%s1 + $0xb0] sm:$0xff]
    %v92 = vld [vmem:[%s1 + $0xb8] sm:$0xff]
    %v93 = vld [vmem:[%s1 + $0xc0] sm:$0xff]
    %v94 = vld [vmem:[%s1 + $0xc8] sm:$0xff]
    %v95 = vld [vmem:[%s1 + $0xd0] sm:$0xff]
    %v96 = vld [vmem:[%s1 + $0xd8] sm:$0xff]
    %v97 = vld [vmem:[%s1 + $0xe0] sm:$0xff]
    %v98 = vld [vmem:[%s1 + $0xe8] sm:$0xff]
    %v99 = vld [vmem:[%s1 + $0xf0] sm:$0xff]
    %v100 = vld [vmem:[%s1 + $0xf8] sm:$0xff]
    %v101 = vld [vmem:[%s1 + $0x100] sm:$0xff]
    %v102 = vld [vmem:[%s1 + $0x108] sm:$0xff]
    %v103 = vld [vmem:[%s1 + $0x110] sm:$0xff]
    %v104 = vld [vmem:[%s1 + $0x118] sm:$0xff]
    %v105 = vld [vmem:[%s1 + $0x120] sm:$0xff]
    %v106 = vld [vmem:[%s1 + $0x128] sm:$0xff]
    %v107 = vld [vmem:[%s1 + $0x130] sm:$0xff]
    %v108 = vld [vmem:[%s1 + $0x138] sm:$0xff]
    %v109 = vld [vmem:[%s1 + $0x140] sm:$0xff]
    %v110 = vld [vmem:[%s1 + $0x148] sm:$0xff]
    %v111 = vld [vmem:[%s1 + $0x150] sm:$0xff]
    %v112 = vld [vmem:[%s1 + $0x158] sm:$0xff]
    %v113 = vld [vmem:[%s1 + $0x160] sm:$0xff]
    %v114 = vld [vmem:[%s1 + $0x168] sm:$0xff]
    %v115 = vld [vmem:[%s1 + $0x170] sm:$0xff]
    %v116 = vld [vmem:[%s1 + $0x178] sm:$0xff]
    %v117 = vld [vmem:[%s1 + $0x180] sm:$0xff]
    %v118 = vld [vmem:[%s1 + $0x188] sm:$0xff]
    %v119 = vld [vmem:[%s1 + $0x190] sm:$0xff]
    %v120 = vld [vmem:[%s1 + $0x198] sm:$0xff]
    %v121 = vld [vmem:[%s1 + $0x1a0] sm:$0xff]
    %v122 = vld [vmem:[%s1 + $0x1a8] sm:$0xff]
    %v123 = vld [vmem:[%s1 + $0x1b0] sm:$0xff]
    %v124 = vld [vmem:[%s1 + $0x1b8] sm:$0xff]
    %v125 = vld [vmem:[%s1 + $0x1c0] sm:$0xff]
    %v126 = vld [vmem:[%s1 + $0x1c8] sm:$0xff]
    %v127 = vld [vmem:[%s1 + $0x1d0] sm:$0xff]
    %v128 = vld [vmem:[%s1 + $0x1d8] sm:$0xff]
    %v129 = vld [vmem:[%s1 + $0x1e0] sm:$0xff]
    %v130 = vld [vmem:[%s1 + $0x1e8] sm:$0xff]
    %v131 = vld [vmem:[%s1 + $0x1f0] sm:$0xff]
    %v132 = vld [vmem:[%s1 + $0x1f8] sm:$0xff]
    %v133 = vld [vmem:[%s1 + $0x200] sm:$0xff]
    %v134 = vld [vmem:[%s1 + $0x208] sm:$0xff]
    %v135 = vld [vmem:[%s1 + $0x210] sm:$0xff]
    %v136 = vld [vmem:[%s1 + $0x218] sm:$0xff]
    %v137 = vld [vmem:[%s1 + $0x220] sm:$0xff]
    %v138 = vld [vmem:[%s1 + $0x228] sm:$0xff]
    %v139 = vld [vmem:[%s1 + $0x230] sm:$0xff]
    %v140 = vld [vmem:[%s1 + $0x238] sm:$0xff]
    %v141 = vld [vmem:[%s1 + $0x240] sm:$0xff]
    %v142 = vld [vmem:[%s1 + $0x248] sm:$0xff]
    %v143 = vld [vmem:[%s1 + $0x250] sm:$0xff]
    %v144 = vld [vmem:[%s1 + $0x258] sm:$0xff]
    %v145 = vld [vmem:[%s1 + $0x260] sm:$0xff]
    %v146 = vld [vmem:[%s1 + $0x268] sm:$0xff]
    %v147 = vld [vmem:[%s1 + $0x270] sm:$0xff]
    %v148 = vld [vmem:[%s1 + $0x278] sm:$0xff]
    %v149 = vld [vmem:[%s1 + $0x280] sm:$0xff]
    %v150 = vld [vmem:[%s1 + $0x288] sm:$0xff]
    %v151 = vld [vmem:[%s1 + $0x290] sm:$0xff]
    %v152 = vld [vmem:[%s1 + $0x298] sm:$0xff]
    %v153 = vld [vmem:[%s1 + $0x2a0] sm:$0xff]
    %v154 = vld [vmem:[%s1 + $0x2a8] sm:$0xff]
    %v155 = vld [vmem:[%s1 + $0x2b0] sm:$0xff]
    %v156 = vld [vmem:[%s1 + $0x2b8] sm:$0xff]
    %v157 = vld [vmem:[%s1 + $0x2c0] sm:$0xff]
    %v158 = vld [vmem:[%s1 + $0x2c8] sm:$0xff]
    %v159 = vld [vmem:[%s1 + $0x2d0] sm:$0xff]
    %v160 = vld [vmem:[%s1 + $0x2d8] sm:$0xff]
    %v161 = vld [vmem:[%s1 + $0x2e0] sm:$0xff]
    %v162 = vld [vmem:[%s1 + $0x2e8] sm:$0xff]
    %v163 = vld [vmem:[%s1 + $0x2f0] sm:$0xff]
    %v164 = vld [vmem:[%s1 + $0x2f8] sm:$0xff]
    %v165 = vld [vmem:[%s1 + $0x300] sm:$0xff]
    %v166 = vld [vmem:[%s1 + $0x308] sm:$0xff]
    %v167 = vld [vmem:[%s1 + $0x310] sm:$0xff]
    %v168 = vld [vmem:[%s1 + $0x318] sm:$0xff]
    %v169 = vld [vmem:[%s1 + $0x320] sm:$0xff]
    %v170 = vld [vmem:[%s1 + $0x328] sm:$0xff]
    %v171 = vld [vmem:[%s1 + $0x330] sm:$0xff]
    %v172 = vld [vmem:[%s1 + $0x338] sm:$0xff]
    %v173 = vld [vmem:[%s1 + $0x340] sm:$0xff]
    %v174 = vld [vmem:[%s1 + $0x348] sm:$0xff]
    %v175 = vld [vmem:[%s1 + $0x350] sm:$0xff]
    %v176 = vld [vmem:[%s1 + $0x358] sm:$0xff]
    %v177 = vld [vmem:[%s1 + $0x360] sm:$0xff]
    %v178 = vld [vmem:[%s1 + $0x368] sm:$0xff]
    %v179 = vld [vmem:[%s1 + $0x370] sm:$0xff]
    %v180 = vld [vmem:[%s1 + $0x378] sm:$0xff]
    %v181 = vld [vmem:[%s1 + $0x380] sm:$0xff]
    %v182 = vld [vmem:[%s1 + $0x388] sm:$0xff]
    %v183 = vld [vmem:[%s1 + $0x390] sm:$0xff]
    %v184 = vld [vmem:[%s1 + $0x398] sm:$0xff]
    %v185 = vld [vmem:[%s1 + $0x3a0] sm:$0xff]
    %v186 = vld [vmem:[%s1 + $0x3a8] sm:$0xff]
    %v187 = vld [vmem:[%s1 + $0x3b0] sm:$0xff]
    %v188 = vld [vmem:[%s1 + $0x3b8] sm:$0xff]
    %v189 = vld [vmem:[%s1 + $0x3c0] sm:$0xff]
    %v190 = vld [vmem:[%s1 + $0x3c8] sm:$0xff]
    %v191 = vld [vmem:[%s1 + $0x3d0] sm:$0xff]
    %v192 = vld [vmem:[%s1 + $0x3d8] sm:$0xff]
    %v193 = vld [vmem:[%s1 + $0x3e0] sm:$0xff]
    %v194 = vld [vmem:[%s1 + $0x3e8] sm:$0xff]
    %v195 = vld [vmem:[%s1 + $0x3f0] sm:$0xff]
    %v196 = vld [vmem:[%s1 + $0x3f8] sm:$0xff]
    %v197 = vld [vmem:[%s2] sm:$0xf]
    %v199 = vlaneseq
    %v200 = vshrl.u32 %v199, 7
    %v201 = vsub.s32 0, %v200
    %v202 = vrot.slane %v197, %v201
    %v203 = vlaneseq
    %v204 = vshrl.u32 %v203, 7
    %v205 = vsub.s32 1, %v204
    %v206 = vrot.slane %v197, %v205
    %v207 = vlaneseq
    %v208 = vshrl.u32 %v207, 7
    %v209 = vsub.s32 2, %v208
    %v210 = vrot.slane %v197, %v209
    %v211 = vlaneseq
    %v212 = vshrl.u32 %v211, 7
    %v213 = vsub.s32 3, %v212
    %v214 = vrot.slane %v197, %v213
    %v347 = vunpack.c.l.b16 %v69
    %v348 = vunpack.c.h.b16 %v69
    %v349 = vunpack.c.l.b16 %v70
    %v350 = vunpack.c.h.b16 %v70
    %v351 = vunpack.c.l.b16 %v71
    %v352 = vunpack.c.h.b16 %v71
    %v353 = vunpack.c.l.b16 %v72
    %v354 = vunpack.c.h.b16 %v72
    %v355 = vunpack.c.l.b16 %v73
    %v356 = vunpack.c.h.b16 %v73
    %v357 = vunpack.c.l.b16 %v74
    %v358 = vunpack.c.h.b16 %v74
    %v359 = vunpack.c.l.b16 %v75
    %v360 = vunpack.c.h.b16 %v75
    %v361 = vunpack.c.l.b16 %v76
    %v362 = vunpack.c.h.b16 %v76
    %v363 = vunpack.c.l.b16 %v77
    %v364 = vunpack.c.h.b16 %v77
    %v365 = vunpack.c.l.b16 %v78
    %v366 = vunpack.c.h.b16 %v78
    %v367 = vunpack.c.l.b16 %v79
    %v368 = vunpack.c.h.b16 %v79
    %v369 = vunpack.c.l.b16 %v80
    %v370 = vunpack.c.h.b16 %v80
    %v371 = vunpack.c.l.b16 %v81
    %v372 = vunpack.c.h.b16 %v81
    %v373 = vunpack.c.l.b16 %v82
    %v374 = vunpack.c.h.b16 %v82
    %v375 = vunpack.c.l.b16 %v83
    %v376 = vunpack.c.h.b16 %v83
    %v377 = vunpack.c.l.b16 %v84
    %v378 = vunpack.c.h.b16 %v84
    %v379 = vunpack.c.l.b16 %v85
    %v380 = vunpack.c.h.b16 %v85
    %v381 = vunpack.c.l.b16 %v86
    %v382 = vunpack.c.h.b16 %v86
    %v383 = vunpack.c.l.b16 %v87
    %v384 = vunpack.c.h.b16 %v87
    %v385 = vunpack.c.l.b16 %v88
    %v386 = vunpack.c.h.b16 %v88
    %v387 = vunpack.c.l.b16 %v89
    %v388 = vunpack.c.h.b16 %v89
    %v389 = vunpack.c.l.b16 %v90
    %v390 = vunpack.c.h.b16 %v90
    %v391 = vunpack.c.l.b16 %v91
    %v392 = vunpack.c.h.b16 %v91
    %v393 = vunpack.c.l.b16 %v92
    %v394 = vunpack.c.h.b16 %v92
    %v395 = vunpack.c.l.b16 %v93
    %v396 = vunpack.c.h.b16 %v93
    %v397 = vunpack.c.l.b16 %v94
    %v398 = vunpack.c.h.b16 %v94
    %v399 = vunpack.c.l.b16 %v95
    %v400 = vunpack.c.h.b16 %v95
    %v401 = vunpack.c.l.b16 %v96
    %v402 = vunpack.c.h.b16 %v96
    %v403 = vunpack.c.l.b16 %v97
    %v404 = vunpack.c.h.b16 %v97
    %v405 = vunpack.c.l.b16 %v98
    %v406 = vunpack.c.h.b16 %v98
    %v407 = vunpack.c.l.b16 %v99
    %v408 = vunpack.c.h.b16 %v99
    %v409 = vunpack.c.l.b16 %v100
    %v410 = vunpack.c.h.b16 %v100
    %v411 = vunpack.c.l.b16 %v101
    %v412 = vunpack.c.h.b16 %v101
    %v413 = vunpack.c.l.b16 %v102
    %v414 = vunpack.c.h.b16 %v102
    %v415 = vunpack.c.l.b16 %v103
    %v416 = vunpack.c.h.b16 %v103
    %v417 = vunpack.c.l.b16 %v104
    %v418 = vunpack.c.h.b16 %v104
    %v419 = vunpack.c.l.b16 %v105
    %v420 = vunpack.c.h.b16 %v105
    %v421 = vunpack.c.l.b16 %v106
    %v422 = vunpack.c.h.b16 %v106
    %v423 = vunpack.c.l.b16 %v107
    %v424 = vunpack.c.h.b16 %v107
    %v425 = vunpack.c.l.b16 %v108
    %v426 = vunpack.c.h.b16 %v108
    %v427 = vunpack.c.l.b16 %v109
    %v428 = vunpack.c.h.b16 %v109
    %v429 = vunpack.c.l.b16 %v110
    %v430 = vunpack.c.h.b16 %v110
    %v431 = vunpack.c.l.b16 %v111
    %v432 = vunpack.c.h.b16 %v111
    %v433 = vunpack.c.l.b16 %v112
    %v434 = vunpack.c.h.b16 %v112
    %v435 = vunpack.c.l.b16 %v113
    %v436 = vunpack.c.h.b16 %v113
    %v437 = vunpack.c.l.b16 %v114
    %v438 = vunpack.c.h.b16 %v114
    %v439 = vunpack.c.l.b16 %v115
    %v440 = vunpack.c.h.b16 %v115
    %v441 = vunpack.c.l.b16 %v116
    %v442 = vunpack.c.h.b16 %v116
    %v443 = vunpack.c.l.b16 %v117
    %v444 = vunpack.c.h.b16 %v117
    %v445 = vunpack.c.l.b16 %v118
    %v446 = vunpack.c.h.b16 %v118
    %v447 = vunpack.c.l.b16 %v119
    %v448 = vunpack.c.h.b16 %v119
    %v449 = vunpack.c.l.b16 %v120
    %v450 = vunpack.c.h.b16 %v120
    %v451 = vunpack.c.l.b16 %v121
    %v452 = vunpack.c.h.b16 %v121
    %v453 = vunpack.c.l.b16 %v122
    %v454 = vunpack.c.h.b16 %v122
    %v455 = vunpack.c.l.b16 %v123
    %v456 = vunpack.c.h.b16 %v123
    %v457 = vunpack.c.l.b16 %v124
    %v458 = vunpack.c.h.b16 %v124
    %v459 = vunpack.c.l.b16 %v125
    %v460 = vunpack.c.h.b16 %v125
    %v461 = vunpack.c.l.b16 %v126
    %v462 = vunpack.c.h.b16 %v126
    %v463 = vunpack.c.l.b16 %v127
    %v464 = vunpack.c.h.b16 %v127
    %v465 = vunpack.c.l.b16 %v128
    %v466 = vunpack.c.h.b16 %v128
    %v467 = vunpack.c.l.b16 %v129
    %v468 = vunpack.c.h.b16 %v129
    %v469 = vunpack.c.l.b16 %v130
    %v470 = vunpack.c.h.b16 %v130
    %v471 = vunpack.c.l.b16 %v131
    %v472 = vunpack.c.h.b16 %v131
    %v473 = vunpack.c.l.b16 %v132
    %v474 = vunpack.c.h.b16 %v132
    %v475 = vunpack.c.l.b16 %v133
    %v476 = vunpack.c.h.b16 %v133
    %v477 = vunpack.c.l.b16 %v134
    %v478 = vunpack.c.h.b16 %v134
    %v479 = vunpack.c.l.b16 %v135
    %v480 = vunpack.c.h.b16 %v135
    %v481 = vunpack.c.l.b16 %v136
    %v482 = vunpack.c.h.b16 %v136
    %v483 = vunpack.c.l.b16 %v137
    %v484 = vunpack.c.h.b16 %v137
    %v485 = vunpack.c.l.b16 %v138
    %v486 = vunpack.c.h.b16 %v138
    %v487 = vunpack.c.l.b16 %v139
    %v488 = vunpack.c.h.b16 %v139
    %v489 = vunpack.c.l.b16 %v140
    %v490 = vunpack.c.h.b16 %v140
    %v491 = vunpack.c.l.b16 %v141
    %v492 = vunpack.c.h.b16 %v141
    %v493 = vunpack.c.l.b16 %v142
    %v494 = vunpack.c.h.b16 %v142
    %v495 = vunpack.c.l.b16 %v143
    %v496 = vunpack.c.h.b16 %v143
    %v497 = vunpack.c.l.b16 %v144
    %v498 = vunpack.c.h.b16 %v144
    %v499 = vunpack.c.l.b16 %v145
    %v500 = vunpack.c.h.b16 %v145
    %v501 = vunpack.c.l.b16 %v146
    %v502 = vunpack.c.h.b16 %v146
    %v503 = vunpack.c.l.b16 %v147
    %v504 = vunpack.c.h.b16 %v147
    %v505 = vunpack.c.l.b16 %v148
    %v506 = vunpack.c.h.b16 %v148
    %v507 = vunpack.c.l.b16 %v149
    %v508 = vunpack.c.h.b16 %v149
    %v509 = vunpack.c.l.b16 %v150
    %v510 = vunpack.c.h.b16 %v150
    %v511 = vunpack.c.l.b16 %v151
    %v512 = vunpack.c.h.b16 %v151
    %v513 = vunpack.c.l.b16 %v152
    %v514 = vunpack.c.h.b16 %v152
    %v515 = vunpack.c.l.b16 %v153
    %v516 = vunpack.c.h.b16 %v153
    %v517 = vunpack.c.l.b16 %v154
    %v518 = vunpack.c.h.b16 %v154
    %v519 = vunpack.c.l.b16 %v155
    %v520 = vunpack.c.h.b16 %v155
    %v521 = vunpack.c.l.b16 %v156
    %v522 = vunpack.c.h.b16 %v156
    %v523 = vunpack.c.l.b16 %v157
    %v524 = vunpack.c.h.b16 %v157
    %v525 = vunpack.c.l.b16 %v158
    %v526 = vunpack.c.h.b16 %v158
    %v527 = vunpack.c.l.b16 %v159
    %v528 = vunpack.c.h.b16 %v159
    %v529 = vunpack.c.l.b16 %v160
    %v530 = vunpack.c.h.b16 %v160
    %v531 = vunpack.c.l.b16 %v161
    %v532 = vunpack.c.h.b16 %v161
    %v533 = vunpack.c.l.b16 %v162
    %v534 = vunpack.c.h.b16 %v162
    %v535 = vunpack.c.l.b16 %v163
    %v536 = vunpack.c.h.b16 %v163
    %v537 = vunpack.c.l.b16 %v164
    %v538 = vunpack.c.h.b16 %v164
    %v539 = vunpack.c.l.b16 %v165
    %v540 = vunpack.c.h.b16 %v165
    %v541 = vunpack.c.l.b16 %v166
    %v542 = vunpack.c.h.b16 %v166
    %v543 = vunpack.c.l.b16 %v167
    %v544 = vunpack.c.h.b16 %v167
    %v545 = vunpack.c.l.b16 %v168
    %v546 = vunpack.c.h.b16 %v168
    %v547 = vunpack.c.l.b16 %v169
    %v548 = vunpack.c.h.b16 %v169
    %v549 = vunpack.c.l.b16 %v170
    %v550 = vunpack.c.h.b16 %v170
    %v551 = vunpack.c.l.b16 %v171
    %v552 = vunpack.c.h.b16 %v171
    %v553 = vunpack.c.l.b16 %v172
    %v554 = vunpack.c.h.b16 %v172
    %v555 = vunpack.c.l.b16 %v173
    %v556 = vunpack.c.h.b16 %v173
    %v557 = vunpack.c.l.b16 %v174
    %v558 = vunpack.c.h.b16 %v174
    %v559 = vunpack.c.l.b16 %v175
    %v560 = vunpack.c.h.b16 %v175
    %v561 = vunpack.c.l.b16 %v176
    %v562 = vunpack.c.h.b16 %v176
    %v563 = vunpack.c.l.b16 %v177
    %v564 = vunpack.c.h.b16 %v177
    %v565 = vunpack.c.l.b16 %v178
    %v566 = vunpack.c.h.b16 %v178
    %v567 = vunpack.c.l.b16 %v179
    %v568 = vunpack.c.h.b16 %v179
    %v569 = vunpack.c.l.b16 %v180
    %v570 = vunpack.c.h.b16 %v180
    %v571 = vunpack.c.l.b16 %v181
    %v572 = vunpack.c.h.b16 %v181
    %v573 = vunpack.c.l.b16 %v182
    %v574 = vunpack.c.h.b16 %v182
    %v575 = vunpack.c.l.b16 %v183
    %v576 = vunpack.c.h.b16 %v183
    %v577 = vunpack.c.l.b16 %v184
    %v578 = vunpack.c.h.b16 %v184
    %v579 = vunpack.c.l.b16 %v185
    %v580 = vunpack.c.h.b16 %v185
    %v581 = vunpack.c.l.b16 %v186
    %v582 = vunpack.c.h.b16 %v186
    %v583 = vunpack.c.l.b16 %v187
    %v584 = vunpack.c.h.b16 %v187
    %v585 = vunpack.c.l.b16 %v188
    %v586 = vunpack.c.h.b16 %v188
    %v587 = vunpack.c.l.b16 %v189
    %v588 = vunpack.c.h.b16 %v189
    %v589 = vunpack.c.l.b16 %v190
    %v590 = vunpack.c.h.b16 %v190
    %v591 = vunpack.c.l.b16 %v191
    %v592 = vunpack.c.h.b16 %v191
    %v593 = vunpack.c.l.b16 %v192
    %v594 = vunpack.c.h.b16 %v192
    %v595 = vunpack.c.l.b16 %v193
    %v596 = vunpack.c.h.b16 %v193
    %v597 = vunpack.c.l.b16 %v194
    %v598 = vunpack.c.h.b16 %v194
    %v599 = vunpack.c.l.b16 %v195
    %v600 = vunpack.c.h.b16 %v195
    %v601 = vunpack.c.l.b16 %v196
    %v602 = vunpack.c.h.b16 %v196
    %v603 = vpack.c.b16 %v351, %v347
    %v604 = vpack.c.b16 %v352, %v348
    %v605 = vpack.c.b16 %v353, %v349
    %v606 = vpack.c.b16 %v354, %v350
    %v607 = vpack.c.b16 %v359, %v355
    %v608 = vpack.c.b16 %v360, %v356
    %v609 = vpack.c.b16 %v361, %v357
    %v610 = vpack.c.b16 %v362, %v358
    %v611 = vpack.c.b16 %v367, %v363
    %v612 = vpack.c.b16 %v368, %v364
    %v613 = vpack.c.b16 %v369, %v365
    %v614 = vpack.c.b16 %v370, %v366
    %v615 = vpack.c.b16 %v375, %v371
    %v616 = vpack.c.b16 %v376, %v372
    %v617 = vpack.c.b16 %v377, %v373
    %v618 = vpack.c.b16 %v378, %v374
    %v619 = vpack.c.b16 %v383, %v379
    %v620 = vpack.c.b16 %v384, %v380
    %v621 = vpack.c.b16 %v385, %v381
    %v622 = vpack.c.b16 %v386, %v382
    %v623 = vpack.c.b16 %v391, %v387
    %v624 = vpack.c.b16 %v392, %v388
    %v625 = vpack.c.b16 %v393, %v389
    %v626 = vpack.c.b16 %v394, %v390
    %v627 = vpack.c.b16 %v399, %v395
    %v628 = vpack.c.b16 %v400, %v396
    %v629 = vpack.c.b16 %v401, %v397
    %v630 = vpack.c.b16 %v402, %v398
    %v631 = vpack.c.b16 %v407, %v403
    %v632 = vpack.c.b16 %v408, %v404
    %v633 = vpack.c.b16 %v409, %v405
    %v634 = vpack.c.b16 %v410, %v406
    %v635 = vpack.c.b16 %v415, %v411
    %v636 = vpack.c.b16 %v416, %v412
    %v637 = vpack.c.b16 %v417, %v413
    %v638 = vpack.c.b16 %v418, %v414
    %v639 = vpack.c.b16 %v423, %v419
    %v640 = vpack.c.b16 %v424, %v420
    %v641 = vpack.c.b16 %v425, %v421
    %v642 = vpack.c.b16 %v426, %v422
    %v643 = vpack.c.b16 %v431, %v427
    %v644 = vpack.c.b16 %v432, %v428
    %v645 = vpack.c.b16 %v433, %v429
    %v646 = vpack.c.b16 %v434, %v430
    %v647 = vpack.c.b16 %v439, %v435
    %v648 = vpack.c.b16 %v440, %v436
    %v649 = vpack.c.b16 %v441, %v437
    %v650 = vpack.c.b16 %v442, %v438
    %v651 = vpack.c.b16 %v447, %v443
    %v652 = vpack.c.b16 %v448, %v444
    %v653 = vpack.c.b16 %v449, %v445
    %v654 = vpack.c.b16 %v450, %v446
    %v655 = vpack.c.b16 %v455, %v451
    %v656 = vpack.c.b16 %v456, %v452
    %v657 = vpack.c.b16 %v457, %v453
    %v658 = vpack.c.b16 %v458, %v454
    %v659 = vpack.c.b16 %v463, %v459
    %v660 = vpack.c.b16 %v464, %v460
    %v661 = vpack.c.b16 %v465, %v461
    %v662 = vpack.c.b16 %v466, %v462
    %v663 = vpack.c.b16 %v471, %v467
    %v664 = vpack.c.b16 %v472, %v468
    %v665 = vpack.c.b16 %v473, %v469
    %v666 = vpack.c.b16 %v474, %v470
    %v667 = vpack.c.b16 %v479, %v475
    %v668 = vpack.c.b16 %v480, %v476
    %v669 = vpack.c.b16 %v481, %v477
    %v670 = vpack.c.b16 %v482, %v478
    %v671 = vpack.c.b16 %v487, %v483
    %v672 = vpack.c.b16 %v488, %v484
    %v673 = vpack.c.b16 %v489, %v485
    %v674 = vpack.c.b16 %v490, %v486
    %v675 = vpack.c.b16 %v495, %v491
    %v676 = vpack.c.b16 %v496, %v492
    %v677 = vpack.c.b16 %v497, %v493
    %v678 = vpack.c.b16 %v498, %v494
    %v679 = vpack.c.b16 %v503, %v499
    %v680 = vpack.c.b16 %v504, %v500
    %v681 = vpack.c.b16 %v505, %v501
    %v682 = vpack.c.b16 %v506, %v502
    %v683 = vpack.c.b16 %v511, %v507
    %v684 = vpack.c.b16 %v512, %v508
    %v685 = vpack.c.b16 %v513, %v509
    %v686 = vpack.c.b16 %v514, %v510
    %v687 = vpack.c.b16 %v519, %v515
    %v688 = vpack.c.b16 %v520, %v516
    %v689 = vpack.c.b16 %v521, %v517
    %v690 = vpack.c.b16 %v522, %v518
    %v691 = vpack.c.b16 %v527, %v523
    %v692 = vpack.c.b16 %v528, %v524
    %v693 = vpack.c.b16 %v529, %v525
    %v694 = vpack.c.b16 %v530, %v526
    %v695 = vpack.c.b16 %v535, %v531
    %v696 = vpack.c.b16 %v536, %v532
    %v697 = vpack.c.b16 %v537, %v533
    %v698 = vpack.c.b16 %v538, %v534
    %v699 = vpack.c.b16 %v543, %v539
    %v700 = vpack.c.b16 %v544, %v540
    %v701 = vpack.c.b16 %v545, %v541
    %v702 = vpack.c.b16 %v546, %v542
    %v703 = vpack.c.b16 %v551, %v547
    %v704 = vpack.c.b16 %v552, %v548
    %v705 = vpack.c.b16 %v553, %v549
    %v706 = vpack.c.b16 %v554, %v550
    %v707 = vpack.c.b16 %v559, %v555
    %v708 = vpack.c.b16 %v560, %v556
    %v709 = vpack.c.b16 %v561, %v557
    %v710 = vpack.c.b16 %v562, %v558
    %v711 = vpack.c.b16 %v567, %v563
    %v712 = vpack.c.b16 %v568, %v564
    %v713 = vpack.c.b16 %v569, %v565
    %v714 = vpack.c.b16 %v570, %v566
    %v715 = vpack.c.b16 %v575, %v571
    %v716 = vpack.c.b16 %v576, %v572
    %v717 = vpack.c.b16 %v577, %v573
    %v718 = vpack.c.b16 %v578, %v574
    %v719 = vpack.c.b16 %v583, %v579
    %v720 = vpack.c.b16 %v584, %v580
    %v721 = vpack.c.b16 %v585, %v581
    %v722 = vpack.c.b16 %v586, %v582
    %v723 = vpack.c.b16 %v591, %v587
    %v724 = vpack.c.b16 %v592, %v588
    %v725 = vpack.c.b16 %v593, %v589
    %v726 = vpack.c.b16 %v594, %v590
    %v727 = vpack.c.b16 %v599, %v595
    %v728 = vpack.c.b16 %v600, %v596
    %v729 = vpack.c.b16 %v601, %v597
    %v730 = vpack.c.b16 %v602, %v598
    %859 = vmatprep.subr.bf16.mxu0 %v604
    %860 = vmatpush1.bf16.msra.mxu0 %v603
    %861 = vmatprep.subr.bf16.mxu0 %v608
    %862 = vmatpush1.bf16.msra.mxu0 %v607
    %863 = vmatprep.subr.bf16.mxu0 %v612
    %864 = vmatpush1.bf16.msra.mxu0 %v611
    %865 = vmatprep.subr.bf16.mxu0 %v616
    %866 = vmatpush1.bf16.msra.mxu0 %v615
    %867 = vmatprep.subr.bf16.mxu0 %v620
    %868 = vmatpush1.bf16.msra.mxu0 %v619
    %869 = vmatprep.subr.bf16.mxu0 %v624
    %870 = vmatpush1.bf16.msra.mxu0 %v623
    %871 = vmatprep.subr.bf16.mxu0 %v628
    %872 = vmatpush1.bf16.msra.mxu0 %v627
    %873 = vmatprep.subr.bf16.mxu0 %v632
    %874 = vmatpush1.bf16.msra.mxu0 %v631
    %875 = vmatprep.subr.bf16.mxu0 %v636
    %876 = vmatpush1.bf16.msra.mxu0 %v635
    %877 = vmatprep.subr.bf16.mxu0 %v640
    %878 = vmatpush1.bf16.msra.mxu0 %v639
    %879 = vmatprep.subr.bf16.mxu0 %v644
    %880 = vmatpush1.bf16.msra.mxu0 %v643
    %881 = vmatprep.subr.bf16.mxu0 %v648
    %882 = vmatpush1.bf16.msra.mxu0 %v647
    %883 = vmatprep.subr.bf16.mxu0 %v652
    %884 = vmatpush1.bf16.msra.mxu0 %v651
    %885 = vmatprep.subr.bf16.mxu0 %v656
    %886 = vmatpush1.bf16.msra.mxu0 %v655
    %887 = vmatprep.subr.bf16.mxu0 %v660
    %888 = vmatpush1.bf16.msra.mxu0 %v659
    %889 = vmatprep.subr.bf16.mxu0 %v664
    %890 = vmatpush1.bf16.msra.mxu0 %v663
    %891 = vmatprep.mubr.bf16.mxu0 %v54
    %892 = vmatmul.mubr.bf16.gmra.mrb[0].mxu0 %v53
    %v893 = vpop.f32.mrb[0].mxu0
    %v894 = vadd.f32 %v202, %v893
    %v895 = vpop.f32.mrb[0].mxu0
    %v896 = vadd.f32 %v206, %v895
    %v897 = vpop.f32.mrb[0].mxu0
    %v898 = vadd.f32 %v202, %v897
    %v899 = vpop.f32.mrb[0].mxu0
    %v900 = vadd.f32 %v206, %v899
    %901 = vmatprep.mubr.bf16.mxu0 %v58
    %902 = vmatmul.mubr.bf16.gmra.mrb[0].mxu0 %v57
    %v903 = vpop.f32.mrb[0].mxu0
    %v904 = vadd.f32 %v202, %v903
    %v905 = vpop.f32.mrb[0].mxu0
    %v906 = vadd.f32 %v206, %v905
    %v907 = vpop.f32.mrb[0].mxu0
    %v908 = vadd.f32 %v202, %v907
    %v909 = vpop.f32.mrb[0].mxu0
    %v910 = vadd.f32 %v206, %v909
    %911 = vmatprep.mubr.bf16.mxu0 %v62
    %912 = vmatmul.mubr.bf16.gmra.mrb[0].mxu0 %v61
    %v913 = vpop.f32.mrb[0].mxu0
    %v914 = vadd.f32 %v202, %v913
    %v915 = vpop.f32.mrb[0].mxu0
    %v916 = vadd.f32 %v206, %v915
    %v917 = vpop.f32.mrb[0].mxu0
    %v918 = vadd.f32 %v202, %v917
    %v919 = vpop.f32.mrb[0].mxu0
    %v920 = vadd.f32 %v206, %v919
    %921 = vmatprep.mubr.bf16.mxu0 %v66
    %922 = vmatmul.mubr.bf16.gmra.mrb[0].mxu0 %v65
    %v923 = vpop.f32.mrb[0].mxu0
    %v924 = vadd.f32 %v202, %v923
    %v925 = vpop.f32.mrb[0].mxu0
    %v926 = vadd.f32 %v206, %v925
    %v927 = vpop.f32.mrb[0].mxu0
    %v928 = vadd.f32 %v202, %v927
    %v929 = vpop.f32.mrb[0].mxu0
    %v930 = vadd.f32 %v206, %v929
    %931 = vdwg.mxu0
    %932 = vmatprep.subr.bf16.mxu0 %v668
    %933 = vmatpush1.bf16.msra.mxu0 %v667
    %934 = vmatprep.subr.bf16.mxu0 %v672
    %935 = vmatpush1.bf16.msra.mxu0 %v671
    %936 = vmatprep.subr.bf16.mxu0 %v676
    %937 = vmatpush1.bf16.msra.mxu0 %v675
    %938 = vmatprep.subr.bf16.mxu0 %v680
    %939 = vmatpush1.bf16.msra.mxu0 %v679
    %940 = vmatprep.subr.bf16.mxu0 %v684
    %941 = vmatpush1.bf16.msra.mxu0 %v683
    %942 = vmatprep.subr.bf16.mxu0 %v688
    %943 = vmatpush1.bf16.msra.mxu0 %v687
    %944 = vmatprep.subr.bf16.mxu0 %v692
    %945 = vmatpush1.bf16.msra.mxu0 %v691
    %946 = vmatprep.subr.bf16.mxu0 %v696
    %947 = vmatpush1.bf16.msra.mxu0 %v695
    %948 = vmatprep.subr.bf16.mxu0 %v700
    %949 = vmatpush1.bf16.msra.mxu0 %v699
    %950 = vmatprep.subr.bf16.mxu0 %v704
    %951 = vmatpush1.bf16.msra.mxu0 %v703
    %952 = vmatprep.subr.bf16.mxu0 %v708
    %953 = vmatpush1.bf16.msra.mxu0 %v707
    %954 = vmatprep.subr.bf16.mxu0 %v712
    %955 = vmatpush1.bf16.msra.mxu0 %v711
    %956 = vmatprep.subr.bf16.mxu0 %v716
    %957 = vmatpush1.bf16.msra.mxu0 %v715
    %958 = vmatprep.subr.bf16.mxu0 %v720
    %959 = vmatpush1.bf16.msra.mxu0 %v719
    %960 = vmatprep.subr.bf16.mxu0 %v724
    %961 = vmatpush1.bf16.msra.mxu0 %v723
    %962 = vmatprep.subr.bf16.mxu0 %v728
    %963 = vmatpush1.bf16.msra.mxu0 %v727
    %964 = vmatprep.mubr.bf16.mxu0 %v56
    %965 = vmatmul.mubr.bf16.gmra.mrb[0].mxu0 %v55
    %v966 = vpop.f32.mrb[0].mxu0
    %v967 = vadd.f32 %v894, %v966
    %v968 = vpop.f32.mrb[0].mxu0
    %v969 = vadd.f32 %v896, %v968
    %v970 = vpop.f32.mrb[0].mxu0
    %v971 = vadd.f32 %v898, %v970
    %v972 = vpop.f32.mrb[0].mxu0
    %v973 = vadd.f32 %v900, %v972
    %974 = vmatprep.mubr.bf16.mxu0 %v60
    %975 = vmatmul.mubr.bf16.gmra.mrb[0].mxu0 %v59
    %v976 = vpop.f32.mrb[0].mxu0
    %v977 = vadd.f32 %v904, %v976
    %v978 = vpop.f32.mrb[0].mxu0
    %v979 = vadd.f32 %v906, %v978
    %v980 = vpop.f32.mrb[0].mxu0
    %v981 = vadd.f32 %v908, %v980
    %v982 = vpop.f32.mrb[0].mxu0
    %v983 = vadd.f32 %v910, %v982
    %984 = vmatprep.mubr.bf16.mxu0 %v64
    %985 = vmatmul.mubr.bf16.gmra.mrb[0].mxu0 %v63
    %v986 = vpop.f32.mrb[0].mxu0
    %v987 = vadd.f32 %v914, %v986
    %v988 = vpop.f32.mrb[0].mxu0
    %v989 = vadd.f32 %v916, %v988
    %v990 = vpop.f32.mrb[0].mxu0
    %v991 = vadd.f32 %v918, %v990
    %v992 = vpop.f32.mrb[0].mxu0
    %v993 = vadd.f32 %v920, %v992
    %994 = vmatprep.mubr.bf16.mxu0 %v68
    %995 = vmatmul.mubr.bf16.gmra.mrb[0].mxu0 %v67
    %v996 = vpop.f32.mrb[0].mxu0
    %v997 = vadd.f32 %v924, %v996
    %v998 = vpop.f32.mrb[0].mxu0
    %v999 = vadd.f32 %v926, %v998
    %v1000 = vpop.f32.mrb[0].mxu0
    %v1001 = vadd.f32 %v928, %v1000
    %v1002 = vpop.f32.mrb[0].mxu0
    %v1003 = vadd.f32 %v930, %v1002
    %1004 = vdwg.mxu0
    %1005 = vmatprep.subr.bf16.mxu0 %v606
    %1006 = vmatpush1.bf16.msra.mxu0 %v605
    %1007 = vmatprep.subr.bf16.mxu0 %v610
    %1008 = vmatpush1.bf16.msra.mxu0 %v609
    %1009 = vmatprep.subr.bf16.mxu0 %v614
    %1010 = vmatpush1.bf16.msra.mxu0 %v613
    %1011 = vmatprep.subr.bf16.mxu0 %v618
    %1012 = vmatpush1.bf16.msra.mxu0 %v617
    %1013 = vmatprep.subr.bf16.mxu0 %v622
    %1014 = vmatpush1.bf16.msra.mxu0 %v621
    %1015 = vmatprep.subr.bf16.mxu0 %v626
    %1016 = vmatpush1.bf16.msra.mxu0 %v625
    %1017 = vmatprep.subr.bf16.mxu0 %v630
    %1018 = vmatpush1.bf16.msra.mxu0 %v629
    %1019 = vmatprep.subr.bf16.mxu0 %v634
    %1020 = vmatpush1.bf16.msra.mxu0 %v633
    %1021 = vmatprep.subr.bf16.mxu0 %v638
    %1022 = vmatpush1.bf16.msra.mxu0 %v637
    %1023 = vmatprep.subr.bf16.mxu0 %v642
    %1024 = vmatpush1.bf16.msra.mxu0 %v641
    %1025 = vmatprep.subr.bf16.mxu0 %v646
    %1026 = vmatpush1.bf16.msra.mxu0 %v645
    %1027 = vmatprep.subr.bf16.mxu0 %v650
    %1028 = vmatpush1.bf16.msra.mxu0 %v649
    %1029 = vmatprep.subr.bf16.mxu0 %v654
    %1030 = vmatpush1.bf16.msra.mxu0 %v653
    %1031 = vmatprep.subr.bf16.mxu0 %v658
    %1032 = vmatpush1.bf16.msra.mxu0 %v657
    %1033 = vmatprep.subr.bf16.mxu0 %v662
    %1034 = vmatpush1.bf16.msra.mxu0 %v661
    %1035 = vmatprep.subr.bf16.mxu0 %v666
    %1036 = vmatpush1.bf16.msra.mxu0 %v665
    %1037 = vmatprep.mubr.bf16.mxu0 %v54
    %1038 = vmatmul.mubr.bf16.gmra.mrb[0].mxu0 %v53
    %v1039 = vpop.f32.mrb[0].mxu0
    %v1040 = vadd.f32 %v210, %v1039
    %v1041 = vpop.f32.mrb[0].mxu0
    %v1042 = vadd.f32 %v214, %v1041
    %v1043 = vpop.f32.mrb[0].mxu0
    %v1044 = vadd.f32 %v210, %v1043
    %v1045 = vpop.f32.mrb[0].mxu0
    %v1046 = vadd.f32 %v214, %v1045
    %1047 = vmatprep.mubr.bf16.mxu0 %v58
    %1048 = vmatmul.mubr.bf16.gmra.mrb[0].mxu0 %v57
    %v1049 = vpop.f32.mrb[0].mxu0
    %v1050 = vadd.f32 %v210, %v1049
    %v1051 = vpop.f32.mrb[0].mxu0
    %v1052 = vadd.f32 %v214, %v1051
    %v1053 = vpop.f32.mrb[0].mxu0
    %v1054 = vadd.f32 %v210, %v1053
    %v1055 = vpop.f32.mrb[0].mxu0
    %v1056 = vadd.f32 %v214, %v1055
    %1057 = vmatprep.mubr.bf16.mxu0 %v62
    %1058 = vmatmul.mubr.bf16.gmra.mrb[0].mxu0 %v61
    %v1059 = vpop.f32.mrb[0].mxu0
    %v1060 = vadd.f32 %v210, %v1059
    %v1061 = vpop.f32.mrb[0].mxu0
    %v1062 = vadd.f32 %v214, %v1061
    %v1063 = vpop.f32.mrb[0].mxu0
    %v1064 = vadd.f32 %v210, %v1063
    %v1065 = vpop.f32.mrb[0].mxu0
    %v1066 = vadd.f32 %v214, %v1065
    %1067 = vmatprep.mubr.bf16.mxu0 %v66
    %1068 = vmatmul.mubr.bf16.gmra.mrb[0].mxu0 %v65
    %v1069 = vpop.f32.mrb[0].mxu0
    %v1070 = vadd.f32 %v210, %v1069
    %v1071 = vpop.f32.mrb[0].mxu0
    %v1072 = vadd.f32 %v214, %v1071
    %v1073 = vpop.f32.mrb[0].mxu0
    %v1074 = vadd.f32 %v210, %v1073
    %v1075 = vpop.f32.mrb[0].mxu0
    %v1076 = vadd.f32 %v214, %v1075
    %1077 = vdwg.mxu0
    %1078 = vmatprep.subr.bf16.mxu0 %v670
    %1079 = vmatpush1.bf16.msra.mxu0 %v669
    %1080 = vmatprep.subr.bf16.mxu0 %v674
    %1081 = vmatpush1.bf16.msra.mxu0 %v673
    %1082 = vmatprep.subr.bf16.mxu0 %v678
    %1083 = vmatpush1.bf16.msra.mxu0 %v677
    %1084 = vmatprep.subr.bf16.mxu0 %v682
    %1085 = vmatpush1.bf16.msra.mxu0 %v681
    %1086 = vmatprep.subr.bf16.mxu0 %v686
    %1087 = vmatpush1.bf16.msra.mxu0 %v685
    %1088 = vmatprep.subr.bf16.mxu0 %v690
    %1089 = vmatpush1.bf16.msra.mxu0 %v689
    %1090 = vmatprep.subr.bf16.mxu0 %v694
    %1091 = vmatpush1.bf16.msra.mxu0 %v693
    %1092 = vmatprep.subr.bf16.mxu0 %v698
    %1093 = vmatpush1.bf16.msra.mxu0 %v697
    %1094 = vmatprep.subr.bf16.mxu0 %v702
    %1095 = vmatpush1.bf16.msra.mxu0 %v701
    %1096 = vmatprep.subr.bf16.mxu0 %v706
    %1097 = vmatpush1.bf16.msra.mxu0 %v705
    %1098 = vmatprep.subr.bf16.mxu0 %v710
    %1099 = vmatpush1.bf16.msra.mxu0 %v709
    %1100 = vmatprep.subr.bf16.mxu0 %v714
    %1101 = vmatpush1.bf16.msra.mxu0 %v713
    %1102 = vmatprep.subr.bf16.mxu0 %v718
    %1103 = vmatpush1.bf16.msra.mxu0 %v717
    %1104 = vmatprep.subr.bf16.mxu0 %v722
    %1105 = vmatpush1.bf16.msra.mxu0 %v721
    %1106 = vmatprep.subr.bf16.mxu0 %v726
    %1107 = vmatpush1.bf16.msra.mxu0 %v725
    %1108 = vmatprep.subr.bf16.mxu0 %v730
    %1109 = vmatpush1.bf16.msra.mxu0 %v729
    %1110 = vmatprep.mubr.bf16.mxu0 %v56
    %1111 = vmatmul.mubr.bf16.gmra.mrb[0].mxu0 %v55
    %v1112 = vpop.f32.mrb[0].mxu0
    %v1113 = vadd.f32 %v1040, %v1112
    %v1114 = vpop.f32.mrb[0].mxu0
    %v1115 = vadd.f32 %v1042, %v1114
    %v1116 = vpop.f32.mrb[0].mxu0
    %v1117 = vadd.f32 %v1044, %v1116
    %v1118 = vpop.f32.mrb[0].mxu0
    %v1119 = vadd.f32 %v1046, %v1118
    %1120 = vmatprep.mubr.bf16.mxu0 %v60
    %1121 = vmatmul.mubr.bf16.gmra.mrb[0].mxu0 %v59
    %v1122 = vpop.f32.mrb[0].mxu0
    %v1123 = vadd.f32 %v1050, %v1122
    %v1124 = vpop.f32.mrb[0].mxu0
    %v1125 = vadd.f32 %v1052, %v1124
    %v1126 = vpop.f32.mrb[0].mxu0
    %v1127 = vadd.f32 %v1054, %v1126
    %v1128 = vpop.f32.mrb[0].mxu0
    %v1129 = vadd.f32 %v1056, %v1128
    %1130 = vmatprep.mubr.bf16.mxu0 %v64
    %1131 = vmatmul.mubr.bf16.gmra.mrb[0].mxu0 %v63
    %v1132 = vpop.f32.mrb[0].mxu0
    %v1133 = vadd.f32 %v1060, %v1132
    %v1134 = vpop.f32.mrb[0].mxu0
    %v1135 = vadd.f32 %v1062, %v1134
    %v1136 = vpop.f32.mrb[0].mxu0
    %v1137 = vadd.f32 %v1064, %v1136
    %v1138 = vpop.f32.mrb[0].mxu0
    %v1139 = vadd.f32 %v1066, %v1138
    %1140 = vmatprep.mubr.bf16.mxu0 %v68
    %1141 = vmatmul.mubr.bf16.gmra.mrb[0].mxu0 %v67
    %v1142 = vpop.f32.mrb[0].mxu0
    %v1143 = vadd.f32 %v1070, %v1142
    %v1144 = vpop.f32.mrb[0].mxu0
    %v1145 = vadd.f32 %v1072, %v1144
    %v1146 = vpop.f32.mrb[0].mxu0
    %v1147 = vadd.f32 %v1074, %v1146
    %v1148 = vpop.f32.mrb[0].mxu0
    %v1149 = vadd.f32 %v1076, %v1148
    %1150 = vdwg.mxu0
    %v1151 = vpack.c.bf16 %v971, %v967
    %v1152 = vpack.c.bf16 %v973, %v969
    %v1153 = vpack.c.bf16 %v1117, %v1113
    %v1154 = vpack.c.bf16 %v1119, %v1115
    %v1155 = vpack.c.bf16 %v981, %v977
    %v1156 = vpack.c.bf16 %v983, %v979
    %v1157 = vpack.c.bf16 %v1127, %v1123
    %v1158 = vpack.c.bf16 %v1129, %v1125
    %v1159 = vpack.c.bf16 %v991, %v987
    %v1160 = vpack.c.bf16 %v993, %v989
    %v1161 = vpack.c.bf16 %v1137, %v1133
    %v1162 = vpack.c.bf16 %v1139, %v1135
    %v1163 = vpack.c.bf16 %v1001, %v997
    %v1164 = vpack.c.bf16 %v1003, %v999
    %v1165 = vpack.c.bf16 %v1147, %v1143
    %v1166 = vpack.c.bf16 %v1149, %v1145
    %v1167 = vld [vmem:[%s3] sm:$0xff]
    %v1168 = vld [vmem:[%s3 + $0x8] sm:$0xff]
    %v1169 = vld [vmem:[%s3 + $0x10] sm:$0xff]
    %v1170 = vld [vmem:[%s3 + $0x18] sm:$0xff]
    %v1171 = vld [vmem:[%s3 + $0x20] sm:$0xff]
    %v1172 = vld [vmem:[%s3 + $0x28] sm:$0xff]
    %v1173 = vld [vmem:[%s3 + $0x30] sm:$0xff]
    %v1174 = vld [vmem:[%s3 + $0x38] sm:$0xff]
    %v1175 = vld [vmem:[%s3 + $0x40] sm:$0xff]
    %v1176 = vld [vmem:[%s3 + $0x48] sm:$0xff]
    %v1177 = vld [vmem:[%s3 + $0x50] sm:$0xff]
    %v1178 = vld [vmem:[%s3 + $0x58] sm:$0xff]
    %v1179 = vld [vmem:[%s3 + $0x60] sm:$0xff]
    %v1180 = vld [vmem:[%s3 + $0x68] sm:$0xff]
    %v1181 = vld [vmem:[%s3 + $0x70] sm:$0xff]
    %v1182 = vld [vmem:[%s3 + $0x78] sm:$0xff]
    %v1183 = vld [vmem:[%s3 + $0x80] sm:$0xff]
    %v1184 = vld [vmem:[%s3 + $0x88] sm:$0xff]
    %v1185 = vld [vmem:[%s3 + $0x90] sm:$0xff]
    %v1186 = vld [vmem:[%s3 + $0x98] sm:$0xff]
    %v1187 = vld [vmem:[%s3 + $0xa0] sm:$0xff]
    %v1188 = vld [vmem:[%s3 + $0xa8] sm:$0xff]
    %v1189 = vld [vmem:[%s3 + $0xb0] sm:$0xff]
    %v1190 = vld [vmem:[%s3 + $0xb8] sm:$0xff]
    %v1191 = vld [vmem:[%s3 + $0xc0] sm:$0xff]
    %v1192 = vld [vmem:[%s3 + $0xc8] sm:$0xff]
    %v1193 = vld [vmem:[%s3 + $0xd0] sm:$0xff]
    %v1194 = vld [vmem:[%s3 + $0xd8] sm:$0xff]
    %v1195 = vld [vmem:[%s3 + $0xe0] sm:$0xff]
    %v1196 = vld [vmem:[%s3 + $0xe8] sm:$0xff]
    %v1197 = vld [vmem:[%s3 + $0xf0] sm:$0xff]
    %v1198 = vld [vmem:[%s3 + $0xf8] sm:$0xff]
    %v1199 = vld [vmem:[%s3 + $0x100] sm:$0xff]
    %v1200 = vld [vmem:[%s3 + $0x108] sm:$0xff]
    %v1201 = vld [vmem:[%s3 + $0x110] sm:$0xff]
    %v1202 = vld [vmem:[%s3 + $0x118] sm:$0xff]
    %v1203 = vld [vmem:[%s3 + $0x120] sm:$0xff]
    %v1204 = vld [vmem:[%s3 + $0x128] sm:$0xff]
    %v1205 = vld [vmem:[%s3 + $0x130] sm:$0xff]
    %v1206 = vld [vmem:[%s3 + $0x138] sm:$0xff]
    %v1207 = vld [vmem:[%s3 + $0x140] sm:$0xff]
    %v1208 = vld [vmem:[%s3 + $0x148] sm:$0xff]
    %v1209 = vld [vmem:[%s3 + $0x150] sm:$0xff]
    %v1210 = vld [vmem:[%s3 + $0x158] sm:$0xff]
    %v1211 = vld [vmem:[%s3 + $0x160] sm:$0xff]
    %v1212 = vld [vmem:[%s3 + $0x168] sm:$0xff]
    %v1213 = vld [vmem:[%s3 + $0x170] sm:$0xff]
    %v1214 = vld [vmem:[%s3 + $0x178] sm:$0xff]
    %v1215 = vld [vmem:[%s3 + $0x180] sm:$0xff]
    %v1216 = vld [vmem:[%s3 + $0x188] sm:$0xff]
    %v1217 = vld [vmem:[%s3 + $0x190] sm:$0xff]
    %v1218 = vld [vmem:[%s3 + $0x198] sm:$0xff]
    %v1219 = vld [vmem:[%s3 + $0x1a0] sm:$0xff]
    %v1220 = vld [vmem:[%s3 + $0x1a8] sm:$0xff]
    %v1221 = vld [vmem:[%s3 + $0x1b0] sm:$0xff]
    %v1222 = vld [vmem:[%s3 + $0x1b8] sm:$0xff]
    %v1223 = vld [vmem:[%s3 + $0x1c0] sm:$0xff]
    %v1224 = vld [vmem:[%s3 + $0x1c8] sm:$0xff]
    %v1225 = vld [vmem:[%s3 + $0x1d0] sm:$0xff]
    %v1226 = vld [vmem:[%s3 + $0x1d8] sm:$0xff]
    %v1227 = vld [vmem:[%s3 + $0x1e0] sm:$0xff]
    %v1228 = vld [vmem:[%s3 + $0x1e8] sm:$0xff]
    %v1229 = vld [vmem:[%s3 + $0x1f0] sm:$0xff]
    %v1230 = vld [vmem:[%s3 + $0x1f8] sm:$0xff]
    %v1231 = vld [vmem:[%s3 + $0x200] sm:$0xff]
    %v1232 = vld [vmem:[%s3 + $0x208] sm:$0xff]
    %v1233 = vld [vmem:[%s3 + $0x210] sm:$0xff]
    %v1234 = vld [vmem:[%s3 + $0x218] sm:$0xff]
    %v1235 = vld [vmem:[%s3 + $0x220] sm:$0xff]
    %v1236 = vld [vmem:[%s3 + $0x228] sm:$0xff]
    %v1237 = vld [vmem:[%s3 + $0x230] sm:$0xff]
    %v1238 = vld [vmem:[%s3 + $0x238] sm:$0xff]
    %v1239 = vld [vmem:[%s3 + $0x240] sm:$0xff]
    %v1240 = vld [vmem:[%s3 + $0x248] sm:$0xff]
    %v1241 = vld [vmem:[%s3 + $0x250] sm:$0xff]
    %v1242 = vld [vmem:[%s3 + $0x258] sm:$0xff]
    %v1243 = vld [vmem:[%s3 + $0x260] sm:$0xff]
    %v1244 = vld [vmem:[%s3 + $0x268] sm:$0xff]
    %v1245 = vld [vmem:[%s3 + $0x270] sm:$0xff]
    %v1246 = vld [vmem:[%s3 + $0x278] sm:$0xff]
    %v1247 = vld [vmem:[%s3 + $0x280] sm:$0xff]
    %v1248 = vld [vmem:[%s3 + $0x288] sm:$0xff]
    %v1249 = vld [vmem:[%s3 + $0x290] sm:$0xff]
    %v1250 = vld [vmem:[%s3 + $0x298] sm:$0xff]
    %v1251 = vld [vmem:[%s3 + $0x2a0] sm:$0xff]
    %v1252 = vld [vmem:[%s3 + $0x2a8] sm:$0xff]
    %v1253 = vld [vmem:[%s3 + $0x2b0] sm:$0xff]
    %v1254 = vld [vmem:[%s3 + $0x2b8] sm:$0xff]
    %v1255 = vld [vmem:[%s3 + $0x2c0] sm:$0xff]
    %v1256 = vld [vmem:[%s3 + $0x2c8] sm:$0xff]
    %v1257 = vld [vmem:[%s3 + $0x2d0] sm:$0xff]
    %v1258 = vld [vmem:[%s3 + $0x2d8] sm:$0xff]
    %v1259 = vld [vmem:[%s3 + $0x2e0] sm:$0xff]
    %v1260 = vld [vmem:[%s3 + $0x2e8] sm:$0xff]
    %v1261 = vld [vmem:[%s3 + $0x2f0] sm:$0xff]
    %v1262 = vld [vmem:[%s3 + $0x2f8] sm:$0xff]
    %v1263 = vld [vmem:[%s3 + $0x300] sm:$0xff]
    %v1264 = vld [vmem:[%s3 + $0x308] sm:$0xff]
    %v1265 = vld [vmem:[%s3 + $0x310] sm:$0xff]
    %v1266 = vld [vmem:[%s3 + $0x318] sm:$0xff]
    %v1267 = vld [vmem:[%s3 + $0x320] sm:$0xff]
    %v1268 = vld [vmem:[%s3 + $0x328] sm:$0xff]
    %v1269 = vld [vmem:[%s3 + $0x330] sm:$0xff]
    %v1270 = vld [vmem:[%s3 + $0x338] sm:$0xff]
    %v1271 = vld [vmem:[%s3 + $0x340] sm:$0xff]
    %v1272 = vld [vmem:[%s3 + $0x348] sm:$0xff]
    %v1273 = vld [vmem:[%s3 + $0x350] sm:$0xff]
    %v1274 = vld [vmem:[%s3 + $0x358] sm:$0xff]
    %v1275 = vld [vmem:[%s3 + $0x360] sm:$0xff]
    %v1276 = vld [vmem:[%s3 + $0x368] sm:$0xff]
    %v1277 = vld [vmem:[%s3 + $0x370] sm:$0xff]
    %v1278 = vld [vmem:[%s3 + $0x378] sm:$0xff]
    %v1279 = vld [vmem:[%s3 + $0x380] sm:$0xff]
    %v1280 = vld [vmem:[%s3 + $0x388] sm:$0xff]
    %v1281 = vld [vmem:[%s3 + $0x390] sm:$0xff]
    %v1282 = vld [vmem:[%s3 + $0x398] sm:$0xff]
    %v1283 = vld [vmem:[%s3 + $0x3a0] sm:$0xff]
    %v1284 = vld [vmem:[%s3 + $0x3a8] sm:$0xff]
    %v1285 = vld [vmem:[%s3 + $0x3b0] sm:$0xff]
    %v1286 = vld [vmem:[%s3 + $0x3b8] sm:$0xff]
    %v1287 = vld [vmem:[%s3 + $0x3c0] sm:$0xff]
    %v1288 = vld [vmem:[%s3 + $0x3c8] sm:$0xff]
    %v1289 = vld [vmem:[%s3 + $0x3d0] sm:$0xff]
    %v1290 = vld [vmem:[%s3 + $0x3d8] sm:$0xff]
    %v1291 = vld [vmem:[%s3 + $0x3e0] sm:$0xff]
    %v1292 = vld [vmem:[%s3 + $0x3e8] sm:$0xff]
    %v1293 = vld [vmem:[%s3 + $0x3f0] sm:$0xff]
    %v1294 = vld [vmem:[%s3 + $0x3f8] sm:$0xff]
    %v1295 = vld [vmem:[%s4] sm:$0xf]
    %v1297 = vlaneseq
    %v1298 = vshrl.u32 %v1297, 7
    %v1299 = vsub.s32 0, %v1298
    %v1300 = vrot.slane %v1295, %v1299
    %v1301 = vlaneseq
    %v1302 = vshrl.u32 %v1301, 7
    %v1303 = vsub.s32 1, %v1302
    %v1304 = vrot.slane %v1295, %v1303
    %v1305 = vlaneseq
    %v1306 = vshrl.u32 %v1305, 7
    %v1307 = vsub.s32 2, %v1306
    %v1308 = vrot.slane %v1295, %v1307
    %v1309 = vlaneseq
    %v1310 = vshrl.u32 %v1309, 7
    %v1311 = vsub.s32 3, %v1310
    %v1312 = vrot.slane %v1295, %v1311
    %v1445 = vunpack.c.l.b16 %v1167
    %v1446 = vunpack.c.h.b16 %v1167
    %v1447 = vunpack.c.l.b16 %v1168
    %v1448 = vunpack.c.h.b16 %v1168
    %v1449 = vunpack.c.l.b16 %v1169
    %v1450 = vunpack.c.h.b16 %v1169
    %v1451 = vunpack.c.l.b16 %v1170
    %v1452 = vunpack.c.h.b16 %v1170
    %v1453 = vunpack.c.l.b16 %v1171
    %v1454 = vunpack.c.h.b16 %v1171
    %v1455 = vunpack.c.l.b16 %v1172
    %v1456 = vunpack.c.h.b16 %v1172
    %v1457 = vunpack.c.l.b16 %v1173
    %v1458 = vunpack.c.h.b16 %v1173
    %v1459 = vunpack.c.l.b16 %v1174
    %v1460 = vunpack.c.h.b16 %v1174
    %v1461 = vunpack.c.l.b16 %v1175
    %v1462 = vunpack.c.h.b16 %v1175
    %v1463 = vunpack.c.l.b16 %v1176
    %v1464 = vunpack.c.h.b16 %v1176
    %v1465 = vunpack.c.l.b16 %v1177
    %v1466 = vunpack.c.h.b16 %v1177
    %v1467 = vunpack.c.l.b16 %v1178
    %v1468 = vunpack.c.h.b16 %v1178
    %v1469 = vunpack.c.l.b16 %v1179
    %v1470 = vunpack.c.h.b16 %v1179
    %v1471 = vunpack.c.l.b16 %v1180
    %v1472 = vunpack.c.h.b16 %v1180
    %v1473 = vunpack.c.l.b16 %v1181
    %v1474 = vunpack.c.h.b16 %v1181
    %v1475 = vunpack.c.l.b16 %v1182
    %v1476 = vunpack.c.h.b16 %v1182
    %v1477 = vunpack.c.l.b16 %v1183
    %v1478 = vunpack.c.h.b16 %v1183
    %v1479 = vunpack.c.l.b16 %v1184
    %v1480 = vunpack.c.h.b16 %v1184
    %v1481 = vunpack.c.l.b16 %v1185
    %v1482 = vunpack.c.h.b16 %v1185
    %v1483 = vunpack.c.l.b16 %v1186
    %v1484 = vunpack.c.h.b16 %v1186
    %v1485 = vunpack.c.l.b16 %v1187
    %v1486 = vunpack.c.h.b16 %v1187
    %v1487 = vunpack.c.l.b16 %v1188
    %v1488 = vunpack.c.h.b16 %v1188
    %v1489 = vunpack.c.l.b16 %v1189
    %v1490 = vunpack.c.h.b16 %v1189
    %v1491 = vunpack.c.l.b16 %v1190
    %v1492 = vunpack.c.h.b16 %v1190
    %v1493 = vunpack.c.l.b16 %v1191
    %v1494 = vunpack.c.h.b16 %v1191
    %v1495 = vunpack.c.l.b16 %v1192
    %v1496 = vunpack.c.h.b16 %v1192
    %v1497 = vunpack.c.l.b16 %v1193
    %v1498 = vunpack.c.h.b16 %v1193
    %v1499 = vunpack.c.l.b16 %v1194
    %v1500 = vunpack.c.h.b16 %v1194
    %v1501 = vunpack.c.l.b16 %v1195
    %v1502 = vunpack.c.h.b16 %v1195
    %v1503 = vunpack.c.l.b16 %v1196
    %v1504 = vunpack.c.h.b16 %v1196
    %v1505 = vunpack.c.l.b16 %v1197
    %v1506 = vunpack.c.h.b16 %v1197
    %v1507 = vunpack.c.l.b16 %v1198
    %v1508 = vunpack.c.h.b16 %v1198
    %v1509 = vunpack.c.l.b16 %v1199
    %v1510 = vunpack.c.h.b16 %v1199
    %v1511 = vunpack.c.l.b16 %v1200
    %v1512 = vunpack.c.h.b16 %v1200
    %v1513 = vunpack.c.l.b16 %v1201
    %v1514 = vunpack.c.h.b16 %v1201
    %v1515 = vunpack.c.l.b16 %v1202
    %v1516 = vunpack.c.h.b16 %v1202
    %v1517 = vunpack.c.l.b16 %v1203
    %v1518 = vunpack.c.h.b16 %v1203
    %v1519 = vunpack.c.l.b16 %v1204
    %v1520 = vunpack.c.h.b16 %v1204
    %v1521 = vunpack.c.l.b16 %v1205
    %v1522 = vunpack.c.h.b16 %v1205
    %v1523 = vunpack.c.l.b16 %v1206
    %v1524 = vunpack.c.h.b16 %v1206
    %v1525 = vunpack.c.l.b16 %v1207
    %v1526 = vunpack.c.h.b16 %v1207
    %v1527 = vunpack.c.l.b16 %v1208
    %v1528 = vunpack.c.h.b16 %v1208
    %v1529 = vunpack.c.l.b16 %v1209
    %v1530 = vunpack.c.h.b16 %v1209
    %v1531 = vunpack.c.l.b16 %v1210
    %v1532 = vunpack.c.h.b16 %v1210
    %v1533 = vunpack.c.l.b16 %v1211
    %v1534 = vunpack.c.h.b16 %v1211
    %v1535 = vunpack.c.l.b16 %v1212
    %v1536 = vunpack.c.h.b16 %v1212
    %v1537 = vunpack.c.l.b16 %v1213
    %v1538 = vunpack.c.h.b16 %v1213
    %v1539 = vunpack.c.l.b16 %v1214
    %v1540 = vunpack.c.h.b16 %v1214
    %v1541 = vunpack.c.l.b16 %v1215
    %v1542 = vunpack.c.h.b16 %v1215
    %v1543 = vunpack.c.l.b16 %v1216
    %v1544 = vunpack.c.h.b16 %v1216
    %v1545 = vunpack.c.l.b16 %v1217
    %v1546 = vunpack.c.h.b16 %v1217
    %v1547 = vunpack.c.l.b16 %v1218
    %v1548 = vunpack.c.h.b16 %v1218
    %v1549 = vunpack.c.l.b16 %v1219
    %v1550 = vunpack.c.h.b16 %v1219
    %v1551 = vunpack.c.l.b16 %v1220
    %v1552 = vunpack.c.h.b16 %v1220
    %v1553 = vunpack.c.l.b16 %v1221
    %v1554 = vunpack.c.h.b16 %v1221
    %v1555 = vunpack.c.l.b16 %v1222
    %v1556 = vunpack.c.h.b16 %v1222
    %v1557 = vunpack.c.l.b16 %v1223
    %v1558 = vunpack.c.h.b16 %v1223
    %v1559 = vunpack.c.l.b16 %v1224
    %v1560 = vunpack.c.h.b16 %v1224
    %v1561 = vunpack.c.l.b16 %v1225
    %v1562 = vunpack.c.h.b16 %v1225
    %v1563 = vunpack.c.l.b16 %v1226
    %v1564 = vunpack.c.h.b16 %v1226
    %v1565 = vunpack.c.l.b16 %v1227
    %v1566 = vunpack.c.h.b16 %v1227
    %v1567 = vunpack.c.l.b16 %v1228
    %v1568 = vunpack.c.h.b16 %v1228
    %v1569 = vunpack.c.l.b16 %v1229
    %v1570 = vunpack.c.h.b16 %v1229
    %v1571 = vunpack.c.l.b16 %v1230
    %v1572 = vunpack.c.h.b16 %v1230
    %v1573 = vunpack.c.l.b16 %v1231
    %v1574 = vunpack.c.h.b16 %v1231
    %v1575 = vunpack.c.l.b16 %v1232
    %v1576 = vunpack.c.h.b16 %v1232
    %v1577 = vunpack.c.l.b16 %v1233
    %v1578 = vunpack.c.h.b16 %v1233
    %v1579 = vunpack.c.l.b16 %v1234
    %v1580 = vunpack.c.h.b16 %v1234
    %v1581 = vunpack.c.l.b16 %v1235
    %v1582 = vunpack.c.h.b16 %v1235
    %v1583 = vunpack.c.l.b16 %v1236
    %v1584 = vunpack.c.h.b16 %v1236
    %v1585 = vunpack.c.l.b16 %v1237
    %v1586 = vunpack.c.h.b16 %v1237
    %v1587 = vunpack.c.l.b16 %v1238
    %v1588 = vunpack.c.h.b16 %v1238
    %v1589 = vunpack.c.l.b16 %v1239
    %v1590 = vunpack.c.h.b16 %v1239
    %v1591 = vunpack.c.l.b16 %v1240
    %v1592 = vunpack.c.h.b16 %v1240
    %v1593 = vunpack.c.l.b16 %v1241
    %v1594 = vunpack.c.h.b16 %v1241
    %v1595 = vunpack.c.l.b16 %v1242
    %v1596 = vunpack.c.h.b16 %v1242
    %v1597 = vunpack.c.l.b16 %v1243
    %v1598 = vunpack.c.h.b16 %v1243
    %v1599 = vunpack.c.l.b16 %v1244
    %v1600 = vunpack.c.h.b16 %v1244
    %v1601 = vunpack.c.l.b16 %v1245
    %v1602 = vunpack.c.h.b16 %v1245
    %v1603 = vunpack.c.l.b16 %v1246
    %v1604 = vunpack.c.h.b16 %v1246
    %v1605 = vunpack.c.l.b16 %v1247
    %v1606 = vunpack.c.h.b16 %v1247
    %v1607 = vunpack.c.l.b16 %v1248
    %v1608 = vunpack.c.h.b16 %v1248
    %v1609 = vunpack.c.l.b16 %v1249
    %v1610 = vunpack.c.h.b16 %v1249
    %v1611 = vunpack.c.l.b16 %v1250
    %v1612 = vunpack.c.h.b16 %v1250
    %v1613 = vunpack.c.l.b16 %v1251
    %v1614 = vunpack.c.h.b16 %v1251
    %v1615 = vunpack.c.l.b16 %v1252
    %v1616 = vunpack.c.h.b16 %v1252
    %v1617 = vunpack.c.l.b16 %v1253
    %v1618 = vunpack.c.h.b16 %v1253
    %v1619 = vunpack.c.l.b16 %v1254
    %v1620 = vunpack.c.h.b16 %v1254
    %v1621 = vunpack.c.l.b16 %v1255
    %v1622 = vunpack.c.h.b16 %v1255
    %v1623 = vunpack.c.l.b16 %v1256
    %v1624 = vunpack.c.h.b16 %v1256
    %v1625 = vunpack.c.l.b16 %v1257
    %v1626 = vunpack.c.h.b16 %v1257
    %v1627 = vunpack.c.l.b16 %v1258
    %v1628 = vunpack.c.h.b16 %v1258
    %v1629 = vunpack.c.l.b16 %v1259
    %v1630 = vunpack.c.h.b16 %v1259
    %v1631 = vunpack.c.l.b16 %v1260
    %v1632 = vunpack.c.h.b16 %v1260
    %v1633 = vunpack.c.l.b16 %v1261
    %v1634 = vunpack.c.h.b16 %v1261
    %v1635 = vunpack.c.l.b16 %v1262
    %v1636 = vunpack.c.h.b16 %v1262
    %v1637 = vunpack.c.l.b16 %v1263
    %v1638 = vunpack.c.h.b16 %v1263
    %v1639 = vunpack.c.l.b16 %v1264
    %v1640 = vunpack.c.h.b16 %v1264
    %v1641 = vunpack.c.l.b16 %v1265
    %v1642 = vunpack.c.h.b16 %v1265
    %v1643 = vunpack.c.l.b16 %v1266
    %v1644 = vunpack.c.h.b16 %v1266
    %v1645 = vunpack.c.l.b16 %v1267
    %v1646 = vunpack.c.h.b16 %v1267
    %v1647 = vunpack.c.l.b16 %v1268
    %v1648 = vunpack.c.h.b16 %v1268
    %v1649 = vunpack.c.l.b16 %v1269
    %v1650 = vunpack.c.h.b16 %v1269
    %v1651 = vunpack.c.l.b16 %v1270
    %v1652 = vunpack.c.h.b16 %v1270
    %v1653 = vunpack.c.l.b16 %v1271
    %v1654 = vunpack.c.h.b16 %v1271
    %v1655 = vunpack.c.l.b16 %v1272
    %v1656 = vunpack.c.h.b16 %v1272
    %v1657 = vunpack.c.l.b16 %v1273
    %v1658 = vunpack.c.h.b16 %v1273
    %v1659 = vunpack.c.l.b16 %v1274
    %v1660 = vunpack.c.h.b16 %v1274
    %v1661 = vunpack.c.l.b16 %v1275
    %v1662 = vunpack.c.h.b16 %v1275
    %v1663 = vunpack.c.l.b16 %v1276
    %v1664 = vunpack.c.h.b16 %v1276
    %v1665 = vunpack.c.l.b16 %v1277
    %v1666 = vunpack.c.h.b16 %v1277
    %v1667 = vunpack.c.l.b16 %v1278
    %v1668 = vunpack.c.h.b16 %v1278
    %v1669 = vunpack.c.l.b16 %v1279
    %v1670 = vunpack.c.h.b16 %v1279
    %v1671 = vunpack.c.l.b16 %v1280
    %v1672 = vunpack.c.h.b16 %v1280
    %v1673 = vunpack.c.l.b16 %v1281
    %v1674 = vunpack.c.h.b16 %v1281
    %v1675 = vunpack.c.l.b16 %v1282
    %v1676 = vunpack.c.h.b16 %v1282
    %v1677 = vunpack.c.l.b16 %v1283
    %v1678 = vunpack.c.h.b16 %v1283
    %v1679 = vunpack.c.l.b16 %v1284
    %v1680 = vunpack.c.h.b16 %v1284
    %v1681 = vunpack.c.l.b16 %v1285
    %v1682 = vunpack.c.h.b16 %v1285
    %v1683 = vunpack.c.l.b16 %v1286
    %v1684 = vunpack.c.h.b16 %v1286
    %v1685 = vunpack.c.l.b16 %v1287
    %v1686 = vunpack.c.h.b16 %v1287
    %v1687 = vunpack.c.l.b16 %v1288
    %v1688 = vunpack.c.h.b16 %v1288
    %v1689 = vunpack.c.l.b16 %v1289
    %v1690 = vunpack.c.h.b16 %v1289
    %v1691 = vunpack.c.l.b16 %v1290
    %v1692 = vunpack.c.h.b16 %v1290
    %v1693 = vunpack.c.l.b16 %v1291
    %v1694 = vunpack.c.h.b16 %v1291
    %v1695 = vunpack.c.l.b16 %v1292
    %v1696 = vunpack.c.h.b16 %v1292
    %v1697 = vunpack.c.l.b16 %v1293
    %v1698 = vunpack.c.h.b16 %v1293
    %v1699 = vunpack.c.l.b16 %v1294
    %v1700 = vunpack.c.h.b16 %v1294
    %v1701 = vpack.c.b16 %v1449, %v1445
    %v1702 = vpack.c.b16 %v1450, %v1446
    %v1703 = vpack.c.b16 %v1451, %v1447
    %v1704 = vpack.c.b16 %v1452, %v1448
    %v1705 = vpack.c.b16 %v1457, %v1453
    %v1706 = vpack.c.b16 %v1458, %v1454
    %v1707 = vpack.c.b16 %v1459, %v1455
    %v1708 = vpack.c.b16 %v1460, %v1456
    %v1709 = vpack.c.b16 %v1465, %v1461
    %v1710 = vpack.c.b16 %v1466, %v1462
    %v1711 = vpack.c.b16 %v1467, %v1463
    %v1712 = vpack.c.b16 %v1468, %v1464
    %v1713 = vpack.c.b16 %v1473, %v1469
    %v1714 = vpack.c.b16 %v1474, %v1470
    %v1715 = vpack.c.b16 %v1475, %v1471
    %v1716 = vpack.c.b16 %v1476, %v1472
    %v1717 = vpack.c.b16 %v1481, %v1477
    %v1718 = vpack.c.b16 %v1482, %v1478
    %v1719 = vpack.c.b16 %v1483, %v1479
    %v1720 = vpack.c.b16 %v1484, %v1480
    %v1721 = vpack.c.b16 %v1489, %v1485
    %v1722 = vpack.c.b16 %v1490, %v1486
    %v1723 = vpack.c.b16 %v1491, %v1487
    %v1724 = vpack.c.b16 %v1492, %v1488
    %v1725 = vpack.c.b16 %v1497, %v1493
    %v1726 = vpack.c.b16 %v1498, %v1494
    %v1727 = vpack.c.b16 %v1499, %v1495
    %v1728 = vpack.c.b16 %v1500, %v1496
    %v1729 = vpack.c.b16 %v1505, %v1501
    %v1730 = vpack.c.b16 %v1506, %v1502
    %v1731 = vpack.c.b16 %v1507, %v1503
    %v1732 = vpack.c.b16 %v1508, %v1504
    %v1733 = vpack.c.b16 %v1513, %v1509
    %v1734 = vpack.c.b16 %v1514, %v1510
    %v1735 = vpack.c.b16 %v1515, %v1511
    %v1736 = vpack.c.b16 %v1516, %v1512
    %v1737 = vpack.c.b16 %v1521, %v1517
    %v1738 = vpack.c.b16 %v1522, %v1518
    %v1739 = vpack.c.b16 %v1523, %v1519
    %v1740 = vpack.c.b16 %v1524, %v1520
    %v1741 = vpack.c.b16 %v1529, %v1525
    %v1742 = vpack.c.b16 %v1530, %v1526
    %v1743 = vpack.c.b16 %v1531, %v1527
    %v1744 = vpack.c.b16 %v1532, %v1528
    %v1745 = vpack.c.b16 %v1537, %v1533
    %v1746 = vpack.c.b16 %v1538, %v1534
    %v1747 = vpack.c.b16 %v1539, %v1535
    %v1748 = vpack.c.b16 %v1540, %v1536
    %v1749 = vpack.c.b16 %v1545, %v1541
    %v1750 = vpack.c.b16 %v1546, %v1542
    %v1751 = vpack.c.b16 %v1547, %v1543
    %v1752 = vpack.c.b16 %v1548, %v1544
    %v1753 = vpack.c.b16 %v1553, %v1549
    %v1754 = vpack.c.b16 %v1554, %v1550
    %v1755 = vpack.c.b16 %v1555, %v1551
    %v1756 = vpack.c.b16 %v1556, %v1552
    %v1757 = vpack.c.b16 %v1561, %v1557
    %v1758 = vpack.c.b16 %v1562, %v1558
    %v1759 = vpack.c.b16 %v1563, %v1559
    %v1760 = vpack.c.b16 %v1564, %v1560
    %v1761 = vpack.c.b16 %v1569, %v1565
    %v1762 = vpack.c.b16 %v1570, %v1566
    %v1763 = vpack.c.b16 %v1571, %v1567
    %v1764 = vpack.c.b16 %v1572, %v1568
    %v1765 = vpack.c.b16 %v1577, %v1573
    %v1766 = vpack.c.b16 %v1578, %v1574
    %v1767 = vpack.c.b16 %v1579, %v1575
    %v1768 = vpack.c.b16 %v1580, %v1576
    %v1769 = vpack.c.b16 %v1585, %v1581
    %v1770 = vpack.c.b16 %v1586, %v1582
    %v1771 = vpack.c.b16 %v1587, %v1583
    %v1772 = vpack.c.b16 %v1588, %v1584
    %v1773 = vpack.c.b16 %v1593, %v1589
    %v1774 = vpack.c.b16 %v1594, %v1590
    %v1775 = vpack.c.b16 %v1595, %v1591
    %v1776 = vpack.c.b16 %v1596, %v1592
    %v1777 = vpack.c.b16 %v1601, %v1597
    %v1778 = vpack.c.b16 %v1602, %v1598
    %v1779 = vpack.c.b16 %v1603, %v1599
    %v1780 = vpack.c.b16 %v1604, %v1600
    %v1781 = vpack.c.b16 %v1609, %v1605
    %v1782 = vpack.c.b16 %v1610, %v1606
    %v1783 = vpack.c.b16 %v1611, %v1607
    %v1784 = vpack.c.b16 %v1612, %v1608
    %v1785 = vpack.c.b16 %v1617, %v1613
    %v1786 = vpack.c.b16 %v1618, %v1614
    %v1787 = vpack.c.b16 %v1619, %v1615
    %v1788 = vpack.c.b16 %v1620, %v1616
    %v1789 = vpack.c.b16 %v1625, %v1621
    %v1790 = vpack.c.b16 %v1626, %v1622
    %v1791 = vpack.c.b16 %v1627, %v1623
    %v1792 = vpack.c.b16 %v1628, %v1624
    %v1793 = vpack.c.b16 %v1633, %v1629
    %v1794 = vpack.c.b16 %v1634, %v1630
    %v1795 = vpack.c.b16 %v1635, %v1631
    %v1796 = vpack.c.b16 %v1636, %v1632
    %v1797 = vpack.c.b16 %v1641, %v1637
    %v1798 = vpack.c.b16 %v1642, %v1638
    %v1799 = vpack.c.b16 %v1643, %v1639
    %v1800 = vpack.c.b16 %v1644, %v1640
    %v1801 = vpack.c.b16 %v1649, %v1645
    %v1802 = vpack.c.b16 %v1650, %v1646
    %v1803 = vpack.c.b16 %v1651, %v1647
    %v1804 = vpack.c.b16 %v1652, %v1648
    %v1805 = vpack.c.b16 %v1657, %v1653
    %v1806 = vpack.c.b16 %v1658, %v1654
    %v1807 = vpack.c.b16 %v1659, %v1655
    %v1808 = vpack.c.b16 %v1660, %v1656
    %v1809 = vpack.c.b16 %v1665, %v1661
    %v1810 = vpack.c.b16 %v1666, %v1662
    %v1811 = vpack.c.b16 %v1667, %v1663
    %v1812 = vpack.c.b16 %v1668, %v1664
    %v1813 = vpack.c.b16 %v1673, %v1669
    %v1814 = vpack.c.b16 %v1674, %v1670
    %v1815 = vpack.c.b16 %v1675, %v1671
    %v1816 = vpack.c.b16 %v1676, %v1672
    %v1817 = vpack.c.b16 %v1681, %v1677
    %v1818 = vpack.c.b16 %v1682, %v1678
    %v1819 = vpack.c.b16 %v1683, %v1679
    %v1820 = vpack.c.b16 %v1684, %v1680
    %v1821 = vpack.c.b16 %v1689, %v1685
    %v1822 = vpack.c.b16 %v1690, %v1686
    %v1823 = vpack.c.b16 %v1691, %v1687
    %v1824 = vpack.c.b16 %v1692, %v1688
    %v1825 = vpack.c.b16 %v1697, %v1693
    %v1826 = vpack.c.b16 %v1698, %v1694
    %v1827 = vpack.c.b16 %v1699, %v1695
    %v1828 = vpack.c.b16 %v1700, %v1696
    %1957 = vmatprep.subr.bf16.mxu0 %v1702
    %1958 = vmatpush1.bf16.msra.mxu0 %v1701
    %1959 = vmatprep.subr.bf16.mxu0 %v1706
    %1960 = vmatpush1.bf16.msra.mxu0 %v1705
    %1961 = vmatprep.subr.bf16.mxu0 %v1710
    %1962 = vmatpush1.bf16.msra.mxu0 %v1709
    %1963 = vmatprep.subr.bf16.mxu0 %v1714
    %1964 = vmatpush1.bf16.msra.mxu0 %v1713
    %1965 = vmatprep.subr.bf16.mxu0 %v1718
    %1966 = vmatpush1.bf16.msra.mxu0 %v1717
    %1967 = vmatprep.subr.bf16.mxu0 %v1722
    %1968 = vmatpush1.bf16.msra.mxu0 %v1721
    %1969 = vmatprep.subr.bf16.mxu0 %v1726
    %1970 = vmatpush1.bf16.msra.mxu0 %v1725
    %1971 = vmatprep.subr.bf16.mxu0 %v1730
    %1972 = vmatpush1.bf16.msra.mxu0 %v1729
    %1973 = vmatprep.subr.bf16.mxu0 %v1734
    %1974 = vmatpush1.bf16.msra.mxu0 %v1733
    %1975 = vmatprep.subr.bf16.mxu0 %v1738
    %1976 = vmatpush1.bf16.msra.mxu0 %v1737
    %1977 = vmatprep.subr.bf16.mxu0 %v1742
    %1978 = vmatpush1.bf16.msra.mxu0 %v1741
    %1979 = vmatprep.subr.bf16.mxu0 %v1746
    %1980 = vmatpush1.bf16.msra.mxu0 %v1745
    %1981 = vmatprep.subr.bf16.mxu0 %v1750
    %1982 = vmatpush1.bf16.msra.mxu0 %v1749
    %1983 = vmatprep.subr.bf16.mxu0 %v1754
    %1984 = vmatpush1.bf16.msra.mxu0 %v1753
    %1985 = vmatprep.subr.bf16.mxu0 %v1758
    %1986 = vmatpush1.bf16.msra.mxu0 %v1757
    %1987 = vmatprep.subr.bf16.mxu0 %v1762
    %1988 = vmatpush1.bf16.msra.mxu0 %v1761
    %1989 = vmatprep.mubr.bf16.mxu0 %v1152
    %1990 = vmatmul.mubr.bf16.gmra.mrb[0].mxu0 %v1151
    %v1991 = vpop.f32.mrb[0].mxu0
    %v1992 = vadd.f32 %v1300, %v1991
    %v1993 = vpop.f32.mrb[0].mxu0
    %v1994 = vadd.f32 %v1304, %v1993
    %v1995 = vpop.f32.mrb[0].mxu0
    %v1996 = vadd.f32 %v1300, %v1995
    %v1997 = vpop.f32.mrb[0].mxu0
    %v1998 = vadd.f32 %v1304, %v1997
    %1999 = vmatprep.mubr.bf16.mxu0 %v1156
    %2000 = vmatmul.mubr.bf16.gmra.mrb[0].mxu0 %v1155
    %v2001 = vpop.f32.mrb[0].mxu0
    %v2002 = vadd.f32 %v1300, %v2001
    %v2003 = vpop.f32.mrb[0].mxu0
    %v2004 = vadd.f32 %v1304, %v2003
    %v2005 = vpop.f32.mrb[0].mxu0
    %v2006 = vadd.f32 %v1300, %v2005
    %v2007 = vpop.f32.mrb[0].mxu0
    %v2008 = vadd.f32 %v1304, %v2007
    %2009 = vmatprep.mubr.bf16.mxu0 %v1160
    %2010 = vmatmul.mubr.bf16.gmra.mrb[0].mxu0 %v1159
    %v2011 = vpop.f32.mrb[0].mxu0
    %v2012 = vadd.f32 %v1300, %v2011
    %v2013 = vpop.f32.mrb[0].mxu0
    %v2014 = vadd.f32 %v1304, %v2013
    %v2015 = vpop.f32.mrb[0].mxu0
    %v2016 = vadd.f32 %v1300, %v2015
    %v2017 = vpop.f32.mrb[0].mxu0
    %v2018 = vadd.f32 %v1304, %v2017
    %2019 = vmatprep.mubr.bf16.mxu0 %v1164
    %2020 = vmatmul.mubr.bf16.gmra.mrb[0].mxu0 %v1163
    %v2021 = vpop.f32.mrb[0].mxu0
    %v2022 = vadd.f32 %v1300, %v2021
    %v2023 = vpop.f32.mrb[0].mxu0
    %v2024 = vadd.f32 %v1304, %v2023
    %v2025 = vpop.f32.mrb[0].mxu0
    %v2026 = vadd.f32 %v1300, %v2025
    %v2027 = vpop.f32.mrb[0].mxu0
    %v2028 = vadd.f32 %v1304, %v2027
    %2029 = vdwg.mxu0
    %2030 = vmatprep.subr.bf16.mxu0 %v1766
    %2031 = vmatpush1.bf16.msra.mxu0 %v1765
    %2032 = vmatprep.subr.bf16.mxu0 %v1770
    %2033 = vmatpush1.bf16.msra.mxu0 %v1769
    %2034 = vmatprep.subr.bf16.mxu0 %v1774
    %2035 = vmatpush1.bf16.msra.mxu0 %v1773
    %2036 = vmatprep.subr.bf16.mxu0 %v1778
    %2037 = vmatpush1.bf16.msra.mxu0 %v1777
    %2038 = vmatprep.subr.bf16.mxu0 %v1782
    %2039 = vmatpush1.bf16.msra.mxu0 %v1781
    %2040 = vmatprep.subr.bf16.mxu0 %v1786
    %2041 = vmatpush1.bf16.msra.mxu0 %v1785
    %2042 = vmatprep.subr.bf16.mxu0 %v1790
    %2043 = vmatpush1.bf16.msra.mxu0 %v1789
    %2044 = vmatprep.subr.bf16.mxu0 %v1794
    %2045 = vmatpush1.bf16.msra.mxu0 %v1793
    %2046 = vmatprep.subr.bf16.mxu0 %v1798
    %2047 = vmatpush1.bf16.msra.mxu0 %v1797
    %2048 = vmatprep.subr.bf16.mxu0 %v1802
    %2049 = vmatpush1.bf16.msra.mxu0 %v1801
    %2050 = vmatprep.subr.bf16.mxu0 %v1806
    %2051 = vmatpush1.bf16.msra.mxu0 %v1805
    %2052 = vmatprep.subr.bf16.mxu0 %v1810
    %2053 = vmatpush1.bf16.msra.mxu0 %v1809
    %2054 = vmatprep.subr.bf16.mxu0 %v1814
    %2055 = vmatpush1.bf16.msra.mxu0 %v1813
    %2056 = vmatprep.subr.bf16.mxu0 %v1818
    %2057 = vmatpush1.bf16.msra.mxu0 %v1817
    %2058 = vmatprep.subr.bf16.mxu0 %v1822
    %2059 = vmatpush1.bf16.msra.mxu0 %v1821
    %2060 = vmatprep.subr.bf16.mxu0 %v1826
    %2061 = vmatpush1.bf16.msra.mxu0 %v1825
    %2062 = vmatprep.mubr.bf16.mxu0 %v1154
    %2063 = vmatmul.mubr.bf16.gmra.mrb[0].mxu0 %v1153
    %v2064 = vpop.f32.mrb[0].mxu0
    %v2065 = vadd.f32 %v1992, %v2064
    %v2066 = vpop.f32.mrb[0].mxu0
    %v2067 = vadd.f32 %v1994, %v2066
    %v2068 = vpop.f32.mrb[0].mxu0
    %v2069 = vadd.f32 %v1996, %v2068
    %v2070 = vpop.f32.mrb[0].mxu0
    %v2071 = vadd.f32 %v1998, %v2070
    %2072 = vmatprep.mubr.bf16.mxu0 %v1158
    %2073 = vmatmul.mubr.bf16.gmra.mrb[0].mxu0 %v1157
    %v2074 = vpop.f32.mrb[0].mxu0
    %v2075 = vadd.f32 %v2002, %v2074
    %v2076 = vpop.f32.mrb[0].mxu0
    %v2077 = vadd.f32 %v2004, %v2076
    %v2078 = vpop.f32.mrb[0].mxu0
    %v2079 = vadd.f32 %v2006, %v2078
    %v2080 = vpop.f32.mrb[0].mxu0
    %v2081 = vadd.f32 %v2008, %v2080
    %2082 = vmatprep.mubr.bf16.mxu0 %v1162
    %2083 = vmatmul.mubr.bf16.gmra.mrb[0].mxu0 %v1161
    %v2084 = vpop.f32.mrb[0].mxu0
    %v2085 = vadd.f32 %v2012, %v2084
    %v2086 = vpop.f32.mrb[0].mxu0
    %v2087 = vadd.f32 %v2014, %v2086
    %v2088 = vpop.f32.mrb[0].mxu0
    %v2089 = vadd.f32 %v2016, %v2088
    %v2090 = vpop.f32.mrb[0].mxu0
    %v2091 = vadd.f32 %v2018, %v2090
    %2092 = vmatprep.mubr.bf16.mxu0 %v1166
    %2093 = vmatmul.mubr.bf16.gmra.mrb[0].mxu0 %v1165
    %v2094 = vpop.f32.mrb[0].mxu0
    %v2095 = vadd.f32 %v2022, %v2094
    %v2096 = vpop.f32.mrb[0].mxu0
    %v2097 = vadd.f32 %v2024, %v2096
    %v2098 = vpop.f32.mrb[0].mxu0
    %v2099 = vadd.f32 %v2026, %v2098
    %v2100 = vpop.f32.mrb[0].mxu0
    %v2101 = vadd.f32 %v2028, %v2100
    %2102 = vdwg.mxu0
    %2103 = vmatprep.subr.bf16.mxu0 %v1704
    %2104 = vmatpush1.bf16.msra.mxu0 %v1703
    %2105 = vmatprep.subr.bf16.mxu0 %v1708
    %2106 = vmatpush1.bf16.msra.mxu0 %v1707
    %2107 = vmatprep.subr.bf16.mxu0 %v1712
    %2108 = vmatpush1.bf16.msra.mxu0 %v1711
    %2109 = vmatprep.subr.bf16.mxu0 %v1716
    %2110 = vmatpush1.bf16.msra.mxu0 %v1715
    %2111 = vmatprep.subr.bf16.mxu0 %v1720
    %2112 = vmatpush1.bf16.msra.mxu0 %v1719
    %2113 = vmatprep.subr.bf16.mxu0 %v1724
    %2114 = vmatpush1.bf16.msra.mxu0 %v1723
    %2115 = vmatprep.subr.bf16.mxu0 %v1728
    %2116 = vmatpush1.bf16.msra.mxu0 %v1727
    %2117 = vmatprep.subr.bf16.mxu0 %v1732
    %2118 = vmatpush1.bf16.msra.mxu0 %v1731
    %2119 = vmatprep.subr.bf16.mxu0 %v1736
    %2120 = vmatpush1.bf16.msra.mxu0 %v1735
    %2121 = vmatprep.subr.bf16.mxu0 %v1740
    %2122 = vmatpush1.bf16.msra.mxu0 %v1739
    %2123 = vmatprep.subr.bf16.mxu0 %v1744
    %2124 = vmatpush1.bf16.msra.mxu0 %v1743
    %2125 = vmatprep.subr.bf16.mxu0 %v1748
    %2126 = vmatpush1.bf16.msra.mxu0 %v1747
    %2127 = vmatprep.subr.bf16.mxu0 %v1752
    %2128 = vmatpush1.bf16.msra.mxu0 %v1751
    %2129 = vmatprep.subr.bf16.mxu0 %v1756
    %2130 = vmatpush1.bf16.msra.mxu0 %v1755
    %2131 = vmatprep.subr.bf16.mxu0 %v1760
    %2132 = vmatpush1.bf16.msra.mxu0 %v1759
    %2133 = vmatprep.subr.bf16.mxu0 %v1764
    %2134 = vmatpush1.bf16.msra.mxu0 %v1763
    %2135 = vmatprep.mubr.bf16.mxu0 %v1152
    %2136 = vmatmul.mubr.bf16.gmra.mrb[0].mxu0 %v1151
    %v2137 = vpop.f32.mrb[0].mxu0
    %v2138 = vadd.f32 %v1308, %v2137
    %v2139 = vpop.f32.mrb[0].mxu0
    %v2140 = vadd.f32 %v1312, %v2139
    %v2141 = vpop.f32.mrb[0].mxu0
    %v2142 = vadd.f32 %v1308, %v2141
    %v2143 = vpop.f32.mrb[0].mxu0
    %v2144 = vadd.f32 %v1312, %v2143
    %2145 = vmatprep.mubr.bf16.mxu0 %v1156
    %2146 = vmatmul.mubr.bf16.gmra.mrb[0].mxu0 %v1155
    %v2147 = vpop.f32.mrb[0].mxu0
    %v2148 = vadd.f32 %v1308, %v2147
    %v2149 = vpop.f32.mrb[0].mxu0
    %v2150 = vadd.f32 %v1312, %v2149
    %v2151 = vpop.f32.mrb[0].mxu0
    %v2152 = vadd.f32 %v1308, %v2151
    %v2153 = vpop.f32.mrb[0].mxu0
    %v2154 = vadd.f32 %v1312, %v2153
    %2155 = vmatprep.mubr.bf16.mxu0 %v1160
    %2156 = vmatmul.mubr.bf16.gmra.mrb[0].mxu0 %v1159
    %v2157 = vpop.f32.mrb[0].mxu0
    %v2158 = vadd.f32 %v1308, %v2157
    %v2159 = vpop.f32.mrb[0].mxu0
    %v2160 = vadd.f32 %v1312, %v2159
    %v2161 = vpop.f32.mrb[0].mxu0
    %v2162 = vadd.f32 %v1308, %v2161
    %v2163 = vpop.f32.mrb[0].mxu0
    %v2164 = vadd.f32 %v1312, %v2163
    %2165 = vmatprep.mubr.bf16.mxu0 %v1164
    %2166 = vmatmul.mubr.bf16.gmra.mrb[0].mxu0 %v1163
    %v2167 = vpop.f32.mrb[0].mxu0
    %v2168 = vadd.f32 %v1308, %v2167
    %v2169 = vpop.f32.mrb[0].mxu0
    %v2170 = vadd.f32 %v1312, %v2169
    %v2171 = vpop.f32.mrb[0].mxu0
    %v2172 = vadd.f32 %v1308, %v2171
    %v2173 = vpop.f32.mrb[0].mxu0
    %v2174 = vadd.f32 %v1312, %v2173
    %2175 = vdwg.mxu0
    %2176 = vmatprep.subr.bf16.mxu0 %v1768
    %2177 = vmatpush1.bf16.msra.mxu0 %v1767
    %2178 = vmatprep.subr.bf16.mxu0 %v1772
    %2179 = vmatpush1.bf16.msra.mxu0 %v1771
    %2180 = vmatprep.subr.bf16.mxu0 %v1776
    %2181 = vmatpush1.bf16.msra.mxu0 %v1775
    %2182 = vmatprep.subr.bf16.mxu0 %v1780
    %2183 = vmatpush1.bf16.msra.mxu0 %v1779
    %2184 = vmatprep.subr.bf16.mxu0 %v1784
    %2185 = vmatpush1.bf16.msra.mxu0 %v1783
    %2186 = vmatprep.subr.bf16.mxu0 %v1788
    %2187 = vmatpush1.bf16.msra.mxu0 %v1787
    %2188 = vmatprep.subr.bf16.mxu0 %v1792
    %2189 = vmatpush1.bf16.msra.mxu0 %v1791
    %2190 = vmatprep.subr.bf16.mxu0 %v1796
    %2191 = vmatpush1.bf16.msra.mxu0 %v1795
    %2192 = vmatprep.subr.bf16.mxu0 %v1800
    %2193 = vmatpush1.bf16.msra.mxu0 %v1799
    %2194 = vmatprep.subr.bf16.mxu0 %v1804
    %2195 = vmatpush1.bf16.msra.mxu0 %v1803
    %2196 = vmatprep.subr.bf16.mxu0 %v1808
    %2197 = vmatpush1.bf16.msra.mxu0 %v1807
    %2198 = vmatprep.subr.bf16.mxu0 %v1812
    %2199 = vmatpush1.bf16.msra.mxu0 %v1811
    %2200 = vmatprep.subr.bf16.mxu0 %v1816
    %2201 = vmatpush1.bf16.msra.mxu0 %v1815
    %2202 = vmatprep.subr.bf16.mxu0 %v1820
    %2203 = vmatpush1.bf16.msra.mxu0 %v1819
    %2204 = vmatprep.subr.bf16.mxu0 %v1824
    %2205 = vmatpush1.bf16.msra.mxu0 %v1823
    %2206 = vmatprep.subr.bf16.mxu0 %v1828
    %2207 = vmatpush1.bf16.msra.mxu0 %v1827
    %2208 = vmatprep.mubr.bf16.mxu0 %v1154
    %2209 = vmatmul.mubr.bf16.gmra.mrb[0].mxu0 %v1153
    %v2210 = vpop.f32.mrb[0].mxu0
    %v2211 = vadd.f32 %v2138, %v2210
    %v2212 = vpop.f32.mrb[0].mxu0
    %v2213 = vadd.f32 %v2140, %v2212
    %v2214 = vpop.f32.mrb[0].mxu0
    %v2215 = vadd.f32 %v2142, %v2214
    %v2216 = vpop.f32.mrb[0].mxu0
    %v2217 = vadd.f32 %v2144, %v2216
    %2218 = vmatprep.mubr.bf16.mxu0 %v1158
    %2219 = vmatmul.mubr.bf16.gmra.mrb[0].mxu0 %v1157
    %v2220 = vpop.f32.mrb[0].mxu0
    %v2221 = vadd.f32 %v2148, %v2220
    %v2222 = vpop.f32.mrb[0].mxu0
    %v2223 = vadd.f32 %v2150, %v2222
    %v2224 = vpop.f32.mrb[0].mxu0
    %v2225 = vadd.f32 %v2152, %v2224
    %v2226 = vpop.f32.mrb[0].mxu0
    %v2227 = vadd.f32 %v2154, %v2226
    %2228 = vmatprep.mubr.bf16.mxu0 %v1162
    %2229 = vmatmul.mubr.bf16.gmra.mrb[0].mxu0 %v1161
    %v2230 = vpop.f32.mrb[0].mxu0
    %v2231 = vadd.f32 %v2158, %v2230
    %v2232 = vpop.f32.mrb[0].mxu0
    %v2233 = vadd.f32 %v2160, %v2232
    %v2234 = vpop.f32.mrb[0].mxu0
    %v2235 = vadd.f32 %v2162, %v2234
    %v2236 = vpop.f32.mrb[0].mxu0
    %v2237 = vadd.f32 %v2164, %v2236
    %2238 = vmatprep.mubr.bf16.mxu0 %v1166
    %2239 = vmatmul.mubr.bf16.gmra.mrb[0].mxu0 %v1165
    %v2240 = vpop.f32.mrb[0].mxu0
    %v2241 = vadd.f32 %v2168, %v2240
    %v2242 = vpop.f32.mrb[0].mxu0
    %v2243 = vadd.f32 %v2170, %v2242
    %v2244 = vpop.f32.mrb[0].mxu0
    %v2245 = vadd.f32 %v2172, %v2244
    %v2246 = vpop.f32.mrb[0].mxu0
    %v2247 = vadd.f32 %v2174, %v2246
    %2248 = vdwg.mxu0
    %v2249 = vmul.f32 %v2085, %v2085
    %v2250 = vmul.f32 %v2087, %v2087
    %v2251 = vmul.f32 %v2231, %v2231
    %v2252 = vmul.f32 %v2233, %v2233
    %v2253 = vmul.f32 %v2089, %v2089
    %v2254 = vmul.f32 %v2091, %v2091
    %v2255 = vmul.f32 %v2235, %v2235
    %v2256 = vmul.f32 %v2237, %v2237
    %v2257 = vmul.f32 %v2095, %v2095
    %v2258 = vmul.f32 %v2097, %v2097
    %v2259 = vmul.f32 %v2241, %v2241
    %v2260 = vmul.f32 %v2243, %v2243
    %v2261 = vmul.f32 %v2099, %v2099
    %v2262 = vmul.f32 %v2101, %v2101
    %v2263 = vmul.f32 %v2245, %v2245
    %v2264 = vmul.f32 %v2247, %v2247
    %v2265 = vadd.f32 %v2249, %v2250
    %v2266 = vadd.f32 %v2265, %v2251
    %v2267 = vadd.f32 %v2266, %v2252
    %2268 = vadd.xlane.f32.xlu0 %v2267
    %v2269 = vpop.xlane.xlu0 %2268
    %v2270 = vadd.f32 %v2253, %v2254
    %v2271 = vadd.f32 %v2270, %v2255
    %v2272 = vadd.f32 %v2271, %v2256
    %2273 = vadd.xlane.f32.xlu0 %v2272
    %v2274 = vpop.xlane.xlu0 %2273
    %v2275 = vadd.f32 %v2257, %v2258
    %v2276 = vadd.f32 %v2275, %v2259
    %v2277 = vadd.f32 %v2276, %v2260
    %2278 = vadd.xlane.f32.xlu0 %v2277
    %v2279 = vpop.xlane.xlu0 %2278
    %v2280 = vadd.f32 %v2261, %v2262
    %v2281 = vadd.f32 %v2280, %v2263
    %v2282 = vadd.f32 %v2281, %v2264
    %2283 = vadd.xlane.f32.xlu0 %v2282
    %v2284 = vpop.xlane.xlu0 %2283
    %v2285 = vrsqrt.pop %v2269
    %v2286 = vmul.f32 %v2269, %v2285
    %vm2287 = vcmp.eq.f32.partialorder %v2269, inf
    %v2288 = vsel %vm2287, %v2269, %v2286
    %vm2289 = vcmp.eq.f32.partialorder %v2269, 0.0
    %v2290 = vand.u32 %v2269, 2147483648
    %v2291 = vsel %vm2289, %v2290, %v2288
    %v2292 = vrsqrt.pop %v2274
    %v2293 = vmul.f32 %v2274, %v2292
    %vm2294 = vcmp.eq.f32.partialorder %v2274, inf
    %v2295 = vsel %vm2294, %v2274, %v2293
    %vm2296 = vcmp.eq.f32.partialorder %v2274, 0.0
    %v2297 = vand.u32 %v2274, 2147483648
    %v2298 = vsel %vm2296, %v2297, %v2295
    %v2299 = vrsqrt.pop %v2279
    %v2300 = vmul.f32 %v2279, %v2299
    %vm2301 = vcmp.eq.f32.partialorder %v2279, inf
    %v2302 = vsel %vm2301, %v2279, %v2300
    %vm2303 = vcmp.eq.f32.partialorder %v2279, 0.0
    %v2304 = vand.u32 %v2279, 2147483648
    %v2305 = vsel %vm2303, %v2304, %v2302
    %v2306 = vrsqrt.pop %v2284
    %v2307 = vmul.f32 %v2284, %v2306
    %vm2308 = vcmp.eq.f32.partialorder %v2284, inf
    %v2309 = vsel %vm2308, %v2284, %v2307
    %vm2310 = vcmp.eq.f32.partialorder %v2284, 0.0
    %v2311 = vand.u32 %v2284, 2147483648
    %v2312 = vsel %vm2310, %v2311, %v2309
    %v2313 = vmax.f32 %v2291, 1e-12
    %v2314 = vmax.f32 %v2298, 1e-12
    %v2315 = vmax.f32 %v2305, 1e-12
    %v2316 = vmax.f32 %v2312, 1e-12
    %v2317 = vrcp.pop %v2313
    %v2318 = vmul.f32 %v2085, %v2317
    %v2319 = vmul.f32 %v2087, %v2317
    %v2320 = vmul.f32 %v2231, %v2317
    %v2321 = vmul.f32 %v2233, %v2317
    %v2322 = vrcp.pop %v2314
    %v2323 = vmul.f32 %v2089, %v2322
    %v2324 = vmul.f32 %v2091, %v2322
    %v2325 = vmul.f32 %v2235, %v2322
    %v2326 = vmul.f32 %v2237, %v2322
    %v2327 = vrcp.pop %v2315
    %v2328 = vmul.f32 %v2095, %v2327
    %v2329 = vmul.f32 %v2097, %v2327
    %v2330 = vmul.f32 %v2241, %v2327
    %v2331 = vmul.f32 %v2243, %v2327
    %v2332 = vrcp.pop %v2316
    %v2333 = vmul.f32 %v2099, %v2332
    %v2334 = vmul.f32 %v2101, %v2332
    %v2335 = vmul.f32 %v2245, %v2332
    %v2336 = vmul.f32 %v2247, %v2332
    %v2337 = vmul.f32 %v37, %v37
    %v2338 = vmul.f32 %v38, %v38
    %v2339 = vmul.f32 %v39, %v39
    %v2340 = vmul.f32 %v40, %v40
    %v2341 = vmul.f32 %v41, %v41
    %v2342 = vmul.f32 %v42, %v42
    %v2343 = vmul.f32 %v43, %v43
    %v2344 = vmul.f32 %v44, %v44
    %v2345 = vmul.f32 %v45, %v45
    %v2346 = vmul.f32 %v46, %v46
    %v2347 = vmul.f32 %v47, %v47
    %v2348 = vmul.f32 %v48, %v48
    %v2349 = vmul.f32 %v49, %v49
    %v2350 = vmul.f32 %v50, %v50
    %v2351 = vmul.f32 %v51, %v51
    %v2352 = vmul.f32 %v52, %v52
    %v2353 = vadd.f32 %v2337, %v2338
    %v2354 = vadd.f32 %v2353, %v2339
    %v2355 = vadd.f32 %v2354, %v2340
    %2356 = vadd.xlane.f32.xlu0 %v2355
    %v2357 = vpop.xlane.xlu0 %2356
    %v2358 = vadd.f32 %v2341, %v2342
    %v2359 = vadd.f32 %v2358, %v2343
    %v2360 = vadd.f32 %v2359, %v2344
    %2361 = vadd.xlane.f32.xlu0 %v2360
    %v2362 = vpop.xlane.xlu0 %2361
    %v2363 = vadd.f32 %v2345, %v2346
    %v2364 = vadd.f32 %v2363, %v2347
    %v2365 = vadd.f32 %v2364, %v2348
    %2366 = vadd.xlane.f32.xlu0 %v2365
    %v2367 = vpop.xlane.xlu0 %2366
    %v2368 = vadd.f32 %v2349, %v2350
    %v2369 = vadd.f32 %v2368, %v2351
    %v2370 = vadd.f32 %v2369, %v2352
    %2371 = vadd.xlane.f32.xlu0 %v2370
    %v2372 = vpop.xlane.xlu0 %2371
    %v2373 = vrsqrt.pop %v2357
    %v2374 = vmul.f32 %v2357, %v2373
    %vm2375 = vcmp.eq.f32.partialorder %v2357, inf
    %v2376 = vsel %vm2375, %v2357, %v2374
    %vm2377 = vcmp.eq.f32.partialorder %v2357, 0.0
    %v2378 = vand.u32 %v2357, 2147483648
    %v2379 = vsel %vm2377, %v2378, %v2376
    %v2380 = vrsqrt.pop %v2362
    %v2381 = vmul.f32 %v2362, %v2380
    %vm2382 = vcmp.eq.f32.partialorder %v2362, inf
    %v2383 = vsel %vm2382, %v2362, %v2381
    %vm2384 = vcmp.eq.f32.partialorder %v2362, 0.0
    %v2385 = vand.u32 %v2362, 2147483648
    %v2386 = vsel %vm2384, %v2385, %v2383
    %v2387 = vrsqrt.pop %v2367
    %v2388 = vmul.f32 %v2367, %v2387
    %vm2389 = vcmp.eq.f32.partialorder %v2367, inf
    %v2390 = vsel %vm2389, %v2367, %v2388
    %vm2391 = vcmp.eq.f32.partialorder %v2367, 0.0
    %v2392 = vand.u32 %v2367, 2147483648
    %v2393 = vsel %vm2391, %v2392, %v2390
    %v2394 = vrsqrt.pop %v2372
    %v2395 = vmul.f32 %v2372, %v2394
    %vm2396 = vcmp.eq.f32.partialorder %v2372, inf
    %v2397 = vsel %vm2396, %v2372, %v2395
    %vm2398 = vcmp.eq.f32.partialorder %v2372, 0.0
    %v2399 = vand.u32 %v2372, 2147483648
    %v2400 = vsel %vm2398, %v2399, %v2397
    %v2401 = vmax.f32 %v2379, 1e-12
    %v2402 = vmax.f32 %v2386, 1e-12
    %v2403 = vmax.f32 %v2393, 1e-12
    %v2404 = vmax.f32 %v2400, 1e-12
    %v2405 = vrcp.pop %v2401
    %v2406 = vmul.f32 %v37, %v2405
    %v2407 = vmul.f32 %v38, %v2405
    %v2408 = vmul.f32 %v39, %v2405
    %v2409 = vmul.f32 %v40, %v2405
    %v2410 = vrcp.pop %v2402
    %v2411 = vmul.f32 %v41, %v2410
    %v2412 = vmul.f32 %v42, %v2410
    %v2413 = vmul.f32 %v43, %v2410
    %v2414 = vmul.f32 %v44, %v2410
    %v2415 = vrcp.pop %v2403
    %v2416 = vmul.f32 %v45, %v2415
    %v2417 = vmul.f32 %v46, %v2415
    %v2418 = vmul.f32 %v47, %v2415
    %v2419 = vmul.f32 %v48, %v2415
    %v2420 = vrcp.pop %v2404
    %v2421 = vmul.f32 %v49, %v2420
    %v2422 = vmul.f32 %v50, %v2420
    %v2423 = vmul.f32 %v51, %v2420
    %v2424 = vmul.f32 %v52, %v2420
    %2425 = vmatprep.subr.mxu0 %v2407
    %2426 = vmatpush1.xpose.msra.mxu0 %v2406
    %2427 = vmatprep.subr.mxu0 %v2412
    %2428 = vmatpush1.xpose.msra.mxu0 %v2411
    %2429 = vmatprep.subr.mxu0 %v2417
    %2430 = vmatpush1.xpose.msra.mxu0 %v2416
    %2431 = vmatprep.subr.mxu0 %v2422
    %2432 = vmatpush1.xpose.msra.mxu0 %v2421
    %2433 = vmatprep.subr.mxu0 0.0
    %2434 = vmatpush1.xpose.msra.mxu0 0.0
    %2435 = vmatprep.subr.mxu0 0.0
    %2436 = vmatpush1.xpose.msra.mxu0 0.0
    %2437 = vmatprep.subr.mxu0 0.0
    %2438 = vmatpush1.xpose.msra.mxu0 0.0
    %2439 = vmatprep.subr.mxu0 0.0
    %2440 = vmatpush1.xpose.msra.mxu0 0.0
    %2441 = vmatprep.subr.mxu0 0.0
    %2442 = vmatpush1.xpose.msra.mxu0 0.0
    %2443 = vmatprep.subr.mxu0 0.0
    %2444 = vmatpush1.xpose.msra.mxu0 0.0
    %2445 = vmatprep.subr.mxu0 0.0
    %2446 = vmatpush1.xpose.msra.mxu0 0.0
    %2447 = vmatprep.subr.mxu0 0.0
    %2448 = vmatpush1.xpose.msra.mxu0 0.0
    %2449 = vmatprep.subr.mxu0 0.0
    %2450 = vmatpush1.xpose.msra.mxu0 0.0
    %2451 = vmatprep.subr.mxu0 0.0
    %2452 = vmatpush1.xpose.msra.mxu0 0.0
    %2453 = vmatprep.subr.mxu0 0.0
    %2454 = vmatpush1.xpose.msra.mxu0 0.0
    %2455 = vmatprep.subr.mxu0 0.0
    %2456 = vmatpush1.xpose.msra.mxu0 0.0
    %2457 = vmatprep.subr.mxu0 0.0
    %2458 = vmatpush1.xpose.msra.mxu0 0.0
    %2459 = vmatprep.subr.mxu0 0.0
    %2460 = vmatpush1.xpose.msra.mxu0 0.0
    %2461 = vmatprep.subr.mxu0 0.0
    %2462 = vmatpush1.xpose.msra.mxu0 0.0
    %2463 = vmatprep.subr.mxu0 0.0
    %2464 = vmatpush1.xpose.msra.mxu0 0.0
    %2465 = vmatprep.subr.mxu0 0.0
    %2466 = vmatpush1.xpose.msra.mxu0 0.0
    %2467 = vmatprep.subr.mxu0 0.0
    %2468 = vmatpush1.xpose.msra.mxu0 0.0
    %2469 = vmatprep.subr.mxu0 0.0
    %2470 = vmatpush1.xpose.msra.mxu0 0.0
    %2471 = vmatprep.subr.mxu0 0.0
    %2472 = vmatpush1.xpose.msra.mxu0 0.0
    %2473 = vmatprep.subr.mxu0 0.0
    %2474 = vmatpush1.xpose.msra.mxu0 0.0
    %2475 = vmatprep.subr.mxu0 0.0
    %2476 = vmatpush1.xpose.msra.mxu0 0.0
    %2477 = vmatprep.subr.mxu0 0.0
    %2478 = vmatpush1.xpose.msra.mxu0 0.0
    %2479 = vmatprep.subr.mxu0 0.0
    %2480 = vmatpush1.xpose.msra.mxu0 0.0
    %2481 = vmatprep.subr.mxu0 0.0
    %2482 = vmatpush1.xpose.msra.mxu0 0.0
    %2483 = vmatprep.subr.mxu0 0.0
    %2484 = vmatpush1.xpose.msra.mxu0 0.0
    %2485 = vmatprep.subr.mxu0 0.0
    %2486 = vmatpush1.xpose.msra.mxu0 0.0
    %2487 = vmatprep.subr.mxu0 0.0
    %2488 = vmatpush1.xpose.msra.mxu0 0.0
    %2489 = vmatprep.mubr.f32.mxu0 %v2319
    %2490 = vmatmul.mubr.f32.gmra.mrb[0].mxu0 %v2318
    %v2491 = vpop.f32.mrb[0].mxu0
    %v2492 = vadd.f32 0.0, %v2491
    %v2493 = vpop.f32.mrb[0].mxu0
    %2494 = vmatprep.mubr.f32.mxu0 %v2324
    %2495 = vmatmul.mubr.f32.gmra.mrb[0].mxu0 %v2323
    %v2496 = vpop.f32.mrb[0].mxu0
    %v2497 = vadd.f32 0.0, %v2496
    %v2498 = vpop.f32.mrb[0].mxu0
    %2499 = vmatprep.mubr.f32.mxu0 %v2329
    %2500 = vmatmul.mubr.f32.gmra.mrb[0].mxu0 %v2328
    %v2501 = vpop.f32.mrb[0].mxu0
    %v2502 = vadd.f32 0.0, %v2501
    %v2503 = vpop.f32.mrb[0].mxu0
    %2504 = vmatprep.mubr.f32.mxu0 %v2334
    %2505 = vmatmul.mubr.f32.gmra.mrb[0].mxu0 %v2333
    %v2506 = vpop.f32.mrb[0].mxu0
    %v2507 = vadd.f32 0.0, %v2506
    %v2508 = vpop.f32.mrb[0].mxu0
    %2509 = vdwg.mxu0
    %2510 = vmatprep.subr.mxu0 %v2409
    %2511 = vmatpush1.xpose.msra.mxu0 %v2408
    %2512 = vmatprep.subr.mxu0 %v2414
    %2513 = vmatpush1.xpose.msra.mxu0 %v2413
    %2514 = vmatprep.subr.mxu0 %v2419
    %2515 = vmatpush1.xpose.msra.mxu0 %v2418
    %2516 = vmatprep.subr.mxu0 %v2424
    %2517 = vmatpush1.xpose.msra.mxu0 %v2423
    %2518 = vmatprep.subr.mxu0 0.0
    %2519 = vmatpush1.xpose.msra.mxu0 0.0
    %2520 = vmatprep.subr.mxu0 0.0
    %2521 = vmatpush1.xpose.msra.mxu0 0.0
    %2522 = vmatprep.subr.mxu0 0.0
    %2523 = vmatpush1.xpose.msra.mxu0 0.0
    %2524 = vmatprep.subr.mxu0 0.0
    %2525 = vmatpush1.xpose.msra.mxu0 0.0
    %2526 = vmatprep.subr.mxu0 0.0
    %2527 = vmatpush1.xpose.msra.mxu0 0.0
    %2528 = vmatprep.subr.mxu0 0.0
    %2529 = vmatpush1.xpose.msra.mxu0 0.0
    %2530 = vmatprep.subr.mxu0 0.0
    %2531 = vmatpush1.xpose.msra.mxu0 0.0
    %2532 = vmatprep.subr.mxu0 0.0
    %2533 = vmatpush1.xpose.msra.mxu0 0.0
    %2534 = vmatprep.subr.mxu0 0.0
    %2535 = vmatpush1.xpose.msra.mxu0 0.0
    %2536 = vmatprep.subr.mxu0 0.0
    %2537 = vmatpush1.xpose.msra.mxu0 0.0
    %2538 = vmatprep.subr.mxu0 0.0
    %2539 = vmatpush1.xpose.msra.mxu0 0.0
    %2540 = vmatprep.subr.mxu0 0.0
    %2541 = vmatpush1.xpose.msra.mxu0 0.0
    %2542 = vmatprep.subr.mxu0 0.0
    %2543 = vmatpush1.xpose.msra.mxu0 0.0
    %2544 = vmatprep.subr.mxu0 0.0
    %2545 = vmatpush1.xpose.msra.mxu0 0.0
    %2546 = vmatprep.subr.mxu0 0.0
    %2547 = vmatpush1.xpose.msra.mxu0 0.0
    %2548 = vmatprep.subr.mxu0 0.0
    %2549 = vmatpush1.xpose.msra.mxu0 0.0
    %2550 = vmatprep.subr.mxu0 0.0
    %2551 = vmatpush1.xpose.msra.mxu0 0.0
    %2552 = vmatprep.subr.mxu0 0.0
    %2553 = vmatpush1.xpose.msra.mxu0 0.0
    %2554 = vmatprep.subr.mxu0 0.0
    %2555 = vmatpush1.xpose.msra.mxu0 0.0
    %2556 = vmatprep.subr.mxu0 0.0
    %2557 = vmatpush1.xpose.msra.mxu0 0.0
    %2558 = vmatprep.subr.mxu0 0.0
    %2559 = vmatpush1.xpose.msra.mxu0 0.0
    %2560 = vmatprep.subr.mxu0 0.0
    %2561 = vmatpush1.xpose.msra.mxu0 0.0
    %2562 = vmatprep.subr.mxu0 0.0
    %2563 = vmatpush1.xpose.msra.mxu0 0.0
    %2564 = vmatprep.subr.mxu0 0.0
    %2565 = vmatpush1.xpose.msra.mxu0 0.0
    %2566 = vmatprep.subr.mxu0 0.0
    %2567 = vmatpush1.xpose.msra.mxu0 0.0
    %2568 = vmatprep.subr.mxu0 0.0
    %2569 = vmatpush1.xpose.msra.mxu0 0.0
    %2570 = vmatprep.subr.mxu0 0.0
    %2571 = vmatpush1.xpose.msra.mxu0 0.0
    %2572 = vmatprep.subr.mxu0 0.0
    %2573 = vmatpush1.xpose.msra.mxu0 0.0
    %2574 = vmatprep.mubr.f32.mxu0 %v2321
    %2575 = vmatmul.mubr.f32.gmra.mrb[0].mxu0 %v2320
    %v2576 = vpop.f32.mrb[0].mxu0
    %v2577 = vadd.f32 %v2492, %v2576
    %v2578 = vpop.f32.mrb[0].mxu0
    %2579 = vmatprep.mubr.f32.mxu0 %v2326
    %2580 = vmatmul.mubr.f32.gmra.mrb[0].mxu0 %v2325
    %v2581 = vpop.f32.mrb[0].mxu0
    %v2582 = vadd.f32 %v2497, %v2581
    %v2583 = vpop.f32.mrb[0].mxu0
    %2584 = vmatprep.mubr.f32.mxu0 %v2331
    %2585 = vmatmul.mubr.f32.gmra.mrb[0].mxu0 %v2330
    %v2586 = vpop.f32.mrb[0].mxu0
    %v2587 = vadd.f32 %v2502, %v2586
    %v2588 = vpop.f32.mrb[0].mxu0
    %2589 = vmatprep.mubr.f32.mxu0 %v2336
    %2590 = vmatmul.mubr.f32.gmra.mrb[0].mxu0 %v2335
    %v2591 = vpop.f32.mrb[0].mxu0
    %v2592 = vadd.f32 %v2507, %v2591
    %v2593 = vpop.f32.mrb[0].mxu0
    %2594 = vdwg.mxu0
    %v2595 = vrcp.pop 0.07
    %v2596 = vmul.f32 %v2577, %v2595
    %v2597 = vmul.f32 %v2582, %v2595
    %v2598 = vmul.f32 %v2587, %v2595
    %v2599 = vmul.f32 %v2592, %v2595
    %vm2600 = vcmask 261120
    %v2601 = vsel %vm2600, %v2596, -inf
    %2602 = vmax.xlane.f32.xlu0 %v2601
    %v2603 = vpop.xlane.xlu0 %2602
    %v2604 = vsel %vm2600, %v2597, -inf
    %2605 = vmax.xlane.f32.xlu0 %v2604
    %v2606 = vpop.xlane.xlu0 %2605
    %v2607 = vsel %vm2600, %v2598, -inf
    %2608 = vmax.xlane.f32.xlu0 %v2607
    %v2609 = vpop.xlane.xlu0 %2608
    %v2610 = vsel %vm2600, %v2599, -inf
    %2611 = vmax.xlane.f32.xlu0 %v2610
    %v2612 = vpop.xlane.xlu0 %2611
    %v2613 = vsub.f32 %v2596, %v2603
    %v2614 = vsub.f32 %v2597, %v2606
    %v2615 = vsub.f32 %v2598, %v2609
    %v2616 = vsub.f32 %v2599, %v2612
    %v2617 = vmul.f32 %v2613, 1.442695
    %v2618 = vpow.pop %v2617
    %v2619 = vmul.f32 %v2614, 1.442695
    %v2620 = vpow.pop %v2619
    %v2621 = vmul.f32 %v2615, 1.442695
    %v2622 = vpow.pop %v2621
    %v2623 = vmul.f32 %v2616, 1.442695
    %v2624 = vpow.pop %v2623
    %v2625 = vsel %vm2600, %v2618, 0.0
    %2626 = vadd.xlane.f32.xlu0 %v2625
    %v2627 = vpop.xlane.xlu0 %2626
    %v2628 = vsel %vm2600, %v2620, 0.0
    %2629 = vadd.xlane.f32.xlu0 %v2628
    %v2630 = vpop.xlane.xlu0 %2629
    %v2631 = vsel %vm2600, %v2622, 0.0
    %2632 = vadd.xlane.f32.xlu0 %v2631
    %v2633 = vpop.xlane.xlu0 %2632
    %v2634 = vsel %vm2600, %v2624, 0.0
    %2635 = vadd.xlane.f32.xlu0 %v2634
    %v2636 = vpop.xlane.xlu0 %2635
    %v2637 = vlog2.pop %v2627
    %v2638 = vmul.f32 %v2637, 0.6931472
    %v2639 = vlog2.pop %v2630
    %v2640 = vmul.f32 %v2639, 0.6931472
    %v2641 = vlog2.pop %v2633
    %v2642 = vmul.f32 %v2641, 0.6931472
    %v2643 = vlog2.pop %v2636
    %v2644 = vmul.f32 %v2643, 0.6931472
    %v2645 = vadd.f32 %v2638, %v2603
    %v2646 = vadd.f32 %v2640, %v2606
    %v2647 = vadd.f32 %v2642, %v2609
    %v2648 = vadd.f32 %v2644, %v2612
    %v2649 = vlaneseq
    %v2650 = vshrl.u32 %v2649, 7
    %v2651 = vadd.s32 %v2650, 8
    %v2652 = vadd.s32 %v2650, 16
    %v2653 = vadd.s32 %v2650, 24
    %v2654 = vlaneseq
    %v2655 = vand.u32 %v2654, 127
    %vm2656 = vcmp.eq.s32.totalorder %v2650, %v2655
    %vm2657 = vcmp.eq.s32.totalorder %v2651, %v2655
    %vm2658 = vcmp.eq.s32.totalorder %v2652, %v2655
    %vm2659 = vcmp.eq.s32.totalorder %v2653, %v2655
    %v2660 = vsel %vm2656, %v2596, 0.0
    %v2661 = vsel %vm2657, %v2597, 0.0
    %v2662 = vsel %vm2658, %v2598, 0.0
    %v2663 = vsel %vm2659, %v2599, 0.0
    %v2664 = vsel %vm2600, %v2660, 0.0
    %2665 = vadd.xlane.f32.xlu0 %v2664
    %v2666 = vpop.xlane.xlu0 %2665
    %v2667 = vsel %vm2600, %v2661, 0.0
    %2668 = vadd.xlane.f32.xlu0 %v2667
    %v2669 = vpop.xlane.xlu0 %2668
    %v2670 = vsel %vm2600, %v2662, 0.0
    %2671 = vadd.xlane.f32.xlu0 %v2670
    %v2672 = vpop.xlane.xlu0 %2671
    %v2673 = vsel %vm2600, %v2663, 0.0
    %2674 = vadd.xlane.f32.xlu0 %v2673
    %v2675 = vpop.xlane.xlu0 %2674
    %v2676 = vsub.f32 %v2645, %v2666
    %v2677 = vsub.f32 %v2646, %v2669
    %v2678 = vsub.f32 %v2647, %v2672
    %v2679 = vsub.f32 %v2648, %v2675
    %v2680 = vadd.f32 %v2676, %v2677
    %v2681 = vadd.f32 %v2680, %v2678
    %v2682 = vadd.f32 %v2681, %v2679
    %v2683 = vrot.slane %v2682, 4
    %v2684 = vadd.f32 %v2682, %v2683
    %v2685 = vrot.slane %v2684, 2
    %v2686 = vadd.f32 %v2684, %v2685
    %v2687 = vrot.slane %v2686, 1
    %v2688 = vadd.f32 %v2686, %v2687
    %v2689 = vrcp.pop 32.0
    %v2690 = vmul.f32 %v2688, %v2689
    %v2691 = vmul.f32 %v2065, %v2065
    %v2692 = vmul.f32 %v2067, %v2067
    %v2693 = vmul.f32 %v2211, %v2211
    %v2694 = vmul.f32 %v2213, %v2213
    %v2695 = vmul.f32 %v2069, %v2069
    %v2696 = vmul.f32 %v2071, %v2071
    %v2697 = vmul.f32 %v2215, %v2215
    %v2698 = vmul.f32 %v2217, %v2217
    %v2699 = vmul.f32 %v2075, %v2075
    %v2700 = vmul.f32 %v2077, %v2077
    %v2701 = vmul.f32 %v2221, %v2221
    %v2702 = vmul.f32 %v2223, %v2223
    %v2703 = vmul.f32 %v2079, %v2079
    %v2704 = vmul.f32 %v2081, %v2081
    %v2705 = vmul.f32 %v2225, %v2225
    %v2706 = vmul.f32 %v2227, %v2227
    %v2707 = vadd.f32 %v2691, %v2692
    %v2708 = vadd.f32 %v2707, %v2693
    %v2709 = vadd.f32 %v2708, %v2694
    %2710 = vadd.xlane.f32.xlu0 %v2709
    %v2711 = vpop.xlane.xlu0 %2710
    %v2712 = vadd.f32 %v2695, %v2696
    %v2713 = vadd.f32 %v2712, %v2697
    %v2714 = vadd.f32 %v2713, %v2698
    %2715 = vadd.xlane.f32.xlu0 %v2714
    %v2716 = vpop.xlane.xlu0 %2715
    %v2717 = vadd.f32 %v2699, %v2700
    %v2718 = vadd.f32 %v2717, %v2701
    %v2719 = vadd.f32 %v2718, %v2702
    %2720 = vadd.xlane.f32.xlu0 %v2719
    %v2721 = vpop.xlane.xlu0 %2720
    %v2722 = vadd.f32 %v2703, %v2704
    %v2723 = vadd.f32 %v2722, %v2705
    %v2724 = vadd.f32 %v2723, %v2706
    %2725 = vadd.xlane.f32.xlu0 %v2724
    %v2726 = vpop.xlane.xlu0 %2725
    %v2727 = vrsqrt.pop %v2711
    %v2728 = vmul.f32 %v2711, %v2727
    %vm2729 = vcmp.eq.f32.partialorder %v2711, inf
    %v2730 = vsel %vm2729, %v2711, %v2728
    %vm2731 = vcmp.eq.f32.partialorder %v2711, 0.0
    %v2732 = vand.u32 %v2711, 2147483648
    %v2733 = vsel %vm2731, %v2732, %v2730
    %v2734 = vrsqrt.pop %v2716
    %v2735 = vmul.f32 %v2716, %v2734
    %vm2736 = vcmp.eq.f32.partialorder %v2716, inf
    %v2737 = vsel %vm2736, %v2716, %v2735
    %vm2738 = vcmp.eq.f32.partialorder %v2716, 0.0
    %v2739 = vand.u32 %v2716, 2147483648
    %v2740 = vsel %vm2738, %v2739, %v2737
    %v2741 = vrsqrt.pop %v2721
    %v2742 = vmul.f32 %v2721, %v2741
    %vm2743 = vcmp.eq.f32.partialorder %v2721, inf
    %v2744 = vsel %vm2743, %v2721, %v2742
    %vm2745 = vcmp.eq.f32.partialorder %v2721, 0.0
    %v2746 = vand.u32 %v2721, 2147483648
    %v2747 = vsel %vm2745, %v2746, %v2744
    %v2748 = vrsqrt.pop %v2726
    %v2749 = vmul.f32 %v2726, %v2748
    %vm2750 = vcmp.eq.f32.partialorder %v2726, inf
    %v2751 = vsel %vm2750, %v2726, %v2749
    %vm2752 = vcmp.eq.f32.partialorder %v2726, 0.0
    %v2753 = vand.u32 %v2726, 2147483648
    %v2754 = vsel %vm2752, %v2753, %v2751
    %v2755 = vmax.f32 %v2733, 1e-12
    %v2756 = vmax.f32 %v2740, 1e-12
    %v2757 = vmax.f32 %v2747, 1e-12
    %v2758 = vmax.f32 %v2754, 1e-12
    %v2759 = vrcp.pop %v2755
    %v2760 = vmul.f32 %v2065, %v2759
    %v2761 = vmul.f32 %v2067, %v2759
    %v2762 = vmul.f32 %v2211, %v2759
    %v2763 = vmul.f32 %v2213, %v2759
    %v2764 = vrcp.pop %v2756
    %v2765 = vmul.f32 %v2069, %v2764
    %v2766 = vmul.f32 %v2071, %v2764
    %v2767 = vmul.f32 %v2215, %v2764
    %v2768 = vmul.f32 %v2217, %v2764
    %v2769 = vrcp.pop %v2757
    %v2770 = vmul.f32 %v2075, %v2769
    %v2771 = vmul.f32 %v2077, %v2769
    %v2772 = vmul.f32 %v2221, %v2769
    %v2773 = vmul.f32 %v2223, %v2769
    %v2774 = vrcp.pop %v2758
    %v2775 = vmul.f32 %v2079, %v2774
    %v2776 = vmul.f32 %v2081, %v2774
    %v2777 = vmul.f32 %v2225, %v2774
    %v2778 = vmul.f32 %v2227, %v2774
    %v2779 = vmul.f32 %v21, %v21
    %v2780 = vmul.f32 %v22, %v22
    %v2781 = vmul.f32 %v23, %v23
    %v2782 = vmul.f32 %v24, %v24
    %v2783 = vmul.f32 %v25, %v25
    %v2784 = vmul.f32 %v26, %v26
    %v2785 = vmul.f32 %v27, %v27
    %v2786 = vmul.f32 %v28, %v28
    %v2787 = vmul.f32 %v29, %v29
    %v2788 = vmul.f32 %v30, %v30
    %v2789 = vmul.f32 %v31, %v31
    %v2790 = vmul.f32 %v32, %v32
    %v2791 = vmul.f32 %v33, %v33
    %v2792 = vmul.f32 %v34, %v34
    %v2793 = vmul.f32 %v35, %v35
    %v2794 = vmul.f32 %v36, %v36
    %v2795 = vadd.f32 %v2779, %v2780
    %v2796 = vadd.f32 %v2795, %v2781
    %v2797 = vadd.f32 %v2796, %v2782
    %2798 = vadd.xlane.f32.xlu0 %v2797
    %v2799 = vpop.xlane.xlu0 %2798
    %v2800 = vadd.f32 %v2783, %v2784
    %v2801 = vadd.f32 %v2800, %v2785
    %v2802 = vadd.f32 %v2801, %v2786
    %2803 = vadd.xlane.f32.xlu0 %v2802
    %v2804 = vpop.xlane.xlu0 %2803
    %v2805 = vadd.f32 %v2787, %v2788
    %v2806 = vadd.f32 %v2805, %v2789
    %v2807 = vadd.f32 %v2806, %v2790
    %2808 = vadd.xlane.f32.xlu0 %v2807
    %v2809 = vpop.xlane.xlu0 %2808
    %v2810 = vadd.f32 %v2791, %v2792
    %v2811 = vadd.f32 %v2810, %v2793
    %v2812 = vadd.f32 %v2811, %v2794
    %2813 = vadd.xlane.f32.xlu0 %v2812
    %v2814 = vpop.xlane.xlu0 %2813
    %v2815 = vrsqrt.pop %v2799
    %v2816 = vmul.f32 %v2799, %v2815
    %vm2817 = vcmp.eq.f32.partialorder %v2799, inf
    %v2818 = vsel %vm2817, %v2799, %v2816
    %vm2819 = vcmp.eq.f32.partialorder %v2799, 0.0
    %v2820 = vand.u32 %v2799, 2147483648
    %v2821 = vsel %vm2819, %v2820, %v2818
    %v2822 = vrsqrt.pop %v2804
    %v2823 = vmul.f32 %v2804, %v2822
    %vm2824 = vcmp.eq.f32.partialorder %v2804, inf
    %v2825 = vsel %vm2824, %v2804, %v2823
    %vm2826 = vcmp.eq.f32.partialorder %v2804, 0.0
    %v2827 = vand.u32 %v2804, 2147483648
    %v2828 = vsel %vm2826, %v2827, %v2825
    %v2829 = vrsqrt.pop %v2809
    %v2830 = vmul.f32 %v2809, %v2829
    %vm2831 = vcmp.eq.f32.partialorder %v2809, inf
    %v2832 = vsel %vm2831, %v2809, %v2830
    %vm2833 = vcmp.eq.f32.partialorder %v2809, 0.0
    %v2834 = vand.u32 %v2809, 2147483648
    %v2835 = vsel %vm2833, %v2834, %v2832
    %v2836 = vrsqrt.pop %v2814
    %v2837 = vmul.f32 %v2814, %v2836
    %vm2838 = vcmp.eq.f32.partialorder %v2814, inf
    %v2839 = vsel %vm2838, %v2814, %v2837
    %vm2840 = vcmp.eq.f32.partialorder %v2814, 0.0
    %v2841 = vand.u32 %v2814, 2147483648
    %v2842 = vsel %vm2840, %v2841, %v2839
    %v2843 = vmax.f32 %v2821, 1e-12
    %v2844 = vmax.f32 %v2828, 1e-12
    %v2845 = vmax.f32 %v2835, 1e-12
    %v2846 = vmax.f32 %v2842, 1e-12
    %v2847 = vrcp.pop %v2843
    %v2848 = vmul.f32 %v21, %v2847
    %v2849 = vmul.f32 %v22, %v2847
    %v2850 = vmul.f32 %v23, %v2847
    %v2851 = vmul.f32 %v24, %v2847
    %v2852 = vrcp.pop %v2844
    %v2853 = vmul.f32 %v25, %v2852
    %v2854 = vmul.f32 %v26, %v2852
    %v2855 = vmul.f32 %v27, %v2852
    %v2856 = vmul.f32 %v28, %v2852
    %v2857 = vrcp.pop %v2845
    %v2858 = vmul.f32 %v29, %v2857
    %v2859 = vmul.f32 %v30, %v2857
    %v2860 = vmul.f32 %v31, %v2857
    %v2861 = vmul.f32 %v32, %v2857
    %v2862 = vrcp.pop %v2846
    %v2863 = vmul.f32 %v33, %v2862
    %v2864 = vmul.f32 %v34, %v2862
    %v2865 = vmul.f32 %v35, %v2862
    %v2866 = vmul.f32 %v36, %v2862
    %2867 = vmatprep.subr.mxu0 %v2849
    %2868 = vmatpush1.xpose.msra.mxu0 %v2848
    %2869 = vmatprep.subr.mxu0 %v2854
    %2870 = vmatpush1.xpose.msra.mxu0 %v2853
    %2871 = vmatprep.subr.mxu0 %v2859
    %2872 = vmatpush1.xpose.msra.mxu0 %v2858
    %2873 = vmatprep.subr.mxu0 %v2864
    %2874 = vmatpush1.xpose.msra.mxu0 %v2863
    %2875 = vmatprep.subr.mxu0 0.0
    %2876 = vmatpush1.xpose.msra.mxu0 0.0
    %2877 = vmatprep.subr.mxu0 0.0
    %2878 = vmatpush1.xpose.msra.mxu0 0.0
    %2879 = vmatprep.subr.mxu0 0.0
    %2880 = vmatpush1.xpose.msra.mxu0 0.0
    %2881 = vmatprep.subr.mxu0 0.0
    %2882 = vmatpush1.xpose.msra.mxu0 0.0
    %2883 = vmatprep.subr.mxu0 0.0
    %2884 = vmatpush1.xpose.msra.mxu0 0.0
    %2885 = vmatprep.subr.mxu0 0.0
    %2886 = vmatpush1.xpose.msra.mxu0 0.0
    %2887 = vmatprep.subr.mxu0 0.0
    %2888 = vmatpush1.xpose.msra.mxu0 0.0
    %2889 = vmatprep.subr.mxu0 0.0
    %2890 = vmatpush1.xpose.msra.mxu0 0.0
    %2891 = vmatprep.subr.mxu0 0.0
    %2892 = vmatpush1.xpose.msra.mxu0 0.0
    %2893 = vmatprep.subr.mxu0 0.0
    %2894 = vmatpush1.xpose.msra.mxu0 0.0
    %2895 = vmatprep.subr.mxu0 0.0
    %2896 = vmatpush1.xpose.msra.mxu0 0.0
    %2897 = vmatprep.subr.mxu0 0.0
    %2898 = vmatpush1.xpose.msra.mxu0 0.0
    %2899 = vmatprep.subr.mxu0 0.0
    %2900 = vmatpush1.xpose.msra.mxu0 0.0
    %2901 = vmatprep.subr.mxu0 0.0
    %2902 = vmatpush1.xpose.msra.mxu0 0.0
    %2903 = vmatprep.subr.mxu0 0.0
    %2904 = vmatpush1.xpose.msra.mxu0 0.0
    %2905 = vmatprep.subr.mxu0 0.0
    %2906 = vmatpush1.xpose.msra.mxu0 0.0
    %2907 = vmatprep.subr.mxu0 0.0
    %2908 = vmatpush1.xpose.msra.mxu0 0.0
    %2909 = vmatprep.subr.mxu0 0.0
    %2910 = vmatpush1.xpose.msra.mxu0 0.0
    %2911 = vmatprep.subr.mxu0 0.0
    %2912 = vmatpush1.xpose.msra.mxu0 0.0
    %2913 = vmatprep.subr.mxu0 0.0
    %2914 = vmatpush1.xpose.msra.mxu0 0.0
    %2915 = vmatprep.subr.mxu0 0.0
    %2916 = vmatpush1.xpose.msra.mxu0 0.0
    %2917 = vmatprep.subr.mxu0 0.0
    %2918 = vmatpush1.xpose.msra.mxu0 0.0
    %2919 = vmatprep.subr.mxu0 0.0
    %2920 = vmatpush1.xpose.msra.mxu0 0.0
    %2921 = vmatprep.subr.mxu0 0.0
    %2922 = vmatpush1.xpose.msra.mxu0 0.0
    %2923 = vmatprep.subr.mxu0 0.0
    %2924 = vmatpush1.xpose.msra.mxu0 0.0
    %2925 = vmatprep.subr.mxu0 0.0
    %2926 = vmatpush1.xpose.msra.mxu0 0.0
    %2927 = vmatprep.subr.mxu0 0.0
    %2928 = vmatpush1.xpose.msra.mxu0 0.0
    %2929 = vmatprep.subr.mxu0 0.0
    %2930 = vmatpush1.xpose.msra.mxu0 0.0
    %2931 = vmatprep.mubr.f32.mxu0 %v2761
    %2932 = vmatmul.mubr.f32.gmra.mrb[0].mxu0 %v2760
    %v2933 = vpop.f32.mrb[0].mxu0
    %v2934 = vadd.f32 0.0, %v2933
    %v2935 = vpop.f32.mrb[0].mxu0
    %2936 = vmatprep.mubr.f32.mxu0 %v2766
    %2937 = vmatmul.mubr.f32.gmra.mrb[0].mxu0 %v2765
    %v2938 = vpop.f32.mrb[0].mxu0
    %v2939 = vadd.f32 0.0, %v2938
    %v2940 = vpop.f32.mrb[0].mxu0
    %2941 = vmatprep.mubr.f32.mxu0 %v2771
    %2942 = vmatmul.mubr.f32.gmra.mrb[0].mxu0 %v2770
    %v2943 = vpop.f32.mrb[0].mxu0
    %v2944 = vadd.f32 0.0, %v2943
    %v2945 = vpop.f32.mrb[0].mxu0
    %2946 = vmatprep.mubr.f32.mxu0 %v2776
    %2947 = vmatmul.mubr.f32.gmra.mrb[0].mxu0 %v2775
    %v2948 = vpop.f32.mrb[0].mxu0
    %v2949 = vadd.f32 0.0, %v2948
    %v2950 = vpop.f32.mrb[0].mxu0
    %2951 = vdwg.mxu0
    %2952 = vmatprep.subr.mxu0 %v2851
    %2953 = vmatpush1.xpose.msra.mxu0 %v2850
    %2954 = vmatprep.subr.mxu0 %v2856
    %2955 = vmatpush1.xpose.msra.mxu0 %v2855
    %2956 = vmatprep.subr.mxu0 %v2861
    %2957 = vmatpush1.xpose.msra.mxu0 %v2860
    %2958 = vmatprep.subr.mxu0 %v2866
    %2959 = vmatpush1.xpose.msra.mxu0 %v2865
    %2960 = vmatprep.subr.mxu0 0.0
    %2961 = vmatpush1.xpose.msra.mxu0 0.0
    %2962 = vmatprep.subr.mxu0 0.0
    %2963 = vmatpush1.xpose.msra.mxu0 0.0
    %2964 = vmatprep.subr.mxu0 0.0
    %2965 = vmatpush1.xpose.msra.mxu0 0.0
    %2966 = vmatprep.subr.mxu0 0.0
    %2967 = vmatpush1.xpose.msra.mxu0 0.0
    %2968 = vmatprep.subr.mxu0 0.0
    %2969 = vmatpush1.xpose.msra.mxu0 0.0
    %2970 = vmatprep.subr.mxu0 0.0
    %2971 = vmatpush1.xpose.msra.mxu0 0.0
    %2972 = vmatprep.subr.mxu0 0.0
    %2973 = vmatpush1.xpose.msra.mxu0 0.0
    %2974 = vmatprep.subr.mxu0 0.0
    %2975 = vmatpush1.xpose.msra.mxu0 0.0
    %2976 = vmatprep.subr.mxu0 0.0
    %2977 = vmatpush1.xpose.msra.mxu0 0.0
    %2978 = vmatprep.subr.mxu0 0.0
    %2979 = vmatpush1.xpose.msra.mxu0 0.0
    %2980 = vmatprep.subr.mxu0 0.0
    %2981 = vmatpush1.xpose.msra.mxu0 0.0
    %2982 = vmatprep.subr.mxu0 0.0
    %2983 = vmatpush1.xpose.msra.mxu0 0.0
    %2984 = vmatprep.subr.mxu0 0.0
    %2985 = vmatpush1.xpose.msra.mxu0 0.0
    %2986 = vmatprep.subr.mxu0 0.0
    %2987 = vmatpush1.xpose.msra.mxu0 0.0
    %2988 = vmatprep.subr.mxu0 0.0
    %2989 = vmatpush1.xpose.msra.mxu0 0.0
    %2990 = vmatprep.subr.mxu0 0.0
    %2991 = vmatpush1.xpose.msra.mxu0 0.0
    %2992 = vmatprep.subr.mxu0 0.0
    %2993 = vmatpush1.xpose.msra.mxu0 0.0
    %2994 = vmatprep.subr.mxu0 0.0
    %2995 = vmatpush1.xpose.msra.mxu0 0.0
    %2996 = vmatprep.subr.mxu0 0.0
    %2997 = vmatpush1.xpose.msra.mxu0 0.0
    %2998 = vmatprep.subr.mxu0 0.0
    %2999 = vmatpush1.xpose.msra.mxu0 0.0
    %3000 = vmatprep.subr.mxu0 0.0
    %3001 = vmatpush1.xpose.msra.mxu0 0.0
    %3002 = vmatprep.subr.mxu0 0.0
    %3003 = vmatpush1.xpose.msra.mxu0 0.0
    %3004 = vmatprep.subr.mxu0 0.0
    %3005 = vmatpush1.xpose.msra.mxu0 0.0
    %3006 = vmatprep.subr.mxu0 0.0
    %3007 = vmatpush1.xpose.msra.mxu0 0.0
    %3008 = vmatprep.subr.mxu0 0.0
    %3009 = vmatpush1.xpose.msra.mxu0 0.0
    %3010 = vmatprep.subr.mxu0 0.0
    %3011 = vmatpush1.xpose.msra.mxu0 0.0
    %3012 = vmatprep.subr.mxu0 0.0
    %3013 = vmatpush1.xpose.msra.mxu0 0.0
    %3014 = vmatprep.subr.mxu0 0.0
    %3015 = vmatpush1.xpose.msra.mxu0 0.0
    %3016 = vmatprep.mubr.f32.mxu0 %v2763
    %3017 = vmatmul.mubr.f32.gmra.mrb[0].mxu0 %v2762
    %v3018 = vpop.f32.mrb[0].mxu0
    %v3019 = vadd.f32 %v2934, %v3018
    %v3020 = vpop.f32.mrb[0].mxu0
    %3021 = vmatprep.mubr.f32.mxu0 %v2768
    %3022 = vmatmul.mubr.f32.gmra.mrb[0].mxu0 %v2767
    %v3023 = vpop.f32.mrb[0].mxu0
    %v3024 = vadd.f32 %v2939, %v3023
    %v3025 = vpop.f32.mrb[0].mxu0
    %3026 = vmatprep.mubr.f32.mxu0 %v2773
    %3027 = vmatmul.mubr.f32.gmra.mrb[0].mxu0 %v2772
    %v3028 = vpop.f32.mrb[0].mxu0
    %v3029 = vadd.f32 %v2944, %v3028
    %v3030 = vpop.f32.mrb[0].mxu0
    %3031 = vmatprep.mubr.f32.mxu0 %v2778
    %3032 = vmatmul.mubr.f32.gmra.mrb[0].mxu0 %v2777
    %v3033 = vpop.f32.mrb[0].mxu0
    %v3034 = vadd.f32 %v2949, %v3033
    %v3035 = vpop.f32.mrb[0].mxu0
    %3036 = vdwg.mxu0
    %v3037 = vmul.f32 %v3019, %v2595
    %v3038 = vmul.f32 %v3024, %v2595
    %v3039 = vmul.f32 %v3029, %v2595
    %v3040 = vmul.f32 %v3034, %v2595
    %v3041 = vsel %vm2600, %v3037, -inf
    %3042 = vmax.xlane.f32.xlu0 %v3041
    %v3043 = vpop.xlane.xlu0 %3042
    %v3044 = vsel %vm2600, %v3038, -inf
    %3045 = vmax.xlane.f32.xlu0 %v3044
    %v3046 = vpop.xlane.xlu0 %3045
    %v3047 = vsel %vm2600, %v3039, -inf
    %3048 = vmax.xlane.f32.xlu0 %v3047
    %v3049 = vpop.xlane.xlu0 %3048
    %v3050 = vsel %vm2600, %v3040, -inf
    %3051 = vmax.xlane.f32.xlu0 %v3050
    %v3052 = vpop.xlane.xlu0 %3051
    %v3053 = vsub.f32 %v3037, %v3043
    %v3054 = vsub.f32 %v3038, %v3046
    %v3055 = vsub.f32 %v3039, %v3049
    %v3056 = vsub.f32 %v3040, %v3052
    %v3057 = vmul.f32 %v3053, 1.442695
    %v3058 = vpow.pop %v3057
    %v3059 = vmul.f32 %v3054, 1.442695
    %v3060 = vpow.pop %v3059
    %v3061 = vmul.f32 %v3055, 1.442695
    %v3062 = vpow.pop %v3061
    %v3063 = vmul.f32 %v3056, 1.442695
    %v3064 = vpow.pop %v3063
    %v3065 = vsel %vm2600, %v3058, 0.0
    %3066 = vadd.xlane.f32.xlu0 %v3065
    %v3067 = vpop.xlane.xlu0 %3066
    %v3068 = vsel %vm2600, %v3060, 0.0
    %3069 = vadd.xlane.f32.xlu0 %v3068
    %v3070 = vpop.xlane.xlu0 %3069
    %v3071 = vsel %vm2600, %v3062, 0.0
    %3072 = vadd.xlane.f32.xlu0 %v3071
    %v3073 = vpop.xlane.xlu0 %3072
    %v3074 = vsel %vm2600, %v3064, 0.0
    %3075 = vadd.xlane.f32.xlu0 %v3074
    %v3076 = vpop.xlane.xlu0 %3075
    %v3077 = vlog2.pop %v3067
    %v3078 = vmul.f32 %v3077, 0.6931472
    %v3079 = vlog2.pop %v3070
    %v3080 = vmul.f32 %v3079, 0.6931472
    %v3081 = vlog2.pop %v3073
    %v3082 = vmul.f32 %v3081, 0.6931472
    %v3083 = vlog2.pop %v3076
    %v3084 = vmul.f32 %v3083, 0.6931472
    %v3085 = vadd.f32 %v3078, %v3043
    %v3086 = vadd.f32 %v3080, %v3046
    %v3087 = vadd.f32 %v3082, %v3049
    %v3088 = vadd.f32 %v3084, %v3052
    %v3089 = vsel %vm2656, %v3037, 0.0
    %v3090 = vsel %vm2657, %v3038, 0.0
    %v3091 = vsel %vm2658, %v3039, 0.0
    %v3092 = vsel %vm2659, %v3040, 0.0
    %v3093 = vsel %vm2600, %v3089, 0.0
    %3094 = vadd.xlane.f32.xlu0 %v3093
    %v3095 = vpop.xlane.xlu0 %3094
    %v3096 = vsel %vm2600, %v3090, 0.0
    %3097 = vadd.xlane.f32.xlu0 %v3096
    %v3098 = vpop.xlane.xlu0 %3097
    %v3099 = vsel %vm2600, %v3091, 0.0
    %3100 = vadd.xlane.f32.xlu0 %v3099
    %v3101 = vpop.xlane.xlu0 %3100
    %v3102 = vsel %vm2600, %v3092, 0.0
    %3103 = vadd.xlane.f32.xlu0 %v3102
    %v3104 = vpop.xlane.xlu0 %3103
    %v3105 = vsub.f32 %v3085, %v3095
    %v3106 = vsub.f32 %v3086, %v3098
    %v3107 = vsub.f32 %v3087, %v3101
    %v3108 = vsub.f32 %v3088, %v3104
    %v3109 = vadd.f32 %v3105, %v3106
    %v3110 = vadd.f32 %v3109, %v3107
    %v3111 = vadd.f32 %v3110, %v3108
    %v3112 = vrot.slane %v3111, 4
    %v3113 = vadd.f32 %v3111, %v3112
    %v3114 = vrot.slane %v3113, 2
    %v3115 = vadd.f32 %v3113, %v3114
    %v3116 = vrot.slane %v3115, 1
    %v3117 = vadd.f32 %v3115, %v3116
    %v3118 = vmul.f32 %v3117, %v2689
    %v3119 = vadd.f32 %v2690, %v3118
    %vm3120 = vcmask 0
    %3121 = vst.msk [vmem:[#allocation2] sm:$0x1] %vm3120, %v3119
    // Predicated region
    $region22: #{_moca_forward.7} parent=1 // pred_check
      _
    $region23: #{_moca_forward.7} parent=1 // pred_check_branch
      %3123 = sbr.rel (0) target = $region25
    $region24: #{_moca_forward.7} parent=1 // pred_region
      %s3125 = ssub.s32 16, 16
      %3126 = vsyncadd [#allocation3], %s3125
      %s3128 = sshll.u32 [#allocation2], 4
      %s3129 = int_to_ptr.vmem [resolvable:$true] %s3128
      %3131 = dma.vmem_to_hbm [thread:$0]  %s3129, 16, %s5, [#allocation3]
    $region25: #{_moca_forward.7} parent=1 // pred_fallthru
      _
    // Predicated region
    $region26: #{_moca_forward.7} parent=1 // pred_check
      _
    $region27: #{_moca_forward.7} parent=1 // pred_check_branch
      %3133 = sbr.rel (0) target = $region29
    $region28: #{_moca_forward.7} parent=1 // pred_region
      %3134 = dma.done [#allocation3], 16
    $region29: #{_moca_forward.7} parent=1 // pred_fallthru
      _
    %3135 = vsyncpa [#allocation3], 1

</llo_original>
